<compile_context>
chip_gen: v7x
topology: tpu7x:2x2x1
jax: 0.10.0
libtpu: 0.0.40
codegen_flags: <defaults>
</compile_context>

<pallas_src>
import functools

import jax
import jax.numpy as jnp
from jax import lax
from jax.experimental import pallas as pl
from jax.experimental.pallas import tpu as pltpu


# ---------------------------------------------------------------------------
# Pallas kernel 1: bidirectional GRU recurrence (packed-sequence semantics).
#   grid = (2,): d=0 forward time order, d=1 reverse time order.
#   gx_* : [T, B, H] per direction (input projection, biases folded in)
#   out  : [T, B, H] per direction (zeros in padded positions)
#   hfin : [B, H]   per direction (hidden frozen at each sequence's length)
# ---------------------------------------------------------------------------
def _bigru_kernel(gxr_ref, gxz_ref, gxn_ref, m_ref,
                  whr_ref, whz_ref, whn_ref, bhn_ref,
                  out_ref, hfin_ref, *, T):
    d = pl.program_id(0)                       # 0 = forward, 1 = backward
    base = jnp.where(d == 0, 0, T - 1)
    sign = jnp.where(d == 0, 1, -1)

    whr = whr_ref[...]                         # [H, H] bf16
    whz = whz_ref[...]
    whn = whn_ref[...]
    bhn = bhn_ref[...]                         # [1, H] f32

    B, H = hfin_ref.shape

    def step(i, h):
        t = base + sign * i
        m = m_ref[t]                           # [B, 1]  1.0 while t < length
        hb = h.astype(whr.dtype)
        # PyTorch GRU gate order r, z, n; b_hn stays inside r * (...)
        r = jax.nn.sigmoid(
            gxr_ref[t] + jnp.dot(hb, whr, preferred_element_type=jnp.float32))
        z = jax.nn.sigmoid(
            gxz_ref[t] + jnp.dot(hb, whz, preferred_element_type=jnp.float32))
        n = jnp.tanh(
            gxn_ref[t]
            + r * (jnp.dot(hb, whn, preferred_element_type=jnp.float32) + bhn))
        h_new = (1.0 - z) * n + z * h
        # pack_padded semantics: freeze the hidden state past the sequence length
        h_upd = h + m * (h_new - h)
        # pad_packed semantics: zero outputs in padded positions
        out_ref[t] = h_upd * m
        return h_upd

    h0 = jnp.zeros((B, H), jnp.float32)
    hfin_ref[...] = lax.fori_loop(0, T, step, h0, unroll=(T <= 32))


def bigru_scan(gx_r, gx_z, gx_n, mask_tm, whh_r, whh_z, whh_n, bhh_n):
    """Run both GRU directions in one pallas_call.

    gx_*    : [2, T, B, H] f32   (precomputed input projections, biases folded)
    mask_tm : [T, B, 1]    f32
    whh_*   : [2, H, H]    bf16
    bhh_n   : [2, 1, H]    f32
    returns (out [2, T, B, H] f32, h_final [2, B, H] f32)
    """
    _, T, B, H = gx_r.shape
    gx_spec = pl.BlockSpec((None, T, B, H), lambda d: (d, 0, 0, 0))
    w_spec = pl.BlockSpec((None, H, H), lambda d: (d, 0, 0))
    out, hfin = pl.pallas_call(
        functools.partial(_bigru_kernel, T=T),
        out_shape=(jax.ShapeDtypeStruct((2, T, B, H), jnp.float32),
                   jax.ShapeDtypeStruct((2, B, H), jnp.float32)),
        grid_spec=pltpu.PrefetchScalarGridSpec(
            num_scalar_prefetch=0,
            grid=(2,),
            in_specs=[
                gx_spec, gx_spec, gx_spec,
                pl.BlockSpec((T, B, 1), lambda d: (0, 0, 0)),
                w_spec, w_spec, w_spec,
                pl.BlockSpec((None, 1, H), lambda d: (d, 0, 0)),
            ],
            out_specs=[
                pl.BlockSpec((None, T, B, H), lambda d: (d, 0, 0, 0)),
                pl.BlockSpec((None, B, H), lambda d: (d, 0, 0)),
            ],
        ),
        compiler_params=pltpu.CompilerParams(
            dimension_semantics=("parallel",)),
    )(gx_r, gx_z, gx_n, mask_tm, whh_r, whh_z, whh_n, bhh_n)
    return out, hfin


# ---------------------------------------------------------------------------
# Pallas kernel 2: bmm(doc, query) + exact masked softmax from the module.
#   All batches in one grid step; scores via VPU multiply + lane reduce;
#   lane-dense [B, T] output.
# ---------------------------------------------------------------------------
def _attention_kernel(doc_ref, q_ref, m_ref, out_ref):
    doc = doc_ref[...]                                  # [B, T, 2H]
    q = q_ref[...]                                      # [B, 2H]
    m = m_ref[...]                                      # [B, T]
    scores = jnp.sum(doc * q[:, None, :], axis=-1)      # [B, T]
    masked = scores * m
    mx = jnp.max(masked, axis=-1, keepdims=True)
    shifted = (masked - mx) * m
    logdenom = jnp.log(jnp.sum(jnp.exp(shifted) * m, axis=-1, keepdims=True))
    logprobs = (shifted - logdenom) * m
    out_ref[...] = jnp.exp(logprobs) * m


def attention_probs(doc_bm, q, mask_bt):
    """doc_bm [B,T,2H], q [B,2H], mask_bt [B,T] -> probs [B,T]."""
    B, T, D2 = doc_bm.shape
    return pl.pallas_call(
        _attention_kernel,
        out_shape=jax.ShapeDtypeStruct((B, T), jnp.float32),
        grid_spec=pltpu.PrefetchScalarGridSpec(
            num_scalar_prefetch=0,
            grid=(1,),
            in_specs=[
                pl.BlockSpec((B, T, D2), lambda i: (0, 0, 0)),
                pl.BlockSpec((B, D2), lambda i: (0, 0)),
                pl.BlockSpec((B, T), lambda i: (0, 0)),
            ],
            out_specs=pl.BlockSpec((B, T), lambda i: (0, 0)),
        ),
        compiler_params=pltpu.CompilerParams(
            dimension_semantics=("arbitrary",)),
    )(doc_bm, q, mask_bt)


# ---------------------------------------------------------------------------
# Encoder: embedding lookup (time-major) + hoisted input projection + GRU kernel.
# ---------------------------------------------------------------------------
def encode(tokens, lengths, enc, emb_table):
    """tokens [B, T] int (sorted by length desc), lengths [B] ->
       (outputs [T, B, 2H], final hidden [B, 2H])."""
    B, T = tokens.shape
    # Embedding gather done directly in time-major layout (glue, stays in XLA).
    emb_tm = jnp.take(emb_table, tokens.T, axis=0)                  # [T, B, E]
    mask_tm = (jnp.arange(T)[:, None] < lengths[None, :]
               ).astype(jnp.float32)[:, :, None]                    # [T, B, 1]

    # Hoisted input projection: one large matmul per gate covering all timesteps
    # and both directions; b_ih (and b_hh for r, z) folded in.
    gx_r = jnp.einsum('tbe,deh->dtbh', emb_tm, enc['wih_r']) + enc['b_r'][:, None]
    gx_z = jnp.einsum('tbe,deh->dtbh', emb_tm, enc['wih_z']) + enc['b_z'][:, None]
    gx_n = jnp.einsum('tbe,deh->dtbh', emb_tm, enc['wih_n']) + enc['bih_n'][:, None]

    out, hfin = bigru_scan(
        gx_r, gx_z, gx_n, mask_tm,
        enc['whh_r'].astype(jnp.bfloat16),
        enc['whh_z'].astype(jnp.bfloat16),
        enc['whh_n'].astype(jnp.bfloat16),
        enc['bhh_n'])

    out_cat = jnp.concatenate([out[0], out[1]], axis=-1)            # [T, B, 2H]
    h_cat = jnp.concatenate([hfin[0], hfin[1]], axis=-1)            # [B, 2H]
    return out_cat, h_cat


# ---------------------------------------------------------------------------
# ASReader forward (matches the PyTorch module semantics).
# ---------------------------------------------------------------------------
def asreader_forward(params, document_batch, query_batch, query_lengths,
                     document_lengths, query_unsort, document_unsort, length_mask):
    emb = params["embedding"]

    # query encoder: final hidden states of both directions -> [B, 2H]
    _, query_encoded = encode(query_batch, query_lengths, params["query"], emb)
    # document encoder: full sequence outputs (zeros in padding) -> [T, B, 2H]
    doc_out_tm, _ = encode(document_batch, document_lengths, params["doc"], emb)

    # undo the length-sort (torch.index_select) and present batch-major docs
    query_unsorted = jnp.take(query_encoded, query_unsort, axis=0)   # [B, 2H]
    doc_unsorted = jnp.take(doc_out_tm, document_unsort, axis=1)     # [T, B, 2H]
    doc_bm = jnp.transpose(doc_unsorted, (1, 0, 2))                  # [B, T, 2H]

    probs_bt = attention_probs(doc_bm, query_unsorted, length_mask[:, :, 0])
    return probs_bt[:, :, None]                                      # [B, T, 1]


# ---------------------------------------------------------------------------
# Parameter init (embedding uniform(-0.1, 0.1); GRU default uniform(-1/sqrt(H), 1/sqrt(H)))
# Weights stored per gate with a leading direction axis (0 = fwd, 1 = bwd).
# ---------------------------------------------------------------------------
def _encoder_params(key, E, H):
    bound = 1.0 / (H ** 0.5)
    ks = jax.random.split(key, 12)
    u = lambda k, shape: jax.random.uniform(k, shape, jnp.float32, -bound, bound)
    wih_r, wih_z, wih_n = u(ks[0], (2, E, H)), u(ks[1], (2, E, H)), u(ks[2], (2, E, H))
    whh_r, whh_z, whh_n = u(ks[3], (2, H, H)), u(ks[4], (2, H, H)), u(ks[5], (2, H, H))
    bih_r, bih_z, bih_n = u(ks[6], (2, 1, H)), u(ks[7], (2, 1, H)), u(ks[8], (2, 1, H))
    bhh_r, bhh_z, bhh_n = u(ks[9], (2, 1, H)), u(ks[10], (2, 1, H)), u(ks[11], (2, 1, H))
    return dict(
        wih_r=wih_r, wih_z=wih_z, wih_n=wih_n,
        whh_r=whh_r, whh_z=whh_z, whh_n=whh_n,
        b_r=bih_r + bhh_r,          # b_hr can be folded with b_ir
        b_z=bih_z + bhh_z,          # b_hz can be folded with b_iz
        bih_n=bih_n, bhh_n=bhh_n,   # b_hn must stay inside r * (...)
    )


def init_params(key, vocab_size, embedding_dim, encoding_dim):
    ke, kd, kq = jax.random.split(key, 3)
    return dict(
        embedding=jax.random.uniform(ke, (vocab_size, embedding_dim),
                                     jnp.float32, -0.1, 0.1),
        doc=_encoder_params(kd, embedding_dim, encoding_dim),
        query=_encoder_params(kq, embedding_dim, encoding_dim),
    )


if __name__ == "__main__":
    key = jax.random.PRNGKey(0)
    vocab_size, embedding_dim, encoding_dim = 50, 16, 16
    B, Td, Tq = 4, 12, 6

    kp, kd, kq = jax.random.split(key, 3)
    params = init_params(kp, vocab_size, embedding_dim, encoding_dim)

    # original (unsorted) batches and lengths
    doc_lens_orig = jnp.array([9, 12, 7, 10], dtype=jnp.int32)
    q_lens_orig = jnp.array([4, 6, 3, 5], dtype=jnp.int32)
    doc_tokens_orig = jax.random.randint(kd, (B, Td), 0, vocab_size)
    q_tokens_orig = jax.random.randint(kq, (B, Tq), 0, vocab_size)

    # sort descending by length (pack_padded_sequence requirement) + unsort indices
    doc_sort = jnp.argsort(-doc_lens_orig)
    q_sort = jnp.argsort(-q_lens_orig)
    document_unsort = jnp.argsort(doc_sort)
    query_unsort = jnp.argsort(q_sort)

    document_batch = doc_tokens_orig[doc_sort]
    query_batch = q_tokens_orig[q_sort]
    document_lengths = doc_lens_orig[doc_sort]
    query_lengths = q_lens_orig[q_sort]

    # length mask in original (unsorted) order, shape [B, Td, 1]
    length_mask = (jnp.arange(Td)[None, :] < doc_lens_orig[:, None]
                   ).astype(jnp.float32)[:, :, None]

    fwd = jax.jit(asreader_forward)
    probs = fwd(params, document_batch, query_batch, query_lengths,
                document_lengths, query_unsort, document_unsort, length_mask)
    jax.block_until_ready(probs)

    # sanity: probabilities over valid positions sum to ~1, zeros in padding
    sums = jnp.sum(probs[:, :, 0], axis=1)
    assert probs.shape == (B, Td, 1)
    assert bool(jnp.all(jnp.abs(sums - 1.0) < 1e-4))
    assert bool(jnp.all(jnp.where(length_mask[:, :, 0] == 0.0,
                                  probs[:, :, 0] == 0.0, True)))
    print("KERNEL_OK")
</pallas_src>

<mosaic_0001>
module attributes {stable_mosaic.version = 11 : i64} {
  func.func @_bigru_kernel(%arg0: i32, %arg1: memref<1x12x4x16xf32, #tpu.memory_space<vmem>>, %arg2: memref<1x12x4x16xf32, #tpu.memory_space<vmem>>, %arg3: memref<1x12x4x16xf32, #tpu.memory_space<vmem>>, %arg4: memref<12x4x1xf32, #tpu.memory_space<vmem>>, %arg5: memref<1x16x16xbf16, #tpu.memory_space<vmem>>, %arg6: memref<1x16x16xbf16, #tpu.memory_space<vmem>>, %arg7: memref<1x16x16xbf16, #tpu.memory_space<vmem>>, %arg8: memref<1x1x16xf32, #tpu.memory_space<vmem>>, %arg9: memref<1x12x4x16xf32, #tpu.memory_space<vmem>>, %arg10: memref<1x4x16xf32, #tpu.memory_space<vmem>>) attributes {dimension_semantics = [#tpu.dimension_semantics<parallel>], iteration_bounds = array<i64: 2>, scalar_prefetch = 0 : i64, scratch_operands = 0 : i64, tpu.core_type = #tpu.core_type<tc>, window_params = [{transform_indices = @transform_0, window_bounds = array<i64: 1, 12, 4, 16>}, {transform_indices = @transform_1, window_bounds = array<i64: 1, 12, 4, 16>}, {transform_indices = @transform_2, window_bounds = array<i64: 1, 12, 4, 16>}, {pipeline_mode = #tpu.pipeline_mode<synchronous>, transform_indices = @transform_3, window_bounds = array<i64: 12, 4, 1>}, {transform_indices = @transform_4, window_bounds = array<i64: 1, 16, 16>}, {transform_indices = @transform_5, window_bounds = array<i64: 1, 16, 16>}, {transform_indices = @transform_6, window_bounds = array<i64: 1, 16, 16>}, {transform_indices = @transform_7, window_bounds = array<i64: 1, 1, 16>}, {transform_indices = @transform_8, window_bounds = array<i64: 1, 12, 4, 16>}, {transform_indices = @transform_9, window_bounds = array<i64: 1, 4, 16>}]} {
    %c0_i32 = arith.constant 0 : i32
    %0 = arith.cmpi eq, %arg0, %c0_i32 : i32
    %c0_i32_0 = arith.constant 0 : i32
    %c11_i32 = arith.constant 11 : i32
    %1 = arith.select %0, %c0_i32_0, %c11_i32 : i32
    %c0_i32_1 = arith.constant 0 : i32
    %2 = arith.cmpi eq, %arg0, %c0_i32_1 : i32
    %c1_i32 = arith.constant 1 : i32
    %c-1_i32 = arith.constant -1 : i32
    %3 = arith.select %2, %c1_i32, %c-1_i32 : i32
    %c0 = arith.constant 0 : index
    %c0_2 = arith.constant 0 : index
    %c0_3 = arith.constant 0 : index
    %4 = vector.load %arg5[%c0, %c0_2, %c0_3] : memref<1x16x16xbf16, #tpu.memory_space<vmem>>, vector<1x16x16xbf16>
    %5 = vector.shape_cast %4 : vector<1x16x16xbf16> to vector<16x16xbf16>
    %c0_4 = arith.constant 0 : index
    %c0_5 = arith.constant 0 : index
    %c0_6 = arith.constant 0 : index
    %6 = vector.load %arg6[%c0_4, %c0_5, %c0_6] : memref<1x16x16xbf16, #tpu.memory_space<vmem>>, vector<1x16x16xbf16>
    %7 = vector.shape_cast %6 : vector<1x16x16xbf16> to vector<16x16xbf16>
    %c0_7 = arith.constant 0 : index
    %c0_8 = arith.constant 0 : index
    %c0_9 = arith.constant 0 : index
    %8 = vector.load %arg7[%c0_7, %c0_8, %c0_9] : memref<1x16x16xbf16, #tpu.memory_space<vmem>>, vector<1x16x16xbf16>
    %9 = vector.shape_cast %8 : vector<1x16x16xbf16> to vector<16x16xbf16>
    %c0_10 = arith.constant 0 : index
    %c0_11 = arith.constant 0 : index
    %c0_12 = arith.constant 0 : index
    %10 = vector.load %arg8[%c0_10, %c0_11, %c0_12] : memref<1x1x16xf32, #tpu.memory_space<vmem>>, vector<1x1x16xf32>
    %11 = vector.shape_cast %10 : vector<1x1x16xf32> to vector<1x16xf32>
    %cst = arith.constant 0.000000e+00 : f32
    %12 = vector.broadcast %cst : f32 to vector<4x16xf32>
    %c0_i32_13 = arith.constant 0 : i32
    %13 = arith.muli %3, %c0_i32_13 : i32
    %14 = arith.addi %1, %13 : i32
    %15 = arith.index_cast %14 : i32 to index
    %c0_14 = arith.constant 0 : index
    %c0_15 = arith.constant 0 : index
    %16 = vector.load %arg4[%15, %c0_14, %c0_15] : memref<12x4x1xf32, #tpu.memory_space<vmem>>, vector<1x4x1xf32>
    %17 = vector.shape_cast %16 : vector<1x4x1xf32> to vector<4x1xf32>
    %18 = arith.truncf %12 : vector<4x16xf32> to vector<4x16xbf16>
    %c0_16 = arith.constant 0 : index
    %19 = arith.index_cast %14 : i32 to index
    %c0_17 = arith.constant 0 : index
    %c0_18 = arith.constant 0 : index
    %20 = vector.load %arg1[%c0_16, %19, %c0_17, %c0_18] : memref<1x12x4x16xf32, #tpu.memory_space<vmem>>, vector<1x1x4x16xf32>
    %21 = vector.shape_cast %20 : vector<1x1x4x16xf32> to vector<4x16xf32>
    %cst_19 = arith.constant dense<0.000000e+00> : vector<4x16xf32>
    %22 = tpu.matmul %18, %5, %cst_19 {dimension_numbers = #tpu.dot_dimension_numbers<[1], [0], [0], [1], [0, 0, 1, 1], [], []>} : vector<4x16xbf16>, vector<16x16xbf16>, vector<4x16xf32> -> vector<4x16xf32>
    %23 = arith.addf %21, %22 : vector<4x16xf32>
    %24 = arith.negf %23 : vector<4x16xf32>
    %25 = math.exp %24 : vector<4x16xf32>
    %cst_20 = arith.constant 1.000000e+00 : f32
    %26 = vector.broadcast %cst_20 : f32 to vector<4x16xf32>
    %27 = arith.addf %26, %25 : vector<4x16xf32>
    %28 = arith.divf %26, %27 : vector<4x16xf32>
    %c0_21 = arith.constant 0 : index
    %29 = arith.index_cast %14 : i32 to index
    %c0_22 = arith.constant 0 : index
    %c0_23 = arith.constant 0 : index
    %30 = vector.load %arg2[%c0_21, %29, %c0_22, %c0_23] : memref<1x12x4x16xf32, #tpu.memory_space<vmem>>, vector<1x1x4x16xf32>
    %31 = vector.shape_cast %30 : vector<1x1x4x16xf32> to vector<4x16xf32>
    %cst_24 = arith.constant dense<0.000000e+00> : vector<4x16xf32>
    %32 = tpu.matmul %18, %7, %cst_24 {dimension_numbers = #tpu.dot_dimension_numbers<[1], [0], [0], [1], [0, 0, 1, 1], [], []>} : vector<4x16xbf16>, vector<16x16xbf16>, vector<4x16xf32> -> vector<4x16xf32>
    %33 = arith.addf %31, %32 : vector<4x16xf32>
    %34 = arith.negf %33 : vector<4x16xf32>
    %35 = math.exp %34 : vector<4x16xf32>
    %cst_25 = arith.constant 1.000000e+00 : f32
    %36 = vector.broadcast %cst_25 : f32 to vector<4x16xf32>
    %37 = arith.addf %36, %35 : vector<4x16xf32>
    %38 = arith.divf %36, %37 : vector<4x16xf32>
    %c0_26 = arith.constant 0 : index
    %39 = arith.index_cast %14 : i32 to index
    %c0_27 = arith.constant 0 : index
    %c0_28 = arith.constant 0 : index
    %40 = vector.load %arg3[%c0_26, %39, %c0_27, %c0_28] : memref<1x12x4x16xf32, #tpu.memory_space<vmem>>, vector<1x1x4x16xf32>
    %41 = vector.shape_cast %40 : vector<1x1x4x16xf32> to vector<4x16xf32>
    %cst_29 = arith.constant dense<0.000000e+00> : vector<4x16xf32>
    %42 = tpu.matmul %18, %9, %cst_29 {dimension_numbers = #tpu.dot_dimension_numbers<[1], [0], [0], [1], [0, 0, 1, 1], [], []>} : vector<4x16xbf16>, vector<16x16xbf16>, vector<4x16xf32> -> vector<4x16xf32>
    %43 = vector.broadcast %11 : vector<1x16xf32> to vector<4x16xf32>
    %44 = arith.addf %42, %43 : vector<4x16xf32>
    %45 = arith.mulf %28, %44 : vector<4x16xf32>
    %46 = arith.addf %41, %45 : vector<4x16xf32>
    %47 = math.tanh %46 : vector<4x16xf32>
    %cst_30 = arith.constant 1.000000e+00 : f32
    %48 = vector.broadcast %cst_30 : f32 to vector<4x16xf32>
    %49 = arith.subf %48, %38 : vector<4x16xf32>
    %50 = arith.mulf %49, %47 : vector<4x16xf32>
    %51 = arith.mulf %38, %12 : vector<4x16xf32>
    %52 = arith.addf %50, %51 : vector<4x16xf32>
    %53 = arith.subf %52, %12 : vector<4x16xf32>
    %54 = vector.broadcast %17 : vector<4x1xf32> to vector<4x16xf32>
    %55 = arith.mulf %54, %53 : vector<4x16xf32>
    %56 = arith.addf %12, %55 : vector<4x16xf32>
    %57 = vector.broadcast %17 : vector<4x1xf32> to vector<4x16xf32>
    %58 = arith.mulf %56, %57 : vector<4x16xf32>
    %c0_31 = arith.constant 0 : index
    %59 = arith.index_cast %14 : i32 to index
    %c0_32 = arith.constant 0 : index
    %c0_33 = arith.constant 0 : index
    %60 = vector.load %arg9[%c0_31, %59, %c0_32, %c0_33] : memref<1x12x4x16xf32, #tpu.memory_space<vmem>>, vector<1x1x4x16xf32>
    %61 = vector.shape_cast %60 : vector<1x1x4x16xf32> to vector<4x16xf32>
    %62 = vector.shape_cast %58 : vector<4x16xf32> to vector<1x1x4x16xf32>
    tpu.vector_store %arg9[%c0_31, %59, %c0_32, %c0_33], %62 {strides = array<i32>} : memref<1x12x4x16xf32, #tpu.memory_space<vmem>>, vector<1x1x4x16xf32>,
    %c1_i32_34 = arith.constant 1 : i32
    %63 = arith.muli %3, %c1_i32_34 : i32
    %64 = arith.addi %1, %63 : i32
    %65 = arith.index_cast %64 : i32 to index
    %c0_35 = arith.constant 0 : index
    %c0_36 = arith.constant 0 : index
    %66 = vector.load %arg4[%65, %c0_35, %c0_36] : memref<12x4x1xf32, #tpu.memory_space<vmem>>, vector<1x4x1xf32>
    %67 = vector.shape_cast %66 : vector<1x4x1xf32> to vector<4x1xf32>
    %68 = arith.truncf %56 : vector<4x16xf32> to vector<4x16xbf16>
    %c0_37 = arith.constant 0 : index
    %69 = arith.index_cast %64 : i32 to index
    %c0_38 = arith.constant 0 : index
    %c0_39 = arith.constant 0 : index
    %70 = vector.load %arg1[%c0_37, %69, %c0_38, %c0_39] : memref<1x12x4x16xf32, #tpu.memory_space<vmem>>, vector<1x1x4x16xf32>
    %71 = vector.shape_cast %70 : vector<1x1x4x16xf32> to vector<4x16xf32>
    %cst_40 = arith.constant dense<0.000000e+00> : vector<4x16xf32>
    %72 = tpu.matmul %68, %5, %cst_40 {dimension_numbers = #tpu.dot_dimension_numbers<[1], [0], [0], [1], [0, 0, 1, 1], [], []>} : vector<4x16xbf16>, vector<16x16xbf16>, vector<4x16xf32> -> vector<4x16xf32>
    %73 = arith.addf %71, %72 : vector<4x16xf32>
    %74 = arith.negf %73 : vector<4x16xf32>
    %75 = math.exp %74 : vector<4x16xf32>
    %cst_41 = arith.constant 1.000000e+00 : f32
    %76 = vector.broadcast %cst_41 : f32 to vector<4x16xf32>
    %77 = arith.addf %76, %75 : vector<4x16xf32>
    %78 = arith.divf %76, %77 : vector<4x16xf32>
    %c0_42 = arith.constant 0 : index
    %79 = arith.index_cast %64 : i32 to index
    %c0_43 = arith.constant 0 : index
    %c0_44 = arith.constant 0 : index
    %80 = vector.load %arg2[%c0_42, %79, %c0_43, %c0_44] : memref<1x12x4x16xf32, #tpu.memory_space<vmem>>, vector<1x1x4x16xf32>
    %81 = vector.shape_cast %80 : vector<1x1x4x16xf32> to vector<4x16xf32>
    %cst_45 = arith.constant dense<0.000000e+00> : vector<4x16xf32>
    %82 = tpu.matmul %68, %7, %cst_45 {dimension_numbers = #tpu.dot_dimension_numbers<[1], [0], [0], [1], [0, 0, 1, 1], [], []>} : vector<4x16xbf16>, vector<16x16xbf16>, vector<4x16xf32> -> vector<4x16xf32>
    %83 = arith.addf %81, %82 : vector<4x16xf32>
    %84 = arith.negf %83 : vector<4x16xf32>
    %85 = math.exp %84 : vector<4x16xf32>
    %cst_46 = arith.constant 1.000000e+00 : f32
    %86 = vector.broadcast %cst_46 : f32 to vector<4x16xf32>
    %87 = arith.addf %86, %85 : vector<4x16xf32>
    %88 = arith.divf %86, %87 : vector<4x16xf32>
    %c0_47 = arith.constant 0 : index
    %89 = arith.index_cast %64 : i32 to index
    %c0_48 = arith.constant 0 : index
    %c0_49 = arith.constant 0 : index
    %90 = vector.load %arg3[%c0_47, %89, %c0_48, %c0_49] : memref<1x12x4x16xf32, #tpu.memory_space<vmem>>, vector<1x1x4x16xf32>
    %91 = vector.shape_cast %90 : vector<1x1x4x16xf32> to vector<4x16xf32>
    %cst_50 = arith.constant dense<0.000000e+00> : vector<4x16xf32>
    %92 = tpu.matmul %68, %9, %cst_50 {dimension_numbers = #tpu.dot_dimension_numbers<[1], [0], [0], [1], [0, 0, 1, 1], [], []>} : vector<4x16xbf16>, vector<16x16xbf16>, vector<4x16xf32> -> vector<4x16xf32>
    %93 = vector.broadcast %11 : vector<1x16xf32> to vector<4x16xf32>
    %94 = arith.addf %92, %93 : vector<4x16xf32>
    %95 = arith.mulf %78, %94 : vector<4x16xf32>
    %96 = arith.addf %91, %95 : vector<4x16xf32>
    %97 = math.tanh %96 : vector<4x16xf32>
    %cst_51 = arith.constant 1.000000e+00 : f32
    %98 = vector.broadcast %cst_51 : f32 to vector<4x16xf32>
    %99 = arith.subf %98, %88 : vector<4x16xf32>
    %100 = arith.mulf %99, %97 : vector<4x16xf32>
    %101 = arith.mulf %88, %56 : vector<4x16xf32>
    %102 = arith.addf %100, %101 : vector<4x16xf32>
    %103 = arith.subf %102, %56 : vector<4x16xf32>
    %104 = vector.broadcast %67 : vector<4x1xf32> to vector<4x16xf32>
    %105 = arith.mulf %104, %103 : vector<4x16xf32>
    %106 = arith.addf %56, %105 : vector<4x16xf32>
    %107 = vector.broadcast %67 : vector<4x1xf32> to vector<4x16xf32>
    %108 = arith.mulf %106, %107 : vector<4x16xf32>
    %c0_52 = arith.constant 0 : index
    %109 = arith.index_cast %64 : i32 to index
    %c0_53 = arith.constant 0 : index
    %c0_54 = arith.constant 0 : index
    %110 = vector.load %arg9[%c0_52, %109, %c0_53, %c0_54] : memref<1x12x4x16xf32, #tpu.memory_space<vmem>>, vector<1x1x4x16xf32>
    %111 = vector.shape_cast %110 : vector<1x1x4x16xf32> to vector<4x16xf32>
    %112 = vector.shape_cast %108 : vector<4x16xf32> to vector<1x1x4x16xf32>
    tpu.vector_store %arg9[%c0_52, %109, %c0_53, %c0_54], %112 {strides = array<i32>} : memref<1x12x4x16xf32, #tpu.memory_space<vmem>>, vector<1x1x4x16xf32>,
    %c2_i32 = arith.constant 2 : i32
    %113 = arith.muli %3, %c2_i32 : i32
    %114 = arith.addi %1, %113 : i32
    %115 = arith.index_cast %114 : i32 to index
    %c0_55 = arith.constant 0 : index
    %c0_56 = arith.constant 0 : index
    %116 = vector.load %arg4[%115, %c0_55, %c0_56] : memref<12x4x1xf32, #tpu.memory_space<vmem>>, vector<1x4x1xf32>
    %117 = vector.shape_cast %116 : vector<1x4x1xf32> to vector<4x1xf32>
    %118 = arith.truncf %106 : vector<4x16xf32> to vector<4x16xbf16>
    %c0_57 = arith.constant 0 : index
    %119 = arith.index_cast %114 : i32 to index
    %c0_58 = arith.constant 0 : index
    %c0_59 = arith.constant 0 : index
    %120 = vector.load %arg1[%c0_57, %119, %c0_58, %c0_59] : memref<1x12x4x16xf32, #tpu.memory_space<vmem>>, vector<1x1x4x16xf32>
    %121 = vector.shape_cast %120 : vector<1x1x4x16xf32> to vector<4x16xf32>
    %cst_60 = arith.constant dense<0.000000e+00> : vector<4x16xf32>
    %122 = tpu.matmul %118, %5, %cst_60 {dimension_numbers = #tpu.dot_dimension_numbers<[1], [0], [0], [1], [0, 0, 1, 1], [], []>} : vector<4x16xbf16>, vector<16x16xbf16>, vector<4x16xf32> -> vector<4x16xf32>
    %123 = arith.addf %121, %122 : vector<4x16xf32>
    %124 = arith.negf %123 : vector<4x16xf32>
    %125 = math.exp %124 : vector<4x16xf32>
    %cst_61 = arith.constant 1.000000e+00 : f32
    %126 = vector.broadcast %cst_61 : f32 to vector<4x16xf32>
    %127 = arith.addf %126, %125 : vector<4x16xf32>
    %128 = arith.divf %126, %127 : vector<4x16xf32>
    %c0_62 = arith.constant 0 : index
    %129 = arith.index_cast %114 : i32 to index
    %c0_63 = arith.constant 0 : index
    %c0_64 = arith.constant 0 : index
    %130 = vector.load %arg2[%c0_62, %129, %c0_63, %c0_64] : memref<1x12x4x16xf32, #tpu.memory_space<vmem>>, vector<1x1x4x16xf32>
    %131 = vector.shape_cast %130 : vector<1x1x4x16xf32> to vector<4x16xf32>
    %cst_65 = arith.constant dense<0.000000e+00> : vector<4x16xf32>
    %132 = tpu.matmul %118, %7, %cst_65 {dimension_numbers = #tpu.dot_dimension_numbers<[1], [0], [0], [1], [0, 0, 1, 1], [], []>} : vector<4x16xbf16>, vector<16x16xbf16>, vector<4x16xf32> -> vector<4x16xf32>
    %133 = arith.addf %131, %132 : vector<4x16xf32>
    %134 = arith.negf %133 : vector<4x16xf32>
    %135 = math.exp %134 : vector<4x16xf32>
    %cst_66 = arith.constant 1.000000e+00 : f32
    %136 = vector.broadcast %cst_66 : f32 to vector<4x16xf32>
    %137 = arith.addf %136, %135 : vector<4x16xf32>
    %138 = arith.divf %136, %137 : vector<4x16xf32>
    %c0_67 = arith.constant 0 : index
    %139 = arith.index_cast %114 : i32 to index
    %c0_68 = arith.constant 0 : index
    %c0_69 = arith.constant 0 : index
    %140 = vector.load %arg3[%c0_67, %139, %c0_68, %c0_69] : memref<1x12x4x16xf32, #tpu.memory_space<vmem>>, vector<1x1x4x16xf32>
    %141 = vector.shape_cast %140 : vector<1x1x4x16xf32> to vector<4x16xf32>
    %cst_70 = arith.constant dense<0.000000e+00> : vector<4x16xf32>
    %142 = tpu.matmul %118, %9, %cst_70 {dimension_numbers = #tpu.dot_dimension_numbers<[1], [0], [0], [1], [0, 0, 1, 1], [], []>} : vector<4x16xbf16>, vector<16x16xbf16>, vector<4x16xf32> -> vector<4x16xf32>
    %143 = vector.broadcast %11 : vector<1x16xf32> to vector<4x16xf32>
    %144 = arith.addf %142, %143 : vector<4x16xf32>
    %145 = arith.mulf %128, %144 : vector<4x16xf32>
    %146 = arith.addf %141, %145 : vector<4x16xf32>
    %147 = math.tanh %146 : vector<4x16xf32>
    %cst_71 = arith.constant 1.000000e+00 : f32
    %148 = vector.broadcast %cst_71 : f32 to vector<4x16xf32>
    %149 = arith.subf %148, %138 : vector<4x16xf32>
    %150 = arith.mulf %149, %147 : vector<4x16xf32>
    %151 = arith.mulf %138, %106 : vector<4x16xf32>
    %152 = arith.addf %150, %151 : vector<4x16xf32>
    %153 = arith.subf %152, %106 : vector<4x16xf32>
    %154 = vector.broadcast %117 : vector<4x1xf32> to vector<4x16xf32>
    %155 = arith.mulf %154, %153 : vector<4x16xf32>
    %156 = arith.addf %106, %155 : vector<4x16xf32>
    %157 = vector.broadcast %117 : vector<4x1xf32> to vector<4x16xf32>
    %158 = arith.mulf %156, %157 : vector<4x16xf32>
    %c0_72 = arith.constant 0 : index
    %159 = arith.index_cast %114 : i32 to index
    %c0_73 = arith.constant 0 : index
    %c0_74 = arith.constant 0 : index
    %160 = vector.load %arg9[%c0_72, %159, %c0_73, %c0_74] : memref<1x12x4x16xf32, #tpu.memory_space<vmem>>, vector<1x1x4x16xf32>
    %161 = vector.shape_cast %160 : vector<1x1x4x16xf32> to vector<4x16xf32>
    %162 = vector.shape_cast %158 : vector<4x16xf32> to vector<1x1x4x16xf32>
    tpu.vector_store %arg9[%c0_72, %159, %c0_73, %c0_74], %162 {strides = array<i32>} : memref<1x12x4x16xf32, #tpu.memory_space<vmem>>, vector<1x1x4x16xf32>,
    %c3_i32 = arith.constant 3 : i32
    %163 = arith.muli %3, %c3_i32 : i32
    %164 = arith.addi %1, %163 : i32
    %165 = arith.index_cast %164 : i32 to index
    %c0_75 = arith.constant 0 : index
    %c0_76 = arith.constant 0 : index
    %166 = vector.load %arg4[%165, %c0_75, %c0_76] : memref<12x4x1xf32, #tpu.memory_space<vmem>>, vector<1x4x1xf32>
    %167 = vector.shape_cast %166 : vector<1x4x1xf32> to vector<4x1xf32>
    %168 = arith.truncf %156 : vector<4x16xf32> to vector<4x16xbf16>
    %c0_77 = arith.constant 0 : index
    %169 = arith.index_cast %164 : i32 to index
    %c0_78 = arith.constant 0 : index
    %c0_79 = arith.constant 0 : index
    %170 = vector.load %arg1[%c0_77, %169, %c0_78, %c0_79] : memref<1x12x4x16xf32, #tpu.memory_space<vmem>>, vector<1x1x4x16xf32>
    %171 = vector.shape_cast %170 : vector<1x1x4x16xf32> to vector<4x16xf32>
    %cst_80 = arith.constant dense<0.000000e+00> : vector<4x16xf32>
    %172 = tpu.matmul %168, %5, %cst_80 {dimension_numbers = #tpu.dot_dimension_numbers<[1], [0], [0], [1], [0, 0, 1, 1], [], []>} : vector<4x16xbf16>, vector<16x16xbf16>, vector<4x16xf32> -> vector<4x16xf32>
    %173 = arith.addf %171, %172 : vector<4x16xf32>
    %174 = arith.negf %173 : vector<4x16xf32>
    %175 = math.exp %174 : vector<4x16xf32>
    %cst_81 = arith.constant 1.000000e+00 : f32
    %176 = vector.broadcast %cst_81 : f32 to vector<4x16xf32>
    %177 = arith.addf %176, %175 : vector<4x16xf32>
    %178 = arith.divf %176, %177 : vector<4x16xf32>
    %c0_82 = arith.constant 0 : index
    %179 = arith.index_cast %164 : i32 to index
    %c0_83 = arith.constant 0 : index
    %c0_84 = arith.constant 0 : index
    %180 = vector.load %arg2[%c0_82, %179, %c0_83, %c0_84] : memref<1x12x4x16xf32, #tpu.memory_space<vmem>>, vector<1x1x4x16xf32>
    %181 = vector.shape_cast %180 : vector<1x1x4x16xf32> to vector<4x16xf32>
    %cst_85 = arith.constant dense<0.000000e+00> : vector<4x16xf32>
    %182 = tpu.matmul %168, %7, %cst_85 {dimension_numbers = #tpu.dot_dimension_numbers<[1], [0], [0], [1], [0, 0, 1, 1], [], []>} : vector<4x16xbf16>, vector<16x16xbf16>, vector<4x16xf32> -> vector<4x16xf32>
    %183 = arith.addf %181, %182 : vector<4x16xf32>
    %184 = arith.negf %183 : vector<4x16xf32>
    %185 = math.exp %184 : vector<4x16xf32>
    %cst_86 = arith.constant 1.000000e+00 : f32
    %186 = vector.broadcast %cst_86 : f32 to vector<4x16xf32>
    %187 = arith.addf %186, %185 : vector<4x16xf32>
    %188 = arith.divf %186, %187 : vector<4x16xf32>
    %c0_87 = arith.constant 0 : index
    %189 = arith.index_cast %164 : i32 to index
    %c0_88 = arith.constant 0 : index
    %c0_89 = arith.constant 0 : index
    %190 = vector.load %arg3[%c0_87, %189, %c0_88, %c0_89] : memref<1x12x4x16xf32, #tpu.memory_space<vmem>>, vector<1x1x4x16xf32>
    %191 = vector.shape_cast %190 : vector<1x1x4x16xf32> to vector<4x16xf32>
    %cst_90 = arith.constant dense<0.000000e+00> : vector<4x16xf32>
    %192 = tpu.matmul %168, %9, %cst_90 {dimension_numbers = #tpu.dot_dimension_numbers<[1], [0], [0], [1], [0, 0, 1, 1], [], []>} : vector<4x16xbf16>, vector<16x16xbf16>, vector<4x16xf32> -> vector<4x16xf32>
    %193 = vector.broadcast %11 : vector<1x16xf32> to vector<4x16xf32>
    %194 = arith.addf %192, %193 : vector<4x16xf32>
    %195 = arith.mulf %178, %194 : vector<4x16xf32>
    %196 = arith.addf %191, %195 : vector<4x16xf32>
    %197 = math.tanh %196 : vector<4x16xf32>
    %cst_91 = arith.constant 1.000000e+00 : f32
    %198 = vector.broadcast %cst_91 : f32 to vector<4x16xf32>
    %199 = arith.subf %198, %188 : vector<4x16xf32>
    %200 = arith.mulf %199, %197 : vector<4x16xf32>
    %201 = arith.mulf %188, %156 : vector<4x16xf32>
    %202 = arith.addf %200, %201 : vector<4x16xf32>
    %203 = arith.subf %202, %156 : vector<4x16xf32>
    %204 = vector.broadcast %167 : vector<4x1xf32> to vector<4x16xf32>
    %205 = arith.mulf %204, %203 : vector<4x16xf32>
    %206 = arith.addf %156, %205 : vector<4x16xf32>
    %207 = vector.broadcast %167 : vector<4x1xf32> to vector<4x16xf32>
    %208 = arith.mulf %206, %207 : vector<4x16xf32>
    %c0_92 = arith.constant 0 : index
    %209 = arith.index_cast %164 : i32 to index
    %c0_93 = arith.constant 0 : index
    %c0_94 = arith.constant 0 : index
    %210 = vector.load %arg9[%c0_92, %209, %c0_93, %c0_94] : memref<1x12x4x16xf32, #tpu.memory_space<vmem>>, vector<1x1x4x16xf32>
    %211 = vector.shape_cast %210 : vector<1x1x4x16xf32> to vector<4x16xf32>
    %212 = vector.shape_cast %208 : vector<4x16xf32> to vector<1x1x4x16xf32>
    tpu.vector_store %arg9[%c0_92, %209, %c0_93, %c0_94], %212 {strides = array<i32>} : memref<1x12x4x16xf32, #tpu.memory_space<vmem>>, vector<1x1x4x16xf32>,
    %c4_i32 = arith.constant 4 : i32
    %213 = arith.muli %3, %c4_i32 : i32
    %214 = arith.addi %1, %213 : i32
    %215 = arith.index_cast %214 : i32 to index
    %c0_95 = arith.constant 0 : index
    %c0_96 = arith.constant 0 : index
    %216 = vector.load %arg4[%215, %c0_95, %c0_96] : memref<12x4x1xf32, #tpu.memory_space<vmem>>, vector<1x4x1xf32>
    %217 = vector.shape_cast %216 : vector<1x4x1xf32> to vector<4x1xf32>
    %218 = arith.truncf %206 : vector<4x16xf32> to vector<4x16xbf16>
    %c0_97 = arith.constant 0 : index
    %219 = arith.index_cast %214 : i32 to index
    %c0_98 = arith.constant 0 : index
    %c0_99 = arith.constant 0 : index
    %220 = vector.load %arg1[%c0_97, %219, %c0_98, %c0_99] : memref<1x12x4x16xf32, #tpu.memory_space<vmem>>, vector<1x1x4x16xf32>
    %221 = vector.shape_cast %220 : vector<1x1x4x16xf32> to vector<4x16xf32>
    %cst_100 = arith.constant dense<0.000000e+00> : vector<4x16xf32>
    %222 = tpu.matmul %218, %5, %cst_100 {dimension_numbers = #tpu.dot_dimension_numbers<[1], [0], [0], [1], [0, 0, 1, 1], [], []>} : vector<4x16xbf16>, vector<16x16xbf16>, vector<4x16xf32> -> vector<4x16xf32>
    %223 = arith.addf %221, %222 : vector<4x16xf32>
    %224 = arith.negf %223 : vector<4x16xf32>
    %225 = math.exp %224 : vector<4x16xf32>
    %cst_101 = arith.constant 1.000000e+00 : f32
    %226 = vector.broadcast %cst_101 : f32 to vector<4x16xf32>
    %227 = arith.addf %226, %225 : vector<4x16xf32>
    %228 = arith.divf %226, %227 : vector<4x16xf32>
    %c0_102 = arith.constant 0 : index
    %229 = arith.index_cast %214 : i32 to index
    %c0_103 = arith.constant 0 : index
    %c0_104 = arith.constant 0 : index
    %230 = vector.load %arg2[%c0_102, %229, %c0_103, %c0_104] : memref<1x12x4x16xf32, #tpu.memory_space<vmem>>, vector<1x1x4x16xf32>
    %231 = vector.shape_cast %230 : vector<1x1x4x16xf32> to vector<4x16xf32>
    %cst_105 = arith.constant dense<0.000000e+00> : vector<4x16xf32>
    %232 = tpu.matmul %218, %7, %cst_105 {dimension_numbers = #tpu.dot_dimension_numbers<[1], [0], [0], [1], [0, 0, 1, 1], [], []>} : vector<4x16xbf16>, vector<16x16xbf16>, vector<4x16xf32> -> vector<4x16xf32>
    %233 = arith.addf %231, %232 : vector<4x16xf32>
    %234 = arith.negf %233 : vector<4x16xf32>
    %235 = math.exp %234 : vector<4x16xf32>
    %cst_106 = arith.constant 1.000000e+00 : f32
    %236 = vector.broadcast %cst_106 : f32 to vector<4x16xf32>
    %237 = arith.addf %236, %235 : vector<4x16xf32>
    %238 = arith.divf %236, %237 : vector<4x16xf32>
    %c0_107 = arith.constant 0 : index
    %239 = arith.index_cast %214 : i32 to index
    %c0_108 = arith.constant 0 : index
    %c0_109 = arith.constant 0 : index
    %240 = vector.load %arg3[%c0_107, %239, %c0_108, %c0_109] : memref<1x12x4x16xf32, #tpu.memory_space<vmem>>, vector<1x1x4x16xf32>
    %241 = vector.shape_cast %240 : vector<1x1x4x16xf32> to vector<4x16xf32>
    %cst_110 = arith.constant dense<0.000000e+00> : vector<4x16xf32>
    %242 = tpu.matmul %218, %9, %cst_110 {dimension_numbers = #tpu.dot_dimension_numbers<[1], [0], [0], [1], [0, 0, 1, 1], [], []>} : vector<4x16xbf16>, vector<16x16xbf16>, vector<4x16xf32> -> vector<4x16xf32>
    %243 = vector.broadcast %11 : vector<1x16xf32> to vector<4x16xf32>
    %244 = arith.addf %242, %243 : vector<4x16xf32>
    %245 = arith.mulf %228, %244 : vector<4x16xf32>
    %246 = arith.addf %241, %245 : vector<4x16xf32>
    %247 = math.tanh %246 : vector<4x16xf32>
    %cst_111 = arith.constant 1.000000e+00 : f32
    %248 = vector.broadcast %cst_111 : f32 to vector<4x16xf32>
    %249 = arith.subf %248, %238 : vector<4x16xf32>
    %250 = arith.mulf %249, %247 : vector<4x16xf32>
    %251 = arith.mulf %238, %206 : vector<4x16xf32>
    %252 = arith.addf %250, %251 : vector<4x16xf32>
    %253 = arith.subf %252, %206 : vector<4x16xf32>
    %254 = vector.broadcast %217 : vector<4x1xf32> to vector<4x16xf32>
    %255 = arith.mulf %254, %253 : vector<4x16xf32>
    %256 = arith.addf %206, %255 : vector<4x16xf32>
    %257 = vector.broadcast %217 : vector<4x1xf32> to vector<4x16xf32>
    %258 = arith.mulf %256, %257 : vector<4x16xf32>
    %c0_112 = arith.constant 0 : index
    %259 = arith.index_cast %214 : i32 to index
    %c0_113 = arith.constant 0 : index
    %c0_114 = arith.constant 0 : index
    %260 = vector.load %arg9[%c0_112, %259, %c0_113, %c0_114] : memref<1x12x4x16xf32, #tpu.memory_space<vmem>>, vector<1x1x4x16xf32>
    %261 = vector.shape_cast %260 : vector<1x1x4x16xf32> to vector<4x16xf32>
    %262 = vector.shape_cast %258 : vector<4x16xf32> to vector<1x1x4x16xf32>
    tpu.vector_store %arg9[%c0_112, %259, %c0_113, %c0_114], %262 {strides = array<i32>} : memref<1x12x4x16xf32, #tpu.memory_space<vmem>>, vector<1x1x4x16xf32>,
    %c5_i32 = arith.constant 5 : i32
    %263 = arith.muli %3, %c5_i32 : i32
    %264 = arith.addi %1, %263 : i32
    %265 = arith.index_cast %264 : i32 to index
    %c0_115 = arith.constant 0 : index
    %c0_116 = arith.constant 0 : index
    %266 = vector.load %arg4[%265, %c0_115, %c0_116] : memref<12x4x1xf32, #tpu.memory_space<vmem>>, vector<1x4x1xf32>
    %267 = vector.shape_cast %266 : vector<1x4x1xf32> to vector<4x1xf32>
    %268 = arith.truncf %256 : vector<4x16xf32> to vector<4x16xbf16>
    %c0_117 = arith.constant 0 : index
    %269 = arith.index_cast %264 : i32 to index
    %c0_118 = arith.constant 0 : index
    %c0_119 = arith.constant 0 : index
    %270 = vector.load %arg1[%c0_117, %269, %c0_118, %c0_119] : memref<1x12x4x16xf32, #tpu.memory_space<vmem>>, vector<1x1x4x16xf32>
    %271 = vector.shape_cast %270 : vector<1x1x4x16xf32> to vector<4x16xf32>
    %cst_120 = arith.constant dense<0.000000e+00> : vector<4x16xf32>
    %272 = tpu.matmul %268, %5, %cst_120 {dimension_numbers = #tpu.dot_dimension_numbers<[1], [0], [0], [1], [0, 0, 1, 1], [], []>} : vector<4x16xbf16>, vector<16x16xbf16>, vector<4x16xf32> -> vector<4x16xf32>
    %273 = arith.addf %271, %272 : vector<4x16xf32>
    %274 = arith.negf %273 : vector<4x16xf32>
    %275 = math.exp %274 : vector<4x16xf32>
    %cst_121 = arith.constant 1.000000e+00 : f32
    %276 = vector.broadcast %cst_121 : f32 to vector<4x16xf32>
    %277 = arith.addf %276, %275 : vector<4x16xf32>
    %278 = arith.divf %276, %277 : vector<4x16xf32>
    %c0_122 = arith.constant 0 : index
    %279 = arith.index_cast %264 : i32 to index
    %c0_123 = arith.constant 0 : index
    %c0_124 = arith.constant 0 : index
    %280 = vector.load %arg2[%c0_122, %279, %c0_123, %c0_124] : memref<1x12x4x16xf32, #tpu.memory_space<vmem>>, vector<1x1x4x16xf32>
    %281 = vector.shape_cast %280 : vector<1x1x4x16xf32> to vector<4x16xf32>
    %cst_125 = arith.constant dense<0.000000e+00> : vector<4x16xf32>
    %282 = tpu.matmul %268, %7, %cst_125 {dimension_numbers = #tpu.dot_dimension_numbers<[1], [0], [0], [1], [0, 0, 1, 1], [], []>} : vector<4x16xbf16>, vector<16x16xbf16>, vector<4x16xf32> -> vector<4x16xf32>
    %283 = arith.addf %281, %282 : vector<4x16xf32>
    %284 = arith.negf %283 : vector<4x16xf32>
    %285 = math.exp %284 : vector<4x16xf32>
    %cst_126 = arith.constant 1.000000e+00 : f32
    %286 = vector.broadcast %cst_126 : f32 to vector<4x16xf32>
    %287 = arith.addf %286, %285 : vector<4x16xf32>
    %288 = arith.divf %286, %287 : vector<4x16xf32>
    %c0_127 = arith.constant 0 : index
    %289 = arith.index_cast %264 : i32 to index
    %c0_128 = arith.constant 0 : index
    %c0_129 = arith.constant 0 : index
    %290 = vector.load %arg3[%c0_127, %289, %c0_128, %c0_129] : memref<1x12x4x16xf32, #tpu.memory_space<vmem>>, vector<1x1x4x16xf32>
    %291 = vector.shape_cast %290 : vector<1x1x4x16xf32> to vector<4x16xf32>
    %cst_130 = arith.constant dense<0.000000e+00> : vector<4x16xf32>
    %292 = tpu.matmul %268, %9, %cst_130 {dimension_numbers = #tpu.dot_dimension_numbers<[1], [0], [0], [1], [0, 0, 1, 1], [], []>} : vector<4x16xbf16>, vector<16x16xbf16>, vector<4x16xf32> -> vector<4x16xf32>
    %293 = vector.broadcast %11 : vector<1x16xf32> to vector<4x16xf32>
    %294 = arith.addf %292, %293 : vector<4x16xf32>
    %295 = arith.mulf %278, %294 : vector<4x16xf32>
    %296 = arith.addf %291, %295 : vector<4x16xf32>
    %297 = math.tanh %296 : vector<4x16xf32>
    %cst_131 = arith.constant 1.000000e+00 : f32
    %298 = vector.broadcast %cst_131 : f32 to vector<4x16xf32>
    %299 = arith.subf %298, %288 : vector<4x16xf32>
    %300 = arith.mulf %299, %297 : vector<4x16xf32>
    %301 = arith.mulf %288, %256 : vector<4x16xf32>
    %302 = arith.addf %300, %301 : vector<4x16xf32>
    %303 = arith.subf %302, %256 : vector<4x16xf32>
    %304 = vector.broadcast %267 : vector<4x1xf32> to vector<4x16xf32>
    %305 = arith.mulf %304, %303 : vector<4x16xf32>
    %306 = arith.addf %256, %305 : vector<4x16xf32>
    %307 = vector.broadcast %267 : vector<4x1xf32> to vector<4x16xf32>
    %308 = arith.mulf %306, %307 : vector<4x16xf32>
    %c0_132 = arith.constant 0 : index
    %309 = arith.index_cast %264 : i32 to index
    %c0_133 = arith.constant 0 : index
    %c0_134 = arith.constant 0 : index
    %310 = vector.load %arg9[%c0_132, %309, %c0_133, %c0_134] : memref<1x12x4x16xf32, #tpu.memory_space<vmem>>, vector<1x1x4x16xf32>
    %311 = vector.shape_cast %310 : vector<1x1x4x16xf32> to vector<4x16xf32>
    %312 = vector.shape_cast %308 : vector<4x16xf32> to vector<1x1x4x16xf32>
    tpu.vector_store %arg9[%c0_132, %309, %c0_133, %c0_134], %312 {strides = array<i32>} : memref<1x12x4x16xf32, #tpu.memory_space<vmem>>, vector<1x1x4x16xf32>,
    %c6_i32 = arith.constant 6 : i32
    %313 = arith.muli %3, %c6_i32 : i32
    %314 = arith.addi %1, %313 : i32
    %315 = arith.index_cast %314 : i32 to index
    %c0_135 = arith.constant 0 : index
    %c0_136 = arith.constant 0 : index
    %316 = vector.load %arg4[%315, %c0_135, %c0_136] : memref<12x4x1xf32, #tpu.memory_space<vmem>>, vector<1x4x1xf32>
    %317 = vector.shape_cast %316 : vector<1x4x1xf32> to vector<4x1xf32>
    %318 = arith.truncf %306 : vector<4x16xf32> to vector<4x16xbf16>
    %c0_137 = arith.constant 0 : index
    %319 = arith.index_cast %314 : i32 to index
    %c0_138 = arith.constant 0 : index
    %c0_139 = arith.constant 0 : index
    %320 = vector.load %arg1[%c0_137, %319, %c0_138, %c0_139] : memref<1x12x4x16xf32, #tpu.memory_space<vmem>>, vector<1x1x4x16xf32>
    %321 = vector.shape_cast %320 : vector<1x1x4x16xf32> to vector<4x16xf32>
    %cst_140 = arith.constant dense<0.000000e+00> : vector<4x16xf32>
    %322 = tpu.matmul %318, %5, %cst_140 {dimension_numbers = #tpu.dot_dimension_numbers<[1], [0], [0], [1], [0, 0, 1, 1], [], []>} : vector<4x16xbf16>, vector<16x16xbf16>, vector<4x16xf32> -> vector<4x16xf32>
    %323 = arith.addf %321, %322 : vector<4x16xf32>
    %324 = arith.negf %323 : vector<4x16xf32>
    %325 = math.exp %324 : vector<4x16xf32>
    %cst_141 = arith.constant 1.000000e+00 : f32
    %326 = vector.broadcast %cst_141 : f32 to vector<4x16xf32>
    %327 = arith.addf %326, %325 : vector<4x16xf32>
    %328 = arith.divf %326, %327 : vector<4x16xf32>
    %c0_142 = arith.constant 0 : index
    %329 = arith.index_cast %314 : i32 to index
    %c0_143 = arith.constant 0 : index
    %c0_144 = arith.constant 0 : index
    %330 = vector.load %arg2[%c0_142, %329, %c0_143, %c0_144] : memref<1x12x4x16xf32, #tpu.memory_space<vmem>>, vector<1x1x4x16xf32>
    %331 = vector.shape_cast %330 : vector<1x1x4x16xf32> to vector<4x16xf32>
    %cst_145 = arith.constant dense<0.000000e+00> : vector<4x16xf32>
    %332 = tpu.matmul %318, %7, %cst_145 {dimension_numbers = #tpu.dot_dimension_numbers<[1], [0], [0], [1], [0, 0, 1, 1], [], []>} : vector<4x16xbf16>, vector<16x16xbf16>, vector<4x16xf32> -> vector<4x16xf32>
    %333 = arith.addf %331, %332 : vector<4x16xf32>
    %334 = arith.negf %333 : vector<4x16xf32>
    %335 = math.exp %334 : vector<4x16xf32>
    %cst_146 = arith.constant 1.000000e+00 : f32
    %336 = vector.broadcast %cst_146 : f32 to vector<4x16xf32>
    %337 = arith.addf %336, %335 : vector<4x16xf32>
    %338 = arith.divf %336, %337 : vector<4x16xf32>
    %c0_147 = arith.constant 0 : index
    %339 = arith.index_cast %314 : i32 to index
    %c0_148 = arith.constant 0 : index
    %c0_149 = arith.constant 0 : index
    %340 = vector.load %arg3[%c0_147, %339, %c0_148, %c0_149] : memref<1x12x4x16xf32, #tpu.memory_space<vmem>>, vector<1x1x4x16xf32>
    %341 = vector.shape_cast %340 : vector<1x1x4x16xf32> to vector<4x16xf32>
    %cst_150 = arith.constant dense<0.000000e+00> : vector<4x16xf32>
    %342 = tpu.matmul %318, %9, %cst_150 {dimension_numbers = #tpu.dot_dimension_numbers<[1], [0], [0], [1], [0, 0, 1, 1], [], []>} : vector<4x16xbf16>, vector<16x16xbf16>, vector<4x16xf32> -> vector<4x16xf32>
    %343 = vector.broadcast %11 : vector<1x16xf32> to vector<4x16xf32>
    %344 = arith.addf %342, %343 : vector<4x16xf32>
    %345 = arith.mulf %328, %344 : vector<4x16xf32>
    %346 = arith.addf %341, %345 : vector<4x16xf32>
    %347 = math.tanh %346 : vector<4x16xf32>
    %cst_151 = arith.constant 1.000000e+00 : f32
    %348 = vector.broadcast %cst_151 : f32 to vector<4x16xf32>
    %349 = arith.subf %348, %338 : vector<4x16xf32>
    %350 = arith.mulf %349, %347 : vector<4x16xf32>
    %351 = arith.mulf %338, %306 : vector<4x16xf32>
    %352 = arith.addf %350, %351 : vector<4x16xf32>
    %353 = arith.subf %352, %306 : vector<4x16xf32>
    %354 = vector.broadcast %317 : vector<4x1xf32> to vector<4x16xf32>
    %355 = arith.mulf %354, %353 : vector<4x16xf32>
    %356 = arith.addf %306, %355 : vector<4x16xf32>
    %357 = vector.broadcast %317 : vector<4x1xf32> to vector<4x16xf32>
    %358 = arith.mulf %356, %357 : vector<4x16xf32>
    %c0_152 = arith.constant 0 : index
    %359 = arith.index_cast %314 : i32 to index
    %c0_153 = arith.constant 0 : index
    %c0_154 = arith.constant 0 : index
    %360 = vector.load %arg9[%c0_152, %359, %c0_153, %c0_154] : memref<1x12x4x16xf32, #tpu.memory_space<vmem>>, vector<1x1x4x16xf32>
    %361 = vector.shape_cast %360 : vector<1x1x4x16xf32> to vector<4x16xf32>
    %362 = vector.shape_cast %358 : vector<4x16xf32> to vector<1x1x4x16xf32>
    tpu.vector_store %arg9[%c0_152, %359, %c0_153, %c0_154], %362 {strides = array<i32>} : memref<1x12x4x16xf32, #tpu.memory_space<vmem>>, vector<1x1x4x16xf32>,
    %c7_i32 = arith.constant 7 : i32
    %363 = arith.muli %3, %c7_i32 : i32
    %364 = arith.addi %1, %363 : i32
    %365 = arith.index_cast %364 : i32 to index
    %c0_155 = arith.constant 0 : index
    %c0_156 = arith.constant 0 : index
    %366 = vector.load %arg4[%365, %c0_155, %c0_156] : memref<12x4x1xf32, #tpu.memory_space<vmem>>, vector<1x4x1xf32>
    %367 = vector.shape_cast %366 : vector<1x4x1xf32> to vector<4x1xf32>
    %368 = arith.truncf %356 : vector<4x16xf32> to vector<4x16xbf16>
    %c0_157 = arith.constant 0 : index
    %369 = arith.index_cast %364 : i32 to index
    %c0_158 = arith.constant 0 : index
    %c0_159 = arith.constant 0 : index
    %370 = vector.load %arg1[%c0_157, %369, %c0_158, %c0_159] : memref<1x12x4x16xf32, #tpu.memory_space<vmem>>, vector<1x1x4x16xf32>
    %371 = vector.shape_cast %370 : vector<1x1x4x16xf32> to vector<4x16xf32>
    %cst_160 = arith.constant dense<0.000000e+00> : vector<4x16xf32>
    %372 = tpu.matmul %368, %5, %cst_160 {dimension_numbers = #tpu.dot_dimension_numbers<[1], [0], [0], [1], [0, 0, 1, 1], [], []>} : vector<4x16xbf16>, vector<16x16xbf16>, vector<4x16xf32> -> vector<4x16xf32>
    %373 = arith.addf %371, %372 : vector<4x16xf32>
    %374 = arith.negf %373 : vector<4x16xf32>
    %375 = math.exp %374 : vector<4x16xf32>
    %cst_161 = arith.constant 1.000000e+00 : f32
    %376 = vector.broadcast %cst_161 : f32 to vector<4x16xf32>
    %377 = arith.addf %376, %375 : vector<4x16xf32>
    %378 = arith.divf %376, %377 : vector<4x16xf32>
    %c0_162 = arith.constant 0 : index
    %379 = arith.index_cast %364 : i32 to index
    %c0_163 = arith.constant 0 : index
    %c0_164 = arith.constant 0 : index
    %380 = vector.load %arg2[%c0_162, %379, %c0_163, %c0_164] : memref<1x12x4x16xf32, #tpu.memory_space<vmem>>, vector<1x1x4x16xf32>
    %381 = vector.shape_cast %380 : vector<1x1x4x16xf32> to vector<4x16xf32>
    %cst_165 = arith.constant dense<0.000000e+00> : vector<4x16xf32>
    %382 = tpu.matmul %368, %7, %cst_165 {dimension_numbers = #tpu.dot_dimension_numbers<[1], [0], [0], [1], [0, 0, 1, 1], [], []>} : vector<4x16xbf16>, vector<16x16xbf16>, vector<4x16xf32> -> vector<4x16xf32>
    %383 = arith.addf %381, %382 : vector<4x16xf32>
    %384 = arith.negf %383 : vector<4x16xf32>
    %385 = math.exp %384 : vector<4x16xf32>
    %cst_166 = arith.constant 1.000000e+00 : f32
    %386 = vector.broadcast %cst_166 : f32 to vector<4x16xf32>
    %387 = arith.addf %386, %385 : vector<4x16xf32>
    %388 = arith.divf %386, %387 : vector<4x16xf32>
    %c0_167 = arith.constant 0 : index
    %389 = arith.index_cast %364 : i32 to index
    %c0_168 = arith.constant 0 : index
    %c0_169 = arith.constant 0 : index
    %390 = vector.load %arg3[%c0_167, %389, %c0_168, %c0_169] : memref<1x12x4x16xf32, #tpu.memory_space<vmem>>, vector<1x1x4x16xf32>
    %391 = vector.shape_cast %390 : vector<1x1x4x16xf32> to vector<4x16xf32>
    %cst_170 = arith.constant dense<0.000000e+00> : vector<4x16xf32>
    %392 = tpu.matmul %368, %9, %cst_170 {dimension_numbers = #tpu.dot_dimension_numbers<[1], [0], [0], [1], [0, 0, 1, 1], [], []>} : vector<4x16xbf16>, vector<16x16xbf16>, vector<4x16xf32> -> vector<4x16xf32>
    %393 = vector.broadcast %11 : vector<1x16xf32> to vector<4x16xf32>
    %394 = arith.addf %392, %393 : vector<4x16xf32>
    %395 = arith.mulf %378, %394 : vector<4x16xf32>
    %396 = arith.addf %391, %395 : vector<4x16xf32>
    %397 = math.tanh %396 : vector<4x16xf32>
    %cst_171 = arith.constant 1.000000e+00 : f32
    %398 = vector.broadcast %cst_171 : f32 to vector<4x16xf32>
    %399 = arith.subf %398, %388 : vector<4x16xf32>
    %400 = arith.mulf %399, %397 : vector<4x16xf32>
    %401 = arith.mulf %388, %356 : vector<4x16xf32>
    %402 = arith.addf %400, %401 : vector<4x16xf32>
    %403 = arith.subf %402, %356 : vector<4x16xf32>
    %404 = vector.broadcast %367 : vector<4x1xf32> to vector<4x16xf32>
    %405 = arith.mulf %404, %403 : vector<4x16xf32>
    %406 = arith.addf %356, %405 : vector<4x16xf32>
    %407 = vector.broadcast %367 : vector<4x1xf32> to vector<4x16xf32>
    %408 = arith.mulf %406, %407 : vector<4x16xf32>
    %c0_172 = arith.constant 0 : index
    %409 = arith.index_cast %364 : i32 to index
    %c0_173 = arith.constant 0 : index
    %c0_174 = arith.constant 0 : index
    %410 = vector.load %arg9[%c0_172, %409, %c0_173, %c0_174] : memref<1x12x4x16xf32, #tpu.memory_space<vmem>>, vector<1x1x4x16xf32>
    %411 = vector.shape_cast %410 : vector<1x1x4x16xf32> to vector<4x16xf32>
    %412 = vector.shape_cast %408 : vector<4x16xf32> to vector<1x1x4x16xf32>
    tpu.vector_store %arg9[%c0_172, %409, %c0_173, %c0_174], %412 {strides = array<i32>} : memref<1x12x4x16xf32, #tpu.memory_space<vmem>>, vector<1x1x4x16xf32>,
    %c8_i32 = arith.constant 8 : i32
    %413 = arith.muli %3, %c8_i32 : i32
    %414 = arith.addi %1, %413 : i32
    %415 = arith.index_cast %414 : i32 to index
    %c0_175 = arith.constant 0 : index
    %c0_176 = arith.constant 0 : index
    %416 = vector.load %arg4[%415, %c0_175, %c0_176] : memref<12x4x1xf32, #tpu.memory_space<vmem>>, vector<1x4x1xf32>
    %417 = vector.shape_cast %416 : vector<1x4x1xf32> to vector<4x1xf32>
    %418 = arith.truncf %406 : vector<4x16xf32> to vector<4x16xbf16>
    %c0_177 = arith.constant 0 : index
    %419 = arith.index_cast %414 : i32 to index
    %c0_178 = arith.constant 0 : index
    %c0_179 = arith.constant 0 : index
    %420 = vector.load %arg1[%c0_177, %419, %c0_178, %c0_179] : memref<1x12x4x16xf32, #tpu.memory_space<vmem>>, vector<1x1x4x16xf32>
    %421 = vector.shape_cast %420 : vector<1x1x4x16xf32> to vector<4x16xf32>
    %cst_180 = arith.constant dense<0.000000e+00> : vector<4x16xf32>
    %422 = tpu.matmul %418, %5, %cst_180 {dimension_numbers = #tpu.dot_dimension_numbers<[1], [0], [0], [1], [0, 0, 1, 1], [], []>} : vector<4x16xbf16>, vector<16x16xbf16>, vector<4x16xf32> -> vector<4x16xf32>
    %423 = arith.addf %421, %422 : vector<4x16xf32>
    %424 = arith.negf %423 : vector<4x16xf32>
    %425 = math.exp %424 : vector<4x16xf32>
    %cst_181 = arith.constant 1.000000e+00 : f32
    %426 = vector.broadcast %cst_181 : f32 to vector<4x16xf32>
    %427 = arith.addf %426, %425 : vector<4x16xf32>
    %428 = arith.divf %426, %427 : vector<4x16xf32>
    %c0_182 = arith.constant 0 : index
    %429 = arith.index_cast %414 : i32 to index
    %c0_183 = arith.constant 0 : index
    %c0_184 = arith.constant 0 : index
    %430 = vector.load %arg2[%c0_182, %429, %c0_183, %c0_184] : memref<1x12x4x16xf32, #tpu.memory_space<vmem>>, vector<1x1x4x16xf32>
    %431 = vector.shape_cast %430 : vector<1x1x4x16xf32> to vector<4x16xf32>
    %cst_185 = arith.constant dense<0.000000e+00> : vector<4x16xf32>
    %432 = tpu.matmul %418, %7, %cst_185 {dimension_numbers = #tpu.dot_dimension_numbers<[1], [0], [0], [1], [0, 0, 1, 1], [], []>} : vector<4x16xbf16>, vector<16x16xbf16>, vector<4x16xf32> -> vector<4x16xf32>
    %433 = arith.addf %431, %432 : vector<4x16xf32>
    %434 = arith.negf %433 : vector<4x16xf32>
    %435 = math.exp %434 : vector<4x16xf32>
    %cst_186 = arith.constant 1.000000e+00 : f32
    %436 = vector.broadcast %cst_186 : f32 to vector<4x16xf32>
    %437 = arith.addf %436, %435 : vector<4x16xf32>
    %438 = arith.divf %436, %437 : vector<4x16xf32>
    %c0_187 = arith.constant 0 : index
    %439 = arith.index_cast %414 : i32 to index
    %c0_188 = arith.constant 0 : index
    %c0_189 = arith.constant 0 : index
    %440 = vector.load %arg3[%c0_187, %439, %c0_188, %c0_189] : memref<1x12x4x16xf32, #tpu.memory_space<vmem>>, vector<1x1x4x16xf32>
    %441 = vector.shape_cast %440 : vector<1x1x4x16xf32> to vector<4x16xf32>
    %cst_190 = arith.constant dense<0.000000e+00> : vector<4x16xf32>
    %442 = tpu.matmul %418, %9, %cst_190 {dimension_numbers = #tpu.dot_dimension_numbers<[1], [0], [0], [1], [0, 0, 1, 1], [], []>} : vector<4x16xbf16>, vector<16x16xbf16>, vector<4x16xf32> -> vector<4x16xf32>
    %443 = vector.broadcast %11 : vector<1x16xf32> to vector<4x16xf32>
    %444 = arith.addf %442, %443 : vector<4x16xf32>
    %445 = arith.mulf %428, %444 : vector<4x16xf32>
    %446 = arith.addf %441, %445 : vector<4x16xf32>
    %447 = math.tanh %446 : vector<4x16xf32>
    %cst_191 = arith.constant 1.000000e+00 : f32
    %448 = vector.broadcast %cst_191 : f32 to vector<4x16xf32>
    %449 = arith.subf %448, %438 : vector<4x16xf32>
    %450 = arith.mulf %449, %447 : vector<4x16xf32>
    %451 = arith.mulf %438, %406 : vector<4x16xf32>
    %452 = arith.addf %450, %451 : vector<4x16xf32>
    %453 = arith.subf %452, %406 : vector<4x16xf32>
    %454 = vector.broadcast %417 : vector<4x1xf32> to vector<4x16xf32>
    %455 = arith.mulf %454, %453 : vector<4x16xf32>
    %456 = arith.addf %406, %455 : vector<4x16xf32>
    %457 = vector.broadcast %417 : vector<4x1xf32> to vector<4x16xf32>
    %458 = arith.mulf %456, %457 : vector<4x16xf32>
    %c0_192 = arith.constant 0 : index
    %459 = arith.index_cast %414 : i32 to index
    %c0_193 = arith.constant 0 : index
    %c0_194 = arith.constant 0 : index
    %460 = vector.load %arg9[%c0_192, %459, %c0_193, %c0_194] : memref<1x12x4x16xf32, #tpu.memory_space<vmem>>, vector<1x1x4x16xf32>
    %461 = vector.shape_cast %460 : vector<1x1x4x16xf32> to vector<4x16xf32>
    %462 = vector.shape_cast %458 : vector<4x16xf32> to vector<1x1x4x16xf32>
    tpu.vector_store %arg9[%c0_192, %459, %c0_193, %c0_194], %462 {strides = array<i32>} : memref<1x12x4x16xf32, #tpu.memory_space<vmem>>, vector<1x1x4x16xf32>,
    %c9_i32 = arith.constant 9 : i32
    %463 = arith.muli %3, %c9_i32 : i32
    %464 = arith.addi %1, %463 : i32
    %465 = arith.index_cast %464 : i32 to index
    %c0_195 = arith.constant 0 : index
    %c0_196 = arith.constant 0 : index
    %466 = vector.load %arg4[%465, %c0_195, %c0_196] : memref<12x4x1xf32, #tpu.memory_space<vmem>>, vector<1x4x1xf32>
    %467 = vector.shape_cast %466 : vector<1x4x1xf32> to vector<4x1xf32>
    %468 = arith.truncf %456 : vector<4x16xf32> to vector<4x16xbf16>
    %c0_197 = arith.constant 0 : index
    %469 = arith.index_cast %464 : i32 to index
    %c0_198 = arith.constant 0 : index
    %c0_199 = arith.constant 0 : index
    %470 = vector.load %arg1[%c0_197, %469, %c0_198, %c0_199] : memref<1x12x4x16xf32, #tpu.memory_space<vmem>>, vector<1x1x4x16xf32>
    %471 = vector.shape_cast %470 : vector<1x1x4x16xf32> to vector<4x16xf32>
    %cst_200 = arith.constant dense<0.000000e+00> : vector<4x16xf32>
    %472 = tpu.matmul %468, %5, %cst_200 {dimension_numbers = #tpu.dot_dimension_numbers<[1], [0], [0], [1], [0, 0, 1, 1], [], []>} : vector<4x16xbf16>, vector<16x16xbf16>, vector<4x16xf32> -> vector<4x16xf32>
    %473 = arith.addf %471, %472 : vector<4x16xf32>
    %474 = arith.negf %473 : vector<4x16xf32>
    %475 = math.exp %474 : vector<4x16xf32>
    %cst_201 = arith.constant 1.000000e+00 : f32
    %476 = vector.broadcast %cst_201 : f32 to vector<4x16xf32>
    %477 = arith.addf %476, %475 : vector<4x16xf32>
    %478 = arith.divf %476, %477 : vector<4x16xf32>
    %c0_202 = arith.constant 0 : index
    %479 = arith.index_cast %464 : i32 to index
    %c0_203 = arith.constant 0 : index
    %c0_204 = arith.constant 0 : index
    %480 = vector.load %arg2[%c0_202, %479, %c0_203, %c0_204] : memref<1x12x4x16xf32, #tpu.memory_space<vmem>>, vector<1x1x4x16xf32>
    %481 = vector.shape_cast %480 : vector<1x1x4x16xf32> to vector<4x16xf32>
    %cst_205 = arith.constant dense<0.000000e+00> : vector<4x16xf32>
    %482 = tpu.matmul %468, %7, %cst_205 {dimension_numbers = #tpu.dot_dimension_numbers<[1], [0], [0], [1], [0, 0, 1, 1], [], []>} : vector<4x16xbf16>, vector<16x16xbf16>, vector<4x16xf32> -> vector<4x16xf32>
    %483 = arith.addf %481, %482 : vector<4x16xf32>
    %484 = arith.negf %483 : vector<4x16xf32>
    %485 = math.exp %484 : vector<4x16xf32>
    %cst_206 = arith.constant 1.000000e+00 : f32
    %486 = vector.broadcast %cst_206 : f32 to vector<4x16xf32>
    %487 = arith.addf %486, %485 : vector<4x16xf32>
    %488 = arith.divf %486, %487 : vector<4x16xf32>
    %c0_207 = arith.constant 0 : index
    %489 = arith.index_cast %464 : i32 to index
    %c0_208 = arith.constant 0 : index
    %c0_209 = arith.constant 0 : index
    %490 = vector.load %arg3[%c0_207, %489, %c0_208, %c0_209] : memref<1x12x4x16xf32, #tpu.memory_space<vmem>>, vector<1x1x4x16xf32>
    %491 = vector.shape_cast %490 : vector<1x1x4x16xf32> to vector<4x16xf32>
    %cst_210 = arith.constant dense<0.000000e+00> : vector<4x16xf32>
    %492 = tpu.matmul %468, %9, %cst_210 {dimension_numbers = #tpu.dot_dimension_numbers<[1], [0], [0], [1], [0, 0, 1, 1], [], []>} : vector<4x16xbf16>, vector<16x16xbf16>, vector<4x16xf32> -> vector<4x16xf32>
    %493 = vector.broadcast %11 : vector<1x16xf32> to vector<4x16xf32>
    %494 = arith.addf %492, %493 : vector<4x16xf32>
    %495 = arith.mulf %478, %494 : vector<4x16xf32>
    %496 = arith.addf %491, %495 : vector<4x16xf32>
    %497 = math.tanh %496 : vector<4x16xf32>
    %cst_211 = arith.constant 1.000000e+00 : f32
    %498 = vector.broadcast %cst_211 : f32 to vector<4x16xf32>
    %499 = arith.subf %498, %488 : vector<4x16xf32>
    %500 = arith.mulf %499, %497 : vector<4x16xf32>
    %501 = arith.mulf %488, %456 : vector<4x16xf32>
    %502 = arith.addf %500, %501 : vector<4x16xf32>
    %503 = arith.subf %502, %456 : vector<4x16xf32>
    %504 = vector.broadcast %467 : vector<4x1xf32> to vector<4x16xf32>
    %505 = arith.mulf %504, %503 : vector<4x16xf32>
    %506 = arith.addf %456, %505 : vector<4x16xf32>
    %507 = vector.broadcast %467 : vector<4x1xf32> to vector<4x16xf32>
    %508 = arith.mulf %506, %507 : vector<4x16xf32>
    %c0_212 = arith.constant 0 : index
    %509 = arith.index_cast %464 : i32 to index
    %c0_213 = arith.constant 0 : index
    %c0_214 = arith.constant 0 : index
    %510 = vector.load %arg9[%c0_212, %509, %c0_213, %c0_214] : memref<1x12x4x16xf32, #tpu.memory_space<vmem>>, vector<1x1x4x16xf32>
    %511 = vector.shape_cast %510 : vector<1x1x4x16xf32> to vector<4x16xf32>
    %512 = vector.shape_cast %508 : vector<4x16xf32> to vector<1x1x4x16xf32>
    tpu.vector_store %arg9[%c0_212, %509, %c0_213, %c0_214], %512 {strides = array<i32>} : memref<1x12x4x16xf32, #tpu.memory_space<vmem>>, vector<1x1x4x16xf32>,
    %c10_i32 = arith.constant 10 : i32
    %513 = arith.muli %3, %c10_i32 : i32
    %514 = arith.addi %1, %513 : i32
    %515 = arith.index_cast %514 : i32 to index
    %c0_215 = arith.constant 0 : index
    %c0_216 = arith.constant 0 : index
    %516 = vector.load %arg4[%515, %c0_215, %c0_216] : memref<12x4x1xf32, #tpu.memory_space<vmem>>, vector<1x4x1xf32>
    %517 = vector.shape_cast %516 : vector<1x4x1xf32> to vector<4x1xf32>
    %518 = arith.truncf %506 : vector<4x16xf32> to vector<4x16xbf16>
    %c0_217 = arith.constant 0 : index
    %519 = arith.index_cast %514 : i32 to index
    %c0_218 = arith.constant 0 : index
    %c0_219 = arith.constant 0 : index
    %520 = vector.load %arg1[%c0_217, %519, %c0_218, %c0_219] : memref<1x12x4x16xf32, #tpu.memory_space<vmem>>, vector<1x1x4x16xf32>
    %521 = vector.shape_cast %520 : vector<1x1x4x16xf32> to vector<4x16xf32>
    %cst_220 = arith.constant dense<0.000000e+00> : vector<4x16xf32>
    %522 = tpu.matmul %518, %5, %cst_220 {dimension_numbers = #tpu.dot_dimension_numbers<[1], [0], [0], [1], [0, 0, 1, 1], [], []>} : vector<4x16xbf16>, vector<16x16xbf16>, vector<4x16xf32> -> vector<4x16xf32>
    %523 = arith.addf %521, %522 : vector<4x16xf32>
    %524 = arith.negf %523 : vector<4x16xf32>
    %525 = math.exp %524 : vector<4x16xf32>
    %cst_221 = arith.constant 1.000000e+00 : f32
    %526 = vector.broadcast %cst_221 : f32 to vector<4x16xf32>
    %527 = arith.addf %526, %525 : vector<4x16xf32>
    %528 = arith.divf %526, %527 : vector<4x16xf32>
    %c0_222 = arith.constant 0 : index
    %529 = arith.index_cast %514 : i32 to index
    %c0_223 = arith.constant 0 : index
    %c0_224 = arith.constant 0 : index
    %530 = vector.load %arg2[%c0_222, %529, %c0_223, %c0_224] : memref<1x12x4x16xf32, #tpu.memory_space<vmem>>, vector<1x1x4x16xf32>
    %531 = vector.shape_cast %530 : vector<1x1x4x16xf32> to vector<4x16xf32>
    %cst_225 = arith.constant dense<0.000000e+00> : vector<4x16xf32>
    %532 = tpu.matmul %518, %7, %cst_225 {dimension_numbers = #tpu.dot_dimension_numbers<[1], [0], [0], [1], [0, 0, 1, 1], [], []>} : vector<4x16xbf16>, vector<16x16xbf16>, vector<4x16xf32> -> vector<4x16xf32>
    %533 = arith.addf %531, %532 : vector<4x16xf32>
    %534 = arith.negf %533 : vector<4x16xf32>
    %535 = math.exp %534 : vector<4x16xf32>
    %cst_226 = arith.constant 1.000000e+00 : f32
    %536 = vector.broadcast %cst_226 : f32 to vector<4x16xf32>
    %537 = arith.addf %536, %535 : vector<4x16xf32>
    %538 = arith.divf %536, %537 : vector<4x16xf32>
    %c0_227 = arith.constant 0 : index
    %539 = arith.index_cast %514 : i32 to index
    %c0_228 = arith.constant 0 : index
    %c0_229 = arith.constant 0 : index
    %540 = vector.load %arg3[%c0_227, %539, %c0_228, %c0_229] : memref<1x12x4x16xf32, #tpu.memory_space<vmem>>, vector<1x1x4x16xf32>
    %541 = vector.shape_cast %540 : vector<1x1x4x16xf32> to vector<4x16xf32>
    %cst_230 = arith.constant dense<0.000000e+00> : vector<4x16xf32>
    %542 = tpu.matmul %518, %9, %cst_230 {dimension_numbers = #tpu.dot_dimension_numbers<[1], [0], [0], [1], [0, 0, 1, 1], [], []>} : vector<4x16xbf16>, vector<16x16xbf16>, vector<4x16xf32> -> vector<4x16xf32>
    %543 = vector.broadcast %11 : vector<1x16xf32> to vector<4x16xf32>
    %544 = arith.addf %542, %543 : vector<4x16xf32>
    %545 = arith.mulf %528, %544 : vector<4x16xf32>
    %546 = arith.addf %541, %545 : vector<4x16xf32>
    %547 = math.tanh %546 : vector<4x16xf32>
    %cst_231 = arith.constant 1.000000e+00 : f32
    %548 = vector.broadcast %cst_231 : f32 to vector<4x16xf32>
    %549 = arith.subf %548, %538 : vector<4x16xf32>
    %550 = arith.mulf %549, %547 : vector<4x16xf32>
    %551 = arith.mulf %538, %506 : vector<4x16xf32>
    %552 = arith.addf %550, %551 : vector<4x16xf32>
    %553 = arith.subf %552, %506 : vector<4x16xf32>
    %554 = vector.broadcast %517 : vector<4x1xf32> to vector<4x16xf32>
    %555 = arith.mulf %554, %553 : vector<4x16xf32>
    %556 = arith.addf %506, %555 : vector<4x16xf32>
    %557 = vector.broadcast %517 : vector<4x1xf32> to vector<4x16xf32>
    %558 = arith.mulf %556, %557 : vector<4x16xf32>
    %c0_232 = arith.constant 0 : index
    %559 = arith.index_cast %514 : i32 to index
    %c0_233 = arith.constant 0 : index
    %c0_234 = arith.constant 0 : index
    %560 = vector.load %arg9[%c0_232, %559, %c0_233, %c0_234] : memref<1x12x4x16xf32, #tpu.memory_space<vmem>>, vector<1x1x4x16xf32>
    %561 = vector.shape_cast %560 : vector<1x1x4x16xf32> to vector<4x16xf32>
    %562 = vector.shape_cast %558 : vector<4x16xf32> to vector<1x1x4x16xf32>
    tpu.vector_store %arg9[%c0_232, %559, %c0_233, %c0_234], %562 {strides = array<i32>} : memref<1x12x4x16xf32, #tpu.memory_space<vmem>>, vector<1x1x4x16xf32>,
    %c11_i32_235 = arith.constant 11 : i32
    %563 = arith.muli %3, %c11_i32_235 : i32
    %564 = arith.addi %1, %563 : i32
    %565 = arith.index_cast %564 : i32 to index
    %c0_236 = arith.constant 0 : index
    %c0_237 = arith.constant 0 : index
    %566 = vector.load %arg4[%565, %c0_236, %c0_237] : memref<12x4x1xf32, #tpu.memory_space<vmem>>, vector<1x4x1xf32>
    %567 = vector.shape_cast %566 : vector<1x4x1xf32> to vector<4x1xf32>
    %568 = arith.truncf %556 : vector<4x16xf32> to vector<4x16xbf16>
    %c0_238 = arith.constant 0 : index
    %569 = arith.index_cast %564 : i32 to index
    %c0_239 = arith.constant 0 : index
    %c0_240 = arith.constant 0 : index
    %570 = vector.load %arg1[%c0_238, %569, %c0_239, %c0_240] : memref<1x12x4x16xf32, #tpu.memory_space<vmem>>, vector<1x1x4x16xf32>
    %571 = vector.shape_cast %570 : vector<1x1x4x16xf32> to vector<4x16xf32>
    %cst_241 = arith.constant dense<0.000000e+00> : vector<4x16xf32>
    %572 = tpu.matmul %568, %5, %cst_241 {dimension_numbers = #tpu.dot_dimension_numbers<[1], [0], [0], [1], [0, 0, 1, 1], [], []>} : vector<4x16xbf16>, vector<16x16xbf16>, vector<4x16xf32> -> vector<4x16xf32>
    %573 = arith.addf %571, %572 : vector<4x16xf32>
    %574 = arith.negf %573 : vector<4x16xf32>
    %575 = math.exp %574 : vector<4x16xf32>
    %cst_242 = arith.constant 1.000000e+00 : f32
    %576 = vector.broadcast %cst_242 : f32 to vector<4x16xf32>
    %577 = arith.addf %576, %575 : vector<4x16xf32>
    %578 = arith.divf %576, %577 : vector<4x16xf32>
    %c0_243 = arith.constant 0 : index
    %579 = arith.index_cast %564 : i32 to index
    %c0_244 = arith.constant 0 : index
    %c0_245 = arith.constant 0 : index
    %580 = vector.load %arg2[%c0_243, %579, %c0_244, %c0_245] : memref<1x12x4x16xf32, #tpu.memory_space<vmem>>, vector<1x1x4x16xf32>
    %581 = vector.shape_cast %580 : vector<1x1x4x16xf32> to vector<4x16xf32>
    %cst_246 = arith.constant dense<0.000000e+00> : vector<4x16xf32>
    %582 = tpu.matmul %568, %7, %cst_246 {dimension_numbers = #tpu.dot_dimension_numbers<[1], [0], [0], [1], [0, 0, 1, 1], [], []>} : vector<4x16xbf16>, vector<16x16xbf16>, vector<4x16xf32> -> vector<4x16xf32>
    %583 = arith.addf %581, %582 : vector<4x16xf32>
    %584 = arith.negf %583 : vector<4x16xf32>
    %585 = math.exp %584 : vector<4x16xf32>
    %cst_247 = arith.constant 1.000000e+00 : f32
    %586 = vector.broadcast %cst_247 : f32 to vector<4x16xf32>
    %587 = arith.addf %586, %585 : vector<4x16xf32>
    %588 = arith.divf %586, %587 : vector<4x16xf32>
    %c0_248 = arith.constant 0 : index
    %589 = arith.index_cast %564 : i32 to index
    %c0_249 = arith.constant 0 : index
    %c0_250 = arith.constant 0 : index
    %590 = vector.load %arg3[%c0_248, %589, %c0_249, %c0_250] : memref<1x12x4x16xf32, #tpu.memory_space<vmem>>, vector<1x1x4x16xf32>
    %591 = vector.shape_cast %590 : vector<1x1x4x16xf32> to vector<4x16xf32>
    %cst_251 = arith.constant dense<0.000000e+00> : vector<4x16xf32>
    %592 = tpu.matmul %568, %9, %cst_251 {dimension_numbers = #tpu.dot_dimension_numbers<[1], [0], [0], [1], [0, 0, 1, 1], [], []>} : vector<4x16xbf16>, vector<16x16xbf16>, vector<4x16xf32> -> vector<4x16xf32>
    %593 = vector.broadcast %11 : vector<1x16xf32> to vector<4x16xf32>
    %594 = arith.addf %592, %593 : vector<4x16xf32>
    %595 = arith.mulf %578, %594 : vector<4x16xf32>
    %596 = arith.addf %591, %595 : vector<4x16xf32>
    %597 = math.tanh %596 : vector<4x16xf32>
    %cst_252 = arith.constant 1.000000e+00 : f32
    %598 = vector.broadcast %cst_252 : f32 to vector<4x16xf32>
    %599 = arith.subf %598, %588 : vector<4x16xf32>
    %600 = arith.mulf %599, %597 : vector<4x16xf32>
    %601 = arith.mulf %588, %556 : vector<4x16xf32>
    %602 = arith.addf %600, %601 : vector<4x16xf32>
    %603 = arith.subf %602, %556 : vector<4x16xf32>
    %604 = vector.broadcast %567 : vector<4x1xf32> to vector<4x16xf32>
    %605 = arith.mulf %604, %603 : vector<4x16xf32>
    %606 = arith.addf %556, %605 : vector<4x16xf32>
    %607 = vector.broadcast %567 : vector<4x1xf32> to vector<4x16xf32>
    %608 = arith.mulf %606, %607 : vector<4x16xf32>
    %c0_253 = arith.constant 0 : index
    %609 = arith.index_cast %564 : i32 to index
    %c0_254 = arith.constant 0 : index
    %c0_255 = arith.constant 0 : index
    %610 = vector.load %arg9[%c0_253, %609, %c0_254, %c0_255] : memref<1x12x4x16xf32, #tpu.memory_space<vmem>>, vector<1x1x4x16xf32>
    %611 = vector.shape_cast %610 : vector<1x1x4x16xf32> to vector<4x16xf32>
    %612 = vector.shape_cast %608 : vector<4x16xf32> to vector<1x1x4x16xf32>
    tpu.vector_store %arg9[%c0_253, %609, %c0_254, %c0_255], %612 {strides = array<i32>} : memref<1x12x4x16xf32, #tpu.memory_space<vmem>>, vector<1x1x4x16xf32>,
    %c12_i32 = arith.constant 12 : i32
    %c0_256 = arith.constant 0 : index
    %c0_257 = arith.constant 0 : index
    %c0_258 = arith.constant 0 : index
    %613 = vector.load %arg10[%c0_256, %c0_257, %c0_258] : memref<1x4x16xf32, #tpu.memory_space<vmem>>, vector<1x4x16xf32>
    %614 = vector.shape_cast %613 : vector<1x4x16xf32> to vector<4x16xf32>
    %615 = vector.shape_cast %606 : vector<4x16xf32> to vector<1x4x16xf32>
    tpu.vector_store %arg10[%c0_256, %c0_257, %c0_258], %615 {strides = array<i32>} : memref<1x4x16xf32, #tpu.memory_space<vmem>>, vector<1x4x16xf32>,
    return
  }
  func.func @transform_0(%arg0: i32) -> (i32, i32, i32, i32) {
    %c0_i32 = arith.constant 0 : i32
    %c0_i32_0 = arith.constant 0 : i32
    %c0_i32_1 = arith.constant 0 : i32
    %c0_i32_2 = arith.constant 0 : i32
    return %arg0, %c0_i32, %c0_i32_0, %c0_i32_1 : i32, i32, i32, i32
  }
  func.func @transform_1(%arg0: i32) -> (i32, i32, i32, i32) {
    %c0_i32 = arith.constant 0 : i32
    %c0_i32_0 = arith.constant 0 : i32
    %c0_i32_1 = arith.constant 0 : i32
    %c0_i32_2 = arith.constant 0 : i32
    return %arg0, %c0_i32, %c0_i32_0, %c0_i32_1 : i32, i32, i32, i32
  }
  func.func @transform_2(%arg0: i32) -> (i32, i32, i32, i32) {
    %c0_i32 = arith.constant 0 : i32
    %c0_i32_0 = arith.constant 0 : i32
    %c0_i32_1 = arith.constant 0 : i32
    %c0_i32_2 = arith.constant 0 : i32
    return %arg0, %c0_i32, %c0_i32_0, %c0_i32_1 : i32, i32, i32, i32
  }
  func.func @transform_3(%arg0: i32) -> (i32, i32, i32) {
    %c0_i32 = arith.constant 0 : i32
    %c0_i32_0 = arith.constant 0 : i32
    %c0_i32_1 = arith.constant 0 : i32
    %c0_i32_2 = arith.constant 0 : i32
    return %c0_i32, %c0_i32_0, %c0_i32_1 : i32, i32, i32
  }
  func.func @transform_4(%arg0: i32) -> (i32, i32, i32) {
    %c0_i32 = arith.constant 0 : i32
    %c0_i32_0 = arith.constant 0 : i32
    %c0_i32_1 = arith.constant 0 : i32
    return %arg0, %c0_i32, %c0_i32_0 : i32, i32, i32
  }
  func.func @transform_5(%arg0: i32) -> (i32, i32, i32) {
    %c0_i32 = arith.constant 0 : i32
    %c0_i32_0 = arith.constant 0 : i32
    %c0_i32_1 = arith.constant 0 : i32
    return %arg0, %c0_i32, %c0_i32_0 : i32, i32, i32
  }
  func.func @transform_6(%arg0: i32) -> (i32, i32, i32) {
    %c0_i32 = arith.constant 0 : i32
    %c0_i32_0 = arith.constant 0 : i32
    %c0_i32_1 = arith.constant 0 : i32
    return %arg0, %c0_i32, %c0_i32_0 : i32, i32, i32
  }
  func.func @transform_7(%arg0: i32) -> (i32, i32, i32) {
    %c0_i32 = arith.constant 0 : i32
    %c0_i32_0 = arith.constant 0 : i32
    %c0_i32_1 = arith.constant 0 : i32
    return %arg0, %c0_i32, %c0_i32_0 : i32, i32, i32
  }
  func.func @transform_8(%arg0: i32) -> (i32, i32, i32, i32) {
    %c0_i32 = arith.constant 0 : i32
    %c0_i32_0 = arith.constant 0 : i32
    %c0_i32_1 = arith.constant 0 : i32
    %c0_i32_2 = arith.constant 0 : i32
    return %arg0, %c0_i32, %c0_i32_0, %c0_i32_1 : i32, i32, i32, i32
  }
  func.func @transform_9(%arg0: i32) -> (i32, i32, i32) {
    %c0_i32 = arith.constant 0 : i32
    %c0_i32_0 = arith.constant 0 : i32
    %c0_i32_1 = arith.constant 0 : i32
    return %arg0, %c0_i32, %c0_i32_0 : i32, i32, i32
  }
}

module attributes {stable_mosaic.version = 11 : i64} {
  func.func @_bigru_kernel(%arg0: i32, %arg1: memref<1x6x4x16xf32, #tpu.memory_space<vmem>>, %arg2: memref<1x6x4x16xf32, #tpu.memory_space<vmem>>, %arg3: memref<1x6x4x16xf32, #tpu.memory_space<vmem>>, %arg4: memref<6x4x1xf32, #tpu.memory_space<vmem>>, %arg5: memref<1x16x16xbf16, #tpu.memory_space<vmem>>, %arg6: memref<1x16x16xbf16, #tpu.memory_space<vmem>>, %arg7: memref<1x16x16xbf16, #tpu.memory_space<vmem>>, %arg8: memref<1x1x16xf32, #tpu.memory_space<vmem>>, %arg9: memref<1x6x4x16xf32, #tpu.memory_space<vmem>>, %arg10: memref<1x4x16xf32, #tpu.memory_space<vmem>>) attributes {dimension_semantics = [#tpu.dimension_semantics<parallel>], iteration_bounds = array<i64: 2>, scalar_prefetch = 0 : i64, scratch_operands = 0 : i64, tpu.core_type = #tpu.core_type<tc>, window_params = [{transform_indices = @transform_0, window_bounds = array<i64: 1, 6, 4, 16>}, {transform_indices = @transform_1, window_bounds = array<i64: 1, 6, 4, 16>}, {transform_indices = @transform_2, window_bounds = array<i64: 1, 6, 4, 16>}, {pipeline_mode = #tpu.pipeline_mode<synchronous>, transform_indices = @transform_3, window_bounds = array<i64: 6, 4, 1>}, {transform_indices = @transform_4, window_bounds = array<i64: 1, 16, 16>}, {transform_indices = @transform_5, window_bounds = array<i64: 1, 16, 16>}, {transform_indices = @transform_6, window_bounds = array<i64: 1, 16, 16>}, {transform_indices = @transform_7, window_bounds = array<i64: 1, 1, 16>}, {transform_indices = @transform_8, window_bounds = array<i64: 1, 6, 4, 16>}, {transform_indices = @transform_9, window_bounds = array<i64: 1, 4, 16>}]} {
    %c0_i32 = arith.constant 0 : i32
    %0 = arith.cmpi eq, %arg0, %c0_i32 : i32
    %c0_i32_0 = arith.constant 0 : i32
    %c5_i32 = arith.constant 5 : i32
    %1 = arith.select %0, %c0_i32_0, %c5_i32 : i32
    %c0_i32_1 = arith.constant 0 : i32
    %2 = arith.cmpi eq, %arg0, %c0_i32_1 : i32
    %c1_i32 = arith.constant 1 : i32
    %c-1_i32 = arith.constant -1 : i32
    %3 = arith.select %2, %c1_i32, %c-1_i32 : i32
    %c0 = arith.constant 0 : index
    %c0_2 = arith.constant 0 : index
    %c0_3 = arith.constant 0 : index
    %4 = vector.load %arg5[%c0, %c0_2, %c0_3] : memref<1x16x16xbf16, #tpu.memory_space<vmem>>, vector<1x16x16xbf16>
    %5 = vector.shape_cast %4 : vector<1x16x16xbf16> to vector<16x16xbf16>
    %c0_4 = arith.constant 0 : index
    %c0_5 = arith.constant 0 : index
    %c0_6 = arith.constant 0 : index
    %6 = vector.load %arg6[%c0_4, %c0_5, %c0_6] : memref<1x16x16xbf16, #tpu.memory_space<vmem>>, vector<1x16x16xbf16>
    %7 = vector.shape_cast %6 : vector<1x16x16xbf16> to vector<16x16xbf16>
    %c0_7 = arith.constant 0 : index
    %c0_8 = arith.constant 0 : index
    %c0_9 = arith.constant 0 : index
    %8 = vector.load %arg7[%c0_7, %c0_8, %c0_9] : memref<1x16x16xbf16, #tpu.memory_space<vmem>>, vector<1x16x16xbf16>
    %9 = vector.shape_cast %8 : vector<1x16x16xbf16> to vector<16x16xbf16>
    %c0_10 = arith.constant 0 : index
    %c0_11 = arith.constant 0 : index
    %c0_12 = arith.constant 0 : index
    %10 = vector.load %arg8[%c0_10, %c0_11, %c0_12] : memref<1x1x16xf32, #tpu.memory_space<vmem>>, vector<1x1x16xf32>
    %11 = vector.shape_cast %10 : vector<1x1x16xf32> to vector<1x16xf32>
    %cst = arith.constant 0.000000e+00 : f32
    %12 = vector.broadcast %cst : f32 to vector<4x16xf32>
    %c0_i32_13 = arith.constant 0 : i32
    %13 = arith.muli %3, %c0_i32_13 : i32
    %14 = arith.addi %1, %13 : i32
    %15 = arith.index_cast %14 : i32 to index
    %c0_14 = arith.constant 0 : index
    %c0_15 = arith.constant 0 : index
    %16 = vector.load %arg4[%15, %c0_14, %c0_15] : memref<6x4x1xf32, #tpu.memory_space<vmem>>, vector<1x4x1xf32>
    %17 = vector.shape_cast %16 : vector<1x4x1xf32> to vector<4x1xf32>
    %18 = arith.truncf %12 : vector<4x16xf32> to vector<4x16xbf16>
    %c0_16 = arith.constant 0 : index
    %19 = arith.index_cast %14 : i32 to index
    %c0_17 = arith.constant 0 : index
    %c0_18 = arith.constant 0 : index
    %20 = vector.load %arg1[%c0_16, %19, %c0_17, %c0_18] : memref<1x6x4x16xf32, #tpu.memory_space<vmem>>, vector<1x1x4x16xf32>
    %21 = vector.shape_cast %20 : vector<1x1x4x16xf32> to vector<4x16xf32>
    %cst_19 = arith.constant dense<0.000000e+00> : vector<4x16xf32>
    %22 = tpu.matmul %18, %5, %cst_19 {dimension_numbers = #tpu.dot_dimension_numbers<[1], [0], [0], [1], [0, 0, 1, 1], [], []>} : vector<4x16xbf16>, vector<16x16xbf16>, vector<4x16xf32> -> vector<4x16xf32>
    %23 = arith.addf %21, %22 : vector<4x16xf32>
    %24 = arith.negf %23 : vector<4x16xf32>
    %25 = math.exp %24 : vector<4x16xf32>
    %cst_20 = arith.constant 1.000000e+00 : f32
    %26 = vector.broadcast %cst_20 : f32 to vector<4x16xf32>
    %27 = arith.addf %26, %25 : vector<4x16xf32>
    %28 = arith.divf %26, %27 : vector<4x16xf32>
    %c0_21 = arith.constant 0 : index
    %29 = arith.index_cast %14 : i32 to index
    %c0_22 = arith.constant 0 : index
    %c0_23 = arith.constant 0 : index
    %30 = vector.load %arg2[%c0_21, %29, %c0_22, %c0_23] : memref<1x6x4x16xf32, #tpu.memory_space<vmem>>, vector<1x1x4x16xf32>
    %31 = vector.shape_cast %30 : vector<1x1x4x16xf32> to vector<4x16xf32>
    %cst_24 = arith.constant dense<0.000000e+00> : vector<4x16xf32>
    %32 = tpu.matmul %18, %7, %cst_24 {dimension_numbers = #tpu.dot_dimension_numbers<[1], [0], [0], [1], [0, 0, 1, 1], [], []>} : vector<4x16xbf16>, vector<16x16xbf16>, vector<4x16xf32> -> vector<4x16xf32>
    %33 = arith.addf %31, %32 : vector<4x16xf32>
    %34 = arith.negf %33 : vector<4x16xf32>
    %35 = math.exp %34 : vector<4x16xf32>
    %cst_25 = arith.constant 1.000000e+00 : f32
    %36 = vector.broadcast %cst_25 : f32 to vector<4x16xf32>
    %37 = arith.addf %36, %35 : vector<4x16xf32>
    %38 = arith.divf %36, %37 : vector<4x16xf32>
    %c0_26 = arith.constant 0 : index
    %39 = arith.index_cast %14 : i32 to index
    %c0_27 = arith.constant 0 : index
    %c0_28 = arith.constant 0 : index
    %40 = vector.load %arg3[%c0_26, %39, %c0_27, %c0_28] : memref<1x6x4x16xf32, #tpu.memory_space<vmem>>, vector<1x1x4x16xf32>
    %41 = vector.shape_cast %40 : vector<1x1x4x16xf32> to vector<4x16xf32>
    %cst_29 = arith.constant dense<0.000000e+00> : vector<4x16xf32>
    %42 = tpu.matmul %18, %9, %cst_29 {dimension_numbers = #tpu.dot_dimension_numbers<[1], [0], [0], [1], [0, 0, 1, 1], [], []>} : vector<4x16xbf16>, vector<16x16xbf16>, vector<4x16xf32> -> vector<4x16xf32>
    %43 = vector.broadcast %11 : vector<1x16xf32> to vector<4x16xf32>
    %44 = arith.addf %42, %43 : vector<4x16xf32>
    %45 = arith.mulf %28, %44 : vector<4x16xf32>
    %46 = arith.addf %41, %45 : vector<4x16xf32>
    %47 = math.tanh %46 : vector<4x16xf32>
    %cst_30 = arith.constant 1.000000e+00 : f32
    %48 = vector.broadcast %cst_30 : f32 to vector<4x16xf32>
    %49 = arith.subf %48, %38 : vector<4x16xf32>
    %50 = arith.mulf %49, %47 : vector<4x16xf32>
    %51 = arith.mulf %38, %12 : vector<4x16xf32>
    %52 = arith.addf %50, %51 : vector<4x16xf32>
    %53 = arith.subf %52, %12 : vector<4x16xf32>
    %54 = vector.broadcast %17 : vector<4x1xf32> to vector<4x16xf32>
    %55 = arith.mulf %54, %53 : vector<4x16xf32>
    %56 = arith.addf %12, %55 : vector<4x16xf32>
    %57 = vector.broadcast %17 : vector<4x1xf32> to vector<4x16xf32>
    %58 = arith.mulf %56, %57 : vector<4x16xf32>
    %c0_31 = arith.constant 0 : index
    %59 = arith.index_cast %14 : i32 to index
    %c0_32 = arith.constant 0 : index
    %c0_33 = arith.constant 0 : index
    %60 = vector.load %arg9[%c0_31, %59, %c0_32, %c0_33] : memref<1x6x4x16xf32, #tpu.memory_space<vmem>>, vector<1x1x4x16xf32>
    %61 = vector.shape_cast %60 : vector<1x1x4x16xf32> to vector<4x16xf32>
    %62 = vector.shape_cast %58 : vector<4x16xf32> to vector<1x1x4x16xf32>
    tpu.vector_store %arg9[%c0_31, %59, %c0_32, %c0_33], %62 {strides = array<i32>} : memref<1x6x4x16xf32, #tpu.memory_space<vmem>>, vector<1x1x4x16xf32>,
    %c1_i32_34 = arith.constant 1 : i32
    %63 = arith.muli %3, %c1_i32_34 : i32
    %64 = arith.addi %1, %63 : i32
    %65 = arith.index_cast %64 : i32 to index
    %c0_35 = arith.constant 0 : index
    %c0_36 = arith.constant 0 : index
    %66 = vector.load %arg4[%65, %c0_35, %c0_36] : memref<6x4x1xf32, #tpu.memory_space<vmem>>, vector<1x4x1xf32>
    %67 = vector.shape_cast %66 : vector<1x4x1xf32> to vector<4x1xf32>
    %68 = arith.truncf %56 : vector<4x16xf32> to vector<4x16xbf16>
    %c0_37 = arith.constant 0 : index
    %69 = arith.index_cast %64 : i32 to index
    %c0_38 = arith.constant 0 : index
    %c0_39 = arith.constant 0 : index
    %70 = vector.load %arg1[%c0_37, %69, %c0_38, %c0_39] : memref<1x6x4x16xf32, #tpu.memory_space<vmem>>, vector<1x1x4x16xf32>
    %71 = vector.shape_cast %70 : vector<1x1x4x16xf32> to vector<4x16xf32>
    %cst_40 = arith.constant dense<0.000000e+00> : vector<4x16xf32>
    %72 = tpu.matmul %68, %5, %cst_40 {dimension_numbers = #tpu.dot_dimension_numbers<[1], [0], [0], [1], [0, 0, 1, 1], [], []>} : vector<4x16xbf16>, vector<16x16xbf16>, vector<4x16xf32> -> vector<4x16xf32>
    %73 = arith.addf %71, %72 : vector<4x16xf32>
    %74 = arith.negf %73 : vector<4x16xf32>
    %75 = math.exp %74 : vector<4x16xf32>
    %cst_41 = arith.constant 1.000000e+00 : f32
    %76 = vector.broadcast %cst_41 : f32 to vector<4x16xf32>
    %77 = arith.addf %76, %75 : vector<4x16xf32>
    %78 = arith.divf %76, %77 : vector<4x16xf32>
    %c0_42 = arith.constant 0 : index
    %79 = arith.index_cast %64 : i32 to index
    %c0_43 = arith.constant 0 : index
    %c0_44 = arith.constant 0 : index
    %80 = vector.load %arg2[%c0_42, %79, %c0_43, %c0_44] : memref<1x6x4x16xf32, #tpu.memory_space<vmem>>, vector<1x1x4x16xf32>
    %81 = vector.shape_cast %80 : vector<1x1x4x16xf32> to vector<4x16xf32>
    %cst_45 = arith.constant dense<0.000000e+00> : vector<4x16xf32>
    %82 = tpu.matmul %68, %7, %cst_45 {dimension_numbers = #tpu.dot_dimension_numbers<[1], [0], [0], [1], [0, 0, 1, 1], [], []>} : vector<4x16xbf16>, vector<16x16xbf16>, vector<4x16xf32> -> vector<4x16xf32>
    %83 = arith.addf %81, %82 : vector<4x16xf32>
    %84 = arith.negf %83 : vector<4x16xf32>
    %85 = math.exp %84 : vector<4x16xf32>
    %cst_46 = arith.constant 1.000000e+00 : f32
    %86 = vector.broadcast %cst_46 : f32 to vector<4x16xf32>
    %87 = arith.addf %86, %85 : vector<4x16xf32>
    %88 = arith.divf %86, %87 : vector<4x16xf32>
    %c0_47 = arith.constant 0 : index
    %89 = arith.index_cast %64 : i32 to index
    %c0_48 = arith.constant 0 : index
    %c0_49 = arith.constant 0 : index
    %90 = vector.load %arg3[%c0_47, %89, %c0_48, %c0_49] : memref<1x6x4x16xf32, #tpu.memory_space<vmem>>, vector<1x1x4x16xf32>
    %91 = vector.shape_cast %90 : vector<1x1x4x16xf32> to vector<4x16xf32>
    %cst_50 = arith.constant dense<0.000000e+00> : vector<4x16xf32>
    %92 = tpu.matmul %68, %9, %cst_50 {dimension_numbers = #tpu.dot_dimension_numbers<[1], [0], [0], [1], [0, 0, 1, 1], [], []>} : vector<4x16xbf16>, vector<16x16xbf16>, vector<4x16xf32> -> vector<4x16xf32>
    %93 = vector.broadcast %11 : vector<1x16xf32> to vector<4x16xf32>
    %94 = arith.addf %92, %93 : vector<4x16xf32>
    %95 = arith.mulf %78, %94 : vector<4x16xf32>
    %96 = arith.addf %91, %95 : vector<4x16xf32>
    %97 = math.tanh %96 : vector<4x16xf32>
    %cst_51 = arith.constant 1.000000e+00 : f32
    %98 = vector.broadcast %cst_51 : f32 to vector<4x16xf32>
    %99 = arith.subf %98, %88 : vector<4x16xf32>
    %100 = arith.mulf %99, %97 : vector<4x16xf32>
    %101 = arith.mulf %88, %56 : vector<4x16xf32>
    %102 = arith.addf %100, %101 : vector<4x16xf32>
    %103 = arith.subf %102, %56 : vector<4x16xf32>
    %104 = vector.broadcast %67 : vector<4x1xf32> to vector<4x16xf32>
    %105 = arith.mulf %104, %103 : vector<4x16xf32>
    %106 = arith.addf %56, %105 : vector<4x16xf32>
    %107 = vector.broadcast %67 : vector<4x1xf32> to vector<4x16xf32>
    %108 = arith.mulf %106, %107 : vector<4x16xf32>
    %c0_52 = arith.constant 0 : index
    %109 = arith.index_cast %64 : i32 to index
    %c0_53 = arith.constant 0 : index
    %c0_54 = arith.constant 0 : index
    %110 = vector.load %arg9[%c0_52, %109, %c0_53, %c0_54] : memref<1x6x4x16xf32, #tpu.memory_space<vmem>>, vector<1x1x4x16xf32>
    %111 = vector.shape_cast %110 : vector<1x1x4x16xf32> to vector<4x16xf32>
    %112 = vector.shape_cast %108 : vector<4x16xf32> to vector<1x1x4x16xf32>
    tpu.vector_store %arg9[%c0_52, %109, %c0_53, %c0_54], %112 {strides = array<i32>} : memref<1x6x4x16xf32, #tpu.memory_space<vmem>>, vector<1x1x4x16xf32>,
    %c2_i32 = arith.constant 2 : i32
    %113 = arith.muli %3, %c2_i32 : i32
    %114 = arith.addi %1, %113 : i32
    %115 = arith.index_cast %114 : i32 to index
    %c0_55 = arith.constant 0 : index
    %c0_56 = arith.constant 0 : index
    %116 = vector.load %arg4[%115, %c0_55, %c0_56] : memref<6x4x1xf32, #tpu.memory_space<vmem>>, vector<1x4x1xf32>
    %117 = vector.shape_cast %116 : vector<1x4x1xf32> to vector<4x1xf32>
    %118 = arith.truncf %106 : vector<4x16xf32> to vector<4x16xbf16>
    %c0_57 = arith.constant 0 : index
    %119 = arith.index_cast %114 : i32 to index
    %c0_58 = arith.constant 0 : index
    %c0_59 = arith.constant 0 : index
    %120 = vector.load %arg1[%c0_57, %119, %c0_58, %c0_59] : memref<1x6x4x16xf32, #tpu.memory_space<vmem>>, vector<1x1x4x16xf32>
    %121 = vector.shape_cast %120 : vector<1x1x4x16xf32> to vector<4x16xf32>
    %cst_60 = arith.constant dense<0.000000e+00> : vector<4x16xf32>
    %122 = tpu.matmul %118, %5, %cst_60 {dimension_numbers = #tpu.dot_dimension_numbers<[1], [0], [0], [1], [0, 0, 1, 1], [], []>} : vector<4x16xbf16>, vector<16x16xbf16>, vector<4x16xf32> -> vector<4x16xf32>
    %123 = arith.addf %121, %122 : vector<4x16xf32>
    %124 = arith.negf %123 : vector<4x16xf32>
    %125 = math.exp %124 : vector<4x16xf32>
    %cst_61 = arith.constant 1.000000e+00 : f32
    %126 = vector.broadcast %cst_61 : f32 to vector<4x16xf32>
    %127 = arith.addf %126, %125 : vector<4x16xf32>
    %128 = arith.divf %126, %127 : vector<4x16xf32>
    %c0_62 = arith.constant 0 : index
    %129 = arith.index_cast %114 : i32 to index
    %c0_63 = arith.constant 0 : index
    %c0_64 = arith.constant 0 : index
    %130 = vector.load %arg2[%c0_62, %129, %c0_63, %c0_64] : memref<1x6x4x16xf32, #tpu.memory_space<vmem>>, vector<1x1x4x16xf32>
    %131 = vector.shape_cast %130 : vector<1x1x4x16xf32> to vector<4x16xf32>
    %cst_65 = arith.constant dense<0.000000e+00> : vector<4x16xf32>
    %132 = tpu.matmul %118, %7, %cst_65 {dimension_numbers = #tpu.dot_dimension_numbers<[1], [0], [0], [1], [0, 0, 1, 1], [], []>} : vector<4x16xbf16>, vector<16x16xbf16>, vector<4x16xf32> -> vector<4x16xf32>
    %133 = arith.addf %131, %132 : vector<4x16xf32>
    %134 = arith.negf %133 : vector<4x16xf32>
    %135 = math.exp %134 : vector<4x16xf32>
    %cst_66 = arith.constant 1.000000e+00 : f32
    %136 = vector.broadcast %cst_66 : f32 to vector<4x16xf32>
    %137 = arith.addf %136, %135 : vector<4x16xf32>
    %138 = arith.divf %136, %137 : vector<4x16xf32>
    %c0_67 = arith.constant 0 : index
    %139 = arith.index_cast %114 : i32 to index
    %c0_68 = arith.constant 0 : index
    %c0_69 = arith.constant 0 : index
    %140 = vector.load %arg3[%c0_67, %139, %c0_68, %c0_69] : memref<1x6x4x16xf32, #tpu.memory_space<vmem>>, vector<1x1x4x16xf32>
    %141 = vector.shape_cast %140 : vector<1x1x4x16xf32> to vector<4x16xf32>
    %cst_70 = arith.constant dense<0.000000e+00> : vector<4x16xf32>
    %142 = tpu.matmul %118, %9, %cst_70 {dimension_numbers = #tpu.dot_dimension_numbers<[1], [0], [0], [1], [0, 0, 1, 1], [], []>} : vector<4x16xbf16>, vector<16x16xbf16>, vector<4x16xf32> -> vector<4x16xf32>
    %143 = vector.broadcast %11 : vector<1x16xf32> to vector<4x16xf32>
    %144 = arith.addf %142, %143 : vector<4x16xf32>
    %145 = arith.mulf %128, %144 : vector<4x16xf32>
    %146 = arith.addf %141, %145 : vector<4x16xf32>
    %147 = math.tanh %146 : vector<4x16xf32>
    %cst_71 = arith.constant 1.000000e+00 : f32
    %148 = vector.broadcast %cst_71 : f32 to vector<4x16xf32>
    %149 = arith.subf %148, %138 : vector<4x16xf32>
    %150 = arith.mulf %149, %147 : vector<4x16xf32>
    %151 = arith.mulf %138, %106 : vector<4x16xf32>
    %152 = arith.addf %150, %151 : vector<4x16xf32>
    %153 = arith.subf %152, %106 : vector<4x16xf32>
    %154 = vector.broadcast %117 : vector<4x1xf32> to vector<4x16xf32>
    %155 = arith.mulf %154, %153 : vector<4x16xf32>
    %156 = arith.addf %106, %155 : vector<4x16xf32>
    %157 = vector.broadcast %117 : vector<4x1xf32> to vector<4x16xf32>
    %158 = arith.mulf %156, %157 : vector<4x16xf32>
    %c0_72 = arith.constant 0 : index
    %159 = arith.index_cast %114 : i32 to index
    %c0_73 = arith.constant 0 : index
    %c0_74 = arith.constant 0 : index
    %160 = vector.load %arg9[%c0_72, %159, %c0_73, %c0_74] : memref<1x6x4x16xf32, #tpu.memory_space<vmem>>, vector<1x1x4x16xf32>
    %161 = vector.shape_cast %160 : vector<1x1x4x16xf32> to vector<4x16xf32>
    %162 = vector.shape_cast %158 : vector<4x16xf32> to vector<1x1x4x16xf32>
    tpu.vector_store %arg9[%c0_72, %159, %c0_73, %c0_74], %162 {strides = array<i32>} : memref<1x6x4x16xf32, #tpu.memory_space<vmem>>, vector<1x1x4x16xf32>,
    %c3_i32 = arith.constant 3 : i32
    %163 = arith.muli %3, %c3_i32 : i32
    %164 = arith.addi %1, %163 : i32
    %165 = arith.index_cast %164 : i32 to index
    %c0_75 = arith.constant 0 : index
    %c0_76 = arith.constant 0 : index
    %166 = vector.load %arg4[%165, %c0_75, %c0_76] : memref<6x4x1xf32, #tpu.memory_space<vmem>>, vector<1x4x1xf32>
    %167 = vector.shape_cast %166 : vector<1x4x1xf32> to vector<4x1xf32>
    %168 = arith.truncf %156 : vector<4x16xf32> to vector<4x16xbf16>
    %c0_77 = arith.constant 0 : index
    %169 = arith.index_cast %164 : i32 to index
    %c0_78 = arith.constant 0 : index
    %c0_79 = arith.constant 0 : index
    %170 = vector.load %arg1[%c0_77, %169, %c0_78, %c0_79] : memref<1x6x4x16xf32, #tpu.memory_space<vmem>>, vector<1x1x4x16xf32>
    %171 = vector.shape_cast %170 : vector<1x1x4x16xf32> to vector<4x16xf32>
    %cst_80 = arith.constant dense<0.000000e+00> : vector<4x16xf32>
    %172 = tpu.matmul %168, %5, %cst_80 {dimension_numbers = #tpu.dot_dimension_numbers<[1], [0], [0], [1], [0, 0, 1, 1], [], []>} : vector<4x16xbf16>, vector<16x16xbf16>, vector<4x16xf32> -> vector<4x16xf32>
    %173 = arith.addf %171, %172 : vector<4x16xf32>
    %174 = arith.negf %173 : vector<4x16xf32>
    %175 = math.exp %174 : vector<4x16xf32>
    %cst_81 = arith.constant 1.000000e+00 : f32
    %176 = vector.broadcast %cst_81 : f32 to vector<4x16xf32>
    %177 = arith.addf %176, %175 : vector<4x16xf32>
    %178 = arith.divf %176, %177 : vector<4x16xf32>
    %c0_82 = arith.constant 0 : index
    %179 = arith.index_cast %164 : i32 to index
    %c0_83 = arith.constant 0 : index
    %c0_84 = arith.constant 0 : index
    %180 = vector.load %arg2[%c0_82, %179, %c0_83, %c0_84] : memref<1x6x4x16xf32, #tpu.memory_space<vmem>>, vector<1x1x4x16xf32>
    %181 = vector.shape_cast %180 : vector<1x1x4x16xf32> to vector<4x16xf32>
    %cst_85 = arith.constant dense<0.000000e+00> : vector<4x16xf32>
    %182 = tpu.matmul %168, %7, %cst_85 {dimension_numbers = #tpu.dot_dimension_numbers<[1], [0], [0], [1], [0, 0, 1, 1], [], []>} : vector<4x16xbf16>, vector<16x16xbf16>, vector<4x16xf32> -> vector<4x16xf32>
    %183 = arith.addf %181, %182 : vector<4x16xf32>
    %184 = arith.negf %183 : vector<4x16xf32>
    %185 = math.exp %184 : vector<4x16xf32>
    %cst_86 = arith.constant 1.000000e+00 : f32
    %186 = vector.broadcast %cst_86 : f32 to vector<4x16xf32>
    %187 = arith.addf %186, %185 : vector<4x16xf32>
    %188 = arith.divf %186, %187 : vector<4x16xf32>
    %c0_87 = arith.constant 0 : index
    %189 = arith.index_cast %164 : i32 to index
    %c0_88 = arith.constant 0 : index
    %c0_89 = arith.constant 0 : index
    %190 = vector.load %arg3[%c0_87, %189, %c0_88, %c0_89] : memref<1x6x4x16xf32, #tpu.memory_space<vmem>>, vector<1x1x4x16xf32>
    %191 = vector.shape_cast %190 : vector<1x1x4x16xf32> to vector<4x16xf32>
    %cst_90 = arith.constant dense<0.000000e+00> : vector<4x16xf32>
    %192 = tpu.matmul %168, %9, %cst_90 {dimension_numbers = #tpu.dot_dimension_numbers<[1], [0], [0], [1], [0, 0, 1, 1], [], []>} : vector<4x16xbf16>, vector<16x16xbf16>, vector<4x16xf32> -> vector<4x16xf32>
    %193 = vector.broadcast %11 : vector<1x16xf32> to vector<4x16xf32>
    %194 = arith.addf %192, %193 : vector<4x16xf32>
    %195 = arith.mulf %178, %194 : vector<4x16xf32>
    %196 = arith.addf %191, %195 : vector<4x16xf32>
    %197 = math.tanh %196 : vector<4x16xf32>
    %cst_91 = arith.constant 1.000000e+00 : f32
    %198 = vector.broadcast %cst_91 : f32 to vector<4x16xf32>
    %199 = arith.subf %198, %188 : vector<4x16xf32>
    %200 = arith.mulf %199, %197 : vector<4x16xf32>
    %201 = arith.mulf %188, %156 : vector<4x16xf32>
    %202 = arith.addf %200, %201 : vector<4x16xf32>
    %203 = arith.subf %202, %156 : vector<4x16xf32>
    %204 = vector.broadcast %167 : vector<4x1xf32> to vector<4x16xf32>
    %205 = arith.mulf %204, %203 : vector<4x16xf32>
    %206 = arith.addf %156, %205 : vector<4x16xf32>
    %207 = vector.broadcast %167 : vector<4x1xf32> to vector<4x16xf32>
    %208 = arith.mulf %206, %207 : vector<4x16xf32>
    %c0_92 = arith.constant 0 : index
    %209 = arith.index_cast %164 : i32 to index
    %c0_93 = arith.constant 0 : index
    %c0_94 = arith.constant 0 : index
    %210 = vector.load %arg9[%c0_92, %209, %c0_93, %c0_94] : memref<1x6x4x16xf32, #tpu.memory_space<vmem>>, vector<1x1x4x16xf32>
    %211 = vector.shape_cast %210 : vector<1x1x4x16xf32> to vector<4x16xf32>
    %212 = vector.shape_cast %208 : vector<4x16xf32> to vector<1x1x4x16xf32>
    tpu.vector_store %arg9[%c0_92, %209, %c0_93, %c0_94], %212 {strides = array<i32>} : memref<1x6x4x16xf32, #tpu.memory_space<vmem>>, vector<1x1x4x16xf32>,
    %c4_i32 = arith.constant 4 : i32
    %213 = arith.muli %3, %c4_i32 : i32
    %214 = arith.addi %1, %213 : i32
    %215 = arith.index_cast %214 : i32 to index
    %c0_95 = arith.constant 0 : index
    %c0_96 = arith.constant 0 : index
    %216 = vector.load %arg4[%215, %c0_95, %c0_96] : memref<6x4x1xf32, #tpu.memory_space<vmem>>, vector<1x4x1xf32>
    %217 = vector.shape_cast %216 : vector<1x4x1xf32> to vector<4x1xf32>
    %218 = arith.truncf %206 : vector<4x16xf32> to vector<4x16xbf16>
    %c0_97 = arith.constant 0 : index
    %219 = arith.index_cast %214 : i32 to index
    %c0_98 = arith.constant 0 : index
    %c0_99 = arith.constant 0 : index
    %220 = vector.load %arg1[%c0_97, %219, %c0_98, %c0_99] : memref<1x6x4x16xf32, #tpu.memory_space<vmem>>, vector<1x1x4x16xf32>
    %221 = vector.shape_cast %220 : vector<1x1x4x16xf32> to vector<4x16xf32>
    %cst_100 = arith.constant dense<0.000000e+00> : vector<4x16xf32>
    %222 = tpu.matmul %218, %5, %cst_100 {dimension_numbers = #tpu.dot_dimension_numbers<[1], [0], [0], [1], [0, 0, 1, 1], [], []>} : vector<4x16xbf16>, vector<16x16xbf16>, vector<4x16xf32> -> vector<4x16xf32>
    %223 = arith.addf %221, %222 : vector<4x16xf32>
    %224 = arith.negf %223 : vector<4x16xf32>
    %225 = math.exp %224 : vector<4x16xf32>
    %cst_101 = arith.constant 1.000000e+00 : f32
    %226 = vector.broadcast %cst_101 : f32 to vector<4x16xf32>
    %227 = arith.addf %226, %225 : vector<4x16xf32>
    %228 = arith.divf %226, %227 : vector<4x16xf32>
    %c0_102 = arith.constant 0 : index
    %229 = arith.index_cast %214 : i32 to index
    %c0_103 = arith.constant 0 : index
    %c0_104 = arith.constant 0 : index
    %230 = vector.load %arg2[%c0_102, %229, %c0_103, %c0_104] : memref<1x6x4x16xf32, #tpu.memory_space<vmem>>, vector<1x1x4x16xf32>
    %231 = vector.shape_cast %230 : vector<1x1x4x16xf32> to vector<4x16xf32>
    %cst_105 = arith.constant dense<0.000000e+00> : vector<4x16xf32>
    %232 = tpu.matmul %218, %7, %cst_105 {dimension_numbers = #tpu.dot_dimension_numbers<[1], [0], [0], [1], [0, 0, 1, 1], [], []>} : vector<4x16xbf16>, vector<16x16xbf16>, vector<4x16xf32> -> vector<4x16xf32>
    %233 = arith.addf %231, %232 : vector<4x16xf32>
    %234 = arith.negf %233 : vector<4x16xf32>
    %235 = math.exp %234 : vector<4x16xf32>
    %cst_106 = arith.constant 1.000000e+00 : f32
    %236 = vector.broadcast %cst_106 : f32 to vector<4x16xf32>
    %237 = arith.addf %236, %235 : vector<4x16xf32>
    %238 = arith.divf %236, %237 : vector<4x16xf32>
    %c0_107 = arith.constant 0 : index
    %239 = arith.index_cast %214 : i32 to index
    %c0_108 = arith.constant 0 : index
    %c0_109 = arith.constant 0 : index
    %240 = vector.load %arg3[%c0_107, %239, %c0_108, %c0_109] : memref<1x6x4x16xf32, #tpu.memory_space<vmem>>, vector<1x1x4x16xf32>
    %241 = vector.shape_cast %240 : vector<1x1x4x16xf32> to vector<4x16xf32>
    %cst_110 = arith.constant dense<0.000000e+00> : vector<4x16xf32>
    %242 = tpu.matmul %218, %9, %cst_110 {dimension_numbers = #tpu.dot_dimension_numbers<[1], [0], [0], [1], [0, 0, 1, 1], [], []>} : vector<4x16xbf16>, vector<16x16xbf16>, vector<4x16xf32> -> vector<4x16xf32>
    %243 = vector.broadcast %11 : vector<1x16xf32> to vector<4x16xf32>
    %244 = arith.addf %242, %243 : vector<4x16xf32>
    %245 = arith.mulf %228, %244 : vector<4x16xf32>
    %246 = arith.addf %241, %245 : vector<4x16xf32>
    %247 = math.tanh %246 : vector<4x16xf32>
    %cst_111 = arith.constant 1.000000e+00 : f32
    %248 = vector.broadcast %cst_111 : f32 to vector<4x16xf32>
    %249 = arith.subf %248, %238 : vector<4x16xf32>
    %250 = arith.mulf %249, %247 : vector<4x16xf32>
    %251 = arith.mulf %238, %206 : vector<4x16xf32>
    %252 = arith.addf %250, %251 : vector<4x16xf32>
    %253 = arith.subf %252, %206 : vector<4x16xf32>
    %254 = vector.broadcast %217 : vector<4x1xf32> to vector<4x16xf32>
    %255 = arith.mulf %254, %253 : vector<4x16xf32>
    %256 = arith.addf %206, %255 : vector<4x16xf32>
    %257 = vector.broadcast %217 : vector<4x1xf32> to vector<4x16xf32>
    %258 = arith.mulf %256, %257 : vector<4x16xf32>
    %c0_112 = arith.constant 0 : index
    %259 = arith.index_cast %214 : i32 to index
    %c0_113 = arith.constant 0 : index
    %c0_114 = arith.constant 0 : index
    %260 = vector.load %arg9[%c0_112, %259, %c0_113, %c0_114] : memref<1x6x4x16xf32, #tpu.memory_space<vmem>>, vector<1x1x4x16xf32>
    %261 = vector.shape_cast %260 : vector<1x1x4x16xf32> to vector<4x16xf32>
    %262 = vector.shape_cast %258 : vector<4x16xf32> to vector<1x1x4x16xf32>
    tpu.vector_store %arg9[%c0_112, %259, %c0_113, %c0_114], %262 {strides = array<i32>} : memref<1x6x4x16xf32, #tpu.memory_space<vmem>>, vector<1x1x4x16xf32>,
    %c5_i32_115 = arith.constant 5 : i32
    %263 = arith.muli %3, %c5_i32_115 : i32
    %264 = arith.addi %1, %263 : i32
    %265 = arith.index_cast %264 : i32 to index
    %c0_116 = arith.constant 0 : index
    %c0_117 = arith.constant 0 : index
    %266 = vector.load %arg4[%265, %c0_116, %c0_117] : memref<6x4x1xf32, #tpu.memory_space<vmem>>, vector<1x4x1xf32>
    %267 = vector.shape_cast %266 : vector<1x4x1xf32> to vector<4x1xf32>
    %268 = arith.truncf %256 : vector<4x16xf32> to vector<4x16xbf16>
    %c0_118 = arith.constant 0 : index
    %269 = arith.index_cast %264 : i32 to index
    %c0_119 = arith.constant 0 : index
    %c0_120 = arith.constant 0 : index
    %270 = vector.load %arg1[%c0_118, %269, %c0_119, %c0_120] : memref<1x6x4x16xf32, #tpu.memory_space<vmem>>, vector<1x1x4x16xf32>
    %271 = vector.shape_cast %270 : vector<1x1x4x16xf32> to vector<4x16xf32>
    %cst_121 = arith.constant dense<0.000000e+00> : vector<4x16xf32>
    %272 = tpu.matmul %268, %5, %cst_121 {dimension_numbers = #tpu.dot_dimension_numbers<[1], [0], [0], [1], [0, 0, 1, 1], [], []>} : vector<4x16xbf16>, vector<16x16xbf16>, vector<4x16xf32> -> vector<4x16xf32>
    %273 = arith.addf %271, %272 : vector<4x16xf32>
    %274 = arith.negf %273 : vector<4x16xf32>
    %275 = math.exp %274 : vector<4x16xf32>
    %cst_122 = arith.constant 1.000000e+00 : f32
    %276 = vector.broadcast %cst_122 : f32 to vector<4x16xf32>
    %277 = arith.addf %276, %275 : vector<4x16xf32>
    %278 = arith.divf %276, %277 : vector<4x16xf32>
    %c0_123 = arith.constant 0 : index
    %279 = arith.index_cast %264 : i32 to index
    %c0_124 = arith.constant 0 : index
    %c0_125 = arith.constant 0 : index
    %280 = vector.load %arg2[%c0_123, %279, %c0_124, %c0_125] : memref<1x6x4x16xf32, #tpu.memory_space<vmem>>, vector<1x1x4x16xf32>
    %281 = vector.shape_cast %280 : vector<1x1x4x16xf32> to vector<4x16xf32>
    %cst_126 = arith.constant dense<0.000000e+00> : vector<4x16xf32>
    %282 = tpu.matmul %268, %7, %cst_126 {dimension_numbers = #tpu.dot_dimension_numbers<[1], [0], [0], [1], [0, 0, 1, 1], [], []>} : vector<4x16xbf16>, vector<16x16xbf16>, vector<4x16xf32> -> vector<4x16xf32>
    %283 = arith.addf %281, %282 : vector<4x16xf32>
    %284 = arith.negf %283 : vector<4x16xf32>
    %285 = math.exp %284 : vector<4x16xf32>
    %cst_127 = arith.constant 1.000000e+00 : f32
    %286 = vector.broadcast %cst_127 : f32 to vector<4x16xf32>
    %287 = arith.addf %286, %285 : vector<4x16xf32>
    %288 = arith.divf %286, %287 : vector<4x16xf32>
    %c0_128 = arith.constant 0 : index
    %289 = arith.index_cast %264 : i32 to index
    %c0_129 = arith.constant 0 : index
    %c0_130 = arith.constant 0 : index
    %290 = vector.load %arg3[%c0_128, %289, %c0_129, %c0_130] : memref<1x6x4x16xf32, #tpu.memory_space<vmem>>, vector<1x1x4x16xf32>
    %291 = vector.shape_cast %290 : vector<1x1x4x16xf32> to vector<4x16xf32>
    %cst_131 = arith.constant dense<0.000000e+00> : vector<4x16xf32>
    %292 = tpu.matmul %268, %9, %cst_131 {dimension_numbers = #tpu.dot_dimension_numbers<[1], [0], [0], [1], [0, 0, 1, 1], [], []>} : vector<4x16xbf16>, vector<16x16xbf16>, vector<4x16xf32> -> vector<4x16xf32>
    %293 = vector.broadcast %11 : vector<1x16xf32> to vector<4x16xf32>
    %294 = arith.addf %292, %293 : vector<4x16xf32>
    %295 = arith.mulf %278, %294 : vector<4x16xf32>
    %296 = arith.addf %291, %295 : vector<4x16xf32>
    %297 = math.tanh %296 : vector<4x16xf32>
    %cst_132 = arith.constant 1.000000e+00 : f32
    %298 = vector.broadcast %cst_132 : f32 to vector<4x16xf32>
    %299 = arith.subf %298, %288 : vector<4x16xf32>
    %300 = arith.mulf %299, %297 : vector<4x16xf32>
    %301 = arith.mulf %288, %256 : vector<4x16xf32>
    %302 = arith.addf %300, %301 : vector<4x16xf32>
    %303 = arith.subf %302, %256 : vector<4x16xf32>
    %304 = vector.broadcast %267 : vector<4x1xf32> to vector<4x16xf32>
    %305 = arith.mulf %304, %303 : vector<4x16xf32>
    %306 = arith.addf %256, %305 : vector<4x16xf32>
    %307 = vector.broadcast %267 : vector<4x1xf32> to vector<4x16xf32>
    %308 = arith.mulf %306, %307 : vector<4x16xf32>
    %c0_133 = arith.constant 0 : index
    %309 = arith.index_cast %264 : i32 to index
    %c0_134 = arith.constant 0 : index
    %c0_135 = arith.constant 0 : index
    %310 = vector.load %arg9[%c0_133, %309, %c0_134, %c0_135] : memref<1x6x4x16xf32, #tpu.memory_space<vmem>>, vector<1x1x4x16xf32>
    %311 = vector.shape_cast %310 : vector<1x1x4x16xf32> to vector<4x16xf32>
    %312 = vector.shape_cast %308 : vector<4x16xf32> to vector<1x1x4x16xf32>
    tpu.vector_store %arg9[%c0_133, %309, %c0_134, %c0_135], %312 {strides = array<i32>} : memref<1x6x4x16xf32, #tpu.memory_space<vmem>>, vector<1x1x4x16xf32>,
    %c6_i32 = arith.constant 6 : i32
    %c0_136 = arith.constant 0 : index
    %c0_137 = arith.constant 0 : index
    %c0_138 = arith.constant 0 : index
    %313 = vector.load %arg10[%c0_136, %c0_137, %c0_138] : memref<1x4x16xf32, #tpu.memory_space<vmem>>, vector<1x4x16xf32>
    %314 = vector.shape_cast %313 : vector<1x4x16xf32> to vector<4x16xf32>
    %315 = vector.shape_cast %306 : vector<4x16xf32> to vector<1x4x16xf32>
    tpu.vector_store %arg10[%c0_136, %c0_137, %c0_138], %315 {strides = array<i32>} : memref<1x4x16xf32, #tpu.memory_space<vmem>>, vector<1x4x16xf32>,
    return
  }
  func.func @transform_0(%arg0: i32) -> (i32, i32, i32, i32) {
    %c0_i32 = arith.constant 0 : i32
    %c0_i32_0 = arith.constant 0 : i32
    %c0_i32_1 = arith.constant 0 : i32
    %c0_i32_2 = arith.constant 0 : i32
    return %arg0, %c0_i32, %c0_i32_0, %c0_i32_1 : i32, i32, i32, i32
  }
  func.func @transform_1(%arg0: i32) -> (i32, i32, i32, i32) {
    %c0_i32 = arith.constant 0 : i32
    %c0_i32_0 = arith.constant 0 : i32
    %c0_i32_1 = arith.constant 0 : i32
    %c0_i32_2 = arith.constant 0 : i32
    return %arg0, %c0_i32, %c0_i32_0, %c0_i32_1 : i32, i32, i32, i32
  }
  func.func @transform_2(%arg0: i32) -> (i32, i32, i32, i32) {
    %c0_i32 = arith.constant 0 : i32
    %c0_i32_0 = arith.constant 0 : i32
    %c0_i32_1 = arith.constant 0 : i32
    %c0_i32_2 = arith.constant 0 : i32
    return %arg0, %c0_i32, %c0_i32_0, %c0_i32_1 : i32, i32, i32, i32
  }
  func.func @transform_3(%arg0: i32) -> (i32, i32, i32) {
    %c0_i32 = arith.constant 0 : i32
    %c0_i32_0 = arith.constant 0 : i32
    %c0_i32_1 = arith.constant 0 : i32
    %c0_i32_2 = arith.constant 0 : i32
    return %c0_i32, %c0_i32_0, %c0_i32_1 : i32, i32, i32
  }
  func.func @transform_4(%arg0: i32) -> (i32, i32, i32) {
    %c0_i32 = arith.constant 0 : i32
    %c0_i32_0 = arith.constant 0 : i32
    %c0_i32_1 = arith.constant 0 : i32
    return %arg0, %c0_i32, %c0_i32_0 : i32, i32, i32
  }
  func.func @transform_5(%arg0: i32) -> (i32, i32, i32) {
    %c0_i32 = arith.constant 0 : i32
    %c0_i32_0 = arith.constant 0 : i32
    %c0_i32_1 = arith.constant 0 : i32
    return %arg0, %c0_i32, %c0_i32_0 : i32, i32, i32
  }
  func.func @transform_6(%arg0: i32) -> (i32, i32, i32) {
    %c0_i32 = arith.constant 0 : i32
    %c0_i32_0 = arith.constant 0 : i32
    %c0_i32_1 = arith.constant 0 : i32
    return %arg0, %c0_i32, %c0_i32_0 : i32, i32, i32
  }
  func.func @transform_7(%arg0: i32) -> (i32, i32, i32) {
    %c0_i32 = arith.constant 0 : i32
    %c0_i32_0 = arith.constant 0 : i32
    %c0_i32_1 = arith.constant 0 : i32
    return %arg0, %c0_i32, %c0_i32_0 : i32, i32, i32
  }
  func.func @transform_8(%arg0: i32) -> (i32, i32, i32, i32) {
    %c0_i32 = arith.constant 0 : i32
    %c0_i32_0 = arith.constant 0 : i32
    %c0_i32_1 = arith.constant 0 : i32
    %c0_i32_2 = arith.constant 0 : i32
    return %arg0, %c0_i32, %c0_i32_0, %c0_i32_1 : i32, i32, i32, i32
  }
  func.func @transform_9(%arg0: i32) -> (i32, i32, i32) {
    %c0_i32 = arith.constant 0 : i32
    %c0_i32_0 = arith.constant 0 : i32
    %c0_i32_1 = arith.constant 0 : i32
    return %arg0, %c0_i32, %c0_i32_0 : i32, i32, i32
  }
}

module attributes {stable_mosaic.version = 11 : i64} {
  func.func @_attention_kernel(%arg0: i32, %arg1: memref<4x12x32xf32, #tpu.memory_space<vmem>>, %arg2: memref<4x32xf32, #tpu.memory_space<vmem>>, %arg3: memref<4x12xf32, #tpu.memory_space<vmem>>, %arg4: memref<4x12xf32, #tpu.memory_space<vmem>>) attributes {dimension_semantics = [#tpu.dimension_semantics<arbitrary>], iteration_bounds = array<i64: 1>, scalar_prefetch = 0 : i64, scratch_operands = 0 : i64, tpu.core_type = #tpu.core_type<tc>, window_params = [{pipeline_mode = #tpu.pipeline_mode<synchronous>, transform_indices = @transform_0, window_bounds = array<i64: 4, 12, 32>}, {pipeline_mode = #tpu.pipeline_mode<synchronous>, transform_indices = @transform_1, window_bounds = array<i64: 4, 32>}, {pipeline_mode = #tpu.pipeline_mode<synchronous>, transform_indices = @transform_2, window_bounds = array<i64: 4, 12>}, {pipeline_mode = #tpu.pipeline_mode<synchronous>, transform_indices = @transform_3, window_bounds = array<i64: 4, 12>}]} {
    %c0 = arith.constant 0 : index
    %c0_0 = arith.constant 0 : index
    %c0_1 = arith.constant 0 : index
    %0 = vector.load %arg1[%c0, %c0_0, %c0_1] : memref<4x12x32xf32, #tpu.memory_space<vmem>>, vector<4x12x32xf32>
    %c0_2 = arith.constant 0 : index
    %c0_3 = arith.constant 0 : index
    %1 = vector.load %arg2[%c0_2, %c0_3] : memref<4x32xf32, #tpu.memory_space<vmem>>, vector<4x32xf32>
    %c0_4 = arith.constant 0 : index
    %c0_5 = arith.constant 0 : index
    %2 = vector.load %arg3[%c0_4, %c0_5] : memref<4x12xf32, #tpu.memory_space<vmem>>, vector<4x12xf32>
    %3 = vector.shape_cast %1 : vector<4x32xf32> to vector<4x1x32xf32>
    %4 = vector.broadcast %3 : vector<4x1x32xf32> to vector<4x12x32xf32>
    %5 = arith.mulf %0, %4 : vector<4x12x32xf32>
    %cst = arith.constant dense<0.000000e+00> : vector<4x12xf32>
    %6 = vector.multi_reduction <add>, %5, %cst [2] : vector<4x12x32xf32> to vector<4x12xf32>
    %7 = arith.mulf %6, %2 : vector<4x12xf32>
    %cst_6 = arith.constant dense<0xFF800000> : vector<4xf32>
    %8 = vector.multi_reduction <maximumf>, %7, %cst_6 [1] : vector<4x12xf32> to vector<4xf32>
    %9 = vector.shape_cast %8 : vector<4xf32> to vector<4x1xf32>
    %10 = vector.broadcast %9 : vector<4x1xf32> to vector<4x12xf32>
    %11 = arith.subf %7, %10 : vector<4x12xf32>
    %12 = arith.mulf %11, %2 : vector<4x12xf32>
    %13 = math.exp %12 : vector<4x12xf32>
    %14 = arith.mulf %13, %2 : vector<4x12xf32>
    %cst_7 = arith.constant dense<0.000000e+00> : vector<4xf32>
    %15 = vector.multi_reduction <add>, %14, %cst_7 [1] : vector<4x12xf32> to vector<4xf32>
    %16 = vector.shape_cast %15 : vector<4xf32> to vector<4x1xf32>
    %17 = math.log %16 : vector<4x1xf32>
    %18 = vector.broadcast %17 : vector<4x1xf32> to vector<4x12xf32>
    %19 = arith.subf %12, %18 : vector<4x12xf32>
    %20 = arith.mulf %19, %2 : vector<4x12xf32>
    %21 = math.exp %20 : vector<4x12xf32>
    %22 = arith.mulf %21, %2 : vector<4x12xf32>
    %c0_8 = arith.constant 0 : index
    %c0_9 = arith.constant 0 : index
    %23 = vector.load %arg4[%c0_8, %c0_9] : memref<4x12xf32, #tpu.memory_space<vmem>>, vector<4x12xf32>
    tpu.vector_store %arg4[%c0_8, %c0_9], %22 {strides = array<i32>} : memref<4x12xf32, #tpu.memory_space<vmem>>, vector<4x12xf32>,
    return
  }
  func.func @transform_0(%arg0: i32) -> (i32, i32, i32) {
    %c0_i32 = arith.constant 0 : i32
    %c0_i32_0 = arith.constant 0 : i32
    %c0_i32_1 = arith.constant 0 : i32
    %c0_i32_2 = arith.constant 0 : i32
    return %c0_i32, %c0_i32_0, %c0_i32_1 : i32, i32, i32
  }
  func.func @transform_1(%arg0: i32) -> (i32, i32) {
    %c0_i32 = arith.constant 0 : i32
    %c0_i32_0 = arith.constant 0 : i32
    %c0_i32_1 = arith.constant 0 : i32
    return %c0_i32, %c0_i32_0 : i32, i32
  }
  func.func @transform_2(%arg0: i32) -> (i32, i32) {
    %c0_i32 = arith.constant 0 : i32
    %c0_i32_0 = arith.constant 0 : i32
    %c0_i32_1 = arith.constant 0 : i32
    return %c0_i32, %c0_i32_0 : i32, i32
  }
  func.func @transform_3(%arg0: i32) -> (i32, i32) {
    %c0_i32 = arith.constant 0 : i32
    %c0_i32_0 = arith.constant 0 : i32
    %c0_i32_1 = arith.constant 0 : i32
    return %c0_i32, %c0_i32_0 : i32, i32
  }
}

</mosaic_0001>

<llo_original>
// kernel: asreader_forward.5
$region0: #{asreader_forward.5}
  #allocation0 [shape = 'u32[]', space=smem, size = 0x4, offset = 0x4, fixed_abs, tag = 'smem constant byte address 0x4 - core index']
  #allocation1 [shape = 'u32[144,128]{1,0:T(1,128)}', space=vmem, size = 0x12000, scoped, tag = 'internal scratch']
  %s0 = inlined_call_operand.vmem [shape: f32[4,12,32], index: 0, kind: input, shape index: {}]
  %s1 = inlined_call_operand.vmem [shape: f32[4,32], index: 1, kind: input, shape index: {}]
  %s2 = inlined_call_operand.vmem [shape: f32[4,12], index: 2, kind: input, shape index: {}]
  %s3 = inlined_call_operand.hbm [shape: f32[4,12], index: 3, kind: output, shape index: {}]
  %s4 = sld [smem:[#allocation0]]
  $region22: #{asreader_forward.5} parent=0
    _
  %s6 = ssub.s32 1, %s4
  %s7 = scalar_select 0, %s6, %s4
  $region1: #{asreader_forward.5} parent=0
    #allocation2 [shape = 'u8[2048]{0}', space=vmem, size = 0x800, scoped, tag = 'output window, operand 0, single buffered']
    #allocation3 [shape = 's32[1]{0}', space=sflag, size = 0x4, scoped, tag = 'scoped memory for asreader_forward.5']
    %8 = vsyncpa [#allocation3], 0
    // Predicated region
    $region2: #{asreader_forward.5} parent=1 // pred_check
      _
    $region3: #{asreader_forward.5} parent=1 // pred_check_branch
      %10 = sbr.rel (0) target = $region5
    $region4: #{asreader_forward.5} parent=1 // pred_region
      _
    $region5: #{asreader_forward.5} parent=1 // pred_fallthru
      _
    // Predicated region
    $region6: #{asreader_forward.5} parent=1 // pred_check
      _
    $region7: #{asreader_forward.5} parent=1 // pred_check_branch
      %12 = sbr.rel (0) target = $region9
    $region8: #{asreader_forward.5} parent=1 // pred_region
      _
    $region9: #{asreader_forward.5} parent=1 // pred_fallthru
      _
    // Predicated region
    $region10: #{asreader_forward.5} parent=1 // pred_check
      _
    $region11: #{asreader_forward.5} parent=1 // pred_check_branch
      %14 = sbr.rel (0) target = $region13
    $region12: #{asreader_forward.5} parent=1 // pred_region
      _
    $region13: #{asreader_forward.5} parent=1 // pred_fallthru
      _
    %v15 = vld [vmem:[%s0] sm:$0xff]
    %v16 = vld [vmem:[%s0 + $0x8] sm:$0xf]
    %v17 = vld [vmem:[%s0 + $0x10] sm:$0xff]
    %v18 = vld [vmem:[%s0 + $0x18] sm:$0xf]
    %v19 = vld [vmem:[%s0 + $0x20] sm:$0xff]
    %v20 = vld [vmem:[%s0 + $0x28] sm:$0xf]
    %v21 = vld [vmem:[%s0 + $0x30] sm:$0xff]
    %v22 = vld [vmem:[%s0 + $0x38] sm:$0xf]
    %v23 = vld [vmem:[%s1] sm:$0xf]
    %v24 = vld [vmem:[%s2] sm:$0xf]
    %v27 = vunpack.c.l.s4 1966171168
    %v28 = vunpack.c.0.s8 %v27
    %v29 = vlaneseq
    %v30 = vshrl.u32 %v29, 7
    %v31 = vsub.s32 %v28, %v30
    %v32 = vrot.slane %v23, %v31
    %v33 = vcombine.high %v32, %v32
    %v35 = vunpack.c.l.s4 1966171168
    %v36 = vunpack.c.0.s8 %v35
    %v37 = vlaneseq
    %v38 = vshrl.u32 %v37, 7
    %v39 = vsub.s32 %v36, %v38
    %v40 = vrot.slane %v32, %v39
    %v42 = vunpack.c.l.s4 1966171168
    %v43 = vunpack.c.0.s8 %v42
    %v44 = vlaneseq
    %v45 = vshrl.u32 %v44, 7
    %v46 = vsub.s32 %v43, %v45
    %v47 = vrot.slane %v33, %v46
    %v48 = vcombine.high %v40, %v40
    %v49 = vcombine.high %v47, %v47
    %v50 = vlaneseq
    %v51 = vshrl.u32 %v50, 7
    %v52 = vsub.s32 0, %v51
    %v53 = vrot.slane %v40, %v52
    %v54 = vlaneseq
    %v55 = vshrl.u32 %v54, 7
    %v56 = vsub.s32 0, %v55
    %v57 = vrot.slane %v47, %v56
    %v58 = vlaneseq
    %v59 = vshrl.u32 %v58, 7
    %v60 = vsub.s32 0, %v59
    %v61 = vrot.slane %v48, %v60
    %v62 = vlaneseq
    %v63 = vshrl.u32 %v62, 7
    %v64 = vsub.s32 0, %v63
    %v65 = vrot.slane %v49, %v64
    %v70 = vmul.f32 %v15, %v53
    %v71 = vmul.f32 %v16, %v53
    %v72 = vmul.f32 %v17, %v57
    %v73 = vmul.f32 %v18, %v57
    %v74 = vmul.f32 %v19, %v61
    %v75 = vmul.f32 %v20, %v61
    %v76 = vmul.f32 %v21, %v65
    %v77 = vmul.f32 %v22, %v65
    %vm78 = vcmask 261120
    %v79 = vsel %vm78, %v70, 0.0
    %80 = vadd.xlane.f32.xlu0 %v79
    %v81 = vpop.xlane.xlu0 %80
    %vm82 = vcmask 257024
    %v83 = vsel %vm82, %v71, 0.0
    %84 = vadd.xlane.f32.xlu0 %v83
    %v85 = vpop.xlane.xlu0 %84
    %v86 = vsel %vm78, %v72, 0.0
    %87 = vadd.xlane.f32.xlu0 %v86
    %v88 = vpop.xlane.xlu0 %87
    %v89 = vsel %vm82, %v73, 0.0
    %90 = vadd.xlane.f32.xlu0 %v89
    %v91 = vpop.xlane.xlu0 %90
    %v92 = vsel %vm78, %v74, 0.0
    %93 = vadd.xlane.f32.xlu0 %v92
    %v94 = vpop.xlane.xlu0 %93
    %v95 = vsel %vm82, %v75, 0.0
    %96 = vadd.xlane.f32.xlu0 %v95
    %v97 = vpop.xlane.xlu0 %96
    %v98 = vsel %vm78, %v76, 0.0
    %99 = vadd.xlane.f32.xlu0 %v98
    %v100 = vpop.xlane.xlu0 %99
    %v101 = vsel %vm82, %v77, 0.0
    %102 = vadd.xlane.f32.xlu0 %v101
    %v103 = vpop.xlane.xlu0 %102
    %v105 = vlaneseq
    %v106 = vshrl.u32 %v105, 7
    %v107 = vsub.s32 0, %v106
    %v108 = vrot.slane %v24, %v107
    %110 = vbcast.lane.b32.xlu0 %v108, 256
    %v111 = vpop.permute.xlu0 %110
    %s113 = sor.u32 256, 8
    %114 = vbcast.lane.b32.xlu0 %v108, %s113
    %v115 = vpop.permute.xlu0 %114
    %v116 = vlaneseq
    %v117 = vshrl.u32 %v116, 7
    %v118 = vsub.s32 1, %v117
    %v119 = vrot.slane %v24, %v118
    %121 = vbcast.lane.b32.xlu0 %v119, 256
    %v122 = vpop.permute.xlu0 %121
    %s124 = sor.u32 256, 8
    %125 = vbcast.lane.b32.xlu0 %v119, %s124
    %v126 = vpop.permute.xlu0 %125
    %v127 = vlaneseq
    %v128 = vshrl.u32 %v127, 7
    %v129 = vsub.s32 2, %v128
    %v130 = vrot.slane %v24, %v129
    %132 = vbcast.lane.b32.xlu0 %v130, 256
    %v133 = vpop.permute.xlu0 %132
    %s135 = sor.u32 256, 8
    %136 = vbcast.lane.b32.xlu0 %v130, %s135
    %v137 = vpop.permute.xlu0 %136
    %v138 = vlaneseq
    %v139 = vshrl.u32 %v138, 7
    %v140 = vsub.s32 3, %v139
    %v141 = vrot.slane %v24, %v140
    %143 = vbcast.lane.b32.xlu0 %v141, 256
    %v144 = vpop.permute.xlu0 %143
    %s146 = sor.u32 256, 8
    %147 = vbcast.lane.b32.xlu0 %v141, %s146
    %v148 = vpop.permute.xlu0 %147
    %v157 = vmul.f32 %v81, %v111
    %v158 = vmul.f32 %v85, %v115
    %v159 = vmul.f32 %v88, %v122
    %v160 = vmul.f32 %v91, %v126
    %v161 = vmul.f32 %v94, %v133
    %v162 = vmul.f32 %v97, %v137
    %v163 = vmul.f32 %v100, %v144
    %v164 = vmul.f32 %v103, %v148
    %173 = vset.pattern.permute.xlu0 0
    %174 = vperm.xlu0 %173, %v157
    %v175 = vpop.permute.xlu0 %174
    %176 = vset.pattern.permute.xlu0 0
    %177 = vperm.xlu0 %176, %v158
    %v178 = vpop.permute.xlu0 %177
    %179 = vset.pattern.permute.xlu0 0
    %180 = vperm.xlu0 %179, %v159
    %v181 = vpop.permute.xlu0 %180
    %182 = vset.pattern.permute.xlu0 0
    %183 = vperm.xlu0 %182, %v160
    %v184 = vpop.permute.xlu0 %183
    %185 = vset.pattern.permute.xlu0 0
    %186 = vperm.xlu0 %185, %v161
    %v187 = vpop.permute.xlu0 %186
    %188 = vset.pattern.permute.xlu0 0
    %189 = vperm.xlu0 %188, %v162
    %v190 = vpop.permute.xlu0 %189
    %191 = vset.pattern.permute.xlu0 0
    %192 = vperm.xlu0 %191, %v163
    %v193 = vpop.permute.xlu0 %192
    %194 = vset.pattern.permute.xlu0 0
    %195 = vperm.xlu0 %194, %v164
    %v196 = vpop.permute.xlu0 %195
    %v197 = vlaneseq
    %v198 = vand.u32 %v197, 127
    %v199 = vlaneseq
    %v200 = vshrl.u32 %v199, 7
    %v201 = vsub.s32 %v198, %v200
    %v202 = vrot.slane %v175, %v201
    %v203 = vadd.s32 %v198, 4294967288
    %v204 = vlaneseq
    %v205 = vshrl.u32 %v204, 7
    %v206 = vsub.s32 %v203, %v205
    %v207 = vrot.slane %v178, %v206
    %vm208 = vcmask 130112
    %v209 = vsel %vm208, %v207, %v202
    %v210 = vlaneseq
    %v211 = vshrl.u32 %v210, 7
    %v212 = vsub.s32 %v198, %v211
    %v213 = vrot.slane %v181, %v212
    %v214 = vlaneseq
    %v215 = vshrl.u32 %v214, 7
    %v216 = vsub.s32 %v203, %v215
    %v217 = vrot.slane %v184, %v216
    %v218 = vsel %vm208, %v217, %v213
    %v219 = vlaneseq
    %v220 = vshrl.u32 %v219, 7
    %v221 = vsub.s32 %v198, %v220
    %v222 = vrot.slane %v187, %v221
    %v223 = vlaneseq
    %v224 = vshrl.u32 %v223, 7
    %v225 = vsub.s32 %v203, %v224
    %v226 = vrot.slane %v190, %v225
    %v227 = vsel %vm208, %v226, %v222
    %v228 = vlaneseq
    %v229 = vshrl.u32 %v228, 7
    %v230 = vsub.s32 %v198, %v229
    %v231 = vrot.slane %v193, %v230
    %v232 = vlaneseq
    %v233 = vshrl.u32 %v232, 7
    %v234 = vsub.s32 %v203, %v233
    %v235 = vrot.slane %v196, %v234
    %v236 = vsel %vm208, %v235, %v231
    %vm237 = vcmask 1041409
    %v238 = vsel %vm237, %v218, %v209
    %vm239 = vcmask 1042434
    %v240 = vsel %vm239, %v227, %v238
    %vm241 = vcmask 1043459
    %v242 = vsel %vm241, %v236, %v240
    %vm244 = vcmask 93184
    %v245 = vsel %vm244, %v242, -inf
    %246 = vmax.xlane.f32.xlu0 %v245
    %v247 = vpop.xlane.xlu0 %246
    %v249 = vlaneseq
    %v250 = vshrl.u32 %v249, 7
    %v251 = vsub.s32 0, %v250
    %v252 = vrot.slane %v247, %v251
    %v253 = vlaneseq
    %v254 = vshrl.u32 %v253, 7
    %v255 = vsub.s32 1, %v254
    %v256 = vrot.slane %v247, %v255
    %v257 = vlaneseq
    %v258 = vshrl.u32 %v257, 7
    %v259 = vsub.s32 2, %v258
    %v260 = vrot.slane %v247, %v259
    %v261 = vlaneseq
    %v262 = vshrl.u32 %v261, 7
    %v263 = vsub.s32 3, %v262
    %v264 = vrot.slane %v247, %v263
    %v269 = vsub.f32 %v157, %v252
    %v270 = vsub.f32 %v158, %v252
    %v271 = vsub.f32 %v159, %v256
    %v272 = vsub.f32 %v160, %v256
    %v273 = vsub.f32 %v161, %v260
    %v274 = vsub.f32 %v162, %v260
    %v275 = vsub.f32 %v163, %v264
    %v276 = vsub.f32 %v164, %v264
    %v277 = vmul.f32 %v269, %v111
    %v278 = vmul.f32 %v270, %v115
    %v279 = vmul.f32 %v271, %v122
    %v280 = vmul.f32 %v272, %v126
    %v281 = vmul.f32 %v273, %v133
    %v282 = vmul.f32 %v274, %v137
    %v283 = vmul.f32 %v275, %v144
    %v284 = vmul.f32 %v276, %v148
    %v285 = vmul.f32 %v277, 1.442695
    %v286 = vpow.pop %v285
    %v287 = vmul.f32 %v278, 1.442695
    %v288 = vpow.pop %v287
    %v289 = vmul.f32 %v279, 1.442695
    %v290 = vpow.pop %v289
    %v291 = vmul.f32 %v280, 1.442695
    %v292 = vpow.pop %v291
    %v293 = vmul.f32 %v281, 1.442695
    %v294 = vpow.pop %v293
    %v295 = vmul.f32 %v282, 1.442695
    %v296 = vpow.pop %v295
    %v297 = vmul.f32 %v283, 1.442695
    %v298 = vpow.pop %v297
    %v299 = vmul.f32 %v284, 1.442695
    %v300 = vpow.pop %v299
    %v301 = vmul.f32 %v286, %v111
    %v302 = vmul.f32 %v288, %v115
    %v303 = vmul.f32 %v290, %v122
    %v304 = vmul.f32 %v292, %v126
    %v305 = vmul.f32 %v294, %v133
    %v306 = vmul.f32 %v296, %v137
    %v307 = vmul.f32 %v298, %v144
    %v308 = vmul.f32 %v300, %v148
    %317 = vset.pattern.permute.xlu0 0
    %318 = vperm.xlu0 %317, %v301
    %v319 = vpop.permute.xlu0 %318
    %320 = vset.pattern.permute.xlu0 0
    %321 = vperm.xlu0 %320, %v302
    %v322 = vpop.permute.xlu0 %321
    %323 = vset.pattern.permute.xlu0 0
    %324 = vperm.xlu0 %323, %v303
    %v325 = vpop.permute.xlu0 %324
    %326 = vset.pattern.permute.xlu0 0
    %327 = vperm.xlu0 %326, %v304
    %v328 = vpop.permute.xlu0 %327
    %329 = vset.pattern.permute.xlu0 0
    %330 = vperm.xlu0 %329, %v305
    %v331 = vpop.permute.xlu0 %330
    %332 = vset.pattern.permute.xlu0 0
    %333 = vperm.xlu0 %332, %v306
    %v334 = vpop.permute.xlu0 %333
    %335 = vset.pattern.permute.xlu0 0
    %336 = vperm.xlu0 %335, %v307
    %v337 = vpop.permute.xlu0 %336
    %338 = vset.pattern.permute.xlu0 0
    %339 = vperm.xlu0 %338, %v308
    %v340 = vpop.permute.xlu0 %339
    %v341 = vlaneseq
    %v342 = vshrl.u32 %v341, 7
    %v343 = vsub.s32 %v198, %v342
    %v344 = vrot.slane %v319, %v343
    %v345 = vlaneseq
    %v346 = vshrl.u32 %v345, 7
    %v347 = vsub.s32 %v203, %v346
    %v348 = vrot.slane %v322, %v347
    %v349 = vsel %vm208, %v348, %v344
    %v350 = vlaneseq
    %v351 = vshrl.u32 %v350, 7
    %v352 = vsub.s32 %v198, %v351
    %v353 = vrot.slane %v325, %v352
    %v354 = vlaneseq
    %v355 = vshrl.u32 %v354, 7
    %v356 = vsub.s32 %v203, %v355
    %v357 = vrot.slane %v328, %v356
    %v358 = vsel %vm208, %v357, %v353
    %v359 = vlaneseq
    %v360 = vshrl.u32 %v359, 7
    %v361 = vsub.s32 %v198, %v360
    %v362 = vrot.slane %v331, %v361
    %v363 = vlaneseq
    %v364 = vshrl.u32 %v363, 7
    %v365 = vsub.s32 %v203, %v364
    %v366 = vrot.slane %v334, %v365
    %v367 = vsel %vm208, %v366, %v362
    %v368 = vlaneseq
    %v369 = vshrl.u32 %v368, 7
    %v370 = vsub.s32 %v198, %v369
    %v371 = vrot.slane %v337, %v370
    %v372 = vlaneseq
    %v373 = vshrl.u32 %v372, 7
    %v374 = vsub.s32 %v203, %v373
    %v375 = vrot.slane %v340, %v374
    %v376 = vsel %vm208, %v375, %v371
    %v377 = vsel %vm237, %v358, %v349
    %v378 = vsel %vm239, %v367, %v377
    %v379 = vsel %vm241, %v376, %v378
    %v381 = vsel %vm244, %v379, 0.0
    %382 = vadd.xlane.f32.xlu0 %v381
    %v383 = vpop.xlane.xlu0 %382
    %v384 = vlog2.pop %v383
    %v385 = vmul.f32 %v384, 0.6931472
    %v387 = vlaneseq
    %v388 = vshrl.u32 %v387, 7
    %v389 = vsub.s32 0, %v388
    %v390 = vrot.slane %v385, %v389
    %v391 = vlaneseq
    %v392 = vshrl.u32 %v391, 7
    %v393 = vsub.s32 1, %v392
    %v394 = vrot.slane %v385, %v393
    %v395 = vlaneseq
    %v396 = vshrl.u32 %v395, 7
    %v397 = vsub.s32 2, %v396
    %v398 = vrot.slane %v385, %v397
    %v399 = vlaneseq
    %v400 = vshrl.u32 %v399, 7
    %v401 = vsub.s32 3, %v400
    %v402 = vrot.slane %v385, %v401
    %v407 = vsub.f32 %v277, %v390
    %v408 = vsub.f32 %v278, %v390
    %v409 = vsub.f32 %v279, %v394
    %v410 = vsub.f32 %v280, %v394
    %v411 = vsub.f32 %v281, %v398
    %v412 = vsub.f32 %v282, %v398
    %v413 = vsub.f32 %v283, %v402
    %v414 = vsub.f32 %v284, %v402
    %v415 = vmul.f32 %v407, %v111
    %v416 = vmul.f32 %v408, %v115
    %v417 = vmul.f32 %v409, %v122
    %v418 = vmul.f32 %v410, %v126
    %v419 = vmul.f32 %v411, %v133
    %v420 = vmul.f32 %v412, %v137
    %v421 = vmul.f32 %v413, %v144
    %v422 = vmul.f32 %v414, %v148
    %v423 = vmul.f32 %v415, 1.442695
    %v424 = vpow.pop %v423
    %v425 = vmul.f32 %v416, 1.442695
    %v426 = vpow.pop %v425
    %v427 = vmul.f32 %v417, 1.442695
    %v428 = vpow.pop %v427
    %v429 = vmul.f32 %v418, 1.442695
    %v430 = vpow.pop %v429
    %v431 = vmul.f32 %v419, 1.442695
    %v432 = vpow.pop %v431
    %v433 = vmul.f32 %v420, 1.442695
    %v434 = vpow.pop %v433
    %v435 = vmul.f32 %v421, 1.442695
    %v436 = vpow.pop %v435
    %v437 = vmul.f32 %v422, 1.442695
    %v438 = vpow.pop %v437
    %v439 = vmul.f32 %v424, %v111
    %v440 = vmul.f32 %v426, %v115
    %v441 = vmul.f32 %v428, %v122
    %v442 = vmul.f32 %v430, %v126
    %v443 = vmul.f32 %v432, %v133
    %v444 = vmul.f32 %v434, %v137
    %v445 = vmul.f32 %v436, %v144
    %v446 = vmul.f32 %v438, %v148
    %455 = vset.pattern.permute.xlu0 0
    %456 = vperm.xlu0 %455, %v439
    %v457 = vpop.permute.xlu0 %456
    %458 = vset.pattern.permute.xlu0 0
    %459 = vperm.xlu0 %458, %v440
    %v460 = vpop.permute.xlu0 %459
    %461 = vset.pattern.permute.xlu0 0
    %462 = vperm.xlu0 %461, %v441
    %v463 = vpop.permute.xlu0 %462
    %464 = vset.pattern.permute.xlu0 0
    %465 = vperm.xlu0 %464, %v442
    %v466 = vpop.permute.xlu0 %465
    %467 = vset.pattern.permute.xlu0 0
    %468 = vperm.xlu0 %467, %v443
    %v469 = vpop.permute.xlu0 %468
    %470 = vset.pattern.permute.xlu0 0
    %471 = vperm.xlu0 %470, %v444
    %v472 = vpop.permute.xlu0 %471
    %473 = vset.pattern.permute.xlu0 0
    %474 = vperm.xlu0 %473, %v445
    %v475 = vpop.permute.xlu0 %474
    %476 = vset.pattern.permute.xlu0 0
    %477 = vperm.xlu0 %476, %v446
    %v478 = vpop.permute.xlu0 %477
    %v479 = vlaneseq
    %v480 = vshrl.u32 %v479, 7
    %v481 = vsub.s32 %v198, %v480
    %v482 = vrot.slane %v457, %v481
    %v483 = vlaneseq
    %v484 = vshrl.u32 %v483, 7
    %v485 = vsub.s32 %v203, %v484
    %v486 = vrot.slane %v460, %v485
    %v487 = vsel %vm208, %v486, %v482
    %v488 = vlaneseq
    %v489 = vshrl.u32 %v488, 7
    %v490 = vsub.s32 %v198, %v489
    %v491 = vrot.slane %v463, %v490
    %v492 = vlaneseq
    %v493 = vshrl.u32 %v492, 7
    %v494 = vsub.s32 %v203, %v493
    %v495 = vrot.slane %v466, %v494
    %v496 = vsel %vm208, %v495, %v491
    %v497 = vlaneseq
    %v498 = vshrl.u32 %v497, 7
    %v499 = vsub.s32 %v198, %v498
    %v500 = vrot.slane %v469, %v499
    %v501 = vlaneseq
    %v502 = vshrl.u32 %v501, 7
    %v503 = vsub.s32 %v203, %v502
    %v504 = vrot.slane %v472, %v503
    %v505 = vsel %vm208, %v504, %v500
    %v506 = vlaneseq
    %v507 = vshrl.u32 %v506, 7
    %v508 = vsub.s32 %v198, %v507
    %v509 = vrot.slane %v475, %v508
    %v510 = vlaneseq
    %v511 = vshrl.u32 %v510, 7
    %v512 = vsub.s32 %v203, %v511
    %v513 = vrot.slane %v478, %v512
    %v514 = vsel %vm208, %v513, %v509
    %v515 = vsel %vm237, %v496, %v487
    %v516 = vsel %vm239, %v505, %v515
    %v517 = vsel %vm241, %v514, %v516
    %519 = vst.msk [vmem:[#allocation2] sm:$0xf] %vm244, %v517
    // Predicated region
    $region14: #{asreader_forward.5} parent=1 // pred_check
      _
    $region15: #{asreader_forward.5} parent=1 // pred_check_branch
      %521 = sbr.rel (0) target = $region17
    $region16: #{asreader_forward.5} parent=1 // pred_region
      %s523 = ssub.s32 64, 64
      %524 = vsyncadd [#allocation3], %s523
      %s526 = sshll.u32 [#allocation2], 4
      %s527 = int_to_ptr.vmem [resolvable:$true] %s526
      %529 = dma.vmem_to_hbm [thread:$0]  %s527, 64, %s3, [#allocation3]
    $region17: #{asreader_forward.5} parent=1 // pred_fallthru
      _
    // Predicated region
    $region18: #{asreader_forward.5} parent=1 // pred_check
      _
    $region19: #{asreader_forward.5} parent=1 // pred_check_branch
      %531 = sbr.rel (0) target = $region21
    $region20: #{asreader_forward.5} parent=1 // pred_region
      %532 = dma.done [#allocation3], 64
    $region21: #{asreader_forward.5} parent=1 // pred_fallthru
      _
    %533 = vsyncpa [#allocation3], 1

// kernel: asreader_forward.3
$region0: #{asreader_forward.3}
  #allocation0 [shape = 'u32[]', space=smem, size = 0x4, offset = 0x4, fixed_abs, tag = 'smem constant byte address 0x4 - core index']
  #allocation1 [shape = 'u32[144,128]{1,0:T(1,128)}', space=vmem, size = 0x12000, scoped, tag = 'internal scratch']
  %s0 = inlined_call_operand.vmem [shape: f32[2,6,4,16], index: 0, kind: input, shape index: {}]
  %s1 = inlined_call_operand.vmem [shape: f32[2,6,4,16], index: 1, kind: input, shape index: {}]
  %s2 = inlined_call_operand.vmem [shape: f32[2,6,4,16], index: 2, kind: input, shape index: {}]
  %s3 = inlined_call_operand.vmem [shape: f32[6,4,1], index: 3, kind: input, shape index: {}]
  %s4 = inlined_call_operand.vmem [shape: bf16[2,16,16], index: 4, kind: input, shape index: {}]
  %s5 = inlined_call_operand.vmem [shape: bf16[2,16,16], index: 5, kind: input, shape index: {}]
  %s6 = inlined_call_operand.vmem [shape: bf16[2,16,16], index: 6, kind: input, shape index: {}]
  %s7 = inlined_call_operand.vmem [shape: f32[2,1,16], index: 7, kind: input, shape index: {}]
  %s8 = inlined_call_operand.hbm [shape: f32[2,6,4,16], index: 8, kind: output, shape index: {0}]
  %s9 = inlined_call_operand.vmem [shape: f32[2,4,16], index: 9, kind: output, shape index: {1}]
  %10 = xla_tuple %s8, %s9
  %s11 = sld [smem:[#allocation0]]
  $region73: #{asreader_forward.3} parent=0
    _
  %s13 = ssub.s32 1, %s11
  %s14 = scalar_select 0, %s13, %s11
  $region1: #{asreader_forward.3} parent=0
    #allocation2 [shape = 'u8[24576]{0}', space=vmem, size = 0x6000, scoped, tag = 'output window, operand 0']
    #allocation3 [shape = 's32[2]{0}', space=sflag, size = 0x8, scoped, tag = 'scoped memory for asreader_forward.3']
    %15 = vsyncpa [#allocation3], 0
    %s16 = scalar_lea.sflag [#allocation3], 1
    %17 = vsyncpa %s16, 0
    loop: start=0, step=1, limit=4
    $region2: #{asreader_forward.3} parent=1 // loop_pre_header
      _
    $region3: #{asreader_forward.3} parent=1 // loop_header
      %s19 = sphi 0, %s23
      %p20 = scmp.ge.s32.totalorder %s19, 4
      %s29 = sphi 0, %s31
      %s32 = sphi 0, %s29
      %s33 = sphi 0, %s32
      %s49 = sphi 0, %s33
      %s55 = sphi 0, %s57
      %s58 = sphi 0, %s55
      %s59 = sphi 0, %s58
      %s75 = sphi 0, %s59
      %s81 = sphi 0, %s83
      %s84 = sphi 0, %s81
      %s85 = sphi 0, %s84
      %s101 = sphi 0, %s85
      %s105 = sphi 0, %s105
      %s107 = sphi 0, %s105
      %s108 = sphi 0, %s107
      %s122 = sphi 0, %s108
      %s128 = sphi 0, %s130
      %s131 = sphi 0, %s128
      %s132 = sphi 0, %s131
      %s148 = sphi 0, %s132
      %s154 = sphi 0, %s156
      %s157 = sphi 0, %s154
      %s158 = sphi 0, %s157
      %s174 = sphi 0, %s158
      %s180 = sphi 0, %s182
      %s183 = sphi 0, %s180
      %s184 = sphi 0, %s183
      %s200 = sphi 0, %s184
      %s206 = sphi 0, %s208
      %s209 = sphi 0, %s206
      %s210 = sphi 0, %s209
      %s226 = sphi 0, %s210
      %s232 = sphi 0, %s234
      %s235 = sphi 0, %s232
      %s236 = sphi 0, %s235
      %s252 = sphi 0, %s236
      %s258 = sphi 0, %s260
      %s261 = sphi 0, %s258
      %s262 = sphi 0, %s261
      %s278 = sphi 0, %s262
    $region4: #{asreader_forward.3} parent=1 // loop_header_branch
      %22 = sbr.rel (%p20) target = $region8
    $region5: #{asreader_forward.3} parent=1 // loop_body
      %s24 = ssub.s32 %s19, 1
      %s25 = ssub.s32 %s19, 2
      %s26 = sadd.s32 %s19, 1
      %s27 = ssub.s32 %s19, %s26
      %p28 = scmp.eq.s32.totalorder %s27, 0
      %s30 = sadd.s32 %s29, 1
      %s31 = scalar_select %p28, %s29, %s30
      %p34 = pneg %p28
      %p35 = scmp.eq.s32.totalorder %s19, 1
      %p36 = por %p34, %p35
      %p37 = scmp.ne.s32.totalorder %s29, %s32
      %p38 = scmp.eq.s32.totalorder %s19, 0
      %p39 = por %p37, %p38
      %p40 = scmp.ne.s32.totalorder %s29, %s32
      %p41 = scmp.eq.s32.totalorder %s24, 1
      %p42 = por %p40, %p41
      %p43 = scmp.ne.s32.totalorder %s32, %s33
      %p44 = scmp.eq.s32.totalorder %s24, 0
      %p45 = por %p43, %p44
      %p46 = scmp.ne.s32.totalorder %s32, %s33
      %p47 = scmp.eq.s32.totalorder %s25, 1
      %p48 = por %p46, %p47
      %p50 = scmp.ne.s32.totalorder %s33, %s49
      %p51 = scmp.eq.s32.totalorder %s25, 0
      %p52 = por %p50, %p51
      %s53 = ssub.s32 %s19, %s26
      %p54 = scmp.eq.s32.totalorder %s53, 0
      %s56 = sadd.s32 %s55, 1
      %s57 = scalar_select %p54, %s55, %s56
      %p60 = pneg %p54
      %p61 = scmp.eq.s32.totalorder %s19, 1
      %p62 = por %p60, %p61
      %p63 = scmp.ne.s32.totalorder %s55, %s58
      %p64 = scmp.eq.s32.totalorder %s19, 0
      %p65 = por %p63, %p64
      %p66 = scmp.ne.s32.totalorder %s55, %s58
      %p67 = scmp.eq.s32.totalorder %s24, 1
      %p68 = por %p66, %p67
      %p69 = scmp.ne.s32.totalorder %s58, %s59
      %p70 = scmp.eq.s32.totalorder %s24, 0
      %p71 = por %p69, %p70
      %p72 = scmp.ne.s32.totalorder %s58, %s59
      %p73 = scmp.eq.s32.totalorder %s25, 1
      %p74 = por %p72, %p73
      %p76 = scmp.ne.s32.totalorder %s59, %s75
      %p77 = scmp.eq.s32.totalorder %s25, 0
      %p78 = por %p76, %p77
      %s79 = ssub.s32 %s19, %s26
      %p80 = scmp.eq.s32.totalorder %s79, 0
      %s82 = sadd.s32 %s81, 1
      %s83 = scalar_select %p80, %s81, %s82
      %p86 = pneg %p80
      %p87 = scmp.eq.s32.totalorder %s19, 1
      %p88 = por %p86, %p87
      %p89 = scmp.ne.s32.totalorder %s81, %s84
      %p90 = scmp.eq.s32.totalorder %s19, 0
      %p91 = por %p89, %p90
      %p92 = scmp.ne.s32.totalorder %s81, %s84
      %p93 = scmp.eq.s32.totalorder %s24, 1
      %p94 = por %p92, %p93
      %p95 = scmp.ne.s32.totalorder %s84, %s85
      %p96 = scmp.eq.s32.totalorder %s24, 0
      %p97 = por %p95, %p96
      %p98 = scmp.ne.s32.totalorder %s84, %s85
      %p99 = scmp.eq.s32.totalorder %s25, 1
      %p100 = por %p98, %p99
      %p102 = scmp.ne.s32.totalorder %s85, %s101
      %p103 = scmp.eq.s32.totalorder %s25, 0
      %p104 = por %p102, %p103
      %s106 = sadd.s32 %s105, 1
      %p109 = scmp.eq.s32.totalorder %s19, 1
      %p110 = scmp.ne.s32.totalorder %s105, %s107
      %p111 = scmp.eq.s32.totalorder %s19, 0
      %p112 = por %p110, %p111
      %p113 = scmp.ne.s32.totalorder %s105, %s107
      %p114 = scmp.eq.s32.totalorder %s24, 1
      %p115 = por %p113, %p114
      %p116 = scmp.ne.s32.totalorder %s107, %s108
      %p117 = scmp.eq.s32.totalorder %s24, 0
      %p118 = por %p116, %p117
      %p119 = scmp.ne.s32.totalorder %s107, %s108
      %p120 = scmp.eq.s32.totalorder %s25, 1
      %p121 = por %p119, %p120
      %p123 = scmp.ne.s32.totalorder %s108, %s122
      %p124 = scmp.eq.s32.totalorder %s25, 0
      %p125 = por %p123, %p124
      %s126 = ssub.s32 %s19, %s26
      %p127 = scmp.eq.s32.totalorder %s126, 0
      %s129 = sadd.s32 %s128, 1
      %s130 = scalar_select %p127, %s128, %s129
      %p133 = pneg %p127
      %p134 = scmp.eq.s32.totalorder %s19, 1
      %p135 = por %p133, %p134
      %p136 = scmp.ne.s32.totalorder %s128, %s131
      %p137 = scmp.eq.s32.totalorder %s19, 0
      %p138 = por %p136, %p137
      %p139 = scmp.ne.s32.totalorder %s128, %s131
      %p140 = scmp.eq.s32.totalorder %s24, 1
      %p141 = por %p139, %p140
      %p142 = scmp.ne.s32.totalorder %s131, %s132
      %p143 = scmp.eq.s32.totalorder %s24, 0
      %p144 = por %p142, %p143
      %p145 = scmp.ne.s32.totalorder %s131, %s132
      %p146 = scmp.eq.s32.totalorder %s25, 1
      %p147 = por %p145, %p146
      %p149 = scmp.ne.s32.totalorder %s132, %s148
      %p150 = scmp.eq.s32.totalorder %s25, 0
      %p151 = por %p149, %p150
      %s152 = ssub.s32 %s19, %s26
      %p153 = scmp.eq.s32.totalorder %s152, 0
      %s155 = sadd.s32 %s154, 1
      %s156 = scalar_select %p153, %s154, %s155
      %p159 = pneg %p153
      %p160 = scmp.eq.s32.totalorder %s19, 1
      %p161 = por %p159, %p160
      %p162 = scmp.ne.s32.totalorder %s154, %s157
      %p163 = scmp.eq.s32.totalorder %s19, 0
      %p164 = por %p162, %p163
      %p165 = scmp.ne.s32.totalorder %s154, %s157
      %p166 = scmp.eq.s32.totalorder %s24, 1
      %p167 = por %p165, %p166
      %p168 = scmp.ne.s32.totalorder %s157, %s158
      %p169 = scmp.eq.s32.totalorder %s24, 0
      %p170 = por %p168, %p169
      %p171 = scmp.ne.s32.totalorder %s157, %s158
      %p172 = scmp.eq.s32.totalorder %s25, 1
      %p173 = por %p171, %p172
      %p175 = scmp.ne.s32.totalorder %s158, %s174
      %p176 = scmp.eq.s32.totalorder %s25, 0
      %p177 = por %p175, %p176
      %s178 = ssub.s32 %s19, %s26
      %p179 = scmp.eq.s32.totalorder %s178, 0
      %s181 = sadd.s32 %s180, 1
      %s182 = scalar_select %p179, %s180, %s181
      %p185 = pneg %p179
      %p186 = scmp.eq.s32.totalorder %s19, 1
      %p187 = por %p185, %p186
      %p188 = scmp.ne.s32.totalorder %s180, %s183
      %p189 = scmp.eq.s32.totalorder %s19, 0
      %p190 = por %p188, %p189
      %p191 = scmp.ne.s32.totalorder %s180, %s183
      %p192 = scmp.eq.s32.totalorder %s24, 1
      %p193 = por %p191, %p192
      %p194 = scmp.ne.s32.totalorder %s183, %s184
      %p195 = scmp.eq.s32.totalorder %s24, 0
      %p196 = por %p194, %p195
      %p197 = scmp.ne.s32.totalorder %s183, %s184
      %p198 = scmp.eq.s32.totalorder %s25, 1
      %p199 = por %p197, %p198
      %p201 = scmp.ne.s32.totalorder %s184, %s200
      %p202 = scmp.eq.s32.totalorder %s25, 0
      %p203 = por %p201, %p202
      %s204 = ssub.s32 %s19, %s26
      %p205 = scmp.eq.s32.totalorder %s204, 0
      %s207 = sadd.s32 %s206, 1
      %s208 = scalar_select %p205, %s206, %s207
      %p211 = pneg %p205
      %p212 = scmp.eq.s32.totalorder %s19, 1
      %p213 = por %p211, %p212
      %p214 = scmp.ne.s32.totalorder %s206, %s209
      %p215 = scmp.eq.s32.totalorder %s19, 0
      %p216 = por %p214, %p215
      %p217 = scmp.ne.s32.totalorder %s206, %s209
      %p218 = scmp.eq.s32.totalorder %s24, 1
      %p219 = por %p217, %p218
      %p220 = scmp.ne.s32.totalorder %s209, %s210
      %p221 = scmp.eq.s32.totalorder %s24, 0
      %p222 = por %p220, %p221
      %p223 = scmp.ne.s32.totalorder %s209, %s210
      %p224 = scmp.eq.s32.totalorder %s25, 1
      %p225 = por %p223, %p224
      %p227 = scmp.ne.s32.totalorder %s210, %s226
      %p228 = scmp.eq.s32.totalorder %s25, 0
      %p229 = por %p227, %p228
      %s230 = ssub.s32 %s19, %s26
      %p231 = scmp.eq.s32.totalorder %s230, 0
      %s233 = sadd.s32 %s232, 1
      %s234 = scalar_select %p231, %s232, %s233
      %p237 = pneg %p231
      %p238 = scmp.eq.s32.totalorder %s19, 1
      %p239 = por %p237, %p238
      %p240 = scmp.ne.s32.totalorder %s232, %s235
      %p241 = scmp.eq.s32.totalorder %s19, 0
      %p242 = por %p240, %p241
      %p243 = scmp.ne.s32.totalorder %s232, %s235
      %p244 = scmp.eq.s32.totalorder %s24, 1
      %p245 = por %p243, %p244
      %p246 = scmp.ne.s32.totalorder %s235, %s236
      %p247 = scmp.eq.s32.totalorder %s24, 0
      %p248 = por %p246, %p247
      %p249 = scmp.ne.s32.totalorder %s235, %s236
      %p250 = scmp.eq.s32.totalorder %s25, 1
      %p251 = por %p249, %p250
      %p253 = scmp.ne.s32.totalorder %s236, %s252
      %p254 = scmp.eq.s32.totalorder %s25, 0
      %p255 = por %p253, %p254
      %s256 = ssub.s32 %s19, %s26
      %p257 = scmp.eq.s32.totalorder %s256, 0
      %s259 = sadd.s32 %s258, 1
      %s260 = scalar_select %p257, %s258, %s259
      %p263 = pneg %p257
      %p264 = scmp.eq.s32.totalorder %s19, 1
      %p265 = por %p263, %p264
      %p266 = scmp.ne.s32.totalorder %s258, %s261
      %p267 = scmp.eq.s32.totalorder %s19, 0
      %p268 = por %p266, %p267
      %p269 = scmp.ne.s32.totalorder %s258, %s261
      %p270 = scmp.eq.s32.totalorder %s24, 1
      %p271 = por %p269, %p270
      %p272 = scmp.ne.s32.totalorder %s261, %s262
      %p273 = scmp.eq.s32.totalorder %s24, 0
      %p274 = por %p272, %p273
      %p275 = scmp.ne.s32.totalorder %s261, %s262
      %p276 = scmp.eq.s32.totalorder %s25, 1
      %p277 = por %p275, %p276
      %p279 = scmp.ne.s32.totalorder %s262, %s278
      %p280 = scmp.eq.s32.totalorder %s25, 0
      %p281 = por %p279, %p280
      %p282 = scmp.le.s32.totalorder 1, %s19
      %p283 = scmp.lt.s32.totalorder %s19, 3
      %p284 = pnand %p282, %p283
      %p285 = pneg %p284
      // Predicated region
      $region9: #{asreader_forward.3} parent=5 // pred_check
        _
      $region10: #{asreader_forward.3} parent=5 // pred_check_branch
        %287 = sbr.rel (%p284) target = $region12
      $region11: #{asreader_forward.3} parent=5 // pred_region
        %s288 = ssub.s32 %s19, 1
        // Predicated region
        $region13: #{asreader_forward.3} parent=11 // pred_check
          %p289 = pneg %p118
        $region14: #{asreader_forward.3} parent=11 // pred_check_branch
          %291 = sbr.rel (%p289) target = $region16
        $region15: #{asreader_forward.3} parent=11 // pred_region
          _
        $region16: #{asreader_forward.3} parent=11 // pred_fallthru
          _
      $region12: #{asreader_forward.3} parent=5 // pred_fallthru
        _
      %p292 = scmp.lt.s32.totalorder %s19, 2
      // Predicated region
      $region17: #{asreader_forward.3} parent=5 // pred_check
        %p293 = pneg %p292
      $region18: #{asreader_forward.3} parent=5 // pred_check_branch
        %295 = sbr.rel (%p293) target = $region20
      $region19: #{asreader_forward.3} parent=5 // pred_region
        // Predicated region
        $region21: #{asreader_forward.3} parent=19 // pred_check
          %p296 = pneg %p39
        $region22: #{asreader_forward.3} parent=19 // pred_check_branch
          %298 = sbr.rel (%p296) target = $region24
        $region23: #{asreader_forward.3} parent=19 // pred_region
          %p299 = scmp.lt.s32.totalorder %s19, 1
          %s300 = scalar_select %p299, %s19, 1
          %s301 = smul.addr %s300, 6
          %s302 = smul.addr %s301, 4
          %s303 = scalar_lea.vmem %s0, %s302
        $region24: #{asreader_forward.3} parent=19 // pred_fallthru
          _
        // Predicated region
        $region25: #{asreader_forward.3} parent=19 // pred_check
          %p304 = pneg %p65
        $region26: #{asreader_forward.3} parent=19 // pred_check_branch
          %306 = sbr.rel (%p304) target = $region28
        $region27: #{asreader_forward.3} parent=19 // pred_region
          %p307 = scmp.lt.s32.totalorder %s19, 1
          %s308 = scalar_select %p307, %s19, 1
          %s309 = smul.addr %s308, 6
          %s310 = smul.addr %s309, 4
          %s311 = scalar_lea.vmem %s1, %s310
        $region28: #{asreader_forward.3} parent=19 // pred_fallthru
          _
        // Predicated region
        $region29: #{asreader_forward.3} parent=19 // pred_check
          %p312 = pneg %p91
        $region30: #{asreader_forward.3} parent=19 // pred_check_branch
          %314 = sbr.rel (%p312) target = $region32
        $region31: #{asreader_forward.3} parent=19 // pred_region
          %p315 = scmp.lt.s32.totalorder %s19, 1
          %s316 = scalar_select %p315, %s19, 1
          %s317 = smul.addr %s316, 6
          %s318 = smul.addr %s317, 4
          %s319 = scalar_lea.vmem %s2, %s318
        $region32: #{asreader_forward.3} parent=19 // pred_fallthru
          _
        // Predicated region
        $region33: #{asreader_forward.3} parent=19 // pred_check
          %p320 = pneg %p138
        $region34: #{asreader_forward.3} parent=19 // pred_check_branch
          %322 = sbr.rel (%p320) target = $region36
        $region35: #{asreader_forward.3} parent=19 // pred_region
          %p323 = scmp.lt.s32.totalorder %s19, 1
          %s324 = scalar_select %p323, %s19, 1
          %s325 = smul.addr %s324, 2
          %s326 = smul.addr %s325, 4
          %s327 = scalar_lea.vmem %s4, %s326
        $region36: #{asreader_forward.3} parent=19 // pred_fallthru
          _
        // Predicated region
        $region37: #{asreader_forward.3} parent=19 // pred_check
          %p328 = pneg %p164
        $region38: #{asreader_forward.3} parent=19 // pred_check_branch
          %330 = sbr.rel (%p328) target = $region40
        $region39: #{asreader_forward.3} parent=19 // pred_region
          %p331 = scmp.lt.s32.totalorder %s19, 1
          %s332 = scalar_select %p331, %s19, 1
          %s333 = smul.addr %s332, 2
          %s334 = smul.addr %s333, 4
          %s335 = scalar_lea.vmem %s5, %s334
        $region40: #{asreader_forward.3} parent=19 // pred_fallthru
          _
        // Predicated region
        $region41: #{asreader_forward.3} parent=19 // pred_check
          %p336 = pneg %p190
        $region42: #{asreader_forward.3} parent=19 // pred_check_branch
          %338 = sbr.rel (%p336) target = $region44
        $region43: #{asreader_forward.3} parent=19 // pred_region
          %p339 = scmp.lt.s32.totalorder %s19, 1
          %s340 = scalar_select %p339, %s19, 1
          %s341 = smul.addr %s340, 2
          %s342 = smul.addr %s341, 4
          %s343 = scalar_lea.vmem %s6, %s342
        $region44: #{asreader_forward.3} parent=19 // pred_fallthru
          _
        // Predicated region
        $region45: #{asreader_forward.3} parent=19 // pred_check
          %p344 = pneg %p216
        $region46: #{asreader_forward.3} parent=19 // pred_check_branch
          %346 = sbr.rel (%p344) target = $region48
        $region47: #{asreader_forward.3} parent=19 // pred_region
          %p347 = scmp.lt.s32.totalorder %s19, 1
          %s348 = scalar_select %p347, %s19, 1
          %s349 = scalar_lea.vmem %s7, %s348
        $region48: #{asreader_forward.3} parent=19 // pred_fallthru
          _
      $region20: #{asreader_forward.3} parent=5 // pred_fallthru
        _
      %p350 = scmp.le.s32.totalorder 1, %s19
      %p351 = scmp.lt.s32.totalorder %s19, 3
      %p352 = pnand %p350, %p351
      %p353 = pneg %p352
      // Predicated region
      $region49: #{asreader_forward.3} parent=5 // pred_check
        _
      $region50: #{asreader_forward.3} parent=5 // pred_check_branch
        %355 = sbr.rel (%p352) target = $region52
      $region51: #{asreader_forward.3} parent=5 // pred_region
        %s356 = ssub.s32 %s19, 1
        %p357 = scmp.lt.s32.totalorder %s24, 1
        %s358 = scalar_select %p357, %s24, 1
        %s359 = smul.addr %s358, 6
        %s360 = smul.addr %s359, 4
        %s361 = scalar_lea.vmem %s0, %s360
        %p362 = pneg %p45
        %p363 = pneg %p42
        %p364 = scmp.lt.s32.totalorder %s24, 1
        %s365 = scalar_select %p364, %s24, 1
        %s366 = smul.addr %s365, 6
        %s367 = smul.addr %s366, 4
        %s368 = scalar_lea.vmem %s1, %s367
        %p369 = pneg %p71
        %p370 = pneg %p68
        %p371 = scmp.lt.s32.totalorder %s24, 1
        %s372 = scalar_select %p371, %s24, 1
        %s373 = smul.addr %s372, 6
        %s374 = smul.addr %s373, 4
        %s375 = scalar_lea.vmem %s2, %s374
        %p376 = pneg %p97
        %p377 = pneg %p94
        %p378 = pneg %p118
        %p379 = pneg %p115
        %p380 = scmp.lt.s32.totalorder %s24, 1
        %s381 = scalar_select %p380, %s24, 1
        %s382 = smul.addr %s381, 2
        %s383 = smul.addr %s382, 4
        %s384 = scalar_lea.vmem %s4, %s383
        %p385 = pneg %p144
        %p386 = pneg %p141
        %p387 = scmp.lt.s32.totalorder %s24, 1
        %s388 = scalar_select %p387, %s24, 1
        %s389 = smul.addr %s388, 2
        %s390 = smul.addr %s389, 4
        %s391 = scalar_lea.vmem %s5, %s390
        %p392 = pneg %p170
        %p393 = pneg %p167
        %p394 = scmp.lt.s32.totalorder %s24, 1
        %s395 = scalar_select %p394, %s24, 1
        %s396 = smul.addr %s395, 2
        %s397 = smul.addr %s396, 4
        %s398 = scalar_lea.vmem %s6, %s397
        %p399 = pneg %p196
        %p400 = pneg %p193
        %p401 = scmp.lt.s32.totalorder %s24, 1
        %s402 = scalar_select %p401, %s24, 1
        %s403 = scalar_lea.vmem %s7, %s402
        %p404 = pneg %p222
        %p405 = pneg %p219
        %p406 = pneg %p248
        %p407 = pneg %p245
        %s408 = sand.u32 %s235, 1
        %s409 = scalar_lea.sflag [#allocation3], %s408
        %s410 = sand.u32 %s235, 1
        %s411 = smul.addr %s410, 24
        %s412 = scalar_lea.vmem [#allocation2], %s411
        %p413 = pneg %p274
        %p414 = pneg %p271
        %p415 = scmp.lt.s32.totalorder %s24, 1
        %s416 = scalar_select %p415, %s24, 1
        %s417 = smul.addr %s416, 4
        %s418 = scalar_lea.vmem %s9, %s417
        %p419 = scmp.lt.s32.totalorder %s24, 1
        %s420 = scalar_select %p419, %s24, 1
        %s421 = smul.addr %s420, 6
        %s422 = smul.addr %s421, 4
        %s423 = scalar_lea.vmem %s0, %s422
        %p424 = scmp.lt.s32.totalorder %s24, 1
        %s425 = scalar_select %p424, %s24, 1
        %s426 = smul.addr %s425, 6
        %s427 = smul.addr %s426, 4
        %s428 = scalar_lea.vmem %s1, %s427
        %p429 = scmp.lt.s32.totalorder %s24, 1
        %s430 = scalar_select %p429, %s24, 1
        %s431 = smul.addr %s430, 6
        %s432 = smul.addr %s431, 4
        %s433 = scalar_lea.vmem %s2, %s432
        %p434 = scmp.lt.s32.totalorder %s24, 1
        %s435 = scalar_select %p434, %s24, 1
        %s436 = smul.addr %s435, 2
        %s437 = smul.addr %s436, 4
        %s438 = scalar_lea.vmem %s4, %s437
        %p439 = scmp.lt.s32.totalorder %s24, 1
        %s440 = scalar_select %p439, %s24, 1
        %s441 = smul.addr %s440, 2
        %s442 = smul.addr %s441, 4
        %s443 = scalar_lea.vmem %s5, %s442
        %p444 = scmp.lt.s32.totalorder %s24, 1
        %s445 = scalar_select %p444, %s24, 1
        %s446 = smul.addr %s445, 2
        %s447 = smul.addr %s446, 4
        %s448 = scalar_lea.vmem %s6, %s447
        %p449 = scmp.lt.s32.totalorder %s24, 1
        %s450 = scalar_select %p449, %s24, 1
        %s451 = scalar_lea.vmem %s7, %s450
        %p452 = scmp.lt.s32.totalorder %s24, 1
        %s453 = scalar_select %p452, %s24, 1
        %s454 = smul.addr %s453, 4
        %s455 = scalar_lea.vmem %s9, %s454
        %p457 = scmp.eq.s32.totalorder %s24, 0
        %s458 = scalar_select %p457, 0, 5
        %s459 = scalar_select %p457, 1, 4294967295
        %v460 = vld [vmem:[%s438] sm:$0xf]
        %v461 = vld [vmem:[%s438 + $0x4] sm:$0xf]
        %v462 = vld [vmem:[%s443] sm:$0xf]
        %v463 = vld [vmem:[%s443 + $0x4] sm:$0xf]
        %v464 = vld [vmem:[%s448] sm:$0xf]
        %v465 = vld [vmem:[%s448 + $0x4] sm:$0xf]
        %v466 = vld [vmem:[%s451] sm:$0x1]
        %s467 = smul.u32 %s458, 4
        %s468 = scalar_lea.vmem %s3, %s467
        %v469 = vld [vmem:[%s468] sm:$0xf]
        %s470 = scalar_lea.vmem %s423, %s467
        %v471 = vld [vmem:[%s470] sm:$0xf]
        %v474 = vunpack.c.l.b16 %v460
        %v475 = vunpack.c.l.b16 %v461
        %v476 = vpack.c.b16 %v475, %v474
        %vm478 = vcmask 130048
        %v480 = vsel %vm478, 0, 0
        %482 = vmatprep.subr.bf16.mxu0 0
        %483 = vmatpush1.bf16.msra.mxu0 %v476
        %484 = vmatprep.subr.bf16.mxu0 0
        %485 = vmatpush1.bf16.msra.mxu0 0
        %486 = vmatprep.subr.bf16.mxu0 0
        %487 = vmatpush1.bf16.msra.mxu0 0
        %488 = vmatprep.subr.bf16.mxu0 0
        %489 = vmatpush1.bf16.msra.mxu0 0
        %490 = vmatprep.subr.bf16.mxu0 0
        %491 = vmatpush1.bf16.msra.mxu0 0
        %492 = vmatprep.subr.bf16.mxu0 0
        %493 = vmatpush1.bf16.msra.mxu0 0
        %494 = vmatprep.subr.bf16.mxu0 0
        %495 = vmatpush1.bf16.msra.mxu0 0
        %496 = vmatprep.subr.bf16.mxu0 0
        %497 = vmatpush1.bf16.msra.mxu0 0
        %498 = vmatprep.subr.bf16.mxu0 0
        %499 = vmatpush1.bf16.msra.mxu0 0
        %500 = vmatprep.subr.bf16.mxu0 0
        %501 = vmatpush1.bf16.msra.mxu0 0
        %502 = vmatprep.subr.bf16.mxu0 0
        %503 = vmatpush1.bf16.msra.mxu0 0
        %504 = vmatprep.subr.bf16.mxu0 0
        %505 = vmatpush1.bf16.msra.mxu0 0
        %506 = vmatprep.subr.bf16.mxu0 0
        %507 = vmatpush1.bf16.msra.mxu0 0
        %508 = vmatprep.subr.bf16.mxu0 0
        %509 = vmatpush1.bf16.msra.mxu0 0
        %510 = vmatprep.subr.bf16.mxu0 0
        %511 = vmatpush1.bf16.msra.mxu0 0
        %512 = vmatprep.subr.bf16.mxu0 0
        %513 = vmatpush1.bf16.msra.mxu0 0
        %514 = vmatprep.mubr.bf16.mxu0 0
        %515 = vmatmul.mubr.bf16.gmra.mrb[0].mxu0 %v480
        %v516 = vpop.f32.mrb[0].mxu0
        %v517 = vadd.f32 0.0, %v516
        %v518 = vpop.f32.mrb[0].mxu0
        %v519 = vpop.f32.mrb[0].mxu0
        %v520 = vpop.f32.mrb[0].mxu0
        %521 = vdwg.mxu0
        %v522 = vadd.f32 %v471, %v517
        %v523 = vxor.u32 %v522, 2147483648
        %v524 = vmul.f32 %v523, 1.442695
        %v525 = vpow.pop %v524
        %v526 = vadd.f32 %v525, 1.0
        %v527 = vrcp.pop %v526
        %v528 = vmul.f32 1.0, %v527
        %s529 = scalar_lea.vmem %s428, %s467
        %v530 = vld [vmem:[%s529] sm:$0xf]
        %v533 = vunpack.c.l.b16 %v462
        %v534 = vunpack.c.l.b16 %v463
        %v535 = vpack.c.b16 %v534, %v533
        %537 = vmatprep.subr.bf16.mxu0 0
        %538 = vmatpush1.bf16.msra.mxu0 %v535
        %539 = vmatprep.subr.bf16.mxu0 0
        %540 = vmatpush1.bf16.msra.mxu0 0
        %541 = vmatprep.subr.bf16.mxu0 0
        %542 = vmatpush1.bf16.msra.mxu0 0
        %543 = vmatprep.subr.bf16.mxu0 0
        %544 = vmatpush1.bf16.msra.mxu0 0
        %545 = vmatprep.subr.bf16.mxu0 0
        %546 = vmatpush1.bf16.msra.mxu0 0
        %547 = vmatprep.subr.bf16.mxu0 0
        %548 = vmatpush1.bf16.msra.mxu0 0
        %549 = vmatprep.subr.bf16.mxu0 0
        %550 = vmatpush1.bf16.msra.mxu0 0
        %551 = vmatprep.subr.bf16.mxu0 0
        %552 = vmatpush1.bf16.msra.mxu0 0
        %553 = vmatprep.subr.bf16.mxu0 0
        %554 = vmatpush1.bf16.msra.mxu0 0
        %555 = vmatprep.subr.bf16.mxu0 0
        %556 = vmatpush1.bf16.msra.mxu0 0
        %557 = vmatprep.subr.bf16.mxu0 0
        %558 = vmatpush1.bf16.msra.mxu0 0
        %559 = vmatprep.subr.bf16.mxu0 0
        %560 = vmatpush1.bf16.msra.mxu0 0
        %561 = vmatprep.subr.bf16.mxu0 0
        %562 = vmatpush1.bf16.msra.mxu0 0
        %563 = vmatprep.subr.bf16.mxu0 0
        %564 = vmatpush1.bf16.msra.mxu0 0
        %565 = vmatprep.subr.bf16.mxu0 0
        %566 = vmatpush1.bf16.msra.mxu0 0
        %567 = vmatprep.subr.bf16.mxu0 0
        %568 = vmatpush1.bf16.msra.mxu0 0
        %569 = vmatprep.mubr.bf16.mxu0 0
        %570 = vmatmul.mubr.bf16.gmra.mrb[0].mxu0 %v480
        %v571 = vpop.f32.mrb[0].mxu0
        %v572 = vadd.f32 0.0, %v571
        %v573 = vpop.f32.mrb[0].mxu0
        %v574 = vpop.f32.mrb[0].mxu0
        %v575 = vpop.f32.mrb[0].mxu0
        %576 = vdwg.mxu0
        %v577 = vadd.f32 %v530, %v572
        %v578 = vxor.u32 %v577, 2147483648
        %v579 = vmul.f32 %v578, 1.442695
        %v580 = vpow.pop %v579
        %v581 = vadd.f32 %v580, 1.0
        %v582 = vrcp.pop %v581
        %v583 = vmul.f32 1.0, %v582
        %s584 = scalar_lea.vmem %s433, %s467
        %v585 = vld [vmem:[%s584] sm:$0xf]
        %v587 = vlaneseq
        %v588 = vshrl.u32 %v587, 7
        %v589 = vsub.s32 0, %v588
        %v590 = vrot.slane %v466, %v589
        %v594 = vunpack.c.l.b16 %v464
        %v595 = vunpack.c.l.b16 %v465
        %v596 = vpack.c.b16 %v595, %v594
        %598 = vmatprep.subr.bf16.mxu0 0
        %599 = vmatpush1.bf16.msra.mxu0 %v596
        %600 = vmatprep.subr.bf16.mxu0 0
        %601 = vmatpush1.bf16.msra.mxu0 0
        %602 = vmatprep.subr.bf16.mxu0 0
        %603 = vmatpush1.bf16.msra.mxu0 0
        %604 = vmatprep.subr.bf16.mxu0 0
        %605 = vmatpush1.bf16.msra.mxu0 0
        %606 = vmatprep.subr.bf16.mxu0 0
        %607 = vmatpush1.bf16.msra.mxu0 0
        %608 = vmatprep.subr.bf16.mxu0 0
        %609 = vmatpush1.bf16.msra.mxu0 0
        %610 = vmatprep.subr.bf16.mxu0 0
        %611 = vmatpush1.bf16.msra.mxu0 0
        %612 = vmatprep.subr.bf16.mxu0 0
        %613 = vmatpush1.bf16.msra.mxu0 0
        %614 = vmatprep.subr.bf16.mxu0 0
        %615 = vmatpush1.bf16.msra.mxu0 0
        %616 = vmatprep.subr.bf16.mxu0 0
        %617 = vmatpush1.bf16.msra.mxu0 0
        %618 = vmatprep.subr.bf16.mxu0 0
        %619 = vmatpush1.bf16.msra.mxu0 0
        %620 = vmatprep.subr.bf16.mxu0 0
        %621 = vmatpush1.bf16.msra.mxu0 0
        %622 = vmatprep.subr.bf16.mxu0 0
        %623 = vmatpush1.bf16.msra.mxu0 0
        %624 = vmatprep.subr.bf16.mxu0 0
        %625 = vmatpush1.bf16.msra.mxu0 0
        %626 = vmatprep.subr.bf16.mxu0 0
        %627 = vmatpush1.bf16.msra.mxu0 0
        %628 = vmatprep.subr.bf16.mxu0 0
        %629 = vmatpush1.bf16.msra.mxu0 0
        %630 = vmatprep.mubr.bf16.mxu0 0
        %631 = vmatmul.mubr.bf16.gmra.mrb[0].mxu0 %v480
        %v632 = vpop.f32.mrb[0].mxu0
        %v633 = vadd.f32 %v590, %v632
        %v634 = vpop.f32.mrb[0].mxu0
        %v635 = vpop.f32.mrb[0].mxu0
        %v636 = vpop.f32.mrb[0].mxu0
        %637 = vdwg.mxu0
        %v638 = vmul.f32 %v528, %v633
        %v639 = vadd.f32 %v585, %v638
        %v640 = vtanh.pop %v639
        %v641 = vsub.f32 1.0, %v583
        %v642 = vmul.f32 %v641, %v640
        %v643 = vmul.f32 %v583, 0.0
        %v644 = vadd.f32 %v642, %v643
        %646 = vset.pattern.permute.xlu0 0
        %647 = vperm.xlu0 %646, %v469
        %v648 = vpop.permute.xlu0 %647
        %v650 = vmul.f32 %v648, %v644
        %v651 = vadd.f32 %v650, 0.0
        %v652 = vmul.f32 %v651, %v648
        %s653 = scalar_lea.vmem %s412, %s467 [#allocation2]
        %vm654 = vcmask 125952
        %655 = vst.msk [vmem:[%s653] sm:$0xf] %vm654, %v652
        %s656 = sadd.s32 %s458, %s459
        %s657 = smul.u32 %s656, 4
        %s658 = scalar_lea.vmem %s3, %s657
        %v659 = vld [vmem:[%s658] sm:$0xf]
        %v660 = vpack.c.bf16 %v651, %v651
        %s661 = scalar_lea.vmem %s423, %s657
        %v662 = vld [vmem:[%s661] sm:$0xf]
        %v664 = vsel %vm478, %v660, 0
        %666 = vmatprep.subr.bf16.mxu0 0
        %667 = vmatpush1.bf16.msra.mxu0 %v476
        %668 = vmatprep.subr.bf16.mxu0 0
        %669 = vmatpush1.bf16.msra.mxu0 0
        %670 = vmatprep.subr.bf16.mxu0 0
        %671 = vmatpush1.bf16.msra.mxu0 0
        %672 = vmatprep.subr.bf16.mxu0 0
        %673 = vmatpush1.bf16.msra.mxu0 0
        %674 = vmatprep.subr.bf16.mxu0 0
        %675 = vmatpush1.bf16.msra.mxu0 0
        %676 = vmatprep.subr.bf16.mxu0 0
        %677 = vmatpush1.bf16.msra.mxu0 0
        %678 = vmatprep.subr.bf16.mxu0 0
        %679 = vmatpush1.bf16.msra.mxu0 0
        %680 = vmatprep.subr.bf16.mxu0 0
        %681 = vmatpush1.bf16.msra.mxu0 0
        %682 = vmatprep.subr.bf16.mxu0 0
        %683 = vmatpush1.bf16.msra.mxu0 0
        %684 = vmatprep.subr.bf16.mxu0 0
        %685 = vmatpush1.bf16.msra.mxu0 0
        %686 = vmatprep.subr.bf16.mxu0 0
        %687 = vmatpush1.bf16.msra.mxu0 0
        %688 = vmatprep.subr.bf16.mxu0 0
        %689 = vmatpush1.bf16.msra.mxu0 0
        %690 = vmatprep.subr.bf16.mxu0 0
        %691 = vmatpush1.bf16.msra.mxu0 0
        %692 = vmatprep.subr.bf16.mxu0 0
        %693 = vmatpush1.bf16.msra.mxu0 0
        %694 = vmatprep.subr.bf16.mxu0 0
        %695 = vmatpush1.bf16.msra.mxu0 0
        %696 = vmatprep.subr.bf16.mxu0 0
        %697 = vmatpush1.bf16.msra.mxu0 0
        %698 = vmatprep.mubr.bf16.mxu0 0
        %699 = vmatmul.mubr.bf16.gmra.mrb[0].mxu0 %v664
        %v700 = vpop.f32.mrb[0].mxu0
        %v701 = vadd.f32 0.0, %v700
        %v702 = vpop.f32.mrb[0].mxu0
        %v703 = vpop.f32.mrb[0].mxu0
        %v704 = vpop.f32.mrb[0].mxu0
        %705 = vdwg.mxu0
        %v706 = vadd.f32 %v662, %v701
        %v707 = vxor.u32 %v706, 2147483648
        %v708 = vmul.f32 %v707, 1.442695
        %v709 = vpow.pop %v708
        %v710 = vadd.f32 %v709, 1.0
        %v711 = vrcp.pop %v710
        %v712 = vmul.f32 1.0, %v711
        %s713 = scalar_lea.vmem %s428, %s657
        %v714 = vld [vmem:[%s713] sm:$0xf]
        %715 = vmatprep.subr.bf16.mxu0 0
        %716 = vmatpush1.bf16.msra.mxu0 %v535
        %717 = vmatprep.subr.bf16.mxu0 0
        %718 = vmatpush1.bf16.msra.mxu0 0
        %719 = vmatprep.subr.bf16.mxu0 0
        %720 = vmatpush1.bf16.msra.mxu0 0
        %721 = vmatprep.subr.bf16.mxu0 0
        %722 = vmatpush1.bf16.msra.mxu0 0
        %723 = vmatprep.subr.bf16.mxu0 0
        %724 = vmatpush1.bf16.msra.mxu0 0
        %725 = vmatprep.subr.bf16.mxu0 0
        %726 = vmatpush1.bf16.msra.mxu0 0
        %727 = vmatprep.subr.bf16.mxu0 0
        %728 = vmatpush1.bf16.msra.mxu0 0
        %729 = vmatprep.subr.bf16.mxu0 0
        %730 = vmatpush1.bf16.msra.mxu0 0
        %731 = vmatprep.subr.bf16.mxu0 0
        %732 = vmatpush1.bf16.msra.mxu0 0
        %733 = vmatprep.subr.bf16.mxu0 0
        %734 = vmatpush1.bf16.msra.mxu0 0
        %735 = vmatprep.subr.bf16.mxu0 0
        %736 = vmatpush1.bf16.msra.mxu0 0
        %737 = vmatprep.subr.bf16.mxu0 0
        %738 = vmatpush1.bf16.msra.mxu0 0
        %739 = vmatprep.subr.bf16.mxu0 0
        %740 = vmatpush1.bf16.msra.mxu0 0
        %741 = vmatprep.subr.bf16.mxu0 0
        %742 = vmatpush1.bf16.msra.mxu0 0
        %743 = vmatprep.subr.bf16.mxu0 0
        %744 = vmatpush1.bf16.msra.mxu0 0
        %745 = vmatprep.subr.bf16.mxu0 0
        %746 = vmatpush1.bf16.msra.mxu0 0
        %747 = vmatprep.mubr.bf16.mxu0 0
        %748 = vmatmul.mubr.bf16.gmra.mrb[0].mxu0 %v664
        %v749 = vpop.f32.mrb[0].mxu0
        %v750 = vadd.f32 0.0, %v749
        %v751 = vpop.f32.mrb[0].mxu0
        %v752 = vpop.f32.mrb[0].mxu0
        %v753 = vpop.f32.mrb[0].mxu0
        %754 = vdwg.mxu0
        %v755 = vadd.f32 %v714, %v750
        %v756 = vxor.u32 %v755, 2147483648
        %v757 = vmul.f32 %v756, 1.442695
        %v758 = vpow.pop %v757
        %v759 = vadd.f32 %v758, 1.0
        %v760 = vrcp.pop %v759
        %v761 = vmul.f32 1.0, %v760
        %s762 = scalar_lea.vmem %s433, %s657
        %v763 = vld [vmem:[%s762] sm:$0xf]
        %764 = vmatprep.subr.bf16.mxu0 0
        %765 = vmatpush1.bf16.msra.mxu0 %v596
        %766 = vmatprep.subr.bf16.mxu0 0
        %767 = vmatpush1.bf16.msra.mxu0 0
        %768 = vmatprep.subr.bf16.mxu0 0
        %769 = vmatpush1.bf16.msra.mxu0 0
        %770 = vmatprep.subr.bf16.mxu0 0
        %771 = vmatpush1.bf16.msra.mxu0 0
        %772 = vmatprep.subr.bf16.mxu0 0
        %773 = vmatpush1.bf16.msra.mxu0 0
        %774 = vmatprep.subr.bf16.mxu0 0
        %775 = vmatpush1.bf16.msra.mxu0 0
        %776 = vmatprep.subr.bf16.mxu0 0
        %777 = vmatpush1.bf16.msra.mxu0 0
        %778 = vmatprep.subr.bf16.mxu0 0
        %779 = vmatpush1.bf16.msra.mxu0 0
        %780 = vmatprep.subr.bf16.mxu0 0
        %781 = vmatpush1.bf16.msra.mxu0 0
        %782 = vmatprep.subr.bf16.mxu0 0
        %783 = vmatpush1.bf16.msra.mxu0 0
        %784 = vmatprep.subr.bf16.mxu0 0
        %785 = vmatpush1.bf16.msra.mxu0 0
        %786 = vmatprep.subr.bf16.mxu0 0
        %787 = vmatpush1.bf16.msra.mxu0 0
        %788 = vmatprep.subr.bf16.mxu0 0
        %789 = vmatpush1.bf16.msra.mxu0 0
        %790 = vmatprep.subr.bf16.mxu0 0
        %791 = vmatpush1.bf16.msra.mxu0 0
        %792 = vmatprep.subr.bf16.mxu0 0
        %793 = vmatpush1.bf16.msra.mxu0 0
        %794 = vmatprep.subr.bf16.mxu0 0
        %795 = vmatpush1.bf16.msra.mxu0 0
        %796 = vmatprep.mubr.bf16.mxu0 0
        %797 = vmatmul.mubr.bf16.gmra.mrb[0].mxu0 %v664
        %v798 = vpop.f32.mrb[0].mxu0
        %v799 = vadd.f32 %v590, %v798
        %v800 = vpop.f32.mrb[0].mxu0
        %v801 = vpop.f32.mrb[0].mxu0
        %v802 = vpop.f32.mrb[0].mxu0
        %803 = vdwg.mxu0
        %v804 = vmul.f32 %v712, %v799
        %v805 = vadd.f32 %v763, %v804
        %v806 = vtanh.pop %v805
        %v807 = vsub.f32 1.0, %v761
        %v808 = vmul.f32 %v807, %v806
        %v809 = vmul.f32 %v761, %v651
        %v810 = vadd.f32 %v808, %v809
        %v811 = vsub.f32 %v810, %v651
        %813 = vset.pattern.permute.xlu0 0
        %814 = vperm.xlu0 %813, %v659
        %v815 = vpop.permute.xlu0 %814
        %v817 = vmul.f32 %v815, %v811
        %v818 = vadd.f32 %v651, %v817
        %v819 = vmul.f32 %v818, %v815
        %s820 = scalar_lea.vmem %s412, %s657 [#allocation2]
        %821 = vst.msk [vmem:[%s820] sm:$0xf] %vm654, %v819
        %s822 = smul.u32 %s459, 2
        %s823 = sadd.s32 %s458, %s822
        %s824 = smul.u32 %s823, 4
        %s825 = scalar_lea.vmem %s3, %s824
        %v826 = vld [vmem:[%s825] sm:$0xf]
        %v827 = vpack.c.bf16 %v818, %v818
        %s828 = scalar_lea.vmem %s423, %s824
        %v829 = vld [vmem:[%s828] sm:$0xf]
        %v831 = vsel %vm478, %v827, 0
        %833 = vmatprep.subr.bf16.mxu0 0
        %834 = vmatpush1.bf16.msra.mxu0 %v476
        %835 = vmatprep.subr.bf16.mxu0 0
        %836 = vmatpush1.bf16.msra.mxu0 0
        %837 = vmatprep.subr.bf16.mxu0 0
        %838 = vmatpush1.bf16.msra.mxu0 0
        %839 = vmatprep.subr.bf16.mxu0 0
        %840 = vmatpush1.bf16.msra.mxu0 0
        %841 = vmatprep.subr.bf16.mxu0 0
        %842 = vmatpush1.bf16.msra.mxu0 0
        %843 = vmatprep.subr.bf16.mxu0 0
        %844 = vmatpush1.bf16.msra.mxu0 0
        %845 = vmatprep.subr.bf16.mxu0 0
        %846 = vmatpush1.bf16.msra.mxu0 0
        %847 = vmatprep.subr.bf16.mxu0 0
        %848 = vmatpush1.bf16.msra.mxu0 0
        %849 = vmatprep.subr.bf16.mxu0 0
        %850 = vmatpush1.bf16.msra.mxu0 0
        %851 = vmatprep.subr.bf16.mxu0 0
        %852 = vmatpush1.bf16.msra.mxu0 0
        %853 = vmatprep.subr.bf16.mxu0 0
        %854 = vmatpush1.bf16.msra.mxu0 0
        %855 = vmatprep.subr.bf16.mxu0 0
        %856 = vmatpush1.bf16.msra.mxu0 0
        %857 = vmatprep.subr.bf16.mxu0 0
        %858 = vmatpush1.bf16.msra.mxu0 0
        %859 = vmatprep.subr.bf16.mxu0 0
        %860 = vmatpush1.bf16.msra.mxu0 0
        %861 = vmatprep.subr.bf16.mxu0 0
        %862 = vmatpush1.bf16.msra.mxu0 0
        %863 = vmatprep.subr.bf16.mxu0 0
        %864 = vmatpush1.bf16.msra.mxu0 0
        %865 = vmatprep.mubr.bf16.mxu0 0
        %866 = vmatmul.mubr.bf16.gmra.mrb[0].mxu0 %v831
        %v867 = vpop.f32.mrb[0].mxu0
        %v868 = vadd.f32 0.0, %v867
        %v869 = vpop.f32.mrb[0].mxu0
        %v870 = vpop.f32.mrb[0].mxu0
        %v871 = vpop.f32.mrb[0].mxu0
        %872 = vdwg.mxu0
        %v873 = vadd.f32 %v829, %v868
        %v874 = vxor.u32 %v873, 2147483648
        %v875 = vmul.f32 %v874, 1.442695
        %v876 = vpow.pop %v875
        %v877 = vadd.f32 %v876, 1.0
        %v878 = vrcp.pop %v877
        %v879 = vmul.f32 1.0, %v878
        %s880 = scalar_lea.vmem %s428, %s824
        %v881 = vld [vmem:[%s880] sm:$0xf]
        %882 = vmatprep.subr.bf16.mxu0 0
        %883 = vmatpush1.bf16.msra.mxu0 %v535
        %884 = vmatprep.subr.bf16.mxu0 0
        %885 = vmatpush1.bf16.msra.mxu0 0
        %886 = vmatprep.subr.bf16.mxu0 0
        %887 = vmatpush1.bf16.msra.mxu0 0
        %888 = vmatprep.subr.bf16.mxu0 0
        %889 = vmatpush1.bf16.msra.mxu0 0
        %890 = vmatprep.subr.bf16.mxu0 0
        %891 = vmatpush1.bf16.msra.mxu0 0
        %892 = vmatprep.subr.bf16.mxu0 0
        %893 = vmatpush1.bf16.msra.mxu0 0
        %894 = vmatprep.subr.bf16.mxu0 0
        %895 = vmatpush1.bf16.msra.mxu0 0
        %896 = vmatprep.subr.bf16.mxu0 0
        %897 = vmatpush1.bf16.msra.mxu0 0
        %898 = vmatprep.subr.bf16.mxu0 0
        %899 = vmatpush1.bf16.msra.mxu0 0
        %900 = vmatprep.subr.bf16.mxu0 0
        %901 = vmatpush1.bf16.msra.mxu0 0
        %902 = vmatprep.subr.bf16.mxu0 0
        %903 = vmatpush1.bf16.msra.mxu0 0
        %904 = vmatprep.subr.bf16.mxu0 0
        %905 = vmatpush1.bf16.msra.mxu0 0
        %906 = vmatprep.subr.bf16.mxu0 0
        %907 = vmatpush1.bf16.msra.mxu0 0
        %908 = vmatprep.subr.bf16.mxu0 0
        %909 = vmatpush1.bf16.msra.mxu0 0
        %910 = vmatprep.subr.bf16.mxu0 0
        %911 = vmatpush1.bf16.msra.mxu0 0
        %912 = vmatprep.subr.bf16.mxu0 0
        %913 = vmatpush1.bf16.msra.mxu0 0
        %914 = vmatprep.mubr.bf16.mxu0 0
        %915 = vmatmul.mubr.bf16.gmra.mrb[0].mxu0 %v831
        %v916 = vpop.f32.mrb[0].mxu0
        %v917 = vadd.f32 0.0, %v916
        %v918 = vpop.f32.mrb[0].mxu0
        %v919 = vpop.f32.mrb[0].mxu0
        %v920 = vpop.f32.mrb[0].mxu0
        %921 = vdwg.mxu0
        %v922 = vadd.f32 %v881, %v917
        %v923 = vxor.u32 %v922, 2147483648
        %v924 = vmul.f32 %v923, 1.442695
        %v925 = vpow.pop %v924
        %v926 = vadd.f32 %v925, 1.0
        %v927 = vrcp.pop %v926
        %v928 = vmul.f32 1.0, %v927
        %s929 = scalar_lea.vmem %s433, %s824
        %v930 = vld [vmem:[%s929] sm:$0xf]
        %931 = vmatprep.subr.bf16.mxu0 0
        %932 = vmatpush1.bf16.msra.mxu0 %v596
        %933 = vmatprep.subr.bf16.mxu0 0
        %934 = vmatpush1.bf16.msra.mxu0 0
        %935 = vmatprep.subr.bf16.mxu0 0
        %936 = vmatpush1.bf16.msra.mxu0 0
        %937 = vmatprep.subr.bf16.mxu0 0
        %938 = vmatpush1.bf16.msra.mxu0 0
        %939 = vmatprep.subr.bf16.mxu0 0
        %940 = vmatpush1.bf16.msra.mxu0 0
        %941 = vmatprep.subr.bf16.mxu0 0
        %942 = vmatpush1.bf16.msra.mxu0 0
        %943 = vmatprep.subr.bf16.mxu0 0
        %944 = vmatpush1.bf16.msra.mxu0 0
        %945 = vmatprep.subr.bf16.mxu0 0
        %946 = vmatpush1.bf16.msra.mxu0 0
        %947 = vmatprep.subr.bf16.mxu0 0
        %948 = vmatpush1.bf16.msra.mxu0 0
        %949 = vmatprep.subr.bf16.mxu0 0
        %950 = vmatpush1.bf16.msra.mxu0 0
        %951 = vmatprep.subr.bf16.mxu0 0
        %952 = vmatpush1.bf16.msra.mxu0 0
        %953 = vmatprep.subr.bf16.mxu0 0
        %954 = vmatpush1.bf16.msra.mxu0 0
        %955 = vmatprep.subr.bf16.mxu0 0
        %956 = vmatpush1.bf16.msra.mxu0 0
        %957 = vmatprep.subr.bf16.mxu0 0
        %958 = vmatpush1.bf16.msra.mxu0 0
        %959 = vmatprep.subr.bf16.mxu0 0
        %960 = vmatpush1.bf16.msra.mxu0 0
        %961 = vmatprep.subr.bf16.mxu0 0
        %962 = vmatpush1.bf16.msra.mxu0 0
        %963 = vmatprep.mubr.bf16.mxu0 0
        %964 = vmatmul.mubr.bf16.gmra.mrb[0].mxu0 %v831
        %v965 = vpop.f32.mrb[0].mxu0
        %v966 = vadd.f32 %v590, %v965
        %v967 = vpop.f32.mrb[0].mxu0
        %v968 = vpop.f32.mrb[0].mxu0
        %v969 = vpop.f32.mrb[0].mxu0
        %970 = vdwg.mxu0
        %v971 = vmul.f32 %v879, %v966
        %v972 = vadd.f32 %v930, %v971
        %v973 = vtanh.pop %v972
        %v974 = vsub.f32 1.0, %v928
        %v975 = vmul.f32 %v974, %v973
        %v976 = vmul.f32 %v928, %v818
        %v977 = vadd.f32 %v975, %v976
        %v978 = vsub.f32 %v977, %v818
        %980 = vset.pattern.permute.xlu0 0
        %981 = vperm.xlu0 %980, %v826
        %v982 = vpop.permute.xlu0 %981
        %v984 = vmul.f32 %v982, %v978
        %v985 = vadd.f32 %v818, %v984
        %v986 = vmul.f32 %v985, %v982
        %s987 = scalar_lea.vmem %s412, %s824 [#allocation2]
        %988 = vst.msk [vmem:[%s987] sm:$0xf] %vm654, %v986
        %s989 = smul.u32 %s459, 3
        %s990 = sadd.s32 %s458, %s989
        %s991 = smul.u32 %s990, 4
        %s992 = scalar_lea.vmem %s3, %s991
        %v993 = vld [vmem:[%s992] sm:$0xf]
        %v994 = vpack.c.bf16 %v985, %v985
        %s995 = scalar_lea.vmem %s423, %s991
        %v996 = vld [vmem:[%s995] sm:$0xf]
        %v998 = vsel %vm478, %v994, 0
        %1000 = vmatprep.subr.bf16.mxu0 0
        %1001 = vmatpush1.bf16.msra.mxu0 %v476
        %1002 = vmatprep.subr.bf16.mxu0 0
        %1003 = vmatpush1.bf16.msra.mxu0 0
        %1004 = vmatprep.subr.bf16.mxu0 0
        %1005 = vmatpush1.bf16.msra.mxu0 0
        %1006 = vmatprep.subr.bf16.mxu0 0
        %1007 = vmatpush1.bf16.msra.mxu0 0
        %1008 = vmatprep.subr.bf16.mxu0 0
        %1009 = vmatpush1.bf16.msra.mxu0 0
        %1010 = vmatprep.subr.bf16.mxu0 0
        %1011 = vmatpush1.bf16.msra.mxu0 0
        %1012 = vmatprep.subr.bf16.mxu0 0
        %1013 = vmatpush1.bf16.msra.mxu0 0
        %1014 = vmatprep.subr.bf16.mxu0 0
        %1015 = vmatpush1.bf16.msra.mxu0 0
        %1016 = vmatprep.subr.bf16.mxu0 0
        %1017 = vmatpush1.bf16.msra.mxu0 0
        %1018 = vmatprep.subr.bf16.mxu0 0
        %1019 = vmatpush1.bf16.msra.mxu0 0
        %1020 = vmatprep.subr.bf16.mxu0 0
        %1021 = vmatpush1.bf16.msra.mxu0 0
        %1022 = vmatprep.subr.bf16.mxu0 0
        %1023 = vmatpush1.bf16.msra.mxu0 0
        %1024 = vmatprep.subr.bf16.mxu0 0
        %1025 = vmatpush1.bf16.msra.mxu0 0
        %1026 = vmatprep.subr.bf16.mxu0 0
        %1027 = vmatpush1.bf16.msra.mxu0 0
        %1028 = vmatprep.subr.bf16.mxu0 0
        %1029 = vmatpush1.bf16.msra.mxu0 0
        %1030 = vmatprep.subr.bf16.mxu0 0
        %1031 = vmatpush1.bf16.msra.mxu0 0
        %1032 = vmatprep.mubr.bf16.mxu0 0
        %1033 = vmatmul.mubr.bf16.gmra.mrb[0].mxu0 %v998
        %v1034 = vpop.f32.mrb[0].mxu0
        %v1035 = vadd.f32 0.0, %v1034
        %v1036 = vpop.f32.mrb[0].mxu0
        %v1037 = vpop.f32.mrb[0].mxu0
        %v1038 = vpop.f32.mrb[0].mxu0
        %1039 = vdwg.mxu0
        %v1040 = vadd.f32 %v996, %v1035
        %v1041 = vxor.u32 %v1040, 2147483648
        %v1042 = vmul.f32 %v1041, 1.442695
        %v1043 = vpow.pop %v1042
        %v1044 = vadd.f32 %v1043, 1.0
        %v1045 = vrcp.pop %v1044
        %v1046 = vmul.f32 1.0, %v1045
        %s1047 = scalar_lea.vmem %s428, %s991
        %v1048 = vld [vmem:[%s1047] sm:$0xf]
        %1049 = vmatprep.subr.bf16.mxu0 0
        %1050 = vmatpush1.bf16.msra.mxu0 %v535
        %1051 = vmatprep.subr.bf16.mxu0 0
        %1052 = vmatpush1.bf16.msra.mxu0 0
        %1053 = vmatprep.subr.bf16.mxu0 0
        %1054 = vmatpush1.bf16.msra.mxu0 0
        %1055 = vmatprep.subr.bf16.mxu0 0
        %1056 = vmatpush1.bf16.msra.mxu0 0
        %1057 = vmatprep.subr.bf16.mxu0 0
        %1058 = vmatpush1.bf16.msra.mxu0 0
        %1059 = vmatprep.subr.bf16.mxu0 0
        %1060 = vmatpush1.bf16.msra.mxu0 0
        %1061 = vmatprep.subr.bf16.mxu0 0
        %1062 = vmatpush1.bf16.msra.mxu0 0
        %1063 = vmatprep.subr.bf16.mxu0 0
        %1064 = vmatpush1.bf16.msra.mxu0 0
        %1065 = vmatprep.subr.bf16.mxu0 0
        %1066 = vmatpush1.bf16.msra.mxu0 0
        %1067 = vmatprep.subr.bf16.mxu0 0
        %1068 = vmatpush1.bf16.msra.mxu0 0
        %1069 = vmatprep.subr.bf16.mxu0 0
        %1070 = vmatpush1.bf16.msra.mxu0 0
        %1071 = vmatprep.subr.bf16.mxu0 0
        %1072 = vmatpush1.bf16.msra.mxu0 0
        %1073 = vmatprep.subr.bf16.mxu0 0
        %1074 = vmatpush1.bf16.msra.mxu0 0
        %1075 = vmatprep.subr.bf16.mxu0 0
        %1076 = vmatpush1.bf16.msra.mxu0 0
        %1077 = vmatprep.subr.bf16.mxu0 0
        %1078 = vmatpush1.bf16.msra.mxu0 0
        %1079 = vmatprep.subr.bf16.mxu0 0
        %1080 = vmatpush1.bf16.msra.mxu0 0
        %1081 = vmatprep.mubr.bf16.mxu0 0
        %1082 = vmatmul.mubr.bf16.gmra.mrb[0].mxu0 %v998
        %v1083 = vpop.f32.mrb[0].mxu0
        %v1084 = vadd.f32 0.0, %v1083
        %v1085 = vpop.f32.mrb[0].mxu0
        %v1086 = vpop.f32.mrb[0].mxu0
        %v1087 = vpop.f32.mrb[0].mxu0
        %1088 = vdwg.mxu0
        %v1089 = vadd.f32 %v1048, %v1084
        %v1090 = vxor.u32 %v1089, 2147483648
        %v1091 = vmul.f32 %v1090, 1.442695
        %v1092 = vpow.pop %v1091
        %v1093 = vadd.f32 %v1092, 1.0
        %v1094 = vrcp.pop %v1093
        %v1095 = vmul.f32 1.0, %v1094
        %s1096 = scalar_lea.vmem %s433, %s991
        %v1097 = vld [vmem:[%s1096] sm:$0xf]
        %1098 = vmatprep.subr.bf16.mxu0 0
        %1099 = vmatpush1.bf16.msra.mxu0 %v596
        %1100 = vmatprep.subr.bf16.mxu0 0
        %1101 = vmatpush1.bf16.msra.mxu0 0
        %1102 = vmatprep.subr.bf16.mxu0 0
        %1103 = vmatpush1.bf16.msra.mxu0 0
        %1104 = vmatprep.subr.bf16.mxu0 0
        %1105 = vmatpush1.bf16.msra.mxu0 0
        %1106 = vmatprep.subr.bf16.mxu0 0
        %1107 = vmatpush1.bf16.msra.mxu0 0
        %1108 = vmatprep.subr.bf16.mxu0 0
        %1109 = vmatpush1.bf16.msra.mxu0 0
        %1110 = vmatprep.subr.bf16.mxu0 0
        %1111 = vmatpush1.bf16.msra.mxu0 0
        %1112 = vmatprep.subr.bf16.mxu0 0
        %1113 = vmatpush1.bf16.msra.mxu0 0
        %1114 = vmatprep.subr.bf16.mxu0 0
        %1115 = vmatpush1.bf16.msra.mxu0 0
        %1116 = vmatprep.subr.bf16.mxu0 0
        %1117 = vmatpush1.bf16.msra.mxu0 0
        %1118 = vmatprep.subr.bf16.mxu0 0
        %1119 = vmatpush1.bf16.msra.mxu0 0
        %1120 = vmatprep.subr.bf16.mxu0 0
        %1121 = vmatpush1.bf16.msra.mxu0 0
        %1122 = vmatprep.subr.bf16.mxu0 0
        %1123 = vmatpush1.bf16.msra.mxu0 0
        %1124 = vmatprep.subr.bf16.mxu0 0
        %1125 = vmatpush1.bf16.msra.mxu0 0
        %1126 = vmatprep.subr.bf16.mxu0 0
        %1127 = vmatpush1.bf16.msra.mxu0 0
        %1128 = vmatprep.subr.bf16.mxu0 0
        %1129 = vmatpush1.bf16.msra.mxu0 0
        %1130 = vmatprep.mubr.bf16.mxu0 0
        %1131 = vmatmul.mubr.bf16.gmra.mrb[0].mxu0 %v998
        %v1132 = vpop.f32.mrb[0].mxu0
        %v1133 = vadd.f32 %v590, %v1132
        %v1134 = vpop.f32.mrb[0].mxu0
        %v1135 = vpop.f32.mrb[0].mxu0
        %v1136 = vpop.f32.mrb[0].mxu0
        %1137 = vdwg.mxu0
        %v1138 = vmul.f32 %v1046, %v1133
        %v1139 = vadd.f32 %v1097, %v1138
        %v1140 = vtanh.pop %v1139
        %v1141 = vsub.f32 1.0, %v1095
        %v1142 = vmul.f32 %v1141, %v1140
        %v1143 = vmul.f32 %v1095, %v985
        %v1144 = vadd.f32 %v1142, %v1143
        %v1145 = vsub.f32 %v1144, %v985
        %1147 = vset.pattern.permute.xlu0 0
        %1148 = vperm.xlu0 %1147, %v993
        %v1149 = vpop.permute.xlu0 %1148
        %v1151 = vmul.f32 %v1149, %v1145
        %v1152 = vadd.f32 %v985, %v1151
        %v1153 = vmul.f32 %v1152, %v1149
        %s1154 = scalar_lea.vmem %s412, %s991 [#allocation2]
        %1155 = vst.msk [vmem:[%s1154] sm:$0xf] %vm654, %v1153
        %s1156 = smul.u32 %s459, 4
        %s1157 = sadd.s32 %s458, %s1156
        %s1158 = smul.u32 %s1157, 4
        %s1159 = scalar_lea.vmem %s3, %s1158
        %v1160 = vld [vmem:[%s1159] sm:$0xf]
        %v1161 = vpack.c.bf16 %v1152, %v1152
        %s1162 = scalar_lea.vmem %s423, %s1158
        %v1163 = vld [vmem:[%s1162] sm:$0xf]
        %v1165 = vsel %vm478, %v1161, 0
        %1167 = vmatprep.subr.bf16.mxu0 0
        %1168 = vmatpush1.bf16.msra.mxu0 %v476
        %1169 = vmatprep.subr.bf16.mxu0 0
        %1170 = vmatpush1.bf16.msra.mxu0 0
        %1171 = vmatprep.subr.bf16.mxu0 0
        %1172 = vmatpush1.bf16.msra.mxu0 0
        %1173 = vmatprep.subr.bf16.mxu0 0
        %1174 = vmatpush1.bf16.msra.mxu0 0
        %1175 = vmatprep.subr.bf16.mxu0 0
        %1176 = vmatpush1.bf16.msra.mxu0 0
        %1177 = vmatprep.subr.bf16.mxu0 0
        %1178 = vmatpush1.bf16.msra.mxu0 0
        %1179 = vmatprep.subr.bf16.mxu0 0
        %1180 = vmatpush1.bf16.msra.mxu0 0
        %1181 = vmatprep.subr.bf16.mxu0 0
        %1182 = vmatpush1.bf16.msra.mxu0 0
        %1183 = vmatprep.subr.bf16.mxu0 0
        %1184 = vmatpush1.bf16.msra.mxu0 0
        %1185 = vmatprep.subr.bf16.mxu0 0
        %1186 = vmatpush1.bf16.msra.mxu0 0
        %1187 = vmatprep.subr.bf16.mxu0 0
        %1188 = vmatpush1.bf16.msra.mxu0 0
        %1189 = vmatprep.subr.bf16.mxu0 0
        %1190 = vmatpush1.bf16.msra.mxu0 0
        %1191 = vmatprep.subr.bf16.mxu0 0
        %1192 = vmatpush1.bf16.msra.mxu0 0
        %1193 = vmatprep.subr.bf16.mxu0 0
        %1194 = vmatpush1.bf16.msra.mxu0 0
        %1195 = vmatprep.subr.bf16.mxu0 0
        %1196 = vmatpush1.bf16.msra.mxu0 0
        %1197 = vmatprep.subr.bf16.mxu0 0
        %1198 = vmatpush1.bf16.msra.mxu0 0
        %1199 = vmatprep.mubr.bf16.mxu0 0
        %1200 = vmatmul.mubr.bf16.gmra.mrb[0].mxu0 %v1165
        %v1201 = vpop.f32.mrb[0].mxu0
        %v1202 = vadd.f32 0.0, %v1201
        %v1203 = vpop.f32.mrb[0].mxu0
        %v1204 = vpop.f32.mrb[0].mxu0
        %v1205 = vpop.f32.mrb[0].mxu0
        %1206 = vdwg.mxu0
        %v1207 = vadd.f32 %v1163, %v1202
        %v1208 = vxor.u32 %v1207, 2147483648
        %v1209 = vmul.f32 %v1208, 1.442695
        %v1210 = vpow.pop %v1209
        %v1211 = vadd.f32 %v1210, 1.0
        %v1212 = vrcp.pop %v1211
        %v1213 = vmul.f32 1.0, %v1212
        %s1214 = scalar_lea.vmem %s428, %s1158
        %v1215 = vld [vmem:[%s1214] sm:$0xf]
        %1216 = vmatprep.subr.bf16.mxu0 0
        %1217 = vmatpush1.bf16.msra.mxu0 %v535
        %1218 = vmatprep.subr.bf16.mxu0 0
        %1219 = vmatpush1.bf16.msra.mxu0 0
        %1220 = vmatprep.subr.bf16.mxu0 0
        %1221 = vmatpush1.bf16.msra.mxu0 0
        %1222 = vmatprep.subr.bf16.mxu0 0
        %1223 = vmatpush1.bf16.msra.mxu0 0
        %1224 = vmatprep.subr.bf16.mxu0 0
        %1225 = vmatpush1.bf16.msra.mxu0 0
        %1226 = vmatprep.subr.bf16.mxu0 0
        %1227 = vmatpush1.bf16.msra.mxu0 0
        %1228 = vmatprep.subr.bf16.mxu0 0
        %1229 = vmatpush1.bf16.msra.mxu0 0
        %1230 = vmatprep.subr.bf16.mxu0 0
        %1231 = vmatpush1.bf16.msra.mxu0 0
        %1232 = vmatprep.subr.bf16.mxu0 0
        %1233 = vmatpush1.bf16.msra.mxu0 0
        %1234 = vmatprep.subr.bf16.mxu0 0
        %1235 = vmatpush1.bf16.msra.mxu0 0
        %1236 = vmatprep.subr.bf16.mxu0 0
        %1237 = vmatpush1.bf16.msra.mxu0 0
        %1238 = vmatprep.subr.bf16.mxu0 0
        %1239 = vmatpush1.bf16.msra.mxu0 0
        %1240 = vmatprep.subr.bf16.mxu0 0
        %1241 = vmatpush1.bf16.msra.mxu0 0
        %1242 = vmatprep.subr.bf16.mxu0 0
        %1243 = vmatpush1.bf16.msra.mxu0 0
        %1244 = vmatprep.subr.bf16.mxu0 0
        %1245 = vmatpush1.bf16.msra.mxu0 0
        %1246 = vmatprep.subr.bf16.mxu0 0
        %1247 = vmatpush1.bf16.msra.mxu0 0
        %1248 = vmatprep.mubr.bf16.mxu0 0
        %1249 = vmatmul.mubr.bf16.gmra.mrb[0].mxu0 %v1165
        %v1250 = vpop.f32.mrb[0].mxu0
        %v1251 = vadd.f32 0.0, %v1250
        %v1252 = vpop.f32.mrb[0].mxu0
        %v1253 = vpop.f32.mrb[0].mxu0
        %v1254 = vpop.f32.mrb[0].mxu0
        %1255 = vdwg.mxu0
        %v1256 = vadd.f32 %v1215, %v1251
        %v1257 = vxor.u32 %v1256, 2147483648
        %v1258 = vmul.f32 %v1257, 1.442695
        %v1259 = vpow.pop %v1258
        %v1260 = vadd.f32 %v1259, 1.0
        %v1261 = vrcp.pop %v1260
        %v1262 = vmul.f32 1.0, %v1261
        %s1263 = scalar_lea.vmem %s433, %s1158
        %v1264 = vld [vmem:[%s1263] sm:$0xf]
        %1265 = vmatprep.subr.bf16.mxu0 0
        %1266 = vmatpush1.bf16.msra.mxu0 %v596
        %1267 = vmatprep.subr.bf16.mxu0 0
        %1268 = vmatpush1.bf16.msra.mxu0 0
        %1269 = vmatprep.subr.bf16.mxu0 0
        %1270 = vmatpush1.bf16.msra.mxu0 0
        %1271 = vmatprep.subr.bf16.mxu0 0
        %1272 = vmatpush1.bf16.msra.mxu0 0
        %1273 = vmatprep.subr.bf16.mxu0 0
        %1274 = vmatpush1.bf16.msra.mxu0 0
        %1275 = vmatprep.subr.bf16.mxu0 0
        %1276 = vmatpush1.bf16.msra.mxu0 0
        %1277 = vmatprep.subr.bf16.mxu0 0
        %1278 = vmatpush1.bf16.msra.mxu0 0
        %1279 = vmatprep.subr.bf16.mxu0 0
        %1280 = vmatpush1.bf16.msra.mxu0 0
        %1281 = vmatprep.subr.bf16.mxu0 0
        %1282 = vmatpush1.bf16.msra.mxu0 0
        %1283 = vmatprep.subr.bf16.mxu0 0
        %1284 = vmatpush1.bf16.msra.mxu0 0
        %1285 = vmatprep.subr.bf16.mxu0 0
        %1286 = vmatpush1.bf16.msra.mxu0 0
        %1287 = vmatprep.subr.bf16.mxu0 0
        %1288 = vmatpush1.bf16.msra.mxu0 0
        %1289 = vmatprep.subr.bf16.mxu0 0
        %1290 = vmatpush1.bf16.msra.mxu0 0
        %1291 = vmatprep.subr.bf16.mxu0 0
        %1292 = vmatpush1.bf16.msra.mxu0 0
        %1293 = vmatprep.subr.bf16.mxu0 0
        %1294 = vmatpush1.bf16.msra.mxu0 0
        %1295 = vmatprep.subr.bf16.mxu0 0
        %1296 = vmatpush1.bf16.msra.mxu0 0
        %1297 = vmatprep.mubr.bf16.mxu0 0
        %1298 = vmatmul.mubr.bf16.gmra.mrb[0].mxu0 %v1165
        %v1299 = vpop.f32.mrb[0].mxu0
        %v1300 = vadd.f32 %v590, %v1299
        %v1301 = vpop.f32.mrb[0].mxu0
        %v1302 = vpop.f32.mrb[0].mxu0
        %v1303 = vpop.f32.mrb[0].mxu0
        %1304 = vdwg.mxu0
        %v1305 = vmul.f32 %v1213, %v1300
        %v1306 = vadd.f32 %v1264, %v1305
        %v1307 = vtanh.pop %v1306
        %v1308 = vsub.f32 1.0, %v1262
        %v1309 = vmul.f32 %v1308, %v1307
        %v1310 = vmul.f32 %v1262, %v1152
        %v1311 = vadd.f32 %v1309, %v1310
        %v1312 = vsub.f32 %v1311, %v1152
        %1314 = vset.pattern.permute.xlu0 0
        %1315 = vperm.xlu0 %1314, %v1160
        %v1316 = vpop.permute.xlu0 %1315
        %v1318 = vmul.f32 %v1316, %v1312
        %v1319 = vadd.f32 %v1152, %v1318
        %v1320 = vmul.f32 %v1319, %v1316
        %s1321 = scalar_lea.vmem %s412, %s1158 [#allocation2]
        %1322 = vst.msk [vmem:[%s1321] sm:$0xf] %vm654, %v1320
        %s1323 = smul.u32 %s459, 5
        %s1324 = sadd.s32 %s458, %s1323
        %s1325 = smul.u32 %s1324, 4
        %s1326 = scalar_lea.vmem %s3, %s1325
        %v1327 = vld [vmem:[%s1326] sm:$0xf]
        %v1328 = vpack.c.bf16 %v1319, %v1319
        %s1329 = scalar_lea.vmem %s423, %s1325
        %v1330 = vld [vmem:[%s1329] sm:$0xf]
        %v1332 = vsel %vm478, %v1328, 0
        %1334 = vmatprep.subr.bf16.mxu0 0
        %1335 = vmatpush1.bf16.msra.mxu0 %v476
        %1336 = vmatprep.subr.bf16.mxu0 0
        %1337 = vmatpush1.bf16.msra.mxu0 0
        %1338 = vmatprep.subr.bf16.mxu0 0
        %1339 = vmatpush1.bf16.msra.mxu0 0
        %1340 = vmatprep.subr.bf16.mxu0 0
        %1341 = vmatpush1.bf16.msra.mxu0 0
        %1342 = vmatprep.subr.bf16.mxu0 0
        %1343 = vmatpush1.bf16.msra.mxu0 0
        %1344 = vmatprep.subr.bf16.mxu0 0
        %1345 = vmatpush1.bf16.msra.mxu0 0
        %1346 = vmatprep.subr.bf16.mxu0 0
        %1347 = vmatpush1.bf16.msra.mxu0 0
        %1348 = vmatprep.subr.bf16.mxu0 0
        %1349 = vmatpush1.bf16.msra.mxu0 0
        %1350 = vmatprep.subr.bf16.mxu0 0
        %1351 = vmatpush1.bf16.msra.mxu0 0
        %1352 = vmatprep.subr.bf16.mxu0 0
        %1353 = vmatpush1.bf16.msra.mxu0 0
        %1354 = vmatprep.subr.bf16.mxu0 0
        %1355 = vmatpush1.bf16.msra.mxu0 0
        %1356 = vmatprep.subr.bf16.mxu0 0
        %1357 = vmatpush1.bf16.msra.mxu0 0
        %1358 = vmatprep.subr.bf16.mxu0 0
        %1359 = vmatpush1.bf16.msra.mxu0 0
        %1360 = vmatprep.subr.bf16.mxu0 0
        %1361 = vmatpush1.bf16.msra.mxu0 0
        %1362 = vmatprep.subr.bf16.mxu0 0
        %1363 = vmatpush1.bf16.msra.mxu0 0
        %1364 = vmatprep.subr.bf16.mxu0 0
        %1365 = vmatpush1.bf16.msra.mxu0 0
        %1366 = vmatprep.mubr.bf16.mxu0 0
        %1367 = vmatmul.mubr.bf16.gmra.mrb[0].mxu0 %v1332
        %v1368 = vpop.f32.mrb[0].mxu0
        %v1369 = vadd.f32 0.0, %v1368
        %v1370 = vpop.f32.mrb[0].mxu0
        %v1371 = vpop.f32.mrb[0].mxu0
        %v1372 = vpop.f32.mrb[0].mxu0
        %1373 = vdwg.mxu0
        %v1374 = vadd.f32 %v1330, %v1369
        %v1375 = vxor.u32 %v1374, 2147483648
        %v1376 = vmul.f32 %v1375, 1.442695
        %v1377 = vpow.pop %v1376
        %v1378 = vadd.f32 %v1377, 1.0
        %v1379 = vrcp.pop %v1378
        %v1380 = vmul.f32 1.0, %v1379
        %s1381 = scalar_lea.vmem %s428, %s1325
        %v1382 = vld [vmem:[%s1381] sm:$0xf]
        %1383 = vmatprep.subr.bf16.mxu0 0
        %1384 = vmatpush1.bf16.msra.mxu0 %v535
        %1385 = vmatprep.subr.bf16.mxu0 0
        %1386 = vmatpush1.bf16.msra.mxu0 0
        %1387 = vmatprep.subr.bf16.mxu0 0
        %1388 = vmatpush1.bf16.msra.mxu0 0
        %1389 = vmatprep.subr.bf16.mxu0 0
        %1390 = vmatpush1.bf16.msra.mxu0 0
        %1391 = vmatprep.subr.bf16.mxu0 0
        %1392 = vmatpush1.bf16.msra.mxu0 0
        %1393 = vmatprep.subr.bf16.mxu0 0
        %1394 = vmatpush1.bf16.msra.mxu0 0
        %1395 = vmatprep.subr.bf16.mxu0 0
        %1396 = vmatpush1.bf16.msra.mxu0 0
        %1397 = vmatprep.subr.bf16.mxu0 0
        %1398 = vmatpush1.bf16.msra.mxu0 0
        %1399 = vmatprep.subr.bf16.mxu0 0
        %1400 = vmatpush1.bf16.msra.mxu0 0
        %1401 = vmatprep.subr.bf16.mxu0 0
        %1402 = vmatpush1.bf16.msra.mxu0 0
        %1403 = vmatprep.subr.bf16.mxu0 0
        %1404 = vmatpush1.bf16.msra.mxu0 0
        %1405 = vmatprep.subr.bf16.mxu0 0
        %1406 = vmatpush1.bf16.msra.mxu0 0
        %1407 = vmatprep.subr.bf16.mxu0 0
        %1408 = vmatpush1.bf16.msra.mxu0 0
        %1409 = vmatprep.subr.bf16.mxu0 0
        %1410 = vmatpush1.bf16.msra.mxu0 0
        %1411 = vmatprep.subr.bf16.mxu0 0
        %1412 = vmatpush1.bf16.msra.mxu0 0
        %1413 = vmatprep.subr.bf16.mxu0 0
        %1414 = vmatpush1.bf16.msra.mxu0 0
        %1415 = vmatprep.mubr.bf16.mxu0 0
        %1416 = vmatmul.mubr.bf16.gmra.mrb[0].mxu0 %v1332
        %v1417 = vpop.f32.mrb[0].mxu0
        %v1418 = vadd.f32 0.0, %v1417
        %v1419 = vpop.f32.mrb[0].mxu0
        %v1420 = vpop.f32.mrb[0].mxu0
        %v1421 = vpop.f32.mrb[0].mxu0
        %1422 = vdwg.mxu0
        %v1423 = vadd.f32 %v1382, %v1418
        %v1424 = vxor.u32 %v1423, 2147483648
        %v1425 = vmul.f32 %v1424, 1.442695
        %v1426 = vpow.pop %v1425
        %v1427 = vadd.f32 %v1426, 1.0
        %v1428 = vrcp.pop %v1427
        %v1429 = vmul.f32 1.0, %v1428
        %s1430 = scalar_lea.vmem %s433, %s1325
        %v1431 = vld [vmem:[%s1430] sm:$0xf]
        %1432 = vmatprep.subr.bf16.mxu0 0
        %1433 = vmatpush1.bf16.msra.mxu0 %v596
        %1434 = vmatprep.subr.bf16.mxu0 0
        %1435 = vmatpush1.bf16.msra.mxu0 0
        %1436 = vmatprep.subr.bf16.mxu0 0
        %1437 = vmatpush1.bf16.msra.mxu0 0
        %1438 = vmatprep.subr.bf16.mxu0 0
        %1439 = vmatpush1.bf16.msra.mxu0 0
        %1440 = vmatprep.subr.bf16.mxu0 0
        %1441 = vmatpush1.bf16.msra.mxu0 0
        %1442 = vmatprep.subr.bf16.mxu0 0
        %1443 = vmatpush1.bf16.msra.mxu0 0
        %1444 = vmatprep.subr.bf16.mxu0 0
        %1445 = vmatpush1.bf16.msra.mxu0 0
        %1446 = vmatprep.subr.bf16.mxu0 0
        %1447 = vmatpush1.bf16.msra.mxu0 0
        %1448 = vmatprep.subr.bf16.mxu0 0
        %1449 = vmatpush1.bf16.msra.mxu0 0
        %1450 = vmatprep.subr.bf16.mxu0 0
        %1451 = vmatpush1.bf16.msra.mxu0 0
        %1452 = vmatprep.subr.bf16.mxu0 0
        %1453 = vmatpush1.bf16.msra.mxu0 0
        %1454 = vmatprep.subr.bf16.mxu0 0
        %1455 = vmatpush1.bf16.msra.mxu0 0
        %1456 = vmatprep.subr.bf16.mxu0 0
        %1457 = vmatpush1.bf16.msra.mxu0 0
        %1458 = vmatprep.subr.bf16.mxu0 0
        %1459 = vmatpush1.bf16.msra.mxu0 0
        %1460 = vmatprep.subr.bf16.mxu0 0
        %1461 = vmatpush1.bf16.msra.mxu0 0
        %1462 = vmatprep.subr.bf16.mxu0 0
        %1463 = vmatpush1.bf16.msra.mxu0 0
        %1464 = vmatprep.mubr.bf16.mxu0 0
        %1465 = vmatmul.mubr.bf16.gmra.mrb[0].mxu0 %v1332
        %v1466 = vpop.f32.mrb[0].mxu0
        %v1467 = vadd.f32 %v590, %v1466
        %v1468 = vpop.f32.mrb[0].mxu0
        %v1469 = vpop.f32.mrb[0].mxu0
        %v1470 = vpop.f32.mrb[0].mxu0
        %1471 = vdwg.mxu0
        %v1472 = vmul.f32 %v1380, %v1467
        %v1473 = vadd.f32 %v1431, %v1472
        %v1474 = vtanh.pop %v1473
        %v1475 = vsub.f32 1.0, %v1429
        %v1476 = vmul.f32 %v1475, %v1474
        %v1477 = vmul.f32 %v1429, %v1319
        %v1478 = vadd.f32 %v1476, %v1477
        %v1479 = vsub.f32 %v1478, %v1319
        %1481 = vset.pattern.permute.xlu0 0
        %1482 = vperm.xlu0 %1481, %v1327
        %v1483 = vpop.permute.xlu0 %1482
        %v1485 = vmul.f32 %v1483, %v1479
        %v1486 = vadd.f32 %v1319, %v1485
        %v1487 = vmul.f32 %v1486, %v1483
        %s1488 = scalar_lea.vmem %s412, %s1325 [#allocation2]
        %1489 = vst.msk [vmem:[%s1488] sm:$0xf] %vm654, %v1487
        %1490 = vst.msk [vmem:[%s455] sm:$0xf] %vm654, %v1486
        %s1491 = sand.u32 %s235, 1
        %s1492 = scalar_lea.sflag [#allocation3], %s1491
        %s1493 = sand.u32 %s235, 1
        %s1494 = smul.addr %s1493, 24
        %s1495 = scalar_lea.vmem [#allocation2], %s1494
        %p1496 = scmp.lt.s32.totalorder %s24, 1
        %s1497 = scalar_select %p1496, %s24, 1
        %s1498 = smul.addr %s1497, 4
        %s1499 = scalar_lea.vmem %s9, %s1498
        // Predicated region
        $region53: #{asreader_forward.3} parent=51 // pred_check
          %p1500 = pneg %p245
        $region54: #{asreader_forward.3} parent=51 // pred_check_branch
          %1502 = sbr.rel (%p1500) target = $region56
        $region55: #{asreader_forward.3} parent=51 // pred_region
          %s1504 = ssub.s32 384, 384
          %1505 = vsyncadd %s1492, %s1504
          %s1506 = smul.addr %s24, 6
          %s1507 = smul.addr %s1506, 64
          %s1508 = scalar_lea.hbm %s8, %s1507
          %s1509 = sshll.u32 %s1495, 4
          %s1510 = int_to_ptr.vmem [resolvable:$true] %s1509
          %1515 = dma.vmem_to_hbm [thread:$0]  %s1510, 384, %s1508, %s1492, 64, 64, 4
        $region56: #{asreader_forward.3} parent=51 // pred_fallthru
          _
        // Predicated region
        $region57: #{asreader_forward.3} parent=51 // pred_check
          %p1516 = pneg %p271
        $region58: #{asreader_forward.3} parent=51 // pred_check_branch
          %1518 = sbr.rel (%p1516) target = $region60
        $region59: #{asreader_forward.3} parent=51 // pred_region
          _
        $region60: #{asreader_forward.3} parent=51 // pred_fallthru
          _
      $region52: #{asreader_forward.3} parent=5 // pred_fallthru
        _
      %p1519 = scmp.le.s32.totalorder 2, %s19
      // Predicated region
      $region61: #{asreader_forward.3} parent=5 // pred_check
        %p1520 = pneg %p1519
      $region62: #{asreader_forward.3} parent=5 // pred_check_branch
        %1522 = sbr.rel (%p1520) target = $region64
      $region63: #{asreader_forward.3} parent=5 // pred_region
        %s1523 = ssub.s32 %s19, 2
        // Predicated region
        $region65: #{asreader_forward.3} parent=63 // pred_check
          %p1524 = pneg %p251
        $region66: #{asreader_forward.3} parent=63 // pred_check_branch
          %1526 = sbr.rel (%p1524) target = $region68
        $region67: #{asreader_forward.3} parent=63 // pred_region
          %s1527 = sand.u32 %s236, 1
          %s1528 = scalar_lea.sflag [#allocation3], %s1527
          %s1529 = sand.u32 %s236, 1
          %s1530 = smul.addr %s1529, 24
          %s1531 = scalar_lea.vmem [#allocation2], %s1530
          %1532 = dma.done %s1528, 384
        $region68: #{asreader_forward.3} parent=63 // pred_fallthru
          _
        // Predicated region
        $region69: #{asreader_forward.3} parent=63 // pred_check
          %p1533 = pneg %p277
        $region70: #{asreader_forward.3} parent=63 // pred_check_branch
          %1535 = sbr.rel (%p1533) target = $region72
        $region71: #{asreader_forward.3} parent=63 // pred_region
          %p1536 = scmp.lt.s32.totalorder %s25, 1
          %s1537 = scalar_select %p1536, %s25, 1
          %s1538 = smul.addr %s1537, 4
          %s1539 = scalar_lea.vmem %s9, %s1538
        $region72: #{asreader_forward.3} parent=63 // pred_fallthru
          _
      $region64: #{asreader_forward.3} parent=5 // pred_fallthru
        _
    $region6: #{asreader_forward.3} parent=1 // loop_footer
      %s23 = sadd.s32 1, %s19
    $region7: #{asreader_forward.3} parent=1 // loop_footer_branch
      %18 = sbr.rel target = $region3
    $region8: #{asreader_forward.3} parent=1 // loop_exit
      _
    %1540 = vsyncpa [#allocation3], 1
    %s1541 = scalar_lea.sflag [#allocation3], 1
    %1542 = vsyncpa %s1541, 1

// kernel: asreader_forward.4
$region0: #{asreader_forward.4}
  #allocation0 [shape = 'u32[]', space=smem, size = 0x4, offset = 0x4, fixed_abs, tag = 'smem constant byte address 0x4 - core index']
  #allocation1 [shape = 'u32[144,128]{1,0:T(1,128)}', space=vmem, size = 0x12000, scoped, tag = 'internal scratch']
  %s0 = inlined_call_operand.vmem [shape: f32[2,12,4,16], index: 0, kind: input, shape index: {}]
  %s1 = inlined_call_operand.vmem [shape: f32[2,12,4,16], index: 1, kind: input, shape index: {}]
  %s2 = inlined_call_operand.vmem [shape: f32[2,12,4,16], index: 2, kind: input, shape index: {}]
  %s3 = inlined_call_operand.vmem [shape: f32[12,4,1], index: 3, kind: input, shape index: {}]
  %s4 = inlined_call_operand.vmem [shape: bf16[2,16,16], index: 4, kind: input, shape index: {}]
  %s5 = inlined_call_operand.vmem [shape: bf16[2,16,16], index: 5, kind: input, shape index: {}]
  %s6 = inlined_call_operand.vmem [shape: bf16[2,16,16], index: 6, kind: input, shape index: {}]
  %s7 = inlined_call_operand.vmem [shape: f32[2,1,16], index: 7, kind: input, shape index: {}]
  %s8 = inlined_call_operand.vmem [shape: f32[2,12,4,16], index: 8, kind: output, shape index: {0}]
  %s9 = inlined_call_operand.hbm [shape: f32[2,4,16], index: 9, kind: output, shape index: {1}]
  %10 = xla_tuple %s8, %s9
  %s11 = sld [smem:[#allocation0]]
  $region73: #{asreader_forward.4} parent=0
    _
  %s13 = ssub.s32 1, %s11
  %s14 = scalar_select 0, %s13, %s11
  $region1: #{asreader_forward.4} parent=0
    #allocation2 [shape = 'u8[4096]{0}', space=vmem, size = 0x1000, scoped, tag = 'output window, operand 1']
    #allocation3 [shape = 's32[2]{0}', space=sflag, size = 0x8, scoped, tag = 'scoped memory for asreader_forward.4']
    %15 = vsyncpa [#allocation3], 0
    %s16 = scalar_lea.sflag [#allocation3], 1
    %17 = vsyncpa %s16, 0
    loop: start=0, step=1, limit=4
    $region2: #{asreader_forward.4} parent=1 // loop_pre_header
      _
    $region3: #{asreader_forward.4} parent=1 // loop_header
      %s19 = sphi 0, %s23
      %p20 = scmp.ge.s32.totalorder %s19, 4
      %s29 = sphi 0, %s31
      %s32 = sphi 0, %s29
      %s33 = sphi 0, %s32
      %s49 = sphi 0, %s33
      %s55 = sphi 0, %s57
      %s58 = sphi 0, %s55
      %s59 = sphi 0, %s58
      %s75 = sphi 0, %s59
      %s81 = sphi 0, %s83
      %s84 = sphi 0, %s81
      %s85 = sphi 0, %s84
      %s101 = sphi 0, %s85
      %s105 = sphi 0, %s105
      %s107 = sphi 0, %s105
      %s108 = sphi 0, %s107
      %s122 = sphi 0, %s108
      %s128 = sphi 0, %s130
      %s131 = sphi 0, %s128
      %s132 = sphi 0, %s131
      %s148 = sphi 0, %s132
      %s154 = sphi 0, %s156
      %s157 = sphi 0, %s154
      %s158 = sphi 0, %s157
      %s174 = sphi 0, %s158
      %s180 = sphi 0, %s182
      %s183 = sphi 0, %s180
      %s184 = sphi 0, %s183
      %s200 = sphi 0, %s184
      %s206 = sphi 0, %s208
      %s209 = sphi 0, %s206
      %s210 = sphi 0, %s209
      %s226 = sphi 0, %s210
      %s232 = sphi 0, %s234
      %s235 = sphi 0, %s232
      %s236 = sphi 0, %s235
      %s252 = sphi 0, %s236
      %s258 = sphi 0, %s260
      %s261 = sphi 0, %s258
      %s262 = sphi 0, %s261
      %s278 = sphi 0, %s262
    $region4: #{asreader_forward.4} parent=1 // loop_header_branch
      %22 = sbr.rel (%p20) target = $region8
    $region5: #{asreader_forward.4} parent=1 // loop_body
      %s24 = ssub.s32 %s19, 1
      %s25 = ssub.s32 %s19, 2
      %s26 = sadd.s32 %s19, 1
      %s27 = ssub.s32 %s19, %s26
      %p28 = scmp.eq.s32.totalorder %s27, 0
      %s30 = sadd.s32 %s29, 1
      %s31 = scalar_select %p28, %s29, %s30
      %p34 = pneg %p28
      %p35 = scmp.eq.s32.totalorder %s19, 1
      %p36 = por %p34, %p35
      %p37 = scmp.ne.s32.totalorder %s29, %s32
      %p38 = scmp.eq.s32.totalorder %s19, 0
      %p39 = por %p37, %p38
      %p40 = scmp.ne.s32.totalorder %s29, %s32
      %p41 = scmp.eq.s32.totalorder %s24, 1
      %p42 = por %p40, %p41
      %p43 = scmp.ne.s32.totalorder %s32, %s33
      %p44 = scmp.eq.s32.totalorder %s24, 0
      %p45 = por %p43, %p44
      %p46 = scmp.ne.s32.totalorder %s32, %s33
      %p47 = scmp.eq.s32.totalorder %s25, 1
      %p48 = por %p46, %p47
      %p50 = scmp.ne.s32.totalorder %s33, %s49
      %p51 = scmp.eq.s32.totalorder %s25, 0
      %p52 = por %p50, %p51
      %s53 = ssub.s32 %s19, %s26
      %p54 = scmp.eq.s32.totalorder %s53, 0
      %s56 = sadd.s32 %s55, 1
      %s57 = scalar_select %p54, %s55, %s56
      %p60 = pneg %p54
      %p61 = scmp.eq.s32.totalorder %s19, 1
      %p62 = por %p60, %p61
      %p63 = scmp.ne.s32.totalorder %s55, %s58
      %p64 = scmp.eq.s32.totalorder %s19, 0
      %p65 = por %p63, %p64
      %p66 = scmp.ne.s32.totalorder %s55, %s58
      %p67 = scmp.eq.s32.totalorder %s24, 1
      %p68 = por %p66, %p67
      %p69 = scmp.ne.s32.totalorder %s58, %s59
      %p70 = scmp.eq.s32.totalorder %s24, 0
      %p71 = por %p69, %p70
      %p72 = scmp.ne.s32.totalorder %s58, %s59
      %p73 = scmp.eq.s32.totalorder %s25, 1
      %p74 = por %p72, %p73
      %p76 = scmp.ne.s32.totalorder %s59, %s75
      %p77 = scmp.eq.s32.totalorder %s25, 0
      %p78 = por %p76, %p77
      %s79 = ssub.s32 %s19, %s26
      %p80 = scmp.eq.s32.totalorder %s79, 0
      %s82 = sadd.s32 %s81, 1
      %s83 = scalar_select %p80, %s81, %s82
      %p86 = pneg %p80
      %p87 = scmp.eq.s32.totalorder %s19, 1
      %p88 = por %p86, %p87
      %p89 = scmp.ne.s32.totalorder %s81, %s84
      %p90 = scmp.eq.s32.totalorder %s19, 0
      %p91 = por %p89, %p90
      %p92 = scmp.ne.s32.totalorder %s81, %s84
      %p93 = scmp.eq.s32.totalorder %s24, 1
      %p94 = por %p92, %p93
      %p95 = scmp.ne.s32.totalorder %s84, %s85
      %p96 = scmp.eq.s32.totalorder %s24, 0
      %p97 = por %p95, %p96
      %p98 = scmp.ne.s32.totalorder %s84, %s85
      %p99 = scmp.eq.s32.totalorder %s25, 1
      %p100 = por %p98, %p99
      %p102 = scmp.ne.s32.totalorder %s85, %s101
      %p103 = scmp.eq.s32.totalorder %s25, 0
      %p104 = por %p102, %p103
      %s106 = sadd.s32 %s105, 1
      %p109 = scmp.eq.s32.totalorder %s19, 1
      %p110 = scmp.ne.s32.totalorder %s105, %s107
      %p111 = scmp.eq.s32.totalorder %s19, 0
      %p112 = por %p110, %p111
      %p113 = scmp.ne.s32.totalorder %s105, %s107
      %p114 = scmp.eq.s32.totalorder %s24, 1
      %p115 = por %p113, %p114
      %p116 = scmp.ne.s32.totalorder %s107, %s108
      %p117 = scmp.eq.s32.totalorder %s24, 0
      %p118 = por %p116, %p117
      %p119 = scmp.ne.s32.totalorder %s107, %s108
      %p120 = scmp.eq.s32.totalorder %s25, 1
      %p121 = por %p119, %p120
      %p123 = scmp.ne.s32.totalorder %s108, %s122
      %p124 = scmp.eq.s32.totalorder %s25, 0
      %p125 = por %p123, %p124
      %s126 = ssub.s32 %s19, %s26
      %p127 = scmp.eq.s32.totalorder %s126, 0
      %s129 = sadd.s32 %s128, 1
      %s130 = scalar_select %p127, %s128, %s129
      %p133 = pneg %p127
      %p134 = scmp.eq.s32.totalorder %s19, 1
      %p135 = por %p133, %p134
      %p136 = scmp.ne.s32.totalorder %s128, %s131
      %p137 = scmp.eq.s32.totalorder %s19, 0
      %p138 = por %p136, %p137
      %p139 = scmp.ne.s32.totalorder %s128, %s131
      %p140 = scmp.eq.s32.totalorder %s24, 1
      %p141 = por %p139, %p140
      %p142 = scmp.ne.s32.totalorder %s131, %s132
      %p143 = scmp.eq.s32.totalorder %s24, 0
      %p144 = por %p142, %p143
      %p145 = scmp.ne.s32.totalorder %s131, %s132
      %p146 = scmp.eq.s32.totalorder %s25, 1
      %p147 = por %p145, %p146
      %p149 = scmp.ne.s32.totalorder %s132, %s148
      %p150 = scmp.eq.s32.totalorder %s25, 0
      %p151 = por %p149, %p150
      %s152 = ssub.s32 %s19, %s26
      %p153 = scmp.eq.s32.totalorder %s152, 0
      %s155 = sadd.s32 %s154, 1
      %s156 = scalar_select %p153, %s154, %s155
      %p159 = pneg %p153
      %p160 = scmp.eq.s32.totalorder %s19, 1
      %p161 = por %p159, %p160
      %p162 = scmp.ne.s32.totalorder %s154, %s157
      %p163 = scmp.eq.s32.totalorder %s19, 0
      %p164 = por %p162, %p163
      %p165 = scmp.ne.s32.totalorder %s154, %s157
      %p166 = scmp.eq.s32.totalorder %s24, 1
      %p167 = por %p165, %p166
      %p168 = scmp.ne.s32.totalorder %s157, %s158
      %p169 = scmp.eq.s32.totalorder %s24, 0
      %p170 = por %p168, %p169
      %p171 = scmp.ne.s32.totalorder %s157, %s158
      %p172 = scmp.eq.s32.totalorder %s25, 1
      %p173 = por %p171, %p172
      %p175 = scmp.ne.s32.totalorder %s158, %s174
      %p176 = scmp.eq.s32.totalorder %s25, 0
      %p177 = por %p175, %p176
      %s178 = ssub.s32 %s19, %s26
      %p179 = scmp.eq.s32.totalorder %s178, 0
      %s181 = sadd.s32 %s180, 1
      %s182 = scalar_select %p179, %s180, %s181
      %p185 = pneg %p179
      %p186 = scmp.eq.s32.totalorder %s19, 1
      %p187 = por %p185, %p186
      %p188 = scmp.ne.s32.totalorder %s180, %s183
      %p189 = scmp.eq.s32.totalorder %s19, 0
      %p190 = por %p188, %p189
      %p191 = scmp.ne.s32.totalorder %s180, %s183
      %p192 = scmp.eq.s32.totalorder %s24, 1
      %p193 = por %p191, %p192
      %p194 = scmp.ne.s32.totalorder %s183, %s184
      %p195 = scmp.eq.s32.totalorder %s24, 0
      %p196 = por %p194, %p195
      %p197 = scmp.ne.s32.totalorder %s183, %s184
      %p198 = scmp.eq.s32.totalorder %s25, 1
      %p199 = por %p197, %p198
      %p201 = scmp.ne.s32.totalorder %s184, %s200
      %p202 = scmp.eq.s32.totalorder %s25, 0
      %p203 = por %p201, %p202
      %s204 = ssub.s32 %s19, %s26
      %p205 = scmp.eq.s32.totalorder %s204, 0
      %s207 = sadd.s32 %s206, 1
      %s208 = scalar_select %p205, %s206, %s207
      %p211 = pneg %p205
      %p212 = scmp.eq.s32.totalorder %s19, 1
      %p213 = por %p211, %p212
      %p214 = scmp.ne.s32.totalorder %s206, %s209
      %p215 = scmp.eq.s32.totalorder %s19, 0
      %p216 = por %p214, %p215
      %p217 = scmp.ne.s32.totalorder %s206, %s209
      %p218 = scmp.eq.s32.totalorder %s24, 1
      %p219 = por %p217, %p218
      %p220 = scmp.ne.s32.totalorder %s209, %s210
      %p221 = scmp.eq.s32.totalorder %s24, 0
      %p222 = por %p220, %p221
      %p223 = scmp.ne.s32.totalorder %s209, %s210
      %p224 = scmp.eq.s32.totalorder %s25, 1
      %p225 = por %p223, %p224
      %p227 = scmp.ne.s32.totalorder %s210, %s226
      %p228 = scmp.eq.s32.totalorder %s25, 0
      %p229 = por %p227, %p228
      %s230 = ssub.s32 %s19, %s26
      %p231 = scmp.eq.s32.totalorder %s230, 0
      %s233 = sadd.s32 %s232, 1
      %s234 = scalar_select %p231, %s232, %s233
      %p237 = pneg %p231
      %p238 = scmp.eq.s32.totalorder %s19, 1
      %p239 = por %p237, %p238
      %p240 = scmp.ne.s32.totalorder %s232, %s235
      %p241 = scmp.eq.s32.totalorder %s19, 0
      %p242 = por %p240, %p241
      %p243 = scmp.ne.s32.totalorder %s232, %s235
      %p244 = scmp.eq.s32.totalorder %s24, 1
      %p245 = por %p243, %p244
      %p246 = scmp.ne.s32.totalorder %s235, %s236
      %p247 = scmp.eq.s32.totalorder %s24, 0
      %p248 = por %p246, %p247
      %p249 = scmp.ne.s32.totalorder %s235, %s236
      %p250 = scmp.eq.s32.totalorder %s25, 1
      %p251 = por %p249, %p250
      %p253 = scmp.ne.s32.totalorder %s236, %s252
      %p254 = scmp.eq.s32.totalorder %s25, 0
      %p255 = por %p253, %p254
      %s256 = ssub.s32 %s19, %s26
      %p257 = scmp.eq.s32.totalorder %s256, 0
      %s259 = sadd.s32 %s258, 1
      %s260 = scalar_select %p257, %s258, %s259
      %p263 = pneg %p257
      %p264 = scmp.eq.s32.totalorder %s19, 1
      %p265 = por %p263, %p264
      %p266 = scmp.ne.s32.totalorder %s258, %s261
      %p267 = scmp.eq.s32.totalorder %s19, 0
      %p268 = por %p266, %p267
      %p269 = scmp.ne.s32.totalorder %s258, %s261
      %p270 = scmp.eq.s32.totalorder %s24, 1
      %p271 = por %p269, %p270
      %p272 = scmp.ne.s32.totalorder %s261, %s262
      %p273 = scmp.eq.s32.totalorder %s24, 0
      %p274 = por %p272, %p273
      %p275 = scmp.ne.s32.totalorder %s261, %s262
      %p276 = scmp.eq.s32.totalorder %s25, 1
      %p277 = por %p275, %p276
      %p279 = scmp.ne.s32.totalorder %s262, %s278
      %p280 = scmp.eq.s32.totalorder %s25, 0
      %p281 = por %p279, %p280
      %p282 = scmp.le.s32.totalorder 1, %s19
      %p283 = scmp.lt.s32.totalorder %s19, 3
      %p284 = pnand %p282, %p283
      %p285 = pneg %p284
      // Predicated region
      $region9: #{asreader_forward.4} parent=5 // pred_check
        _
      $region10: #{asreader_forward.4} parent=5 // pred_check_branch
        %287 = sbr.rel (%p284) target = $region12
      $region11: #{asreader_forward.4} parent=5 // pred_region
        %s288 = ssub.s32 %s19, 1
        // Predicated region
        $region13: #{asreader_forward.4} parent=11 // pred_check
          %p289 = pneg %p118
        $region14: #{asreader_forward.4} parent=11 // pred_check_branch
          %291 = sbr.rel (%p289) target = $region16
        $region15: #{asreader_forward.4} parent=11 // pred_region
          _
        $region16: #{asreader_forward.4} parent=11 // pred_fallthru
          _
      $region12: #{asreader_forward.4} parent=5 // pred_fallthru
        _
      %p292 = scmp.lt.s32.totalorder %s19, 2
      // Predicated region
      $region17: #{asreader_forward.4} parent=5 // pred_check
        %p293 = pneg %p292
      $region18: #{asreader_forward.4} parent=5 // pred_check_branch
        %295 = sbr.rel (%p293) target = $region20
      $region19: #{asreader_forward.4} parent=5 // pred_region
        // Predicated region
        $region21: #{asreader_forward.4} parent=19 // pred_check
          %p296 = pneg %p39
        $region22: #{asreader_forward.4} parent=19 // pred_check_branch
          %298 = sbr.rel (%p296) target = $region24
        $region23: #{asreader_forward.4} parent=19 // pred_region
          %p299 = scmp.lt.s32.totalorder %s19, 1
          %s300 = scalar_select %p299, %s19, 1
          %s301 = smul.addr %s300, 12
          %s302 = smul.addr %s301, 4
          %s303 = scalar_lea.vmem %s0, %s302
        $region24: #{asreader_forward.4} parent=19 // pred_fallthru
          _
        // Predicated region
        $region25: #{asreader_forward.4} parent=19 // pred_check
          %p304 = pneg %p65
        $region26: #{asreader_forward.4} parent=19 // pred_check_branch
          %306 = sbr.rel (%p304) target = $region28
        $region27: #{asreader_forward.4} parent=19 // pred_region
          %p307 = scmp.lt.s32.totalorder %s19, 1
          %s308 = scalar_select %p307, %s19, 1
          %s309 = smul.addr %s308, 12
          %s310 = smul.addr %s309, 4
          %s311 = scalar_lea.vmem %s1, %s310
        $region28: #{asreader_forward.4} parent=19 // pred_fallthru
          _
        // Predicated region
        $region29: #{asreader_forward.4} parent=19 // pred_check
          %p312 = pneg %p91
        $region30: #{asreader_forward.4} parent=19 // pred_check_branch
          %314 = sbr.rel (%p312) target = $region32
        $region31: #{asreader_forward.4} parent=19 // pred_region
          %p315 = scmp.lt.s32.totalorder %s19, 1
          %s316 = scalar_select %p315, %s19, 1
          %s317 = smul.addr %s316, 12
          %s318 = smul.addr %s317, 4
          %s319 = scalar_lea.vmem %s2, %s318
        $region32: #{asreader_forward.4} parent=19 // pred_fallthru
          _
        // Predicated region
        $region33: #{asreader_forward.4} parent=19 // pred_check
          %p320 = pneg %p138
        $region34: #{asreader_forward.4} parent=19 // pred_check_branch
          %322 = sbr.rel (%p320) target = $region36
        $region35: #{asreader_forward.4} parent=19 // pred_region
          %p323 = scmp.lt.s32.totalorder %s19, 1
          %s324 = scalar_select %p323, %s19, 1
          %s325 = smul.addr %s324, 2
          %s326 = smul.addr %s325, 4
          %s327 = scalar_lea.vmem %s4, %s326
        $region36: #{asreader_forward.4} parent=19 // pred_fallthru
          _
        // Predicated region
        $region37: #{asreader_forward.4} parent=19 // pred_check
          %p328 = pneg %p164
        $region38: #{asreader_forward.4} parent=19 // pred_check_branch
          %330 = sbr.rel (%p328) target = $region40
        $region39: #{asreader_forward.4} parent=19 // pred_region
          %p331 = scmp.lt.s32.totalorder %s19, 1
          %s332 = scalar_select %p331, %s19, 1
          %s333 = smul.addr %s332, 2
          %s334 = smul.addr %s333, 4
          %s335 = scalar_lea.vmem %s5, %s334
        $region40: #{asreader_forward.4} parent=19 // pred_fallthru
          _
        // Predicated region
        $region41: #{asreader_forward.4} parent=19 // pred_check
          %p336 = pneg %p190
        $region42: #{asreader_forward.4} parent=19 // pred_check_branch
          %338 = sbr.rel (%p336) target = $region44
        $region43: #{asreader_forward.4} parent=19 // pred_region
          %p339 = scmp.lt.s32.totalorder %s19, 1
          %s340 = scalar_select %p339, %s19, 1
          %s341 = smul.addr %s340, 2
          %s342 = smul.addr %s341, 4
          %s343 = scalar_lea.vmem %s6, %s342
        $region44: #{asreader_forward.4} parent=19 // pred_fallthru
          _
        // Predicated region
        $region45: #{asreader_forward.4} parent=19 // pred_check
          %p344 = pneg %p216
        $region46: #{asreader_forward.4} parent=19 // pred_check_branch
          %346 = sbr.rel (%p344) target = $region48
        $region47: #{asreader_forward.4} parent=19 // pred_region
          %p347 = scmp.lt.s32.totalorder %s19, 1
          %s348 = scalar_select %p347, %s19, 1
          %s349 = scalar_lea.vmem %s7, %s348
        $region48: #{asreader_forward.4} parent=19 // pred_fallthru
          _
      $region20: #{asreader_forward.4} parent=5 // pred_fallthru
        _
      %p350 = scmp.le.s32.totalorder 1, %s19
      %p351 = scmp.lt.s32.totalorder %s19, 3
      %p352 = pnand %p350, %p351
      %p353 = pneg %p352
      // Predicated region
      $region49: #{asreader_forward.4} parent=5 // pred_check
        _
      $region50: #{asreader_forward.4} parent=5 // pred_check_branch
        %355 = sbr.rel (%p352) target = $region52
      $region51: #{asreader_forward.4} parent=5 // pred_region
        %s356 = ssub.s32 %s19, 1
        %p357 = scmp.lt.s32.totalorder %s24, 1
        %s358 = scalar_select %p357, %s24, 1
        %s359 = smul.addr %s358, 12
        %s360 = smul.addr %s359, 4
        %s361 = scalar_lea.vmem %s0, %s360
        %p362 = pneg %p45
        %p363 = pneg %p42
        %p364 = scmp.lt.s32.totalorder %s24, 1
        %s365 = scalar_select %p364, %s24, 1
        %s366 = smul.addr %s365, 12
        %s367 = smul.addr %s366, 4
        %s368 = scalar_lea.vmem %s1, %s367
        %p369 = pneg %p71
        %p370 = pneg %p68
        %p371 = scmp.lt.s32.totalorder %s24, 1
        %s372 = scalar_select %p371, %s24, 1
        %s373 = smul.addr %s372, 12
        %s374 = smul.addr %s373, 4
        %s375 = scalar_lea.vmem %s2, %s374
        %p376 = pneg %p97
        %p377 = pneg %p94
        %p378 = pneg %p118
        %p379 = pneg %p115
        %p380 = scmp.lt.s32.totalorder %s24, 1
        %s381 = scalar_select %p380, %s24, 1
        %s382 = smul.addr %s381, 2
        %s383 = smul.addr %s382, 4
        %s384 = scalar_lea.vmem %s4, %s383
        %p385 = pneg %p144
        %p386 = pneg %p141
        %p387 = scmp.lt.s32.totalorder %s24, 1
        %s388 = scalar_select %p387, %s24, 1
        %s389 = smul.addr %s388, 2
        %s390 = smul.addr %s389, 4
        %s391 = scalar_lea.vmem %s5, %s390
        %p392 = pneg %p170
        %p393 = pneg %p167
        %p394 = scmp.lt.s32.totalorder %s24, 1
        %s395 = scalar_select %p394, %s24, 1
        %s396 = smul.addr %s395, 2
        %s397 = smul.addr %s396, 4
        %s398 = scalar_lea.vmem %s6, %s397
        %p399 = pneg %p196
        %p400 = pneg %p193
        %p401 = scmp.lt.s32.totalorder %s24, 1
        %s402 = scalar_select %p401, %s24, 1
        %s403 = scalar_lea.vmem %s7, %s402
        %p404 = pneg %p222
        %p405 = pneg %p219
        %p406 = pneg %p248
        %p407 = pneg %p245
        %p408 = scmp.lt.s32.totalorder %s24, 1
        %s409 = scalar_select %p408, %s24, 1
        %s410 = smul.addr %s409, 12
        %s411 = smul.addr %s410, 4
        %s412 = scalar_lea.vmem %s8, %s411
        %p413 = pneg %p274
        %p414 = pneg %p271
        %s415 = sand.u32 %s261, 1
        %s416 = scalar_lea.sflag [#allocation3], %s415
        %s417 = sand.u32 %s261, 1
        %s418 = smul.addr %s417, 4
        %s419 = scalar_lea.vmem [#allocation2], %s418
        %p420 = scmp.lt.s32.totalorder %s24, 1
        %s421 = scalar_select %p420, %s24, 1
        %s422 = smul.addr %s421, 12
        %s423 = smul.addr %s422, 4
        %s424 = scalar_lea.vmem %s0, %s423
        %p425 = scmp.lt.s32.totalorder %s24, 1
        %s426 = scalar_select %p425, %s24, 1
        %s427 = smul.addr %s426, 12
        %s428 = smul.addr %s427, 4
        %s429 = scalar_lea.vmem %s1, %s428
        %p430 = scmp.lt.s32.totalorder %s24, 1
        %s431 = scalar_select %p430, %s24, 1
        %s432 = smul.addr %s431, 12
        %s433 = smul.addr %s432, 4
        %s434 = scalar_lea.vmem %s2, %s433
        %p435 = scmp.lt.s32.totalorder %s24, 1
        %s436 = scalar_select %p435, %s24, 1
        %s437 = smul.addr %s436, 2
        %s438 = smul.addr %s437, 4
        %s439 = scalar_lea.vmem %s4, %s438
        %p440 = scmp.lt.s32.totalorder %s24, 1
        %s441 = scalar_select %p440, %s24, 1
        %s442 = smul.addr %s441, 2
        %s443 = smul.addr %s442, 4
        %s444 = scalar_lea.vmem %s5, %s443
        %p445 = scmp.lt.s32.totalorder %s24, 1
        %s446 = scalar_select %p445, %s24, 1
        %s447 = smul.addr %s446, 2
        %s448 = smul.addr %s447, 4
        %s449 = scalar_lea.vmem %s6, %s448
        %p450 = scmp.lt.s32.totalorder %s24, 1
        %s451 = scalar_select %p450, %s24, 1
        %s452 = scalar_lea.vmem %s7, %s451
        %p453 = scmp.lt.s32.totalorder %s24, 1
        %s454 = scalar_select %p453, %s24, 1
        %s455 = smul.addr %s454, 12
        %s456 = smul.addr %s455, 4
        %s457 = scalar_lea.vmem %s8, %s456
        %p459 = scmp.eq.s32.totalorder %s24, 0
        %s460 = scalar_select %p459, 0, 11
        %s461 = scalar_select %p459, 1, 4294967295
        %v462 = vld [vmem:[%s439] sm:$0xf]
        %v463 = vld [vmem:[%s439 + $0x4] sm:$0xf]
        %v464 = vld [vmem:[%s444] sm:$0xf]
        %v465 = vld [vmem:[%s444 + $0x4] sm:$0xf]
        %v466 = vld [vmem:[%s449] sm:$0xf]
        %v467 = vld [vmem:[%s449 + $0x4] sm:$0xf]
        %v468 = vld [vmem:[%s452] sm:$0x1]
        %s469 = smul.u32 %s460, 4
        %s470 = scalar_lea.vmem %s3, %s469
        %v471 = vld [vmem:[%s470] sm:$0xf]
        %s472 = scalar_lea.vmem %s424, %s469
        %v473 = vld [vmem:[%s472] sm:$0xf]
        %v476 = vunpack.c.l.b16 %v462
        %v477 = vunpack.c.l.b16 %v463
        %v478 = vpack.c.b16 %v477, %v476
        %vm480 = vcmask 130048
        %v482 = vsel %vm480, 0, 0
        %484 = vmatprep.subr.bf16.mxu0 0
        %485 = vmatpush1.bf16.msra.mxu0 %v478
        %486 = vmatprep.subr.bf16.mxu0 0
        %487 = vmatpush1.bf16.msra.mxu0 0
        %488 = vmatprep.subr.bf16.mxu0 0
        %489 = vmatpush1.bf16.msra.mxu0 0
        %490 = vmatprep.subr.bf16.mxu0 0
        %491 = vmatpush1.bf16.msra.mxu0 0
        %492 = vmatprep.subr.bf16.mxu0 0
        %493 = vmatpush1.bf16.msra.mxu0 0
        %494 = vmatprep.subr.bf16.mxu0 0
        %495 = vmatpush1.bf16.msra.mxu0 0
        %496 = vmatprep.subr.bf16.mxu0 0
        %497 = vmatpush1.bf16.msra.mxu0 0
        %498 = vmatprep.subr.bf16.mxu0 0
        %499 = vmatpush1.bf16.msra.mxu0 0
        %500 = vmatprep.subr.bf16.mxu0 0
        %501 = vmatpush1.bf16.msra.mxu0 0
        %502 = vmatprep.subr.bf16.mxu0 0
        %503 = vmatpush1.bf16.msra.mxu0 0
        %504 = vmatprep.subr.bf16.mxu0 0
        %505 = vmatpush1.bf16.msra.mxu0 0
        %506 = vmatprep.subr.bf16.mxu0 0
        %507 = vmatpush1.bf16.msra.mxu0 0
        %508 = vmatprep.subr.bf16.mxu0 0
        %509 = vmatpush1.bf16.msra.mxu0 0
        %510 = vmatprep.subr.bf16.mxu0 0
        %511 = vmatpush1.bf16.msra.mxu0 0
        %512 = vmatprep.subr.bf16.mxu0 0
        %513 = vmatpush1.bf16.msra.mxu0 0
        %514 = vmatprep.subr.bf16.mxu0 0
        %515 = vmatpush1.bf16.msra.mxu0 0
        %516 = vmatprep.mubr.bf16.mxu0 0
        %517 = vmatmul.mubr.bf16.gmra.mrb[0].mxu0 %v482
        %v518 = vpop.f32.mrb[0].mxu0
        %v519 = vadd.f32 0.0, %v518
        %v520 = vpop.f32.mrb[0].mxu0
        %v521 = vpop.f32.mrb[0].mxu0
        %v522 = vpop.f32.mrb[0].mxu0
        %523 = vdwg.mxu0
        %v524 = vadd.f32 %v473, %v519
        %v525 = vxor.u32 %v524, 2147483648
        %v526 = vmul.f32 %v525, 1.442695
        %v527 = vpow.pop %v526
        %v528 = vadd.f32 %v527, 1.0
        %v529 = vrcp.pop %v528
        %v530 = vmul.f32 1.0, %v529
        %s531 = scalar_lea.vmem %s429, %s469
        %v532 = vld [vmem:[%s531] sm:$0xf]
        %v535 = vunpack.c.l.b16 %v464
        %v536 = vunpack.c.l.b16 %v465
        %v537 = vpack.c.b16 %v536, %v535
        %539 = vmatprep.subr.bf16.mxu0 0
        %540 = vmatpush1.bf16.msra.mxu0 %v537
        %541 = vmatprep.subr.bf16.mxu0 0
        %542 = vmatpush1.bf16.msra.mxu0 0
        %543 = vmatprep.subr.bf16.mxu0 0
        %544 = vmatpush1.bf16.msra.mxu0 0
        %545 = vmatprep.subr.bf16.mxu0 0
        %546 = vmatpush1.bf16.msra.mxu0 0
        %547 = vmatprep.subr.bf16.mxu0 0
        %548 = vmatpush1.bf16.msra.mxu0 0
        %549 = vmatprep.subr.bf16.mxu0 0
        %550 = vmatpush1.bf16.msra.mxu0 0
        %551 = vmatprep.subr.bf16.mxu0 0
        %552 = vmatpush1.bf16.msra.mxu0 0
        %553 = vmatprep.subr.bf16.mxu0 0
        %554 = vmatpush1.bf16.msra.mxu0 0
        %555 = vmatprep.subr.bf16.mxu0 0
        %556 = vmatpush1.bf16.msra.mxu0 0
        %557 = vmatprep.subr.bf16.mxu0 0
        %558 = vmatpush1.bf16.msra.mxu0 0
        %559 = vmatprep.subr.bf16.mxu0 0
        %560 = vmatpush1.bf16.msra.mxu0 0
        %561 = vmatprep.subr.bf16.mxu0 0
        %562 = vmatpush1.bf16.msra.mxu0 0
        %563 = vmatprep.subr.bf16.mxu0 0
        %564 = vmatpush1.bf16.msra.mxu0 0
        %565 = vmatprep.subr.bf16.mxu0 0
        %566 = vmatpush1.bf16.msra.mxu0 0
        %567 = vmatprep.subr.bf16.mxu0 0
        %568 = vmatpush1.bf16.msra.mxu0 0
        %569 = vmatprep.subr.bf16.mxu0 0
        %570 = vmatpush1.bf16.msra.mxu0 0
        %571 = vmatprep.mubr.bf16.mxu0 0
        %572 = vmatmul.mubr.bf16.gmra.mrb[0].mxu0 %v482
        %v573 = vpop.f32.mrb[0].mxu0
        %v574 = vadd.f32 0.0, %v573
        %v575 = vpop.f32.mrb[0].mxu0
        %v576 = vpop.f32.mrb[0].mxu0
        %v577 = vpop.f32.mrb[0].mxu0
        %578 = vdwg.mxu0
        %v579 = vadd.f32 %v532, %v574
        %v580 = vxor.u32 %v579, 2147483648
        %v581 = vmul.f32 %v580, 1.442695
        %v582 = vpow.pop %v581
        %v583 = vadd.f32 %v582, 1.0
        %v584 = vrcp.pop %v583
        %v585 = vmul.f32 1.0, %v584
        %s586 = scalar_lea.vmem %s434, %s469
        %v587 = vld [vmem:[%s586] sm:$0xf]
        %v589 = vlaneseq
        %v590 = vshrl.u32 %v589, 7
        %v591 = vsub.s32 0, %v590
        %v592 = vrot.slane %v468, %v591
        %v596 = vunpack.c.l.b16 %v466
        %v597 = vunpack.c.l.b16 %v467
        %v598 = vpack.c.b16 %v597, %v596
        %600 = vmatprep.subr.bf16.mxu0 0
        %601 = vmatpush1.bf16.msra.mxu0 %v598
        %602 = vmatprep.subr.bf16.mxu0 0
        %603 = vmatpush1.bf16.msra.mxu0 0
        %604 = vmatprep.subr.bf16.mxu0 0
        %605 = vmatpush1.bf16.msra.mxu0 0
        %606 = vmatprep.subr.bf16.mxu0 0
        %607 = vmatpush1.bf16.msra.mxu0 0
        %608 = vmatprep.subr.bf16.mxu0 0
        %609 = vmatpush1.bf16.msra.mxu0 0
        %610 = vmatprep.subr.bf16.mxu0 0
        %611 = vmatpush1.bf16.msra.mxu0 0
        %612 = vmatprep.subr.bf16.mxu0 0
        %613 = vmatpush1.bf16.msra.mxu0 0
        %614 = vmatprep.subr.bf16.mxu0 0
        %615 = vmatpush1.bf16.msra.mxu0 0
        %616 = vmatprep.subr.bf16.mxu0 0
        %617 = vmatpush1.bf16.msra.mxu0 0
        %618 = vmatprep.subr.bf16.mxu0 0
        %619 = vmatpush1.bf16.msra.mxu0 0
        %620 = vmatprep.subr.bf16.mxu0 0
        %621 = vmatpush1.bf16.msra.mxu0 0
        %622 = vmatprep.subr.bf16.mxu0 0
        %623 = vmatpush1.bf16.msra.mxu0 0
        %624 = vmatprep.subr.bf16.mxu0 0
        %625 = vmatpush1.bf16.msra.mxu0 0
        %626 = vmatprep.subr.bf16.mxu0 0
        %627 = vmatpush1.bf16.msra.mxu0 0
        %628 = vmatprep.subr.bf16.mxu0 0
        %629 = vmatpush1.bf16.msra.mxu0 0
        %630 = vmatprep.subr.bf16.mxu0 0
        %631 = vmatpush1.bf16.msra.mxu0 0
        %632 = vmatprep.mubr.bf16.mxu0 0
        %633 = vmatmul.mubr.bf16.gmra.mrb[0].mxu0 %v482
        %v634 = vpop.f32.mrb[0].mxu0
        %v635 = vadd.f32 %v592, %v634
        %v636 = vpop.f32.mrb[0].mxu0
        %v637 = vpop.f32.mrb[0].mxu0
        %v638 = vpop.f32.mrb[0].mxu0
        %639 = vdwg.mxu0
        %v640 = vmul.f32 %v530, %v635
        %v641 = vadd.f32 %v587, %v640
        %v642 = vtanh.pop %v641
        %v643 = vsub.f32 1.0, %v585
        %v644 = vmul.f32 %v643, %v642
        %v645 = vmul.f32 %v585, 0.0
        %v646 = vadd.f32 %v644, %v645
        %648 = vset.pattern.permute.xlu0 0
        %649 = vperm.xlu0 %648, %v471
        %v650 = vpop.permute.xlu0 %649
        %v652 = vmul.f32 %v650, %v646
        %v653 = vadd.f32 %v652, 0.0
        %v654 = vmul.f32 %v653, %v650
        %s655 = scalar_lea.vmem %s457, %s469
        %vm656 = vcmask 125952
        %657 = vst.msk [vmem:[%s655] sm:$0xf] %vm656, %v654
        %s658 = sadd.s32 %s460, %s461
        %s659 = smul.u32 %s658, 4
        %s660 = scalar_lea.vmem %s3, %s659
        %v661 = vld [vmem:[%s660] sm:$0xf]
        %v662 = vpack.c.bf16 %v653, %v653
        %s663 = scalar_lea.vmem %s424, %s659
        %v664 = vld [vmem:[%s663] sm:$0xf]
        %v666 = vsel %vm480, %v662, 0
        %668 = vmatprep.subr.bf16.mxu0 0
        %669 = vmatpush1.bf16.msra.mxu0 %v478
        %670 = vmatprep.subr.bf16.mxu0 0
        %671 = vmatpush1.bf16.msra.mxu0 0
        %672 = vmatprep.subr.bf16.mxu0 0
        %673 = vmatpush1.bf16.msra.mxu0 0
        %674 = vmatprep.subr.bf16.mxu0 0
        %675 = vmatpush1.bf16.msra.mxu0 0
        %676 = vmatprep.subr.bf16.mxu0 0
        %677 = vmatpush1.bf16.msra.mxu0 0
        %678 = vmatprep.subr.bf16.mxu0 0
        %679 = vmatpush1.bf16.msra.mxu0 0
        %680 = vmatprep.subr.bf16.mxu0 0
        %681 = vmatpush1.bf16.msra.mxu0 0
        %682 = vmatprep.subr.bf16.mxu0 0
        %683 = vmatpush1.bf16.msra.mxu0 0
        %684 = vmatprep.subr.bf16.mxu0 0
        %685 = vmatpush1.bf16.msra.mxu0 0
        %686 = vmatprep.subr.bf16.mxu0 0
        %687 = vmatpush1.bf16.msra.mxu0 0
        %688 = vmatprep.subr.bf16.mxu0 0
        %689 = vmatpush1.bf16.msra.mxu0 0
        %690 = vmatprep.subr.bf16.mxu0 0
        %691 = vmatpush1.bf16.msra.mxu0 0
        %692 = vmatprep.subr.bf16.mxu0 0
        %693 = vmatpush1.bf16.msra.mxu0 0
        %694 = vmatprep.subr.bf16.mxu0 0
        %695 = vmatpush1.bf16.msra.mxu0 0
        %696 = vmatprep.subr.bf16.mxu0 0
        %697 = vmatpush1.bf16.msra.mxu0 0
        %698 = vmatprep.subr.bf16.mxu0 0
        %699 = vmatpush1.bf16.msra.mxu0 0
        %700 = vmatprep.mubr.bf16.mxu0 0
        %701 = vmatmul.mubr.bf16.gmra.mrb[0].mxu0 %v666
        %v702 = vpop.f32.mrb[0].mxu0
        %v703 = vadd.f32 0.0, %v702
        %v704 = vpop.f32.mrb[0].mxu0
        %v705 = vpop.f32.mrb[0].mxu0
        %v706 = vpop.f32.mrb[0].mxu0
        %707 = vdwg.mxu0
        %v708 = vadd.f32 %v664, %v703
        %v709 = vxor.u32 %v708, 2147483648
        %v710 = vmul.f32 %v709, 1.442695
        %v711 = vpow.pop %v710
        %v712 = vadd.f32 %v711, 1.0
        %v713 = vrcp.pop %v712
        %v714 = vmul.f32 1.0, %v713
        %s715 = scalar_lea.vmem %s429, %s659
        %v716 = vld [vmem:[%s715] sm:$0xf]
        %717 = vmatprep.subr.bf16.mxu0 0
        %718 = vmatpush1.bf16.msra.mxu0 %v537
        %719 = vmatprep.subr.bf16.mxu0 0
        %720 = vmatpush1.bf16.msra.mxu0 0
        %721 = vmatprep.subr.bf16.mxu0 0
        %722 = vmatpush1.bf16.msra.mxu0 0
        %723 = vmatprep.subr.bf16.mxu0 0
        %724 = vmatpush1.bf16.msra.mxu0 0
        %725 = vmatprep.subr.bf16.mxu0 0
        %726 = vmatpush1.bf16.msra.mxu0 0
        %727 = vmatprep.subr.bf16.mxu0 0
        %728 = vmatpush1.bf16.msra.mxu0 0
        %729 = vmatprep.subr.bf16.mxu0 0
        %730 = vmatpush1.bf16.msra.mxu0 0
        %731 = vmatprep.subr.bf16.mxu0 0
        %732 = vmatpush1.bf16.msra.mxu0 0
        %733 = vmatprep.subr.bf16.mxu0 0
        %734 = vmatpush1.bf16.msra.mxu0 0
        %735 = vmatprep.subr.bf16.mxu0 0
        %736 = vmatpush1.bf16.msra.mxu0 0
        %737 = vmatprep.subr.bf16.mxu0 0
        %738 = vmatpush1.bf16.msra.mxu0 0
        %739 = vmatprep.subr.bf16.mxu0 0
        %740 = vmatpush1.bf16.msra.mxu0 0
        %741 = vmatprep.subr.bf16.mxu0 0
        %742 = vmatpush1.bf16.msra.mxu0 0
        %743 = vmatprep.subr.bf16.mxu0 0
        %744 = vmatpush1.bf16.msra.mxu0 0
        %745 = vmatprep.subr.bf16.mxu0 0
        %746 = vmatpush1.bf16.msra.mxu0 0
        %747 = vmatprep.subr.bf16.mxu0 0
        %748 = vmatpush1.bf16.msra.mxu0 0
        %749 = vmatprep.mubr.bf16.mxu0 0
        %750 = vmatmul.mubr.bf16.gmra.mrb[0].mxu0 %v666
        %v751 = vpop.f32.mrb[0].mxu0
        %v752 = vadd.f32 0.0, %v751
        %v753 = vpop.f32.mrb[0].mxu0
        %v754 = vpop.f32.mrb[0].mxu0
        %v755 = vpop.f32.mrb[0].mxu0
        %756 = vdwg.mxu0
        %v757 = vadd.f32 %v716, %v752
        %v758 = vxor.u32 %v757, 2147483648
        %v759 = vmul.f32 %v758, 1.442695
        %v760 = vpow.pop %v759
        %v761 = vadd.f32 %v760, 1.0
        %v762 = vrcp.pop %v761
        %v763 = vmul.f32 1.0, %v762
        %s764 = scalar_lea.vmem %s434, %s659
        %v765 = vld [vmem:[%s764] sm:$0xf]
        %766 = vmatprep.subr.bf16.mxu0 0
        %767 = vmatpush1.bf16.msra.mxu0 %v598
        %768 = vmatprep.subr.bf16.mxu0 0
        %769 = vmatpush1.bf16.msra.mxu0 0
        %770 = vmatprep.subr.bf16.mxu0 0
        %771 = vmatpush1.bf16.msra.mxu0 0
        %772 = vmatprep.subr.bf16.mxu0 0
        %773 = vmatpush1.bf16.msra.mxu0 0
        %774 = vmatprep.subr.bf16.mxu0 0
        %775 = vmatpush1.bf16.msra.mxu0 0
        %776 = vmatprep.subr.bf16.mxu0 0
        %777 = vmatpush1.bf16.msra.mxu0 0
        %778 = vmatprep.subr.bf16.mxu0 0
        %779 = vmatpush1.bf16.msra.mxu0 0
        %780 = vmatprep.subr.bf16.mxu0 0
        %781 = vmatpush1.bf16.msra.mxu0 0
        %782 = vmatprep.subr.bf16.mxu0 0
        %783 = vmatpush1.bf16.msra.mxu0 0
        %784 = vmatprep.subr.bf16.mxu0 0
        %785 = vmatpush1.bf16.msra.mxu0 0
        %786 = vmatprep.subr.bf16.mxu0 0
        %787 = vmatpush1.bf16.msra.mxu0 0
        %788 = vmatprep.subr.bf16.mxu0 0
        %789 = vmatpush1.bf16.msra.mxu0 0
        %790 = vmatprep.subr.bf16.mxu0 0
        %791 = vmatpush1.bf16.msra.mxu0 0
        %792 = vmatprep.subr.bf16.mxu0 0
        %793 = vmatpush1.bf16.msra.mxu0 0
        %794 = vmatprep.subr.bf16.mxu0 0
        %795 = vmatpush1.bf16.msra.mxu0 0
        %796 = vmatprep.subr.bf16.mxu0 0
        %797 = vmatpush1.bf16.msra.mxu0 0
        %798 = vmatprep.mubr.bf16.mxu0 0
        %799 = vmatmul.mubr.bf16.gmra.mrb[0].mxu0 %v666
        %v800 = vpop.f32.mrb[0].mxu0
        %v801 = vadd.f32 %v592, %v800
        %v802 = vpop.f32.mrb[0].mxu0
        %v803 = vpop.f32.mrb[0].mxu0
        %v804 = vpop.f32.mrb[0].mxu0
        %805 = vdwg.mxu0
        %v806 = vmul.f32 %v714, %v801
        %v807 = vadd.f32 %v765, %v806
        %v808 = vtanh.pop %v807
        %v809 = vsub.f32 1.0, %v763
        %v810 = vmul.f32 %v809, %v808
        %v811 = vmul.f32 %v763, %v653
        %v812 = vadd.f32 %v810, %v811
        %v813 = vsub.f32 %v812, %v653
        %815 = vset.pattern.permute.xlu0 0
        %816 = vperm.xlu0 %815, %v661
        %v817 = vpop.permute.xlu0 %816
        %v819 = vmul.f32 %v817, %v813
        %v820 = vadd.f32 %v653, %v819
        %v821 = vmul.f32 %v820, %v817
        %s822 = scalar_lea.vmem %s457, %s659
        %823 = vst.msk [vmem:[%s822] sm:$0xf] %vm656, %v821
        %s824 = smul.u32 %s461, 2
        %s825 = sadd.s32 %s460, %s824
        %s826 = smul.u32 %s825, 4
        %s827 = scalar_lea.vmem %s3, %s826
        %v828 = vld [vmem:[%s827] sm:$0xf]
        %v829 = vpack.c.bf16 %v820, %v820
        %s830 = scalar_lea.vmem %s424, %s826
        %v831 = vld [vmem:[%s830] sm:$0xf]
        %v833 = vsel %vm480, %v829, 0
        %835 = vmatprep.subr.bf16.mxu0 0
        %836 = vmatpush1.bf16.msra.mxu0 %v478
        %837 = vmatprep.subr.bf16.mxu0 0
        %838 = vmatpush1.bf16.msra.mxu0 0
        %839 = vmatprep.subr.bf16.mxu0 0
        %840 = vmatpush1.bf16.msra.mxu0 0
        %841 = vmatprep.subr.bf16.mxu0 0
        %842 = vmatpush1.bf16.msra.mxu0 0
        %843 = vmatprep.subr.bf16.mxu0 0
        %844 = vmatpush1.bf16.msra.mxu0 0
        %845 = vmatprep.subr.bf16.mxu0 0
        %846 = vmatpush1.bf16.msra.mxu0 0
        %847 = vmatprep.subr.bf16.mxu0 0
        %848 = vmatpush1.bf16.msra.mxu0 0
        %849 = vmatprep.subr.bf16.mxu0 0
        %850 = vmatpush1.bf16.msra.mxu0 0
        %851 = vmatprep.subr.bf16.mxu0 0
        %852 = vmatpush1.bf16.msra.mxu0 0
        %853 = vmatprep.subr.bf16.mxu0 0
        %854 = vmatpush1.bf16.msra.mxu0 0
        %855 = vmatprep.subr.bf16.mxu0 0
        %856 = vmatpush1.bf16.msra.mxu0 0
        %857 = vmatprep.subr.bf16.mxu0 0
        %858 = vmatpush1.bf16.msra.mxu0 0
        %859 = vmatprep.subr.bf16.mxu0 0
        %860 = vmatpush1.bf16.msra.mxu0 0
        %861 = vmatprep.subr.bf16.mxu0 0
        %862 = vmatpush1.bf16.msra.mxu0 0
        %863 = vmatprep.subr.bf16.mxu0 0
        %864 = vmatpush1.bf16.msra.mxu0 0
        %865 = vmatprep.subr.bf16.mxu0 0
        %866 = vmatpush1.bf16.msra.mxu0 0
        %867 = vmatprep.mubr.bf16.mxu0 0
        %868 = vmatmul.mubr.bf16.gmra.mrb[0].mxu0 %v833
        %v869 = vpop.f32.mrb[0].mxu0
        %v870 = vadd.f32 0.0, %v869
        %v871 = vpop.f32.mrb[0].mxu0
        %v872 = vpop.f32.mrb[0].mxu0
        %v873 = vpop.f32.mrb[0].mxu0
        %874 = vdwg.mxu0
        %v875 = vadd.f32 %v831, %v870
        %v876 = vxor.u32 %v875, 2147483648
        %v877 = vmul.f32 %v876, 1.442695
        %v878 = vpow.pop %v877
        %v879 = vadd.f32 %v878, 1.0
        %v880 = vrcp.pop %v879
        %v881 = vmul.f32 1.0, %v880
        %s882 = scalar_lea.vmem %s429, %s826
        %v883 = vld [vmem:[%s882] sm:$0xf]
        %884 = vmatprep.subr.bf16.mxu0 0
        %885 = vmatpush1.bf16.msra.mxu0 %v537
        %886 = vmatprep.subr.bf16.mxu0 0
        %887 = vmatpush1.bf16.msra.mxu0 0
        %888 = vmatprep.subr.bf16.mxu0 0
        %889 = vmatpush1.bf16.msra.mxu0 0
        %890 = vmatprep.subr.bf16.mxu0 0
        %891 = vmatpush1.bf16.msra.mxu0 0
        %892 = vmatprep.subr.bf16.mxu0 0
        %893 = vmatpush1.bf16.msra.mxu0 0
        %894 = vmatprep.subr.bf16.mxu0 0
        %895 = vmatpush1.bf16.msra.mxu0 0
        %896 = vmatprep.subr.bf16.mxu0 0
        %897 = vmatpush1.bf16.msra.mxu0 0
        %898 = vmatprep.subr.bf16.mxu0 0
        %899 = vmatpush1.bf16.msra.mxu0 0
        %900 = vmatprep.subr.bf16.mxu0 0
        %901 = vmatpush1.bf16.msra.mxu0 0
        %902 = vmatprep.subr.bf16.mxu0 0
        %903 = vmatpush1.bf16.msra.mxu0 0
        %904 = vmatprep.subr.bf16.mxu0 0
        %905 = vmatpush1.bf16.msra.mxu0 0
        %906 = vmatprep.subr.bf16.mxu0 0
        %907 = vmatpush1.bf16.msra.mxu0 0
        %908 = vmatprep.subr.bf16.mxu0 0
        %909 = vmatpush1.bf16.msra.mxu0 0
        %910 = vmatprep.subr.bf16.mxu0 0
        %911 = vmatpush1.bf16.msra.mxu0 0
        %912 = vmatprep.subr.bf16.mxu0 0
        %913 = vmatpush1.bf16.msra.mxu0 0
        %914 = vmatprep.subr.bf16.mxu0 0
        %915 = vmatpush1.bf16.msra.mxu0 0
        %916 = vmatprep.mubr.bf16.mxu0 0
        %917 = vmatmul.mubr.bf16.gmra.mrb[0].mxu0 %v833
        %v918 = vpop.f32.mrb[0].mxu0
        %v919 = vadd.f32 0.0, %v918
        %v920 = vpop.f32.mrb[0].mxu0
        %v921 = vpop.f32.mrb[0].mxu0
        %v922 = vpop.f32.mrb[0].mxu0
        %923 = vdwg.mxu0
        %v924 = vadd.f32 %v883, %v919
        %v925 = vxor.u32 %v924, 2147483648
        %v926 = vmul.f32 %v925, 1.442695
        %v927 = vpow.pop %v926
        %v928 = vadd.f32 %v927, 1.0
        %v929 = vrcp.pop %v928
        %v930 = vmul.f32 1.0, %v929
        %s931 = scalar_lea.vmem %s434, %s826
        %v932 = vld [vmem:[%s931] sm:$0xf]
        %933 = vmatprep.subr.bf16.mxu0 0
        %934 = vmatpush1.bf16.msra.mxu0 %v598
        %935 = vmatprep.subr.bf16.mxu0 0
        %936 = vmatpush1.bf16.msra.mxu0 0
        %937 = vmatprep.subr.bf16.mxu0 0
        %938 = vmatpush1.bf16.msra.mxu0 0
        %939 = vmatprep.subr.bf16.mxu0 0
        %940 = vmatpush1.bf16.msra.mxu0 0
        %941 = vmatprep.subr.bf16.mxu0 0
        %942 = vmatpush1.bf16.msra.mxu0 0
        %943 = vmatprep.subr.bf16.mxu0 0
        %944 = vmatpush1.bf16.msra.mxu0 0
        %945 = vmatprep.subr.bf16.mxu0 0
        %946 = vmatpush1.bf16.msra.mxu0 0
        %947 = vmatprep.subr.bf16.mxu0 0
        %948 = vmatpush1.bf16.msra.mxu0 0
        %949 = vmatprep.subr.bf16.mxu0 0
        %950 = vmatpush1.bf16.msra.mxu0 0
        %951 = vmatprep.subr.bf16.mxu0 0
        %952 = vmatpush1.bf16.msra.mxu0 0
        %953 = vmatprep.subr.bf16.mxu0 0
        %954 = vmatpush1.bf16.msra.mxu0 0
        %955 = vmatprep.subr.bf16.mxu0 0
        %956 = vmatpush1.bf16.msra.mxu0 0
        %957 = vmatprep.subr.bf16.mxu0 0
        %958 = vmatpush1.bf16.msra.mxu0 0
        %959 = vmatprep.subr.bf16.mxu0 0
        %960 = vmatpush1.bf16.msra.mxu0 0
        %961 = vmatprep.subr.bf16.mxu0 0
        %962 = vmatpush1.bf16.msra.mxu0 0
        %963 = vmatprep.subr.bf16.mxu0 0
        %964 = vmatpush1.bf16.msra.mxu0 0
        %965 = vmatprep.mubr.bf16.mxu0 0
        %966 = vmatmul.mubr.bf16.gmra.mrb[0].mxu0 %v833
        %v967 = vpop.f32.mrb[0].mxu0
        %v968 = vadd.f32 %v592, %v967
        %v969 = vpop.f32.mrb[0].mxu0
        %v970 = vpop.f32.mrb[0].mxu0
        %v971 = vpop.f32.mrb[0].mxu0
        %972 = vdwg.mxu0
        %v973 = vmul.f32 %v881, %v968
        %v974 = vadd.f32 %v932, %v973
        %v975 = vtanh.pop %v974
        %v976 = vsub.f32 1.0, %v930
        %v977 = vmul.f32 %v976, %v975
        %v978 = vmul.f32 %v930, %v820
        %v979 = vadd.f32 %v977, %v978
        %v980 = vsub.f32 %v979, %v820
        %982 = vset.pattern.permute.xlu0 0
        %983 = vperm.xlu0 %982, %v828
        %v984 = vpop.permute.xlu0 %983
        %v986 = vmul.f32 %v984, %v980
        %v987 = vadd.f32 %v820, %v986
        %v988 = vmul.f32 %v987, %v984
        %s989 = scalar_lea.vmem %s457, %s826
        %990 = vst.msk [vmem:[%s989] sm:$0xf] %vm656, %v988
        %s991 = smul.u32 %s461, 3
        %s992 = sadd.s32 %s460, %s991
        %s993 = smul.u32 %s992, 4
        %s994 = scalar_lea.vmem %s3, %s993
        %v995 = vld [vmem:[%s994] sm:$0xf]
        %v996 = vpack.c.bf16 %v987, %v987
        %s997 = scalar_lea.vmem %s424, %s993
        %v998 = vld [vmem:[%s997] sm:$0xf]
        %v1000 = vsel %vm480, %v996, 0
        %1002 = vmatprep.subr.bf16.mxu0 0
        %1003 = vmatpush1.bf16.msra.mxu0 %v478
        %1004 = vmatprep.subr.bf16.mxu0 0
        %1005 = vmatpush1.bf16.msra.mxu0 0
        %1006 = vmatprep.subr.bf16.mxu0 0
        %1007 = vmatpush1.bf16.msra.mxu0 0
        %1008 = vmatprep.subr.bf16.mxu0 0
        %1009 = vmatpush1.bf16.msra.mxu0 0
        %1010 = vmatprep.subr.bf16.mxu0 0
        %1011 = vmatpush1.bf16.msra.mxu0 0
        %1012 = vmatprep.subr.bf16.mxu0 0
        %1013 = vmatpush1.bf16.msra.mxu0 0
        %1014 = vmatprep.subr.bf16.mxu0 0
        %1015 = vmatpush1.bf16.msra.mxu0 0
        %1016 = vmatprep.subr.bf16.mxu0 0
        %1017 = vmatpush1.bf16.msra.mxu0 0
        %1018 = vmatprep.subr.bf16.mxu0 0
        %1019 = vmatpush1.bf16.msra.mxu0 0
        %1020 = vmatprep.subr.bf16.mxu0 0
        %1021 = vmatpush1.bf16.msra.mxu0 0
        %1022 = vmatprep.subr.bf16.mxu0 0
        %1023 = vmatpush1.bf16.msra.mxu0 0
        %1024 = vmatprep.subr.bf16.mxu0 0
        %1025 = vmatpush1.bf16.msra.mxu0 0
        %1026 = vmatprep.subr.bf16.mxu0 0
        %1027 = vmatpush1.bf16.msra.mxu0 0
        %1028 = vmatprep.subr.bf16.mxu0 0
        %1029 = vmatpush1.bf16.msra.mxu0 0
        %1030 = vmatprep.subr.bf16.mxu0 0
        %1031 = vmatpush1.bf16.msra.mxu0 0
        %1032 = vmatprep.subr.bf16.mxu0 0
        %1033 = vmatpush1.bf16.msra.mxu0 0
        %1034 = vmatprep.mubr.bf16.mxu0 0
        %1035 = vmatmul.mubr.bf16.gmra.mrb[0].mxu0 %v1000
        %v1036 = vpop.f32.mrb[0].mxu0
        %v1037 = vadd.f32 0.0, %v1036
        %v1038 = vpop.f32.mrb[0].mxu0
        %v1039 = vpop.f32.mrb[0].mxu0
        %v1040 = vpop.f32.mrb[0].mxu0
        %1041 = vdwg.mxu0
        %v1042 = vadd.f32 %v998, %v1037
        %v1043 = vxor.u32 %v1042, 2147483648
        %v1044 = vmul.f32 %v1043, 1.442695
        %v1045 = vpow.pop %v1044
        %v1046 = vadd.f32 %v1045, 1.0
        %v1047 = vrcp.pop %v1046
        %v1048 = vmul.f32 1.0, %v1047
        %s1049 = scalar_lea.vmem %s429, %s993
        %v1050 = vld [vmem:[%s1049] sm:$0xf]
        %1051 = vmatprep.subr.bf16.mxu0 0
        %1052 = vmatpush1.bf16.msra.mxu0 %v537
        %1053 = vmatprep.subr.bf16.mxu0 0
        %1054 = vmatpush1.bf16.msra.mxu0 0
        %1055 = vmatprep.subr.bf16.mxu0 0
        %1056 = vmatpush1.bf16.msra.mxu0 0
        %1057 = vmatprep.subr.bf16.mxu0 0
        %1058 = vmatpush1.bf16.msra.mxu0 0
        %1059 = vmatprep.subr.bf16.mxu0 0
        %1060 = vmatpush1.bf16.msra.mxu0 0
        %1061 = vmatprep.subr.bf16.mxu0 0
        %1062 = vmatpush1.bf16.msra.mxu0 0
        %1063 = vmatprep.subr.bf16.mxu0 0
        %1064 = vmatpush1.bf16.msra.mxu0 0
        %1065 = vmatprep.subr.bf16.mxu0 0
        %1066 = vmatpush1.bf16.msra.mxu0 0
        %1067 = vmatprep.subr.bf16.mxu0 0
        %1068 = vmatpush1.bf16.msra.mxu0 0
        %1069 = vmatprep.subr.bf16.mxu0 0
        %1070 = vmatpush1.bf16.msra.mxu0 0
        %1071 = vmatprep.subr.bf16.mxu0 0
        %1072 = vmatpush1.bf16.msra.mxu0 0
        %1073 = vmatprep.subr.bf16.mxu0 0
        %1074 = vmatpush1.bf16.msra.mxu0 0
        %1075 = vmatprep.subr.bf16.mxu0 0
        %1076 = vmatpush1.bf16.msra.mxu0 0
        %1077 = vmatprep.subr.bf16.mxu0 0
        %1078 = vmatpush1.bf16.msra.mxu0 0
        %1079 = vmatprep.subr.bf16.mxu0 0
        %1080 = vmatpush1.bf16.msra.mxu0 0
        %1081 = vmatprep.subr.bf16.mxu0 0
        %1082 = vmatpush1.bf16.msra.mxu0 0
        %1083 = vmatprep.mubr.bf16.mxu0 0
        %1084 = vmatmul.mubr.bf16.gmra.mrb[0].mxu0 %v1000
        %v1085 = vpop.f32.mrb[0].mxu0
        %v1086 = vadd.f32 0.0, %v1085
        %v1087 = vpop.f32.mrb[0].mxu0
        %v1088 = vpop.f32.mrb[0].mxu0
        %v1089 = vpop.f32.mrb[0].mxu0
        %1090 = vdwg.mxu0
        %v1091 = vadd.f32 %v1050, %v1086
        %v1092 = vxor.u32 %v1091, 2147483648
        %v1093 = vmul.f32 %v1092, 1.442695
        %v1094 = vpow.pop %v1093
        %v1095 = vadd.f32 %v1094, 1.0
        %v1096 = vrcp.pop %v1095
        %v1097 = vmul.f32 1.0, %v1096
        %s1098 = scalar_lea.vmem %s434, %s993
        %v1099 = vld [vmem:[%s1098] sm:$0xf]
        %1100 = vmatprep.subr.bf16.mxu0 0
        %1101 = vmatpush1.bf16.msra.mxu0 %v598
        %1102 = vmatprep.subr.bf16.mxu0 0
        %1103 = vmatpush1.bf16.msra.mxu0 0
        %1104 = vmatprep.subr.bf16.mxu0 0
        %1105 = vmatpush1.bf16.msra.mxu0 0
        %1106 = vmatprep.subr.bf16.mxu0 0
        %1107 = vmatpush1.bf16.msra.mxu0 0
        %1108 = vmatprep.subr.bf16.mxu0 0
        %1109 = vmatpush1.bf16.msra.mxu0 0
        %1110 = vmatprep.subr.bf16.mxu0 0
        %1111 = vmatpush1.bf16.msra.mxu0 0
        %1112 = vmatprep.subr.bf16.mxu0 0
        %1113 = vmatpush1.bf16.msra.mxu0 0
        %1114 = vmatprep.subr.bf16.mxu0 0
        %1115 = vmatpush1.bf16.msra.mxu0 0
        %1116 = vmatprep.subr.bf16.mxu0 0
        %1117 = vmatpush1.bf16.msra.mxu0 0
        %1118 = vmatprep.subr.bf16.mxu0 0
        %1119 = vmatpush1.bf16.msra.mxu0 0
        %1120 = vmatprep.subr.bf16.mxu0 0
        %1121 = vmatpush1.bf16.msra.mxu0 0
        %1122 = vmatprep.subr.bf16.mxu0 0
        %1123 = vmatpush1.bf16.msra.mxu0 0
        %1124 = vmatprep.subr.bf16.mxu0 0
        %1125 = vmatpush1.bf16.msra.mxu0 0
        %1126 = vmatprep.subr.bf16.mxu0 0
        %1127 = vmatpush1.bf16.msra.mxu0 0
        %1128 = vmatprep.subr.bf16.mxu0 0
        %1129 = vmatpush1.bf16.msra.mxu0 0
        %1130 = vmatprep.subr.bf16.mxu0 0
        %1131 = vmatpush1.bf16.msra.mxu0 0
        %1132 = vmatprep.mubr.bf16.mxu0 0
        %1133 = vmatmul.mubr.bf16.gmra.mrb[0].mxu0 %v1000
        %v1134 = vpop.f32.mrb[0].mxu0
        %v1135 = vadd.f32 %v592, %v1134
        %v1136 = vpop.f32.mrb[0].mxu0
        %v1137 = vpop.f32.mrb[0].mxu0
        %v1138 = vpop.f32.mrb[0].mxu0
        %1139 = vdwg.mxu0
        %v1140 = vmul.f32 %v1048, %v1135
        %v1141 = vadd.f32 %v1099, %v1140
        %v1142 = vtanh.pop %v1141
        %v1143 = vsub.f32 1.0, %v1097
        %v1144 = vmul.f32 %v1143, %v1142
        %v1145 = vmul.f32 %v1097, %v987
        %v1146 = vadd.f32 %v1144, %v1145
        %v1147 = vsub.f32 %v1146, %v987
        %1149 = vset.pattern.permute.xlu0 0
        %1150 = vperm.xlu0 %1149, %v995
        %v1151 = vpop.permute.xlu0 %1150
        %v1153 = vmul.f32 %v1151, %v1147
        %v1154 = vadd.f32 %v987, %v1153
        %v1155 = vmul.f32 %v1154, %v1151
        %s1156 = scalar_lea.vmem %s457, %s993
        %1157 = vst.msk [vmem:[%s1156] sm:$0xf] %vm656, %v1155
        %s1158 = smul.u32 %s461, 4
        %s1159 = sadd.s32 %s460, %s1158
        %s1160 = smul.u32 %s1159, 4
        %s1161 = scalar_lea.vmem %s3, %s1160
        %v1162 = vld [vmem:[%s1161] sm:$0xf]
        %v1163 = vpack.c.bf16 %v1154, %v1154
        %s1164 = scalar_lea.vmem %s424, %s1160
        %v1165 = vld [vmem:[%s1164] sm:$0xf]
        %v1167 = vsel %vm480, %v1163, 0
        %1169 = vmatprep.subr.bf16.mxu0 0
        %1170 = vmatpush1.bf16.msra.mxu0 %v478
        %1171 = vmatprep.subr.bf16.mxu0 0
        %1172 = vmatpush1.bf16.msra.mxu0 0
        %1173 = vmatprep.subr.bf16.mxu0 0
        %1174 = vmatpush1.bf16.msra.mxu0 0
        %1175 = vmatprep.subr.bf16.mxu0 0
        %1176 = vmatpush1.bf16.msra.mxu0 0
        %1177 = vmatprep.subr.bf16.mxu0 0
        %1178 = vmatpush1.bf16.msra.mxu0 0
        %1179 = vmatprep.subr.bf16.mxu0 0
        %1180 = vmatpush1.bf16.msra.mxu0 0
        %1181 = vmatprep.subr.bf16.mxu0 0
        %1182 = vmatpush1.bf16.msra.mxu0 0
        %1183 = vmatprep.subr.bf16.mxu0 0
        %1184 = vmatpush1.bf16.msra.mxu0 0
        %1185 = vmatprep.subr.bf16.mxu0 0
        %1186 = vmatpush1.bf16.msra.mxu0 0
        %1187 = vmatprep.subr.bf16.mxu0 0
        %1188 = vmatpush1.bf16.msra.mxu0 0
        %1189 = vmatprep.subr.bf16.mxu0 0
        %1190 = vmatpush1.bf16.msra.mxu0 0
        %1191 = vmatprep.subr.bf16.mxu0 0
        %1192 = vmatpush1.bf16.msra.mxu0 0
        %1193 = vmatprep.subr.bf16.mxu0 0
        %1194 = vmatpush1.bf16.msra.mxu0 0
        %1195 = vmatprep.subr.bf16.mxu0 0
        %1196 = vmatpush1.bf16.msra.mxu0 0
        %1197 = vmatprep.subr.bf16.mxu0 0
        %1198 = vmatpush1.bf16.msra.mxu0 0
        %1199 = vmatprep.subr.bf16.mxu0 0
        %1200 = vmatpush1.bf16.msra.mxu0 0
        %1201 = vmatprep.mubr.bf16.mxu0 0
        %1202 = vmatmul.mubr.bf16.gmra.mrb[0].mxu0 %v1167
        %v1203 = vpop.f32.mrb[0].mxu0
        %v1204 = vadd.f32 0.0, %v1203
        %v1205 = vpop.f32.mrb[0].mxu0
        %v1206 = vpop.f32.mrb[0].mxu0
        %v1207 = vpop.f32.mrb[0].mxu0
        %1208 = vdwg.mxu0
        %v1209 = vadd.f32 %v1165, %v1204
        %v1210 = vxor.u32 %v1209, 2147483648
        %v1211 = vmul.f32 %v1210, 1.442695
        %v1212 = vpow.pop %v1211
        %v1213 = vadd.f32 %v1212, 1.0
        %v1214 = vrcp.pop %v1213
        %v1215 = vmul.f32 1.0, %v1214
        %s1216 = scalar_lea.vmem %s429, %s1160
        %v1217 = vld [vmem:[%s1216] sm:$0xf]
        %1218 = vmatprep.subr.bf16.mxu0 0
        %1219 = vmatpush1.bf16.msra.mxu0 %v537
        %1220 = vmatprep.subr.bf16.mxu0 0
        %1221 = vmatpush1.bf16.msra.mxu0 0
        %1222 = vmatprep.subr.bf16.mxu0 0
        %1223 = vmatpush1.bf16.msra.mxu0 0
        %1224 = vmatprep.subr.bf16.mxu0 0
        %1225 = vmatpush1.bf16.msra.mxu0 0
        %1226 = vmatprep.subr.bf16.mxu0 0
        %1227 = vmatpush1.bf16.msra.mxu0 0
        %1228 = vmatprep.subr.bf16.mxu0 0
        %1229 = vmatpush1.bf16.msra.mxu0 0
        %1230 = vmatprep.subr.bf16.mxu0 0
        %1231 = vmatpush1.bf16.msra.mxu0 0
        %1232 = vmatprep.subr.bf16.mxu0 0
        %1233 = vmatpush1.bf16.msra.mxu0 0
        %1234 = vmatprep.subr.bf16.mxu0 0
        %1235 = vmatpush1.bf16.msra.mxu0 0
        %1236 = vmatprep.subr.bf16.mxu0 0
        %1237 = vmatpush1.bf16.msra.mxu0 0
        %1238 = vmatprep.subr.bf16.mxu0 0
        %1239 = vmatpush1.bf16.msra.mxu0 0
        %1240 = vmatprep.subr.bf16.mxu0 0
        %1241 = vmatpush1.bf16.msra.mxu0 0
        %1242 = vmatprep.subr.bf16.mxu0 0
        %1243 = vmatpush1.bf16.msra.mxu0 0
        %1244 = vmatprep.subr.bf16.mxu0 0
        %1245 = vmatpush1.bf16.msra.mxu0 0
        %1246 = vmatprep.subr.bf16.mxu0 0
        %1247 = vmatpush1.bf16.msra.mxu0 0
        %1248 = vmatprep.subr.bf16.mxu0 0
        %1249 = vmatpush1.bf16.msra.mxu0 0
        %1250 = vmatprep.mubr.bf16.mxu0 0
        %1251 = vmatmul.mubr.bf16.gmra.mrb[0].mxu0 %v1167
        %v1252 = vpop.f32.mrb[0].mxu0
        %v1253 = vadd.f32 0.0, %v1252
        %v1254 = vpop.f32.mrb[0].mxu0
        %v1255 = vpop.f32.mrb[0].mxu0
        %v1256 = vpop.f32.mrb[0].mxu0
        %1257 = vdwg.mxu0
        %v1258 = vadd.f32 %v1217, %v1253
        %v1259 = vxor.u32 %v1258, 2147483648
        %v1260 = vmul.f32 %v1259, 1.442695
        %v1261 = vpow.pop %v1260
        %v1262 = vadd.f32 %v1261, 1.0
        %v1263 = vrcp.pop %v1262
        %v1264 = vmul.f32 1.0, %v1263
        %s1265 = scalar_lea.vmem %s434, %s1160
        %v1266 = vld [vmem:[%s1265] sm:$0xf]
        %1267 = vmatprep.subr.bf16.mxu0 0
        %1268 = vmatpush1.bf16.msra.mxu0 %v598
        %1269 = vmatprep.subr.bf16.mxu0 0
        %1270 = vmatpush1.bf16.msra.mxu0 0
        %1271 = vmatprep.subr.bf16.mxu0 0
        %1272 = vmatpush1.bf16.msra.mxu0 0
        %1273 = vmatprep.subr.bf16.mxu0 0
        %1274 = vmatpush1.bf16.msra.mxu0 0
        %1275 = vmatprep.subr.bf16.mxu0 0
        %1276 = vmatpush1.bf16.msra.mxu0 0
        %1277 = vmatprep.subr.bf16.mxu0 0
        %1278 = vmatpush1.bf16.msra.mxu0 0
        %1279 = vmatprep.subr.bf16.mxu0 0
        %1280 = vmatpush1.bf16.msra.mxu0 0
        %1281 = vmatprep.subr.bf16.mxu0 0
        %1282 = vmatpush1.bf16.msra.mxu0 0
        %1283 = vmatprep.subr.bf16.mxu0 0
        %1284 = vmatpush1.bf16.msra.mxu0 0
        %1285 = vmatprep.subr.bf16.mxu0 0
        %1286 = vmatpush1.bf16.msra.mxu0 0
        %1287 = vmatprep.subr.bf16.mxu0 0
        %1288 = vmatpush1.bf16.msra.mxu0 0
        %1289 = vmatprep.subr.bf16.mxu0 0
        %1290 = vmatpush1.bf16.msra.mxu0 0
        %1291 = vmatprep.subr.bf16.mxu0 0
        %1292 = vmatpush1.bf16.msra.mxu0 0
        %1293 = vmatprep.subr.bf16.mxu0 0
        %1294 = vmatpush1.bf16.msra.mxu0 0
        %1295 = vmatprep.subr.bf16.mxu0 0
        %1296 = vmatpush1.bf16.msra.mxu0 0
        %1297 = vmatprep.subr.bf16.mxu0 0
        %1298 = vmatpush1.bf16.msra.mxu0 0
        %1299 = vmatprep.mubr.bf16.mxu0 0
        %1300 = vmatmul.mubr.bf16.gmra.mrb[0].mxu0 %v1167
        %v1301 = vpop.f32.mrb[0].mxu0
        %v1302 = vadd.f32 %v592, %v1301
        %v1303 = vpop.f32.mrb[0].mxu0
        %v1304 = vpop.f32.mrb[0].mxu0
        %v1305 = vpop.f32.mrb[0].mxu0
        %1306 = vdwg.mxu0
        %v1307 = vmul.f32 %v1215, %v1302
        %v1308 = vadd.f32 %v1266, %v1307
        %v1309 = vtanh.pop %v1308
        %v1310 = vsub.f32 1.0, %v1264
        %v1311 = vmul.f32 %v1310, %v1309
        %v1312 = vmul.f32 %v1264, %v1154
        %v1313 = vadd.f32 %v1311, %v1312
        %v1314 = vsub.f32 %v1313, %v1154
        %1316 = vset.pattern.permute.xlu0 0
        %1317 = vperm.xlu0 %1316, %v1162
        %v1318 = vpop.permute.xlu0 %1317
        %v1320 = vmul.f32 %v1318, %v1314
        %v1321 = vadd.f32 %v1154, %v1320
        %v1322 = vmul.f32 %v1321, %v1318
        %s1323 = scalar_lea.vmem %s457, %s1160
        %1324 = vst.msk [vmem:[%s1323] sm:$0xf] %vm656, %v1322
        %s1325 = smul.u32 %s461, 5
        %s1326 = sadd.s32 %s460, %s1325
        %s1327 = smul.u32 %s1326, 4
        %s1328 = scalar_lea.vmem %s3, %s1327
        %v1329 = vld [vmem:[%s1328] sm:$0xf]
        %v1330 = vpack.c.bf16 %v1321, %v1321
        %s1331 = scalar_lea.vmem %s424, %s1327
        %v1332 = vld [vmem:[%s1331] sm:$0xf]
        %v1334 = vsel %vm480, %v1330, 0
        %1336 = vmatprep.subr.bf16.mxu0 0
        %1337 = vmatpush1.bf16.msra.mxu0 %v478
        %1338 = vmatprep.subr.bf16.mxu0 0
        %1339 = vmatpush1.bf16.msra.mxu0 0
        %1340 = vmatprep.subr.bf16.mxu0 0
        %1341 = vmatpush1.bf16.msra.mxu0 0
        %1342 = vmatprep.subr.bf16.mxu0 0
        %1343 = vmatpush1.bf16.msra.mxu0 0
        %1344 = vmatprep.subr.bf16.mxu0 0
        %1345 = vmatpush1.bf16.msra.mxu0 0
        %1346 = vmatprep.subr.bf16.mxu0 0
        %1347 = vmatpush1.bf16.msra.mxu0 0
        %1348 = vmatprep.subr.bf16.mxu0 0
        %1349 = vmatpush1.bf16.msra.mxu0 0
        %1350 = vmatprep.subr.bf16.mxu0 0
        %1351 = vmatpush1.bf16.msra.mxu0 0
        %1352 = vmatprep.subr.bf16.mxu0 0
        %1353 = vmatpush1.bf16.msra.mxu0 0
        %1354 = vmatprep.subr.bf16.mxu0 0
        %1355 = vmatpush1.bf16.msra.mxu0 0
        %1356 = vmatprep.subr.bf16.mxu0 0
        %1357 = vmatpush1.bf16.msra.mxu0 0
        %1358 = vmatprep.subr.bf16.mxu0 0
        %1359 = vmatpush1.bf16.msra.mxu0 0
        %1360 = vmatprep.subr.bf16.mxu0 0
        %1361 = vmatpush1.bf16.msra.mxu0 0
        %1362 = vmatprep.subr.bf16.mxu0 0
        %1363 = vmatpush1.bf16.msra.mxu0 0
        %1364 = vmatprep.subr.bf16.mxu0 0
        %1365 = vmatpush1.bf16.msra.mxu0 0
        %1366 = vmatprep.subr.bf16.mxu0 0
        %1367 = vmatpush1.bf16.msra.mxu0 0
        %1368 = vmatprep.mubr.bf16.mxu0 0
        %1369 = vmatmul.mubr.bf16.gmra.mrb[0].mxu0 %v1334
        %v1370 = vpop.f32.mrb[0].mxu0
        %v1371 = vadd.f32 0.0, %v1370
        %v1372 = vpop.f32.mrb[0].mxu0
        %v1373 = vpop.f32.mrb[0].mxu0
        %v1374 = vpop.f32.mrb[0].mxu0
        %1375 = vdwg.mxu0
        %v1376 = vadd.f32 %v1332, %v1371
        %v1377 = vxor.u32 %v1376, 2147483648
        %v1378 = vmul.f32 %v1377, 1.442695
        %v1379 = vpow.pop %v1378
        %v1380 = vadd.f32 %v1379, 1.0
        %v1381 = vrcp.pop %v1380
        %v1382 = vmul.f32 1.0, %v1381
        %s1383 = scalar_lea.vmem %s429, %s1327
        %v1384 = vld [vmem:[%s1383] sm:$0xf]
        %1385 = vmatprep.subr.bf16.mxu0 0
        %1386 = vmatpush1.bf16.msra.mxu0 %v537
        %1387 = vmatprep.subr.bf16.mxu0 0
        %1388 = vmatpush1.bf16.msra.mxu0 0
        %1389 = vmatprep.subr.bf16.mxu0 0
        %1390 = vmatpush1.bf16.msra.mxu0 0
        %1391 = vmatprep.subr.bf16.mxu0 0
        %1392 = vmatpush1.bf16.msra.mxu0 0
        %1393 = vmatprep.subr.bf16.mxu0 0
        %1394 = vmatpush1.bf16.msra.mxu0 0
        %1395 = vmatprep.subr.bf16.mxu0 0
        %1396 = vmatpush1.bf16.msra.mxu0 0
        %1397 = vmatprep.subr.bf16.mxu0 0
        %1398 = vmatpush1.bf16.msra.mxu0 0
        %1399 = vmatprep.subr.bf16.mxu0 0
        %1400 = vmatpush1.bf16.msra.mxu0 0
        %1401 = vmatprep.subr.bf16.mxu0 0
        %1402 = vmatpush1.bf16.msra.mxu0 0
        %1403 = vmatprep.subr.bf16.mxu0 0
        %1404 = vmatpush1.bf16.msra.mxu0 0
        %1405 = vmatprep.subr.bf16.mxu0 0
        %1406 = vmatpush1.bf16.msra.mxu0 0
        %1407 = vmatprep.subr.bf16.mxu0 0
        %1408 = vmatpush1.bf16.msra.mxu0 0
        %1409 = vmatprep.subr.bf16.mxu0 0
        %1410 = vmatpush1.bf16.msra.mxu0 0
        %1411 = vmatprep.subr.bf16.mxu0 0
        %1412 = vmatpush1.bf16.msra.mxu0 0
        %1413 = vmatprep.subr.bf16.mxu0 0
        %1414 = vmatpush1.bf16.msra.mxu0 0
        %1415 = vmatprep.subr.bf16.mxu0 0
        %1416 = vmatpush1.bf16.msra.mxu0 0
        %1417 = vmatprep.mubr.bf16.mxu0 0
        %1418 = vmatmul.mubr.bf16.gmra.mrb[0].mxu0 %v1334
        %v1419 = vpop.f32.mrb[0].mxu0
        %v1420 = vadd.f32 0.0, %v1419
        %v1421 = vpop.f32.mrb[0].mxu0
        %v1422 = vpop.f32.mrb[0].mxu0
        %v1423 = vpop.f32.mrb[0].mxu0
        %1424 = vdwg.mxu0
        %v1425 = vadd.f32 %v1384, %v1420
        %v1426 = vxor.u32 %v1425, 2147483648
        %v1427 = vmul.f32 %v1426, 1.442695
        %v1428 = vpow.pop %v1427
        %v1429 = vadd.f32 %v1428, 1.0
        %v1430 = vrcp.pop %v1429
        %v1431 = vmul.f32 1.0, %v1430
        %s1432 = scalar_lea.vmem %s434, %s1327
        %v1433 = vld [vmem:[%s1432] sm:$0xf]
        %1434 = vmatprep.subr.bf16.mxu0 0
        %1435 = vmatpush1.bf16.msra.mxu0 %v598
        %1436 = vmatprep.subr.bf16.mxu0 0
        %1437 = vmatpush1.bf16.msra.mxu0 0
        %1438 = vmatprep.subr.bf16.mxu0 0
        %1439 = vmatpush1.bf16.msra.mxu0 0
        %1440 = vmatprep.subr.bf16.mxu0 0
        %1441 = vmatpush1.bf16.msra.mxu0 0
        %1442 = vmatprep.subr.bf16.mxu0 0
        %1443 = vmatpush1.bf16.msra.mxu0 0
        %1444 = vmatprep.subr.bf16.mxu0 0
        %1445 = vmatpush1.bf16.msra.mxu0 0
        %1446 = vmatprep.subr.bf16.mxu0 0
        %1447 = vmatpush1.bf16.msra.mxu0 0
        %1448 = vmatprep.subr.bf16.mxu0 0
        %1449 = vmatpush1.bf16.msra.mxu0 0
        %1450 = vmatprep.subr.bf16.mxu0 0
        %1451 = vmatpush1.bf16.msra.mxu0 0
        %1452 = vmatprep.subr.bf16.mxu0 0
        %1453 = vmatpush1.bf16.msra.mxu0 0
        %1454 = vmatprep.subr.bf16.mxu0 0
        %1455 = vmatpush1.bf16.msra.mxu0 0
        %1456 = vmatprep.subr.bf16.mxu0 0
        %1457 = vmatpush1.bf16.msra.mxu0 0
        %1458 = vmatprep.subr.bf16.mxu0 0
        %1459 = vmatpush1.bf16.msra.mxu0 0
        %1460 = vmatprep.subr.bf16.mxu0 0
        %1461 = vmatpush1.bf16.msra.mxu0 0
        %1462 = vmatprep.subr.bf16.mxu0 0
        %1463 = vmatpush1.bf16.msra.mxu0 0
        %1464 = vmatprep.subr.bf16.mxu0 0
        %1465 = vmatpush1.bf16.msra.mxu0 0
        %1466 = vmatprep.mubr.bf16.mxu0 0
        %1467 = vmatmul.mubr.bf16.gmra.mrb[0].mxu0 %v1334
        %v1468 = vpop.f32.mrb[0].mxu0
        %v1469 = vadd.f32 %v592, %v1468
        %v1470 = vpop.f32.mrb[0].mxu0
        %v1471 = vpop.f32.mrb[0].mxu0
        %v1472 = vpop.f32.mrb[0].mxu0
        %1473 = vdwg.mxu0
        %v1474 = vmul.f32 %v1382, %v1469
        %v1475 = vadd.f32 %v1433, %v1474
        %v1476 = vtanh.pop %v1475
        %v1477 = vsub.f32 1.0, %v1431
        %v1478 = vmul.f32 %v1477, %v1476
        %v1479 = vmul.f32 %v1431, %v1321
        %v1480 = vadd.f32 %v1478, %v1479
        %v1481 = vsub.f32 %v1480, %v1321
        %1483 = vset.pattern.permute.xlu0 0
        %1484 = vperm.xlu0 %1483, %v1329
        %v1485 = vpop.permute.xlu0 %1484
        %v1487 = vmul.f32 %v1485, %v1481
        %v1488 = vadd.f32 %v1321, %v1487
        %v1489 = vmul.f32 %v1488, %v1485
        %s1490 = scalar_lea.vmem %s457, %s1327
        %1491 = vst.msk [vmem:[%s1490] sm:$0xf] %vm656, %v1489
        %s1492 = smul.u32 %s461, 6
        %s1493 = sadd.s32 %s460, %s1492
        %s1494 = smul.u32 %s1493, 4
        %s1495 = scalar_lea.vmem %s3, %s1494
        %v1496 = vld [vmem:[%s1495] sm:$0xf]
        %v1497 = vpack.c.bf16 %v1488, %v1488
        %s1498 = scalar_lea.vmem %s424, %s1494
        %v1499 = vld [vmem:[%s1498] sm:$0xf]
        %v1501 = vsel %vm480, %v1497, 0
        %1503 = vmatprep.subr.bf16.mxu0 0
        %1504 = vmatpush1.bf16.msra.mxu0 %v478
        %1505 = vmatprep.subr.bf16.mxu0 0
        %1506 = vmatpush1.bf16.msra.mxu0 0
        %1507 = vmatprep.subr.bf16.mxu0 0
        %1508 = vmatpush1.bf16.msra.mxu0 0
        %1509 = vmatprep.subr.bf16.mxu0 0
        %1510 = vmatpush1.bf16.msra.mxu0 0
        %1511 = vmatprep.subr.bf16.mxu0 0
        %1512 = vmatpush1.bf16.msra.mxu0 0
        %1513 = vmatprep.subr.bf16.mxu0 0
        %1514 = vmatpush1.bf16.msra.mxu0 0
        %1515 = vmatprep.subr.bf16.mxu0 0
        %1516 = vmatpush1.bf16.msra.mxu0 0
        %1517 = vmatprep.subr.bf16.mxu0 0
        %1518 = vmatpush1.bf16.msra.mxu0 0
        %1519 = vmatprep.subr.bf16.mxu0 0
        %1520 = vmatpush1.bf16.msra.mxu0 0
        %1521 = vmatprep.subr.bf16.mxu0 0
        %1522 = vmatpush1.bf16.msra.mxu0 0
        %1523 = vmatprep.subr.bf16.mxu0 0
        %1524 = vmatpush1.bf16.msra.mxu0 0
        %1525 = vmatprep.subr.bf16.mxu0 0
        %1526 = vmatpush1.bf16.msra.mxu0 0
        %1527 = vmatprep.subr.bf16.mxu0 0
        %1528 = vmatpush1.bf16.msra.mxu0 0
        %1529 = vmatprep.subr.bf16.mxu0 0
        %1530 = vmatpush1.bf16.msra.mxu0 0
        %1531 = vmatprep.subr.bf16.mxu0 0
        %1532 = vmatpush1.bf16.msra.mxu0 0
        %1533 = vmatprep.subr.bf16.mxu0 0
        %1534 = vmatpush1.bf16.msra.mxu0 0
        %1535 = vmatprep.mubr.bf16.mxu0 0
        %1536 = vmatmul.mubr.bf16.gmra.mrb[0].mxu0 %v1501
        %v1537 = vpop.f32.mrb[0].mxu0
        %v1538 = vadd.f32 0.0, %v1537
        %v1539 = vpop.f32.mrb[0].mxu0
        %v1540 = vpop.f32.mrb[0].mxu0
        %v1541 = vpop.f32.mrb[0].mxu0
        %1542 = vdwg.mxu0
        %v1543 = vadd.f32 %v1499, %v1538
        %v1544 = vxor.u32 %v1543, 2147483648
        %v1545 = vmul.f32 %v1544, 1.442695
        %v1546 = vpow.pop %v1545
        %v1547 = vadd.f32 %v1546, 1.0
        %v1548 = vrcp.pop %v1547
        %v1549 = vmul.f32 1.0, %v1548
        %s1550 = scalar_lea.vmem %s429, %s1494
        %v1551 = vld [vmem:[%s1550] sm:$0xf]
        %1552 = vmatprep.subr.bf16.mxu0 0
        %1553 = vmatpush1.bf16.msra.mxu0 %v537
        %1554 = vmatprep.subr.bf16.mxu0 0
        %1555 = vmatpush1.bf16.msra.mxu0 0
        %1556 = vmatprep.subr.bf16.mxu0 0
        %1557 = vmatpush1.bf16.msra.mxu0 0
        %1558 = vmatprep.subr.bf16.mxu0 0
        %1559 = vmatpush1.bf16.msra.mxu0 0
        %1560 = vmatprep.subr.bf16.mxu0 0
        %1561 = vmatpush1.bf16.msra.mxu0 0
        %1562 = vmatprep.subr.bf16.mxu0 0
        %1563 = vmatpush1.bf16.msra.mxu0 0
        %1564 = vmatprep.subr.bf16.mxu0 0
        %1565 = vmatpush1.bf16.msra.mxu0 0
        %1566 = vmatprep.subr.bf16.mxu0 0
        %1567 = vmatpush1.bf16.msra.mxu0 0
        %1568 = vmatprep.subr.bf16.mxu0 0
        %1569 = vmatpush1.bf16.msra.mxu0 0
        %1570 = vmatprep.subr.bf16.mxu0 0
        %1571 = vmatpush1.bf16.msra.mxu0 0
        %1572 = vmatprep.subr.bf16.mxu0 0
        %1573 = vmatpush1.bf16.msra.mxu0 0
        %1574 = vmatprep.subr.bf16.mxu0 0
        %1575 = vmatpush1.bf16.msra.mxu0 0
        %1576 = vmatprep.subr.bf16.mxu0 0
        %1577 = vmatpush1.bf16.msra.mxu0 0
        %1578 = vmatprep.subr.bf16.mxu0 0
        %1579 = vmatpush1.bf16.msra.mxu0 0
        %1580 = vmatprep.subr.bf16.mxu0 0
        %1581 = vmatpush1.bf16.msra.mxu0 0
        %1582 = vmatprep.subr.bf16.mxu0 0
        %1583 = vmatpush1.bf16.msra.mxu0 0
        %1584 = vmatprep.mubr.bf16.mxu0 0
        %1585 = vmatmul.mubr.bf16.gmra.mrb[0].mxu0 %v1501
        %v1586 = vpop.f32.mrb[0].mxu0
        %v1587 = vadd.f32 0.0, %v1586
        %v1588 = vpop.f32.mrb[0].mxu0
        %v1589 = vpop.f32.mrb[0].mxu0
        %v1590 = vpop.f32.mrb[0].mxu0
        %1591 = vdwg.mxu0
        %v1592 = vadd.f32 %v1551, %v1587
        %v1593 = vxor.u32 %v1592, 2147483648
        %v1594 = vmul.f32 %v1593, 1.442695
        %v1595 = vpow.pop %v1594
        %v1596 = vadd.f32 %v1595, 1.0
        %v1597 = vrcp.pop %v1596
        %v1598 = vmul.f32 1.0, %v1597
        %s1599 = scalar_lea.vmem %s434, %s1494
        %v1600 = vld [vmem:[%s1599] sm:$0xf]
        %1601 = vmatprep.subr.bf16.mxu0 0
        %1602 = vmatpush1.bf16.msra.mxu0 %v598
        %1603 = vmatprep.subr.bf16.mxu0 0
        %1604 = vmatpush1.bf16.msra.mxu0 0
        %1605 = vmatprep.subr.bf16.mxu0 0
        %1606 = vmatpush1.bf16.msra.mxu0 0
        %1607 = vmatprep.subr.bf16.mxu0 0
        %1608 = vmatpush1.bf16.msra.mxu0 0
        %1609 = vmatprep.subr.bf16.mxu0 0
        %1610 = vmatpush1.bf16.msra.mxu0 0
        %1611 = vmatprep.subr.bf16.mxu0 0
        %1612 = vmatpush1.bf16.msra.mxu0 0
        %1613 = vmatprep.subr.bf16.mxu0 0
        %1614 = vmatpush1.bf16.msra.mxu0 0
        %1615 = vmatprep.subr.bf16.mxu0 0
        %1616 = vmatpush1.bf16.msra.mxu0 0
        %1617 = vmatprep.subr.bf16.mxu0 0
        %1618 = vmatpush1.bf16.msra.mxu0 0
        %1619 = vmatprep.subr.bf16.mxu0 0
        %1620 = vmatpush1.bf16.msra.mxu0 0
        %1621 = vmatprep.subr.bf16.mxu0 0
        %1622 = vmatpush1.bf16.msra.mxu0 0
        %1623 = vmatprep.subr.bf16.mxu0 0
        %1624 = vmatpush1.bf16.msra.mxu0 0
        %1625 = vmatprep.subr.bf16.mxu0 0
        %1626 = vmatpush1.bf16.msra.mxu0 0
        %1627 = vmatprep.subr.bf16.mxu0 0
        %1628 = vmatpush1.bf16.msra.mxu0 0
        %1629 = vmatprep.subr.bf16.mxu0 0
        %1630 = vmatpush1.bf16.msra.mxu0 0
        %1631 = vmatprep.subr.bf16.mxu0 0
        %1632 = vmatpush1.bf16.msra.mxu0 0
        %1633 = vmatprep.mubr.bf16.mxu0 0
        %1634 = vmatmul.mubr.bf16.gmra.mrb[0].mxu0 %v1501
        %v1635 = vpop.f32.mrb[0].mxu0
        %v1636 = vadd.f32 %v592, %v1635
        %v1637 = vpop.f32.mrb[0].mxu0
        %v1638 = vpop.f32.mrb[0].mxu0
        %v1639 = vpop.f32.mrb[0].mxu0
        %1640 = vdwg.mxu0
        %v1641 = vmul.f32 %v1549, %v1636
        %v1642 = vadd.f32 %v1600, %v1641
        %v1643 = vtanh.pop %v1642
        %v1644 = vsub.f32 1.0, %v1598
        %v1645 = vmul.f32 %v1644, %v1643
        %v1646 = vmul.f32 %v1598, %v1488
        %v1647 = vadd.f32 %v1645, %v1646
        %v1648 = vsub.f32 %v1647, %v1488
        %1650 = vset.pattern.permute.xlu0 0
        %1651 = vperm.xlu0 %1650, %v1496
        %v1652 = vpop.permute.xlu0 %1651
        %v1654 = vmul.f32 %v1652, %v1648
        %v1655 = vadd.f32 %v1488, %v1654
        %v1656 = vmul.f32 %v1655, %v1652
        %s1657 = scalar_lea.vmem %s457, %s1494
        %1658 = vst.msk [vmem:[%s1657] sm:$0xf] %vm656, %v1656
        %s1659 = smul.u32 %s461, 7
        %s1660 = sadd.s32 %s460, %s1659
        %s1661 = smul.u32 %s1660, 4
        %s1662 = scalar_lea.vmem %s3, %s1661
        %v1663 = vld [vmem:[%s1662] sm:$0xf]
        %v1664 = vpack.c.bf16 %v1655, %v1655
        %s1665 = scalar_lea.vmem %s424, %s1661
        %v1666 = vld [vmem:[%s1665] sm:$0xf]
        %v1668 = vsel %vm480, %v1664, 0
        %1670 = vmatprep.subr.bf16.mxu0 0
        %1671 = vmatpush1.bf16.msra.mxu0 %v478
        %1672 = vmatprep.subr.bf16.mxu0 0
        %1673 = vmatpush1.bf16.msra.mxu0 0
        %1674 = vmatprep.subr.bf16.mxu0 0
        %1675 = vmatpush1.bf16.msra.mxu0 0
        %1676 = vmatprep.subr.bf16.mxu0 0
        %1677 = vmatpush1.bf16.msra.mxu0 0
        %1678 = vmatprep.subr.bf16.mxu0 0
        %1679 = vmatpush1.bf16.msra.mxu0 0
        %1680 = vmatprep.subr.bf16.mxu0 0
        %1681 = vmatpush1.bf16.msra.mxu0 0
        %1682 = vmatprep.subr.bf16.mxu0 0
        %1683 = vmatpush1.bf16.msra.mxu0 0
        %1684 = vmatprep.subr.bf16.mxu0 0
        %1685 = vmatpush1.bf16.msra.mxu0 0
        %1686 = vmatprep.subr.bf16.mxu0 0
        %1687 = vmatpush1.bf16.msra.mxu0 0
        %1688 = vmatprep.subr.bf16.mxu0 0
        %1689 = vmatpush1.bf16.msra.mxu0 0
        %1690 = vmatprep.subr.bf16.mxu0 0
        %1691 = vmatpush1.bf16.msra.mxu0 0
        %1692 = vmatprep.subr.bf16.mxu0 0
        %1693 = vmatpush1.bf16.msra.mxu0 0
        %1694 = vmatprep.subr.bf16.mxu0 0
        %1695 = vmatpush1.bf16.msra.mxu0 0
        %1696 = vmatprep.subr.bf16.mxu0 0
        %1697 = vmatpush1.bf16.msra.mxu0 0
        %1698 = vmatprep.subr.bf16.mxu0 0
        %1699 = vmatpush1.bf16.msra.mxu0 0
        %1700 = vmatprep.subr.bf16.mxu0 0
        %1701 = vmatpush1.bf16.msra.mxu0 0
        %1702 = vmatprep.mubr.bf16.mxu0 0
        %1703 = vmatmul.mubr.bf16.gmra.mrb[0].mxu0 %v1668
        %v1704 = vpop.f32.mrb[0].mxu0
        %v1705 = vadd.f32 0.0, %v1704
        %v1706 = vpop.f32.mrb[0].mxu0
        %v1707 = vpop.f32.mrb[0].mxu0
        %v1708 = vpop.f32.mrb[0].mxu0
        %1709 = vdwg.mxu0
        %v1710 = vadd.f32 %v1666, %v1705
        %v1711 = vxor.u32 %v1710, 2147483648
        %v1712 = vmul.f32 %v1711, 1.442695
        %v1713 = vpow.pop %v1712
        %v1714 = vadd.f32 %v1713, 1.0
        %v1715 = vrcp.pop %v1714
        %v1716 = vmul.f32 1.0, %v1715
        %s1717 = scalar_lea.vmem %s429, %s1661
        %v1718 = vld [vmem:[%s1717] sm:$0xf]
        %1719 = vmatprep.subr.bf16.mxu0 0
        %1720 = vmatpush1.bf16.msra.mxu0 %v537
        %1721 = vmatprep.subr.bf16.mxu0 0
        %1722 = vmatpush1.bf16.msra.mxu0 0
        %1723 = vmatprep.subr.bf16.mxu0 0
        %1724 = vmatpush1.bf16.msra.mxu0 0
        %1725 = vmatprep.subr.bf16.mxu0 0
        %1726 = vmatpush1.bf16.msra.mxu0 0
        %1727 = vmatprep.subr.bf16.mxu0 0
        %1728 = vmatpush1.bf16.msra.mxu0 0
        %1729 = vmatprep.subr.bf16.mxu0 0
        %1730 = vmatpush1.bf16.msra.mxu0 0
        %1731 = vmatprep.subr.bf16.mxu0 0
        %1732 = vmatpush1.bf16.msra.mxu0 0
        %1733 = vmatprep.subr.bf16.mxu0 0
        %1734 = vmatpush1.bf16.msra.mxu0 0
        %1735 = vmatprep.subr.bf16.mxu0 0
        %1736 = vmatpush1.bf16.msra.mxu0 0
        %1737 = vmatprep.subr.bf16.mxu0 0
        %1738 = vmatpush1.bf16.msra.mxu0 0
        %1739 = vmatprep.subr.bf16.mxu0 0
        %1740 = vmatpush1.bf16.msra.mxu0 0
        %1741 = vmatprep.subr.bf16.mxu0 0
        %1742 = vmatpush1.bf16.msra.mxu0 0
        %1743 = vmatprep.subr.bf16.mxu0 0
        %1744 = vmatpush1.bf16.msra.mxu0 0
        %1745 = vmatprep.subr.bf16.mxu0 0
        %1746 = vmatpush1.bf16.msra.mxu0 0
        %1747 = vmatprep.subr.bf16.mxu0 0
        %1748 = vmatpush1.bf16.msra.mxu0 0
        %1749 = vmatprep.subr.bf16.mxu0 0
        %1750 = vmatpush1.bf16.msra.mxu0 0
        %1751 = vmatprep.mubr.bf16.mxu0 0
        %1752 = vmatmul.mubr.bf16.gmra.mrb[0].mxu0 %v1668
        %v1753 = vpop.f32.mrb[0].mxu0
        %v1754 = vadd.f32 0.0, %v1753
        %v1755 = vpop.f32.mrb[0].mxu0
        %v1756 = vpop.f32.mrb[0].mxu0
        %v1757 = vpop.f32.mrb[0].mxu0
        %1758 = vdwg.mxu0
        %v1759 = vadd.f32 %v1718, %v1754
        %v1760 = vxor.u32 %v1759, 2147483648
        %v1761 = vmul.f32 %v1760, 1.442695
        %v1762 = vpow.pop %v1761
        %v1763 = vadd.f32 %v1762, 1.0
        %v1764 = vrcp.pop %v1763
        %v1765 = vmul.f32 1.0, %v1764
        %s1766 = scalar_lea.vmem %s434, %s1661
        %v1767 = vld [vmem:[%s1766] sm:$0xf]
        %1768 = vmatprep.subr.bf16.mxu0 0
        %1769 = vmatpush1.bf16.msra.mxu0 %v598
        %1770 = vmatprep.subr.bf16.mxu0 0
        %1771 = vmatpush1.bf16.msra.mxu0 0
        %1772 = vmatprep.subr.bf16.mxu0 0
        %1773 = vmatpush1.bf16.msra.mxu0 0
        %1774 = vmatprep.subr.bf16.mxu0 0
        %1775 = vmatpush1.bf16.msra.mxu0 0
        %1776 = vmatprep.subr.bf16.mxu0 0
        %1777 = vmatpush1.bf16.msra.mxu0 0
        %1778 = vmatprep.subr.bf16.mxu0 0
        %1779 = vmatpush1.bf16.msra.mxu0 0
        %1780 = vmatprep.subr.bf16.mxu0 0
        %1781 = vmatpush1.bf16.msra.mxu0 0
        %1782 = vmatprep.subr.bf16.mxu0 0
        %1783 = vmatpush1.bf16.msra.mxu0 0
        %1784 = vmatprep.subr.bf16.mxu0 0
        %1785 = vmatpush1.bf16.msra.mxu0 0
        %1786 = vmatprep.subr.bf16.mxu0 0
        %1787 = vmatpush1.bf16.msra.mxu0 0
        %1788 = vmatprep.subr.bf16.mxu0 0
        %1789 = vmatpush1.bf16.msra.mxu0 0
        %1790 = vmatprep.subr.bf16.mxu0 0
        %1791 = vmatpush1.bf16.msra.mxu0 0
        %1792 = vmatprep.subr.bf16.mxu0 0
        %1793 = vmatpush1.bf16.msra.mxu0 0
        %1794 = vmatprep.subr.bf16.mxu0 0
        %1795 = vmatpush1.bf16.msra.mxu0 0
        %1796 = vmatprep.subr.bf16.mxu0 0
        %1797 = vmatpush1.bf16.msra.mxu0 0
        %1798 = vmatprep.subr.bf16.mxu0 0
        %1799 = vmatpush1.bf16.msra.mxu0 0
        %1800 = vmatprep.mubr.bf16.mxu0 0
        %1801 = vmatmul.mubr.bf16.gmra.mrb[0].mxu0 %v1668
        %v1802 = vpop.f32.mrb[0].mxu0
        %v1803 = vadd.f32 %v592, %v1802
        %v1804 = vpop.f32.mrb[0].mxu0
        %v1805 = vpop.f32.mrb[0].mxu0
        %v1806 = vpop.f32.mrb[0].mxu0
        %1807 = vdwg.mxu0
        %v1808 = vmul.f32 %v1716, %v1803
        %v1809 = vadd.f32 %v1767, %v1808
        %v1810 = vtanh.pop %v1809
        %v1811 = vsub.f32 1.0, %v1765
        %v1812 = vmul.f32 %v1811, %v1810
        %v1813 = vmul.f32 %v1765, %v1655
        %v1814 = vadd.f32 %v1812, %v1813
        %v1815 = vsub.f32 %v1814, %v1655
        %1817 = vset.pattern.permute.xlu0 0
        %1818 = vperm.xlu0 %1817, %v1663
        %v1819 = vpop.permute.xlu0 %1818
        %v1821 = vmul.f32 %v1819, %v1815
        %v1822 = vadd.f32 %v1655, %v1821
        %v1823 = vmul.f32 %v1822, %v1819
        %s1824 = scalar_lea.vmem %s457, %s1661
        %1825 = vst.msk [vmem:[%s1824] sm:$0xf] %vm656, %v1823
        %s1826 = smul.u32 %s461, 8
        %s1827 = sadd.s32 %s460, %s1826
        %s1828 = smul.u32 %s1827, 4
        %s1829 = scalar_lea.vmem %s3, %s1828
        %v1830 = vld [vmem:[%s1829] sm:$0xf]
        %v1831 = vpack.c.bf16 %v1822, %v1822
        %s1832 = scalar_lea.vmem %s424, %s1828
        %v1833 = vld [vmem:[%s1832] sm:$0xf]
        %v1835 = vsel %vm480, %v1831, 0
        %1837 = vmatprep.subr.bf16.mxu0 0
        %1838 = vmatpush1.bf16.msra.mxu0 %v478
        %1839 = vmatprep.subr.bf16.mxu0 0
        %1840 = vmatpush1.bf16.msra.mxu0 0
        %1841 = vmatprep.subr.bf16.mxu0 0
        %1842 = vmatpush1.bf16.msra.mxu0 0
        %1843 = vmatprep.subr.bf16.mxu0 0
        %1844 = vmatpush1.bf16.msra.mxu0 0
        %1845 = vmatprep.subr.bf16.mxu0 0
        %1846 = vmatpush1.bf16.msra.mxu0 0
        %1847 = vmatprep.subr.bf16.mxu0 0
        %1848 = vmatpush1.bf16.msra.mxu0 0
        %1849 = vmatprep.subr.bf16.mxu0 0
        %1850 = vmatpush1.bf16.msra.mxu0 0
        %1851 = vmatprep.subr.bf16.mxu0 0
        %1852 = vmatpush1.bf16.msra.mxu0 0
        %1853 = vmatprep.subr.bf16.mxu0 0
        %1854 = vmatpush1.bf16.msra.mxu0 0
        %1855 = vmatprep.subr.bf16.mxu0 0
        %1856 = vmatpush1.bf16.msra.mxu0 0
        %1857 = vmatprep.subr.bf16.mxu0 0
        %1858 = vmatpush1.bf16.msra.mxu0 0
        %1859 = vmatprep.subr.bf16.mxu0 0
        %1860 = vmatpush1.bf16.msra.mxu0 0
        %1861 = vmatprep.subr.bf16.mxu0 0
        %1862 = vmatpush1.bf16.msra.mxu0 0
        %1863 = vmatprep.subr.bf16.mxu0 0
        %1864 = vmatpush1.bf16.msra.mxu0 0
        %1865 = vmatprep.subr.bf16.mxu0 0
        %1866 = vmatpush1.bf16.msra.mxu0 0
        %1867 = vmatprep.subr.bf16.mxu0 0
        %1868 = vmatpush1.bf16.msra.mxu0 0
        %1869 = vmatprep.mubr.bf16.mxu0 0
        %1870 = vmatmul.mubr.bf16.gmra.mrb[0].mxu0 %v1835
        %v1871 = vpop.f32.mrb[0].mxu0
        %v1872 = vadd.f32 0.0, %v1871
        %v1873 = vpop.f32.mrb[0].mxu0
        %v1874 = vpop.f32.mrb[0].mxu0
        %v1875 = vpop.f32.mrb[0].mxu0
        %1876 = vdwg.mxu0
        %v1877 = vadd.f32 %v1833, %v1872
        %v1878 = vxor.u32 %v1877, 2147483648
        %v1879 = vmul.f32 %v1878, 1.442695
        %v1880 = vpow.pop %v1879
        %v1881 = vadd.f32 %v1880, 1.0
        %v1882 = vrcp.pop %v1881
        %v1883 = vmul.f32 1.0, %v1882
        %s1884 = scalar_lea.vmem %s429, %s1828
        %v1885 = vld [vmem:[%s1884] sm:$0xf]
        %1886 = vmatprep.subr.bf16.mxu0 0
        %1887 = vmatpush1.bf16.msra.mxu0 %v537
        %1888 = vmatprep.subr.bf16.mxu0 0
        %1889 = vmatpush1.bf16.msra.mxu0 0
        %1890 = vmatprep.subr.bf16.mxu0 0
        %1891 = vmatpush1.bf16.msra.mxu0 0
        %1892 = vmatprep.subr.bf16.mxu0 0
        %1893 = vmatpush1.bf16.msra.mxu0 0
        %1894 = vmatprep.subr.bf16.mxu0 0
        %1895 = vmatpush1.bf16.msra.mxu0 0
        %1896 = vmatprep.subr.bf16.mxu0 0
        %1897 = vmatpush1.bf16.msra.mxu0 0
        %1898 = vmatprep.subr.bf16.mxu0 0
        %1899 = vmatpush1.bf16.msra.mxu0 0
        %1900 = vmatprep.subr.bf16.mxu0 0
        %1901 = vmatpush1.bf16.msra.mxu0 0
        %1902 = vmatprep.subr.bf16.mxu0 0
        %1903 = vmatpush1.bf16.msra.mxu0 0
        %1904 = vmatprep.subr.bf16.mxu0 0
        %1905 = vmatpush1.bf16.msra.mxu0 0
        %1906 = vmatprep.subr.bf16.mxu0 0
        %1907 = vmatpush1.bf16.msra.mxu0 0
        %1908 = vmatprep.subr.bf16.mxu0 0
        %1909 = vmatpush1.bf16.msra.mxu0 0
        %1910 = vmatprep.subr.bf16.mxu0 0
        %1911 = vmatpush1.bf16.msra.mxu0 0
        %1912 = vmatprep.subr.bf16.mxu0 0
        %1913 = vmatpush1.bf16.msra.mxu0 0
        %1914 = vmatprep.subr.bf16.mxu0 0
        %1915 = vmatpush1.bf16.msra.mxu0 0
        %1916 = vmatprep.subr.bf16.mxu0 0
        %1917 = vmatpush1.bf16.msra.mxu0 0
        %1918 = vmatprep.mubr.bf16.mxu0 0
        %1919 = vmatmul.mubr.bf16.gmra.mrb[0].mxu0 %v1835
        %v1920 = vpop.f32.mrb[0].mxu0
        %v1921 = vadd.f32 0.0, %v1920
        %v1922 = vpop.f32.mrb[0].mxu0
        %v1923 = vpop.f32.mrb[0].mxu0
        %v1924 = vpop.f32.mrb[0].mxu0
        %1925 = vdwg.mxu0
        %v1926 = vadd.f32 %v1885, %v1921
        %v1927 = vxor.u32 %v1926, 2147483648
        %v1928 = vmul.f32 %v1927, 1.442695
        %v1929 = vpow.pop %v1928
        %v1930 = vadd.f32 %v1929, 1.0
        %v1931 = vrcp.pop %v1930
        %v1932 = vmul.f32 1.0, %v1931
        %s1933 = scalar_lea.vmem %s434, %s1828
        %v1934 = vld [vmem:[%s1933] sm:$0xf]
        %1935 = vmatprep.subr.bf16.mxu0 0
        %1936 = vmatpush1.bf16.msra.mxu0 %v598
        %1937 = vmatprep.subr.bf16.mxu0 0
        %1938 = vmatpush1.bf16.msra.mxu0 0
        %1939 = vmatprep.subr.bf16.mxu0 0
        %1940 = vmatpush1.bf16.msra.mxu0 0
        %1941 = vmatprep.subr.bf16.mxu0 0
        %1942 = vmatpush1.bf16.msra.mxu0 0
        %1943 = vmatprep.subr.bf16.mxu0 0
        %1944 = vmatpush1.bf16.msra.mxu0 0
        %1945 = vmatprep.subr.bf16.mxu0 0
        %1946 = vmatpush1.bf16.msra.mxu0 0
        %1947 = vmatprep.subr.bf16.mxu0 0
        %1948 = vmatpush1.bf16.msra.mxu0 0
        %1949 = vmatprep.subr.bf16.mxu0 0
        %1950 = vmatpush1.bf16.msra.mxu0 0
        %1951 = vmatprep.subr.bf16.mxu0 0
        %1952 = vmatpush1.bf16.msra.mxu0 0
        %1953 = vmatprep.subr.bf16.mxu0 0
        %1954 = vmatpush1.bf16.msra.mxu0 0
        %1955 = vmatprep.subr.bf16.mxu0 0
        %1956 = vmatpush1.bf16.msra.mxu0 0
        %1957 = vmatprep.subr.bf16.mxu0 0
        %1958 = vmatpush1.bf16.msra.mxu0 0
        %1959 = vmatprep.subr.bf16.mxu0 0
        %1960 = vmatpush1.bf16.msra.mxu0 0
        %1961 = vmatprep.subr.bf16.mxu0 0
        %1962 = vmatpush1.bf16.msra.mxu0 0
        %1963 = vmatprep.subr.bf16.mxu0 0
        %1964 = vmatpush1.bf16.msra.mxu0 0
        %1965 = vmatprep.subr.bf16.mxu0 0
        %1966 = vmatpush1.bf16.msra.mxu0 0
        %1967 = vmatprep.mubr.bf16.mxu0 0
        %1968 = vmatmul.mubr.bf16.gmra.mrb[0].mxu0 %v1835
        %v1969 = vpop.f32.mrb[0].mxu0
        %v1970 = vadd.f32 %v592, %v1969
        %v1971 = vpop.f32.mrb[0].mxu0
        %v1972 = vpop.f32.mrb[0].mxu0
        %v1973 = vpop.f32.mrb[0].mxu0
        %1974 = vdwg.mxu0
        %v1975 = vmul.f32 %v1883, %v1970
        %v1976 = vadd.f32 %v1934, %v1975
        %v1977 = vtanh.pop %v1976
        %v1978 = vsub.f32 1.0, %v1932
        %v1979 = vmul.f32 %v1978, %v1977
        %v1980 = vmul.f32 %v1932, %v1822
        %v1981 = vadd.f32 %v1979, %v1980
        %v1982 = vsub.f32 %v1981, %v1822
        %1984 = vset.pattern.permute.xlu0 0
        %1985 = vperm.xlu0 %1984, %v1830
        %v1986 = vpop.permute.xlu0 %1985
        %v1988 = vmul.f32 %v1986, %v1982
        %v1989 = vadd.f32 %v1822, %v1988
        %v1990 = vmul.f32 %v1989, %v1986
        %s1991 = scalar_lea.vmem %s457, %s1828
        %1992 = vst.msk [vmem:[%s1991] sm:$0xf] %vm656, %v1990
        %s1993 = smul.u32 %s461, 9
        %s1994 = sadd.s32 %s460, %s1993
        %s1995 = smul.u32 %s1994, 4
        %s1996 = scalar_lea.vmem %s3, %s1995
        %v1997 = vld [vmem:[%s1996] sm:$0xf]
        %v1998 = vpack.c.bf16 %v1989, %v1989
        %s1999 = scalar_lea.vmem %s424, %s1995
        %v2000 = vld [vmem:[%s1999] sm:$0xf]
        %v2002 = vsel %vm480, %v1998, 0
        %2004 = vmatprep.subr.bf16.mxu0 0
        %2005 = vmatpush1.bf16.msra.mxu0 %v478
        %2006 = vmatprep.subr.bf16.mxu0 0
        %2007 = vmatpush1.bf16.msra.mxu0 0
        %2008 = vmatprep.subr.bf16.mxu0 0
        %2009 = vmatpush1.bf16.msra.mxu0 0
        %2010 = vmatprep.subr.bf16.mxu0 0
        %2011 = vmatpush1.bf16.msra.mxu0 0
        %2012 = vmatprep.subr.bf16.mxu0 0
        %2013 = vmatpush1.bf16.msra.mxu0 0
        %2014 = vmatprep.subr.bf16.mxu0 0
        %2015 = vmatpush1.bf16.msra.mxu0 0
        %2016 = vmatprep.subr.bf16.mxu0 0
        %2017 = vmatpush1.bf16.msra.mxu0 0
        %2018 = vmatprep.subr.bf16.mxu0 0
        %2019 = vmatpush1.bf16.msra.mxu0 0
        %2020 = vmatprep.subr.bf16.mxu0 0
        %2021 = vmatpush1.bf16.msra.mxu0 0
        %2022 = vmatprep.subr.bf16.mxu0 0
        %2023 = vmatpush1.bf16.msra.mxu0 0
        %2024 = vmatprep.subr.bf16.mxu0 0
        %2025 = vmatpush1.bf16.msra.mxu0 0
        %2026 = vmatprep.subr.bf16.mxu0 0
        %2027 = vmatpush1.bf16.msra.mxu0 0
        %2028 = vmatprep.subr.bf16.mxu0 0
        %2029 = vmatpush1.bf16.msra.mxu0 0
        %2030 = vmatprep.subr.bf16.mxu0 0
        %2031 = vmatpush1.bf16.msra.mxu0 0
        %2032 = vmatprep.subr.bf16.mxu0 0
        %2033 = vmatpush1.bf16.msra.mxu0 0
        %2034 = vmatprep.subr.bf16.mxu0 0
        %2035 = vmatpush1.bf16.msra.mxu0 0
        %2036 = vmatprep.mubr.bf16.mxu0 0
        %2037 = vmatmul.mubr.bf16.gmra.mrb[0].mxu0 %v2002
        %v2038 = vpop.f32.mrb[0].mxu0
        %v2039 = vadd.f32 0.0, %v2038
        %v2040 = vpop.f32.mrb[0].mxu0
        %v2041 = vpop.f32.mrb[0].mxu0
        %v2042 = vpop.f32.mrb[0].mxu0
        %2043 = vdwg.mxu0
        %v2044 = vadd.f32 %v2000, %v2039
        %v2045 = vxor.u32 %v2044, 2147483648
        %v2046 = vmul.f32 %v2045, 1.442695
        %v2047 = vpow.pop %v2046
        %v2048 = vadd.f32 %v2047, 1.0
        %v2049 = vrcp.pop %v2048
        %v2050 = vmul.f32 1.0, %v2049
        %s2051 = scalar_lea.vmem %s429, %s1995
        %v2052 = vld [vmem:[%s2051] sm:$0xf]
        %2053 = vmatprep.subr.bf16.mxu0 0
        %2054 = vmatpush1.bf16.msra.mxu0 %v537
        %2055 = vmatprep.subr.bf16.mxu0 0
        %2056 = vmatpush1.bf16.msra.mxu0 0
        %2057 = vmatprep.subr.bf16.mxu0 0
        %2058 = vmatpush1.bf16.msra.mxu0 0
        %2059 = vmatprep.subr.bf16.mxu0 0
        %2060 = vmatpush1.bf16.msra.mxu0 0
        %2061 = vmatprep.subr.bf16.mxu0 0
        %2062 = vmatpush1.bf16.msra.mxu0 0
        %2063 = vmatprep.subr.bf16.mxu0 0
        %2064 = vmatpush1.bf16.msra.mxu0 0
        %2065 = vmatprep.subr.bf16.mxu0 0
        %2066 = vmatpush1.bf16.msra.mxu0 0
        %2067 = vmatprep.subr.bf16.mxu0 0
        %2068 = vmatpush1.bf16.msra.mxu0 0
        %2069 = vmatprep.subr.bf16.mxu0 0
        %2070 = vmatpush1.bf16.msra.mxu0 0
        %2071 = vmatprep.subr.bf16.mxu0 0
        %2072 = vmatpush1.bf16.msra.mxu0 0
        %2073 = vmatprep.subr.bf16.mxu0 0
        %2074 = vmatpush1.bf16.msra.mxu0 0
        %2075 = vmatprep.subr.bf16.mxu0 0
        %2076 = vmatpush1.bf16.msra.mxu0 0
        %2077 = vmatprep.subr.bf16.mxu0 0
        %2078 = vmatpush1.bf16.msra.mxu0 0
        %2079 = vmatprep.subr.bf16.mxu0 0
        %2080 = vmatpush1.bf16.msra.mxu0 0
        %2081 = vmatprep.subr.bf16.mxu0 0
        %2082 = vmatpush1.bf16.msra.mxu0 0
        %2083 = vmatprep.subr.bf16.mxu0 0
        %2084 = vmatpush1.bf16.msra.mxu0 0
        %2085 = vmatprep.mubr.bf16.mxu0 0
        %2086 = vmatmul.mubr.bf16.gmra.mrb[0].mxu0 %v2002
        %v2087 = vpop.f32.mrb[0].mxu0
        %v2088 = vadd.f32 0.0, %v2087
        %v2089 = vpop.f32.mrb[0].mxu0
        %v2090 = vpop.f32.mrb[0].mxu0
        %v2091 = vpop.f32.mrb[0].mxu0
        %2092 = vdwg.mxu0
        %v2093 = vadd.f32 %v2052, %v2088
        %v2094 = vxor.u32 %v2093, 2147483648
        %v2095 = vmul.f32 %v2094, 1.442695
        %v2096 = vpow.pop %v2095
        %v2097 = vadd.f32 %v2096, 1.0
        %v2098 = vrcp.pop %v2097
        %v2099 = vmul.f32 1.0, %v2098
        %s2100 = scalar_lea.vmem %s434, %s1995
        %v2101 = vld [vmem:[%s2100] sm:$0xf]
        %2102 = vmatprep.subr.bf16.mxu0 0
        %2103 = vmatpush1.bf16.msra.mxu0 %v598
        %2104 = vmatprep.subr.bf16.mxu0 0
        %2105 = vmatpush1.bf16.msra.mxu0 0
        %2106 = vmatprep.subr.bf16.mxu0 0
        %2107 = vmatpush1.bf16.msra.mxu0 0
        %2108 = vmatprep.subr.bf16.mxu0 0
        %2109 = vmatpush1.bf16.msra.mxu0 0
        %2110 = vmatprep.subr.bf16.mxu0 0
        %2111 = vmatpush1.bf16.msra.mxu0 0
        %2112 = vmatprep.subr.bf16.mxu0 0
        %2113 = vmatpush1.bf16.msra.mxu0 0
        %2114 = vmatprep.subr.bf16.mxu0 0
        %2115 = vmatpush1.bf16.msra.mxu0 0
        %2116 = vmatprep.subr.bf16.mxu0 0
        %2117 = vmatpush1.bf16.msra.mxu0 0
        %2118 = vmatprep.subr.bf16.mxu0 0
        %2119 = vmatpush1.bf16.msra.mxu0 0
        %2120 = vmatprep.subr.bf16.mxu0 0
        %2121 = vmatpush1.bf16.msra.mxu0 0
        %2122 = vmatprep.subr.bf16.mxu0 0
        %2123 = vmatpush1.bf16.msra.mxu0 0
        %2124 = vmatprep.subr.bf16.mxu0 0
        %2125 = vmatpush1.bf16.msra.mxu0 0
        %2126 = vmatprep.subr.bf16.mxu0 0
        %2127 = vmatpush1.bf16.msra.mxu0 0
        %2128 = vmatprep.subr.bf16.mxu0 0
        %2129 = vmatpush1.bf16.msra.mxu0 0
        %2130 = vmatprep.subr.bf16.mxu0 0
        %2131 = vmatpush1.bf16.msra.mxu0 0
        %2132 = vmatprep.subr.bf16.mxu0 0
        %2133 = vmatpush1.bf16.msra.mxu0 0
        %2134 = vmatprep.mubr.bf16.mxu0 0
        %2135 = vmatmul.mubr.bf16.gmra.mrb[0].mxu0 %v2002
        %v2136 = vpop.f32.mrb[0].mxu0
        %v2137 = vadd.f32 %v592, %v2136
        %v2138 = vpop.f32.mrb[0].mxu0
        %v2139 = vpop.f32.mrb[0].mxu0
        %v2140 = vpop.f32.mrb[0].mxu0
        %2141 = vdwg.mxu0
        %v2142 = vmul.f32 %v2050, %v2137
        %v2143 = vadd.f32 %v2101, %v2142
        %v2144 = vtanh.pop %v2143
        %v2145 = vsub.f32 1.0, %v2099
        %v2146 = vmul.f32 %v2145, %v2144
        %v2147 = vmul.f32 %v2099, %v1989
        %v2148 = vadd.f32 %v2146, %v2147
        %v2149 = vsub.f32 %v2148, %v1989
        %2151 = vset.pattern.permute.xlu0 0
        %2152 = vperm.xlu0 %2151, %v1997
        %v2153 = vpop.permute.xlu0 %2152
        %v2155 = vmul.f32 %v2153, %v2149
        %v2156 = vadd.f32 %v1989, %v2155
        %v2157 = vmul.f32 %v2156, %v2153
        %s2158 = scalar_lea.vmem %s457, %s1995
        %2159 = vst.msk [vmem:[%s2158] sm:$0xf] %vm656, %v2157
        %s2160 = smul.u32 %s461, 10
        %s2161 = sadd.s32 %s460, %s2160
        %s2162 = smul.u32 %s2161, 4
        %s2163 = scalar_lea.vmem %s3, %s2162
        %v2164 = vld [vmem:[%s2163] sm:$0xf]
        %v2165 = vpack.c.bf16 %v2156, %v2156
        %s2166 = scalar_lea.vmem %s424, %s2162
        %v2167 = vld [vmem:[%s2166] sm:$0xf]
        %v2169 = vsel %vm480, %v2165, 0
        %2171 = vmatprep.subr.bf16.mxu0 0
        %2172 = vmatpush1.bf16.msra.mxu0 %v478
        %2173 = vmatprep.subr.bf16.mxu0 0
        %2174 = vmatpush1.bf16.msra.mxu0 0
        %2175 = vmatprep.subr.bf16.mxu0 0
        %2176 = vmatpush1.bf16.msra.mxu0 0
        %2177 = vmatprep.subr.bf16.mxu0 0
        %2178 = vmatpush1.bf16.msra.mxu0 0
        %2179 = vmatprep.subr.bf16.mxu0 0
        %2180 = vmatpush1.bf16.msra.mxu0 0
        %2181 = vmatprep.subr.bf16.mxu0 0
        %2182 = vmatpush1.bf16.msra.mxu0 0
        %2183 = vmatprep.subr.bf16.mxu0 0
        %2184 = vmatpush1.bf16.msra.mxu0 0
        %2185 = vmatprep.subr.bf16.mxu0 0
        %2186 = vmatpush1.bf16.msra.mxu0 0
        %2187 = vmatprep.subr.bf16.mxu0 0
        %2188 = vmatpush1.bf16.msra.mxu0 0
        %2189 = vmatprep.subr.bf16.mxu0 0
        %2190 = vmatpush1.bf16.msra.mxu0 0
        %2191 = vmatprep.subr.bf16.mxu0 0
        %2192 = vmatpush1.bf16.msra.mxu0 0
        %2193 = vmatprep.subr.bf16.mxu0 0
        %2194 = vmatpush1.bf16.msra.mxu0 0
        %2195 = vmatprep.subr.bf16.mxu0 0
        %2196 = vmatpush1.bf16.msra.mxu0 0
        %2197 = vmatprep.subr.bf16.mxu0 0
        %2198 = vmatpush1.bf16.msra.mxu0 0
        %2199 = vmatprep.subr.bf16.mxu0 0
        %2200 = vmatpush1.bf16.msra.mxu0 0
        %2201 = vmatprep.subr.bf16.mxu0 0
        %2202 = vmatpush1.bf16.msra.mxu0 0
        %2203 = vmatprep.mubr.bf16.mxu0 0
        %2204 = vmatmul.mubr.bf16.gmra.mrb[0].mxu0 %v2169
        %v2205 = vpop.f32.mrb[0].mxu0
        %v2206 = vadd.f32 0.0, %v2205
        %v2207 = vpop.f32.mrb[0].mxu0
        %v2208 = vpop.f32.mrb[0].mxu0
        %v2209 = vpop.f32.mrb[0].mxu0
        %2210 = vdwg.mxu0
        %v2211 = vadd.f32 %v2167, %v2206
        %v2212 = vxor.u32 %v2211, 2147483648
        %v2213 = vmul.f32 %v2212, 1.442695
        %v2214 = vpow.pop %v2213
        %v2215 = vadd.f32 %v2214, 1.0
        %v2216 = vrcp.pop %v2215
        %v2217 = vmul.f32 1.0, %v2216
        %s2218 = scalar_lea.vmem %s429, %s2162
        %v2219 = vld [vmem:[%s2218] sm:$0xf]
        %2220 = vmatprep.subr.bf16.mxu0 0
        %2221 = vmatpush1.bf16.msra.mxu0 %v537
        %2222 = vmatprep.subr.bf16.mxu0 0
        %2223 = vmatpush1.bf16.msra.mxu0 0
        %2224 = vmatprep.subr.bf16.mxu0 0
        %2225 = vmatpush1.bf16.msra.mxu0 0
        %2226 = vmatprep.subr.bf16.mxu0 0
        %2227 = vmatpush1.bf16.msra.mxu0 0
        %2228 = vmatprep.subr.bf16.mxu0 0
        %2229 = vmatpush1.bf16.msra.mxu0 0
        %2230 = vmatprep.subr.bf16.mxu0 0
        %2231 = vmatpush1.bf16.msra.mxu0 0
        %2232 = vmatprep.subr.bf16.mxu0 0
        %2233 = vmatpush1.bf16.msra.mxu0 0
        %2234 = vmatprep.subr.bf16.mxu0 0
        %2235 = vmatpush1.bf16.msra.mxu0 0
        %2236 = vmatprep.subr.bf16.mxu0 0
        %2237 = vmatpush1.bf16.msra.mxu0 0
        %2238 = vmatprep.subr.bf16.mxu0 0
        %2239 = vmatpush1.bf16.msra.mxu0 0
        %2240 = vmatprep.subr.bf16.mxu0 0
        %2241 = vmatpush1.bf16.msra.mxu0 0
        %2242 = vmatprep.subr.bf16.mxu0 0
        %2243 = vmatpush1.bf16.msra.mxu0 0
        %2244 = vmatprep.subr.bf16.mxu0 0
        %2245 = vmatpush1.bf16.msra.mxu0 0
        %2246 = vmatprep.subr.bf16.mxu0 0
        %2247 = vmatpush1.bf16.msra.mxu0 0
        %2248 = vmatprep.subr.bf16.mxu0 0
        %2249 = vmatpush1.bf16.msra.mxu0 0
        %2250 = vmatprep.subr.bf16.mxu0 0
        %2251 = vmatpush1.bf16.msra.mxu0 0
        %2252 = vmatprep.mubr.bf16.mxu0 0
        %2253 = vmatmul.mubr.bf16.gmra.mrb[0].mxu0 %v2169
        %v2254 = vpop.f32.mrb[0].mxu0
        %v2255 = vadd.f32 0.0, %v2254
        %v2256 = vpop.f32.mrb[0].mxu0
        %v2257 = vpop.f32.mrb[0].mxu0
        %v2258 = vpop.f32.mrb[0].mxu0
        %2259 = vdwg.mxu0
        %v2260 = vadd.f32 %v2219, %v2255
        %v2261 = vxor.u32 %v2260, 2147483648
        %v2262 = vmul.f32 %v2261, 1.442695
        %v2263 = vpow.pop %v2262
        %v2264 = vadd.f32 %v2263, 1.0
        %v2265 = vrcp.pop %v2264
        %v2266 = vmul.f32 1.0, %v2265
        %s2267 = scalar_lea.vmem %s434, %s2162
        %v2268 = vld [vmem:[%s2267] sm:$0xf]
        %2269 = vmatprep.subr.bf16.mxu0 0
        %2270 = vmatpush1.bf16.msra.mxu0 %v598
        %2271 = vmatprep.subr.bf16.mxu0 0
        %2272 = vmatpush1.bf16.msra.mxu0 0
        %2273 = vmatprep.subr.bf16.mxu0 0
        %2274 = vmatpush1.bf16.msra.mxu0 0
        %2275 = vmatprep.subr.bf16.mxu0 0
        %2276 = vmatpush1.bf16.msra.mxu0 0
        %2277 = vmatprep.subr.bf16.mxu0 0
        %2278 = vmatpush1.bf16.msra.mxu0 0
        %2279 = vmatprep.subr.bf16.mxu0 0
        %2280 = vmatpush1.bf16.msra.mxu0 0
        %2281 = vmatprep.subr.bf16.mxu0 0
        %2282 = vmatpush1.bf16.msra.mxu0 0
        %2283 = vmatprep.subr.bf16.mxu0 0
        %2284 = vmatpush1.bf16.msra.mxu0 0
        %2285 = vmatprep.subr.bf16.mxu0 0
        %2286 = vmatpush1.bf16.msra.mxu0 0
        %2287 = vmatprep.subr.bf16.mxu0 0
        %2288 = vmatpush1.bf16.msra.mxu0 0
        %2289 = vmatprep.subr.bf16.mxu0 0
        %2290 = vmatpush1.bf16.msra.mxu0 0
        %2291 = vmatprep.subr.bf16.mxu0 0
        %2292 = vmatpush1.bf16.msra.mxu0 0
        %2293 = vmatprep.subr.bf16.mxu0 0
        %2294 = vmatpush1.bf16.msra.mxu0 0
        %2295 = vmatprep.subr.bf16.mxu0 0
        %2296 = vmatpush1.bf16.msra.mxu0 0
        %2297 = vmatprep.subr.bf16.mxu0 0
        %2298 = vmatpush1.bf16.msra.mxu0 0
        %2299 = vmatprep.subr.bf16.mxu0 0
        %2300 = vmatpush1.bf16.msra.mxu0 0
        %2301 = vmatprep.mubr.bf16.mxu0 0
        %2302 = vmatmul.mubr.bf16.gmra.mrb[0].mxu0 %v2169
        %v2303 = vpop.f32.mrb[0].mxu0
        %v2304 = vadd.f32 %v592, %v2303
        %v2305 = vpop.f32.mrb[0].mxu0
        %v2306 = vpop.f32.mrb[0].mxu0
        %v2307 = vpop.f32.mrb[0].mxu0
        %2308 = vdwg.mxu0
        %v2309 = vmul.f32 %v2217, %v2304
        %v2310 = vadd.f32 %v2268, %v2309
        %v2311 = vtanh.pop %v2310
        %v2312 = vsub.f32 1.0, %v2266
        %v2313 = vmul.f32 %v2312, %v2311
        %v2314 = vmul.f32 %v2266, %v2156
        %v2315 = vadd.f32 %v2313, %v2314
        %v2316 = vsub.f32 %v2315, %v2156
        %2318 = vset.pattern.permute.xlu0 0
        %2319 = vperm.xlu0 %2318, %v2164
        %v2320 = vpop.permute.xlu0 %2319
        %v2322 = vmul.f32 %v2320, %v2316
        %v2323 = vadd.f32 %v2156, %v2322
        %v2324 = vmul.f32 %v2323, %v2320
        %s2325 = scalar_lea.vmem %s457, %s2162
        %2326 = vst.msk [vmem:[%s2325] sm:$0xf] %vm656, %v2324
        %s2327 = smul.u32 %s461, 11
        %s2328 = sadd.s32 %s460, %s2327
        %s2329 = smul.u32 %s2328, 4
        %s2330 = scalar_lea.vmem %s3, %s2329
        %v2331 = vld [vmem:[%s2330] sm:$0xf]
        %v2332 = vpack.c.bf16 %v2323, %v2323
        %s2333 = scalar_lea.vmem %s424, %s2329
        %v2334 = vld [vmem:[%s2333] sm:$0xf]
        %v2336 = vsel %vm480, %v2332, 0
        %2338 = vmatprep.subr.bf16.mxu0 0
        %2339 = vmatpush1.bf16.msra.mxu0 %v478
        %2340 = vmatprep.subr.bf16.mxu0 0
        %2341 = vmatpush1.bf16.msra.mxu0 0
        %2342 = vmatprep.subr.bf16.mxu0 0
        %2343 = vmatpush1.bf16.msra.mxu0 0
        %2344 = vmatprep.subr.bf16.mxu0 0
        %2345 = vmatpush1.bf16.msra.mxu0 0
        %2346 = vmatprep.subr.bf16.mxu0 0
        %2347 = vmatpush1.bf16.msra.mxu0 0
        %2348 = vmatprep.subr.bf16.mxu0 0
        %2349 = vmatpush1.bf16.msra.mxu0 0
        %2350 = vmatprep.subr.bf16.mxu0 0
        %2351 = vmatpush1.bf16.msra.mxu0 0
        %2352 = vmatprep.subr.bf16.mxu0 0
        %2353 = vmatpush1.bf16.msra.mxu0 0
        %2354 = vmatprep.subr.bf16.mxu0 0
        %2355 = vmatpush1.bf16.msra.mxu0 0
        %2356 = vmatprep.subr.bf16.mxu0 0
        %2357 = vmatpush1.bf16.msra.mxu0 0
        %2358 = vmatprep.subr.bf16.mxu0 0
        %2359 = vmatpush1.bf16.msra.mxu0 0
        %2360 = vmatprep.subr.bf16.mxu0 0
        %2361 = vmatpush1.bf16.msra.mxu0 0
        %2362 = vmatprep.subr.bf16.mxu0 0
        %2363 = vmatpush1.bf16.msra.mxu0 0
        %2364 = vmatprep.subr.bf16.mxu0 0
        %2365 = vmatpush1.bf16.msra.mxu0 0
        %2366 = vmatprep.subr.bf16.mxu0 0
        %2367 = vmatpush1.bf16.msra.mxu0 0
        %2368 = vmatprep.subr.bf16.mxu0 0
        %2369 = vmatpush1.bf16.msra.mxu0 0
        %2370 = vmatprep.mubr.bf16.mxu0 0
        %2371 = vmatmul.mubr.bf16.gmra.mrb[0].mxu0 %v2336
        %v2372 = vpop.f32.mrb[0].mxu0
        %v2373 = vadd.f32 0.0, %v2372
        %v2374 = vpop.f32.mrb[0].mxu0
        %v2375 = vpop.f32.mrb[0].mxu0
        %v2376 = vpop.f32.mrb[0].mxu0
        %2377 = vdwg.mxu0
        %v2378 = vadd.f32 %v2334, %v2373
        %v2379 = vxor.u32 %v2378, 2147483648
        %v2380 = vmul.f32 %v2379, 1.442695
        %v2381 = vpow.pop %v2380
        %v2382 = vadd.f32 %v2381, 1.0
        %v2383 = vrcp.pop %v2382
        %v2384 = vmul.f32 1.0, %v2383
        %s2385 = scalar_lea.vmem %s429, %s2329
        %v2386 = vld [vmem:[%s2385] sm:$0xf]
        %2387 = vmatprep.subr.bf16.mxu0 0
        %2388 = vmatpush1.bf16.msra.mxu0 %v537
        %2389 = vmatprep.subr.bf16.mxu0 0
        %2390 = vmatpush1.bf16.msra.mxu0 0
        %2391 = vmatprep.subr.bf16.mxu0 0
        %2392 = vmatpush1.bf16.msra.mxu0 0
        %2393 = vmatprep.subr.bf16.mxu0 0
        %2394 = vmatpush1.bf16.msra.mxu0 0
        %2395 = vmatprep.subr.bf16.mxu0 0
        %2396 = vmatpush1.bf16.msra.mxu0 0
        %2397 = vmatprep.subr.bf16.mxu0 0
        %2398 = vmatpush1.bf16.msra.mxu0 0
        %2399 = vmatprep.subr.bf16.mxu0 0
        %2400 = vmatpush1.bf16.msra.mxu0 0
        %2401 = vmatprep.subr.bf16.mxu0 0
        %2402 = vmatpush1.bf16.msra.mxu0 0
        %2403 = vmatprep.subr.bf16.mxu0 0
        %2404 = vmatpush1.bf16.msra.mxu0 0
        %2405 = vmatprep.subr.bf16.mxu0 0
        %2406 = vmatpush1.bf16.msra.mxu0 0
        %2407 = vmatprep.subr.bf16.mxu0 0
        %2408 = vmatpush1.bf16.msra.mxu0 0
        %2409 = vmatprep.subr.bf16.mxu0 0
        %2410 = vmatpush1.bf16.msra.mxu0 0
        %2411 = vmatprep.subr.bf16.mxu0 0
        %2412 = vmatpush1.bf16.msra.mxu0 0
        %2413 = vmatprep.subr.bf16.mxu0 0
        %2414 = vmatpush1.bf16.msra.mxu0 0
        %2415 = vmatprep.subr.bf16.mxu0 0
        %2416 = vmatpush1.bf16.msra.mxu0 0
        %2417 = vmatprep.subr.bf16.mxu0 0
        %2418 = vmatpush1.bf16.msra.mxu0 0
        %2419 = vmatprep.mubr.bf16.mxu0 0
        %2420 = vmatmul.mubr.bf16.gmra.mrb[0].mxu0 %v2336
        %v2421 = vpop.f32.mrb[0].mxu0
        %v2422 = vadd.f32 0.0, %v2421
        %v2423 = vpop.f32.mrb[0].mxu0
        %v2424 = vpop.f32.mrb[0].mxu0
        %v2425 = vpop.f32.mrb[0].mxu0
        %2426 = vdwg.mxu0
        %v2427 = vadd.f32 %v2386, %v2422
        %v2428 = vxor.u32 %v2427, 2147483648
        %v2429 = vmul.f32 %v2428, 1.442695
        %v2430 = vpow.pop %v2429
        %v2431 = vadd.f32 %v2430, 1.0
        %v2432 = vrcp.pop %v2431
        %v2433 = vmul.f32 1.0, %v2432
        %s2434 = scalar_lea.vmem %s434, %s2329
        %v2435 = vld [vmem:[%s2434] sm:$0xf]
        %2436 = vmatprep.subr.bf16.mxu0 0
        %2437 = vmatpush1.bf16.msra.mxu0 %v598
        %2438 = vmatprep.subr.bf16.mxu0 0
        %2439 = vmatpush1.bf16.msra.mxu0 0
        %2440 = vmatprep.subr.bf16.mxu0 0
        %2441 = vmatpush1.bf16.msra.mxu0 0
        %2442 = vmatprep.subr.bf16.mxu0 0
        %2443 = vmatpush1.bf16.msra.mxu0 0
        %2444 = vmatprep.subr.bf16.mxu0 0
        %2445 = vmatpush1.bf16.msra.mxu0 0
        %2446 = vmatprep.subr.bf16.mxu0 0
        %2447 = vmatpush1.bf16.msra.mxu0 0
        %2448 = vmatprep.subr.bf16.mxu0 0
        %2449 = vmatpush1.bf16.msra.mxu0 0
        %2450 = vmatprep.subr.bf16.mxu0 0
        %2451 = vmatpush1.bf16.msra.mxu0 0
        %2452 = vmatprep.subr.bf16.mxu0 0
        %2453 = vmatpush1.bf16.msra.mxu0 0
        %2454 = vmatprep.subr.bf16.mxu0 0
        %2455 = vmatpush1.bf16.msra.mxu0 0
        %2456 = vmatprep.subr.bf16.mxu0 0
        %2457 = vmatpush1.bf16.msra.mxu0 0
        %2458 = vmatprep.subr.bf16.mxu0 0
        %2459 = vmatpush1.bf16.msra.mxu0 0
        %2460 = vmatprep.subr.bf16.mxu0 0
        %2461 = vmatpush1.bf16.msra.mxu0 0
        %2462 = vmatprep.subr.bf16.mxu0 0
        %2463 = vmatpush1.bf16.msra.mxu0 0
        %2464 = vmatprep.subr.bf16.mxu0 0
        %2465 = vmatpush1.bf16.msra.mxu0 0
        %2466 = vmatprep.subr.bf16.mxu0 0
        %2467 = vmatpush1.bf16.msra.mxu0 0
        %2468 = vmatprep.mubr.bf16.mxu0 0
        %2469 = vmatmul.mubr.bf16.gmra.mrb[0].mxu0 %v2336
        %v2470 = vpop.f32.mrb[0].mxu0
        %v2471 = vadd.f32 %v592, %v2470
        %v2472 = vpop.f32.mrb[0].mxu0
        %v2473 = vpop.f32.mrb[0].mxu0
        %v2474 = vpop.f32.mrb[0].mxu0
        %2475 = vdwg.mxu0
        %v2476 = vmul.f32 %v2384, %v2471
        %v2477 = vadd.f32 %v2435, %v2476
        %v2478 = vtanh.pop %v2477
        %v2479 = vsub.f32 1.0, %v2433
        %v2480 = vmul.f32 %v2479, %v2478
        %v2481 = vmul.f32 %v2433, %v2323
        %v2482 = vadd.f32 %v2480, %v2481
        %v2483 = vsub.f32 %v2482, %v2323
        %2485 = vset.pattern.permute.xlu0 0
        %2486 = vperm.xlu0 %2485, %v2331
        %v2487 = vpop.permute.xlu0 %2486
        %v2489 = vmul.f32 %v2487, %v2483
        %v2490 = vadd.f32 %v2323, %v2489
        %v2491 = vmul.f32 %v2490, %v2487
        %s2492 = scalar_lea.vmem %s457, %s2329
        %2493 = vst.msk [vmem:[%s2492] sm:$0xf] %vm656, %v2491
        %2494 = vst.msk [vmem:[%s419] sm:$0xf] %vm656, %v2490
        %p2495 = scmp.lt.s32.totalorder %s24, 1
        %s2496 = scalar_select %p2495, %s24, 1
        %s2497 = smul.addr %s2496, 12
        %s2498 = smul.addr %s2497, 4
        %s2499 = scalar_lea.vmem %s8, %s2498
        %s2500 = sand.u32 %s261, 1
        %s2501 = scalar_lea.sflag [#allocation3], %s2500
        %s2502 = sand.u32 %s261, 1
        %s2503 = smul.addr %s2502, 4
        %s2504 = scalar_lea.vmem [#allocation2], %s2503
        // Predicated region
        $region53: #{asreader_forward.4} parent=51 // pred_check
          %p2505 = pneg %p245
        $region54: #{asreader_forward.4} parent=51 // pred_check_branch
          %2507 = sbr.rel (%p2505) target = $region56
        $region55: #{asreader_forward.4} parent=51 // pred_region
          _
        $region56: #{asreader_forward.4} parent=51 // pred_fallthru
          _
        // Predicated region
        $region57: #{asreader_forward.4} parent=51 // pred_check
          %p2508 = pneg %p271
        $region58: #{asreader_forward.4} parent=51 // pred_check_branch
          %2510 = sbr.rel (%p2508) target = $region60
        $region59: #{asreader_forward.4} parent=51 // pred_region
          %s2512 = ssub.s32 64, 64
          %2513 = vsyncadd %s2501, %s2512
          %s2514 = smul.addr %s24, 64
          %s2515 = scalar_lea.hbm %s9, %s2514
          %s2517 = sshll.u32 %s2504, 4
          %s2518 = int_to_ptr.vmem [resolvable:$true] %s2517
          %2520 = dma.vmem_to_hbm [thread:$0]  %s2518, 64, %s2515, %s2501
        $region60: #{asreader_forward.4} parent=51 // pred_fallthru
          _
      $region52: #{asreader_forward.4} parent=5 // pred_fallthru
        _
      %p2521 = scmp.le.s32.totalorder 2, %s19
      // Predicated region
      $region61: #{asreader_forward.4} parent=5 // pred_check
        %p2522 = pneg %p2521
      $region62: #{asreader_forward.4} parent=5 // pred_check_branch
        %2524 = sbr.rel (%p2522) target = $region64
      $region63: #{asreader_forward.4} parent=5 // pred_region
        %s2525 = ssub.s32 %s19, 2
        // Predicated region
        $region65: #{asreader_forward.4} parent=63 // pred_check
          %p2526 = pneg %p251
        $region66: #{asreader_forward.4} parent=63 // pred_check_branch
          %2528 = sbr.rel (%p2526) target = $region68
        $region67: #{asreader_forward.4} parent=63 // pred_region
          %p2529 = scmp.lt.s32.totalorder %s25, 1
          %s2530 = scalar_select %p2529, %s25, 1
          %s2531 = smul.addr %s2530, 12
          %s2532 = smul.addr %s2531, 4
          %s2533 = scalar_lea.vmem %s8, %s2532
        $region68: #{asreader_forward.4} parent=63 // pred_fallthru
          _
        // Predicated region
        $region69: #{asreader_forward.4} parent=63 // pred_check
          %p2534 = pneg %p277
        $region70: #{asreader_forward.4} parent=63 // pred_check_branch
          %2536 = sbr.rel (%p2534) target = $region72
        $region71: #{asreader_forward.4} parent=63 // pred_region
          %s2537 = sand.u32 %s262, 1
          %s2538 = scalar_lea.sflag [#allocation3], %s2537
          %s2539 = sand.u32 %s262, 1
          %s2540 = smul.addr %s2539, 4
          %s2541 = scalar_lea.vmem [#allocation2], %s2540
          %2542 = dma.done %s2538, 64
        $region72: #{asreader_forward.4} parent=63 // pred_fallthru
          _
      $region64: #{asreader_forward.4} parent=5 // pred_fallthru
        _
    $region6: #{asreader_forward.4} parent=1 // loop_footer
      %s23 = sadd.s32 1, %s19
    $region7: #{asreader_forward.4} parent=1 // loop_footer_branch
      %18 = sbr.rel target = $region3
    $region8: #{asreader_forward.4} parent=1 // loop_exit
      _
    %2543 = vsyncpa [#allocation3], 1
    %s2544 = scalar_lea.sflag [#allocation3], 1
    %2545 = vsyncpa %s2544, 1

</llo_original>
